<compile_context>
chip_gen: v7x
topology: tpu7x:2x2x1
jax: 0.10.0
libtpu: 0.0.40
codegen_flags: <defaults>
</compile_context>

<pallas_src>
import math

import jax
import jax.numpy as jnp
from jax.experimental import pallas as pl
from jax.experimental.pallas import tpu as pltpu


def _round_up(x, m):
    return ((x + m - 1) // m) * m


# ------------------------------------------------------------------ kernel --
def _fcn_kernel(x_ref,
                w1_ref, b1_ref,
                w2_ref, b2_ref,
                w3_ref, b3_ref,
                w4_ref, b4_ref,
                o_ref,
                h_ref):
    # Layers 1-3 only depend on the batch tile; compute them once per batch
    # tile (n-tile index 0) and cache the bf16 result in VMEM scratch.
    @pl.when(pl.program_id(1) == 0)
    def _():
        h = jnp.dot(x_ref[...], w1_ref[...], preferred_element_type=jnp.float32)
        h = jnp.maximum(h + b1_ref[...], 0.0).astype(jnp.bfloat16)
        h = jnp.dot(h, w2_ref[...], preferred_element_type=jnp.float32)
        h = jnp.maximum(h + b2_ref[...], 0.0).astype(jnp.bfloat16)
        h = jnp.dot(h, w3_ref[...], preferred_element_type=jnp.float32)
        h_ref[...] = jnp.maximum(h + b3_ref[...], 0.0).astype(jnp.bfloat16)

    # Layer 4: Linear(2048, tn), no activation; lane-dense f32 store.
    out = jnp.dot(h_ref[...], w4_ref[...],
                  preferred_element_type=jnp.float32) + b4_ref[...]
    o_ref[...] = out.astype(o_ref.dtype)


# ----------------------------------------------------------- HW queries -----
def _vmem_capacity_bytes():
    try:
        cap = int(pltpu.get_tpu_info().vmem_capacity_bytes)
        if cap > 0:
            return cap
    except Exception:
        pass
    return 64 * 1024 * 1024  # conservative (v7x per-TC)


def _tensorcores_per_chip():
    try:
        dev = jax.devices()[0]
        kind = (getattr(dev, "device_kind", "") or "").lower()
        if "v7" in kind:
            return 2
        nc = getattr(dev, "num_cores", None)
        if nc:
            return int(nc)
    except Exception:
        pass
    return 1


# ----------------------------------------------------------- VMEM model -----
def _footprint_bytes(tm, tn, in_pad, h1, h2):
    # Resident, single-buffered (constant index_map + Buffered(1)).
    resident = 2 * (in_pad * h1 + h1 * h2 + h2 * h1)       # bf16 w1, w2, w3
    resident += 4 * (h1 + h2 + h1)                          # f32 b1, b2, b3
    # Streamed blocks (double-buffered by the pipeline).
    streamed = 2 * tm * in_pad                               # x block (bf16)
    streamed += 2 * h1 * tn + 4 * tn                         # w4 / b4 blocks
    streamed += 4 * tm * tn                                  # out block (f32)
    scratch = 2 * tm * h1                                    # layer-3 h cache (bf16)
    act = 2 * tm * h1 * 4                                    # f32 matmul temporaries
    return resident + 2 * streamed + scratch + act


def _vmem_limit_bytes(footprint, capacity):
    limit = max(int(footprint * 1.25) + (4 << 20), 16 << 20)
    return int(min(limit, capacity - (4 << 20)))


def _choose_tn(tm, in_pad, h1, h2, out_pad, cap):
    tn = out_pad
    while tn > 128 and _footprint_bytes(tm, tn, in_pad, h1, h2) > cap:
        tn = max(128, _round_up(tn // 2, 128))
    return tn


# --------------------------------------------------------------- wrapper ----
def _spec(shape, index_map, *, single_buffer=False):
    if single_buffer and hasattr(pl, "Buffered"):
        try:
            return pl.BlockSpec(shape, index_map, pipeline_mode=pl.Buffered(1))
        except TypeError:
            pass
    return pl.BlockSpec(shape, index_map)


def fcn_forward(x, prepared_params, output_size):
    """Runs the fused, batch-gridded MLP kernel; returns (B, 1, H, W) f32."""
    (w1, b1), (w2, b2), (w3, b3), (w4, b4) = prepared_params
    B, in_dim = x.shape
    out_dim = output_size[0] * output_size[1]
    in_pad = w1.shape[0]
    h1 = w1.shape[1]
    h2 = w2.shape[1]
    out_pad = w4.shape[1]

    # Batch tile tiers (MXU height); sublane-aligned for tiny B.
    if B >= 512:
        tm = 512
    elif B >= 256:
        tm = 256
    elif B >= 128:
        tm = 128
    else:
        tm = _round_up(max(B, 1), 8)
    nb = -(-B // tm)
    # v7x has 2 TCs: keep the "parallel" batch grid even so both cores work.
    if nb > 1 and (nb % 2 == 1) and _tensorcores_per_chip() >= 2:
        nb += 1
    b_pad = nb * tm

    # Output-column tiling: only kick in if the fully-fused footprint would
    # blow past ~75% of this generation's VMEM (large H*W).
    capacity = _vmem_capacity_bytes()
    cap = int(0.75 * capacity)
    tn = _choose_tn(tm, in_pad, h1, h2, out_pad, cap)
    out_cols = _round_up(out_pad, tn)
    nn = out_cols // tn
    if out_cols != out_pad:
        w4 = jnp.pad(w4, ((0, 0), (0, out_cols - out_pad)))
        b4 = jnp.pad(b4, ((0, 0), (0, out_cols - out_pad)))

    footprint = _footprint_bytes(tm, tn, in_pad, h1, h2)
    vmem_limit = _vmem_limit_bytes(footprint, capacity)

    # Pad batch rows / input columns with zeros, cast activations to bf16.
    x_p = jnp.zeros((b_pad, in_pad), jnp.bfloat16).at[:B, :in_dim].set(
        x.astype(jnp.bfloat16))

    const = lambda i, j: (0, 0)
    grid_spec = pltpu.PrefetchScalarGridSpec(
        num_scalar_prefetch=0,
        grid=(nb, nn),
        in_specs=[
            pl.BlockSpec((tm, in_pad), lambda i, j: (i, 0)),
            _spec(w1.shape, const, single_buffer=True),
            _spec(b1.shape, const, single_buffer=True),
            _spec(w2.shape, const, single_buffer=True),
            _spec(b2.shape, const, single_buffer=True),
            _spec(w3.shape, const, single_buffer=True),
            _spec(b3.shape, const, single_buffer=True),
            _spec((h1, tn), lambda i, j: (0, j), single_buffer=(nn == 1)),
            _spec((1, tn), lambda i, j: (0, j), single_buffer=(nn == 1)),
        ],
        out_specs=pl.BlockSpec((tm, tn), lambda i, j: (i, j)),
        scratch_shapes=[pltpu.VMEM((tm, h1), jnp.bfloat16)],
    )

    # TODO(synk): for the small-batch repeated-inference path the latency floor
    # is the per-call weight HBM reload (~few MiB); a cross-pallas_call
    # persistent-VMEM weight pin would remove it.
    # TODO(synk): on v7x, w2/w3 could be stored fp8 (native MXU path) to halve
    # their HBM traffic; kept bf16 here for cross-generation portability.
    out_flat = pl.pallas_call(
        _fcn_kernel,
        out_shape=jax.ShapeDtypeStruct((b_pad, out_cols), jnp.float32),
        grid_spec=grid_spec,
        compiler_params=pltpu.CompilerParams(
            dimension_semantics=("parallel", "arbitrary"),
            vmem_limit_bytes=vmem_limit,
        ),
    )(x_p, w1, b1, w2, b2, w3, b3, w4, b4)

    # Drop batch/output padding, then the torch reshape: (-1, 1, H, W).
    return out_flat[:B, :out_dim].reshape(-1, 1, output_size[0], output_size[1])


# ------------------------------------------------------------ params --------
def init_params(key, input_size, output_size):
    """PyTorch-style uniform(-1/sqrt(fan_in), 1/sqrt(fan_in)) init, f32.

    Weights are stored as (in_features, out_features) (transposed vs torch's
    nn.Linear storage) so the kernel computes x @ W + b.
    """
    dims = [input_size, 2000, 500, 2000, output_size[0] * output_size[1]]
    params = []
    for fan_in, fan_out in zip(dims[:-1], dims[1:]):
        key, kw, kb = jax.random.split(key, 3)
        bound = 1.0 / math.sqrt(fan_in)
        w = jax.random.uniform(kw, (fan_in, fan_out), jnp.float32,
                               minval=-bound, maxval=bound)
        b = jax.random.uniform(kb, (fan_out,), jnp.float32,
                               minval=-bound, maxval=bound)
        params.append((w, b))
    return params


def prepare_params(params, input_size, output_size):
    """Zero-pad all dims (incl. input) to multiples of 128, weights -> bf16.

    Padded weight rows/cols and bias entries are zero, and ReLU(0) = 0, so the
    math on the original coordinates is unchanged.
    """
    out_dim = output_size[0] * output_size[1]
    dims = [input_size, 2000, 500, 2000, out_dim]
    pdims = [_round_up(d, 128) for d in dims]
    prepared = []
    for k, (w, b) in enumerate(params):
        pi, po = pdims[k], pdims[k + 1]
        wp = jnp.zeros((pi, po), jnp.bfloat16).at[:w.shape[0], :w.shape[1]].set(
            w.astype(jnp.bfloat16))
        bp = jnp.zeros((1, po), jnp.float32).at[:, :b.shape[-1]].set(
            b.reshape(1, -1))
        prepared.append((wp, bp))
    return prepared


# ---------------------------------------------------------- references ------
def fcn_reference_bf16(x, prepared_params, output_size):
    """Pure-JAX reference with the same bf16 weight / f32-accumulate path."""
    (w1, b1), (w2, b2), (w3, b3), (w4, b4) = prepared_params
    out_dim = output_size[0] * output_size[1]
    in_pad = w1.shape[0]
    h = jnp.zeros((x.shape[0], in_pad), jnp.bfloat16).at[:, :x.shape[1]].set(
        x.astype(jnp.bfloat16))
    h = jnp.maximum(jnp.dot(h, w1, preferred_element_type=jnp.float32) + b1, 0.0)
    h = jnp.maximum(jnp.dot(h.astype(jnp.bfloat16), w2,
                            preferred_element_type=jnp.float32) + b2, 0.0)
    h = jnp.maximum(jnp.dot(h.astype(jnp.bfloat16), w3,
                            preferred_element_type=jnp.float32) + b3, 0.0)
    out = jnp.dot(h.astype(jnp.bfloat16), w4,
                  preferred_element_type=jnp.float32) + b4
    return out[:, :out_dim].reshape(-1, 1, output_size[0], output_size[1])


def fcn_reference_f32(x, params, output_size):
    """Full-precision f32 reference (original module semantics)."""
    (w1, b1), (w2, b2), (w3, b3), (w4, b4) = params
    h = jnp.maximum(x @ w1 + b1, 0.0)
    h = jnp.maximum(h @ w2 + b2, 0.0)
    h = jnp.maximum(h @ w3 + b3, 0.0)
    out = h @ w4 + b4
    return out.reshape(-1, 1, output_size[0], output_size[1])


# ------------------------------------------------------------------ main ----
if __name__ == "__main__":
    key = jax.random.PRNGKey(0)
    key, kx = jax.random.split(key)

    batch = 2
    input_size = 32
    output_size = (8, 8)

    x = jax.random.normal(kx, (batch, input_size), jnp.float32)
    params = init_params(key, input_size, output_size)
    prepared = prepare_params(params, input_size, output_size)

    out = fcn_forward(x, prepared, output_size)
    out = jax.block_until_ready(out)

    assert out.shape == (batch, 1, output_size[0], output_size[1]), out.shape

    # Exact-path check: same bf16 weights / f32 accumulation in pure JAX.
    ref_bf16 = fcn_reference_bf16(x, prepared, output_size)
    assert jnp.allclose(out, ref_bf16, atol=1e-3, rtol=1e-3), \
        "mismatch vs matched-precision reference"

    # Sanity vs full-f32 original-module reference (small bf16 quantization).
    ref_f32 = fcn_reference_f32(x, params, output_size)
    assert float(jnp.max(jnp.abs(out - ref_f32))) < 5e-2, \
        "excessive deviation from f32 reference"

    print("KERNEL_OK")
</pallas_src>

<mosaic_0001>
module attributes {stable_mosaic.version = 11 : i64} {
  func.func @_fcn_kernel(%arg0: i32, %arg1: i32, %arg2: memref<8x128xbf16, #tpu.memory_space<vmem>>, %arg3: memref<128x2048xbf16, #tpu.memory_space<vmem>>, %arg4: memref<1x2048xf32, #tpu.memory_space<vmem>>, %arg5: memref<2048x512xbf16, #tpu.memory_space<vmem>>, %arg6: memref<1x512xf32, #tpu.memory_space<vmem>>, %arg7: memref<512x2048xbf16, #tpu.memory_space<vmem>>, %arg8: memref<1x2048xf32, #tpu.memory_space<vmem>>, %arg9: memref<2048x128xbf16, #tpu.memory_space<vmem>>, %arg10: memref<1x128xf32, #tpu.memory_space<vmem>>, %arg11: memref<8x128xf32, #tpu.memory_space<vmem>>, %arg12: memref<8x2048xbf16, #tpu.memory_space<vmem>>) attributes {dimension_semantics = [#tpu.dimension_semantics<parallel>, #tpu.dimension_semantics<arbitrary>], iteration_bounds = array<i64: 1, 1>, scalar_prefetch = 0 : i64, scratch_operands = 1 : i64, tpu.core_type = #tpu.core_type<tc>, window_params = [{transform_indices = @transform_0, window_bounds = array<i64: 8, 128>}, {pipeline_mode = #tpu.pipeline_mode<synchronous>, transform_indices = @transform_1, window_bounds = array<i64: 128, 2048>}, {pipeline_mode = #tpu.pipeline_mode<synchronous>, transform_indices = @transform_2, window_bounds = array<i64: 1, 2048>}, {pipeline_mode = #tpu.pipeline_mode<synchronous>, transform_indices = @transform_3, window_bounds = array<i64: 2048, 512>}, {pipeline_mode = #tpu.pipeline_mode<synchronous>, transform_indices = @transform_4, window_bounds = array<i64: 1, 512>}, {pipeline_mode = #tpu.pipeline_mode<synchronous>, transform_indices = @transform_5, window_bounds = array<i64: 512, 2048>}, {pipeline_mode = #tpu.pipeline_mode<synchronous>, transform_indices = @transform_6, window_bounds = array<i64: 1, 2048>}, {pipeline_mode = #tpu.pipeline_mode<synchronous>, transform_indices = @transform_7, window_bounds = array<i64: 2048, 128>}, {pipeline_mode = #tpu.pipeline_mode<synchronous>, transform_indices = @transform_8, window_bounds = array<i64: 1, 128>}, {transform_indices = @transform_9, window_bounds = array<i64: 8, 128>}]} {
    %c0_i32 = arith.constant 0 : i32
    %0 = arith.cmpi eq, %arg1, %c0_i32 : i32
    %1 = arith.extui %0 : i1 to i32
    %c0_i32_0 = arith.constant 0 : i32
    %2 = arith.cmpi ne, %1, %c0_i32_0 : i32
    scf.if %2 {
      %c0_8 = arith.constant 0 : index
      %c0_9 = arith.constant 0 : index
      %10 = vector.load %arg2[%c0_8, %c0_9] : memref<8x128xbf16, #tpu.memory_space<vmem>>, vector<8x128xbf16>
      %c0_10 = arith.constant 0 : index
      %c0_11 = arith.constant 0 : index
      %11 = vector.load %arg3[%c0_10, %c0_11] : memref<128x2048xbf16, #tpu.memory_space<vmem>>, vector<128x2048xbf16>
      %cst_12 = arith.constant dense<0.000000e+00> : vector<8x2048xf32>
      %12 = tpu.matmul %10, %11, %cst_12 {dimension_numbers = #tpu.dot_dimension_numbers<[1], [0], [0], [1], [0, 0, 1, 1], [], []>} : vector<8x128xbf16>, vector<128x2048xbf16>, vector<8x2048xf32> -> vector<8x2048xf32>
      %c0_13 = arith.constant 0 : index
      %c0_14 = arith.constant 0 : index
      %13 = vector.load %arg4[%c0_13, %c0_14] : memref<1x2048xf32, #tpu.memory_space<vmem>>, vector<1x2048xf32>
      %14 = vector.broadcast %13 : vector<1x2048xf32> to vector<8x2048xf32>
      %15 = arith.addf %12, %14 : vector<8x2048xf32>
      %cst_15 = arith.constant 0.000000e+00 : f32
      %16 = vector.broadcast %cst_15 : f32 to vector<8x2048xf32>
      %17 = arith.maximumf %15, %16 : vector<8x2048xf32>
      %18 = arith.truncf %17 : vector<8x2048xf32> to vector<8x2048xbf16>
      %c0_16 = arith.constant 0 : index
      %c0_17 = arith.constant 0 : index
      %19 = vector.load %arg5[%c0_16, %c0_17] : memref<2048x512xbf16, #tpu.memory_space<vmem>>, vector<2048x512xbf16>
      %cst_18 = arith.constant dense<0.000000e+00> : vector<8x512xf32>
      %20 = tpu.matmul %18, %19, %cst_18 {dimension_numbers = #tpu.dot_dimension_numbers<[1], [0], [0], [1], [0, 0, 1, 1], [], []>} : vector<8x2048xbf16>, vector<2048x512xbf16>, vector<8x512xf32> -> vector<8x512xf32>
      %c0_19 = arith.constant 0 : index
      %c0_20 = arith.constant 0 : index
      %21 = vector.load %arg6[%c0_19, %c0_20] : memref<1x512xf32, #tpu.memory_space<vmem>>, vector<1x512xf32>
      %22 = vector.broadcast %21 : vector<1x512xf32> to vector<8x512xf32>
      %23 = arith.addf %20, %22 : vector<8x512xf32>
      %cst_21 = arith.constant 0.000000e+00 : f32
      %24 = vector.broadcast %cst_21 : f32 to vector<8x512xf32>
      %25 = arith.maximumf %23, %24 : vector<8x512xf32>
      %26 = arith.truncf %25 : vector<8x512xf32> to vector<8x512xbf16>
      %c0_22 = arith.constant 0 : index
      %c0_23 = arith.constant 0 : index
      %27 = vector.load %arg7[%c0_22, %c0_23] : memref<512x2048xbf16, #tpu.memory_space<vmem>>, vector<512x2048xbf16>
      %cst_24 = arith.constant dense<0.000000e+00> : vector<8x2048xf32>
      %28 = tpu.matmul %26, %27, %cst_24 {dimension_numbers = #tpu.dot_dimension_numbers<[1], [0], [0], [1], [0, 0, 1, 1], [], []>} : vector<8x512xbf16>, vector<512x2048xbf16>, vector<8x2048xf32> -> vector<8x2048xf32>
      %c0_25 = arith.constant 0 : index
      %c0_26 = arith.constant 0 : index
      %29 = vector.load %arg8[%c0_25, %c0_26] : memref<1x2048xf32, #tpu.memory_space<vmem>>, vector<1x2048xf32>
      %30 = vector.broadcast %29 : vector<1x2048xf32> to vector<8x2048xf32>
      %31 = arith.addf %28, %30 : vector<8x2048xf32>
      %cst_27 = arith.constant 0.000000e+00 : f32
      %32 = vector.broadcast %cst_27 : f32 to vector<8x2048xf32>
      %33 = arith.maximumf %31, %32 : vector<8x2048xf32>
      %34 = arith.truncf %33 : vector<8x2048xf32> to vector<8x2048xbf16>
      %c0_28 = arith.constant 0 : index
      %c0_29 = arith.constant 0 : index
      %35 = vector.load %arg12[%c0_28, %c0_29] : memref<8x2048xbf16, #tpu.memory_space<vmem>>, vector<8x2048xbf16>
      tpu.vector_store %arg12[%c0_28, %c0_29], %34 {strides = array<i32>} : memref<8x2048xbf16, #tpu.memory_space<vmem>>, vector<8x2048xbf16>,
    } else {
    }
    %c0 = arith.constant 0 : index
    %c0_1 = arith.constant 0 : index
    %3 = vector.load %arg12[%c0, %c0_1] : memref<8x2048xbf16, #tpu.memory_space<vmem>>, vector<8x2048xbf16>
    %c0_2 = arith.constant 0 : index
    %c0_3 = arith.constant 0 : index
    %4 = vector.load %arg9[%c0_2, %c0_3] : memref<2048x128xbf16, #tpu.memory_space<vmem>>, vector<2048x128xbf16>
    %cst = arith.constant dense<0.000000e+00> : vector<8x128xf32>
    %5 = tpu.matmul %3, %4, %cst {dimension_numbers = #tpu.dot_dimension_numbers<[1], [0], [0], [1], [0, 0, 1, 1], [], []>} : vector<8x2048xbf16>, vector<2048x128xbf16>, vector<8x128xf32> -> vector<8x128xf32>
    %c0_4 = arith.constant 0 : index
    %c0_5 = arith.constant 0 : index
    %6 = vector.load %arg10[%c0_4, %c0_5] : memref<1x128xf32, #tpu.memory_space<vmem>>, vector<1x128xf32>
    %7 = vector.broadcast %6 : vector<1x128xf32> to vector<8x128xf32>
    %8 = arith.addf %5, %7 : vector<8x128xf32>
    %c0_6 = arith.constant 0 : index
    %c0_7 = arith.constant 0 : index
    %9 = vector.load %arg11[%c0_6, %c0_7] : memref<8x128xf32, #tpu.memory_space<vmem>>, vector<8x128xf32>
    tpu.vector_store %arg11[%c0_6, %c0_7], %8 {strides = array<i32>} : memref<8x128xf32, #tpu.memory_space<vmem>>, vector<8x128xf32>,
    return
  }
  func.func @transform_0(%arg0: i32, %arg1: i32) -> (i32, i32) {
    %c0_i32 = arith.constant 0 : i32
    %c0_i32_0 = arith.constant 0 : i32
    return %arg0, %c0_i32 : i32, i32
  }
  func.func @transform_1(%arg0: i32, %arg1: i32) -> (i32, i32) {
    %c0_i32 = arith.constant 0 : i32
    %c0_i32_0 = arith.constant 0 : i32
    %c0_i32_1 = arith.constant 0 : i32
    return %c0_i32, %c0_i32_0 : i32, i32
  }
  func.func @transform_2(%arg0: i32, %arg1: i32) -> (i32, i32) {
    %c0_i32 = arith.constant 0 : i32
    %c0_i32_0 = arith.constant 0 : i32
    %c0_i32_1 = arith.constant 0 : i32
    return %c0_i32, %c0_i32_0 : i32, i32
  }
  func.func @transform_3(%arg0: i32, %arg1: i32) -> (i32, i32) {
    %c0_i32 = arith.constant 0 : i32
    %c0_i32_0 = arith.constant 0 : i32
    %c0_i32_1 = arith.constant 0 : i32
    return %c0_i32, %c0_i32_0 : i32, i32
  }
  func.func @transform_4(%arg0: i32, %arg1: i32) -> (i32, i32) {
    %c0_i32 = arith.constant 0 : i32
    %c0_i32_0 = arith.constant 0 : i32
    %c0_i32_1 = arith.constant 0 : i32
    return %c0_i32, %c0_i32_0 : i32, i32
  }
  func.func @transform_5(%arg0: i32, %arg1: i32) -> (i32, i32) {
    %c0_i32 = arith.constant 0 : i32
    %c0_i32_0 = arith.constant 0 : i32
    %c0_i32_1 = arith.constant 0 : i32
    return %c0_i32, %c0_i32_0 : i32, i32
  }
  func.func @transform_6(%arg0: i32, %arg1: i32) -> (i32, i32) {
    %c0_i32 = arith.constant 0 : i32
    %c0_i32_0 = arith.constant 0 : i32
    %c0_i32_1 = arith.constant 0 : i32
    return %c0_i32, %c0_i32_0 : i32, i32
  }
  func.func @transform_7(%arg0: i32, %arg1: i32) -> (i32, i32) {
    %c0_i32 = arith.constant 0 : i32
    %c0_i32_0 = arith.constant 0 : i32
    return %c0_i32, %arg1 : i32, i32
  }
  func.func @transform_8(%arg0: i32, %arg1: i32) -> (i32, i32) {
    %c0_i32 = arith.constant 0 : i32
    %c0_i32_0 = arith.constant 0 : i32
    return %c0_i32, %arg1 : i32, i32
  }
  func.func @transform_9(%arg0: i32, %arg1: i32) -> (i32, i32) {
    %c0_i32 = arith.constant 0 : i32
    return %arg0, %arg1 : i32, i32
  }
}

</mosaic_0001>

<llo_original>
// kernel: tpu_custom_call.1
$region0: #{tpu_custom_call.1}
  #allocation0 [shape = 'u32[]', space=smem, size = 0x4, offset = 0x4, fixed_abs, tag = 'smem constant byte address 0x4 - core index']
  #allocation1 [shape = 'u32[144,128]{1,0:T(1,128)}', space=vmem, size = 0x12000, scoped, tag = 'internal scratch']
  #allocation2 [shape = 'bf16[8,2048]{1,0:T(8,128)(2,1)}', space=vmem, size = 0x8000, scoped, tag = 'scratch operand']
  %s0 = inlined_call_operand.hbm [shape: bf16[8,128], index: 0, kind: input, shape index: {}]
  %s1 = inlined_call_operand.hbm [shape: bf16[128,2048], index: 1, kind: input, shape index: {}]
  %s2 = inlined_call_operand.hbm [shape: f32[1,2048], index: 2, kind: input, shape index: {}]
  %s3 = inlined_call_operand.hbm [shape: bf16[2048,512], index: 3, kind: input, shape index: {}]
  %s4 = inlined_call_operand.hbm [shape: f32[1,512], index: 4, kind: input, shape index: {}]
  %s5 = inlined_call_operand.hbm [shape: bf16[512,2048], index: 5, kind: input, shape index: {}]
  %s6 = inlined_call_operand.hbm [shape: f32[1,2048], index: 6, kind: input, shape index: {}]
  %s7 = inlined_call_operand.hbm [shape: bf16[2048,128], index: 7, kind: input, shape index: {}]
  %s8 = inlined_call_operand.hbm [shape: f32[1,128], index: 8, kind: input, shape index: {}]
  %s9 = inlined_call_operand.hbm [shape: f32[8,128], index: 9, kind: output, shape index: {}]
  %s10 = sld [smem:[#allocation0]]
  $region86: #{tpu_custom_call.1} parent=0
    _
  %s12 = ssub.s32 1, %s10
  %s13 = scalar_select 0, %s12, %s10
  $region1: #{tpu_custom_call.1} parent=0
    #allocation3 [shape = 'u8[2048]{0}', space=vmem, size = 0x800, scoped, tag = 'input window, operand 0, single buffered']
    #allocation4 [shape = 's32[1]{0}', space=sflag, size = 0x4, scoped, tag = 'scoped memory for tpu_custom_call.1']
    #allocation5 [shape = 's32[1]{0}', space=sflag, size = 0x4, scoped, tag = 'scoped memory for tpu_custom_call.1']
    #allocation6 [shape = 'u8[524288]{0}', space=vmem, size = 0x80000, scoped, tag = 'input window, operand 1, single buffered']
    #allocation7 [shape = 's32[1]{0}', space=sflag, size = 0x4, scoped, tag = 'scoped memory for tpu_custom_call.1']
    #allocation8 [shape = 'u8[8192]{0}', space=vmem, size = 0x2000, scoped, tag = 'input window, operand 2, single buffered']
    #allocation9 [shape = 'u8[2097152]{0}', space=vmem, size = 0x200000, scoped, tag = 'input window, operand 3, single buffered']
    #allocation10 [shape = 's32[1]{0}', space=sflag, size = 0x4, scoped, tag = 'scoped memory for tpu_custom_call.1']
    #allocation11 [shape = 'u8[2048]{0}', space=vmem, size = 0x800, scoped, tag = 'input window, operand 4, single buffered']
    #allocation12 [shape = 'u8[2097152]{0}', space=vmem, size = 0x200000, scoped, tag = 'input window, operand 5, single buffered']
    #allocation13 [shape = 's32[1]{0}', space=sflag, size = 0x4, scoped, tag = 'scoped memory for tpu_custom_call.1']
    #allocation14 [shape = 'u8[8192]{0}', space=vmem, size = 0x2000, scoped, tag = 'input window, operand 6, single buffered']
    #allocation15 [shape = 'u8[524288]{0}', space=vmem, size = 0x80000, scoped, tag = 'input window, operand 7, single buffered']
    #allocation16 [shape = 's32[1]{0}', space=sflag, size = 0x4, scoped, tag = 'scoped memory for tpu_custom_call.1']
    #allocation17 [shape = 'u8[512]{0}', space=vmem, size = 0x400, scoped, tag = 'input window, operand 8, single buffered']
    #allocation18 [shape = 'u8[4096]{0}', space=vmem, size = 0x1000, scoped, tag = 'output window, operand 0, single buffered']
    %14 = vsyncpa [#allocation4], 0
    %15 = vsyncpa [#allocation7], 0
    %16 = vsyncpa [#allocation10], 0
    %17 = vsyncpa [#allocation13], 0
    %18 = vsyncpa [#allocation16], 0
    %19 = vsyncpa [#allocation5], 0
    // Predicated region
    $region2: #{tpu_custom_call.1} parent=1 // pred_check
      _
    $region3: #{tpu_custom_call.1} parent=1 // pred_check_branch
      %21 = sbr.rel (0) target = $region5
    $region4: #{tpu_custom_call.1} parent=1 // pred_region
      %s23 = ssub.s32 64, 64
      %24 = vsyncadd [#allocation4], %s23
      %s26 = sshll.u32 [#allocation3], 4
      %s27 = int_to_ptr.vmem [resolvable:$true] %s26
      %29 = dma.hbm_to_vmem [thread:$0]  %s0, 64, %s27, [#allocation4]
    $region5: #{tpu_custom_call.1} parent=1 // pred_fallthru
      _
    // Predicated region
    $region6: #{tpu_custom_call.1} parent=1 // pred_check
      _
    $region7: #{tpu_custom_call.1} parent=1 // pred_check_branch
      %31 = sbr.rel (0) target = $region9
    $region8: #{tpu_custom_call.1} parent=1 // pred_region
      %s33 = ssub.s32 16384, 16384
      %34 = vsyncadd [#allocation7], %s33
      %s35 = sshll.u32 [#allocation6], 4
      %s36 = int_to_ptr.vmem [resolvable:$true] %s35
      %41 = dma.hbm_to_vmem [thread:$0]  %s1, 16384, %s36, [#allocation7], 1024, 1024, 64
    $region9: #{tpu_custom_call.1} parent=1 // pred_fallthru
      _
    // Predicated region
    $region10: #{tpu_custom_call.1} parent=1 // pred_check
      _
    $region11: #{tpu_custom_call.1} parent=1 // pred_check_branch
      %43 = sbr.rel (0) target = $region13
    $region12: #{tpu_custom_call.1} parent=1 // pred_region
      %s45 = ssub.s32 256, 256
      %46 = vsyncadd [#allocation7], %s45
      %s48 = sshll.u32 [#allocation8], 4
      %s49 = int_to_ptr.vmem [resolvable:$true] %s48
      %51 = dma.hbm_to_vmem [thread:$0]  %s2, 256, %s49, [#allocation7]
    $region13: #{tpu_custom_call.1} parent=1 // pred_fallthru
      _
    // Predicated region
    $region14: #{tpu_custom_call.1} parent=1 // pred_check
      _
    $region15: #{tpu_custom_call.1} parent=1 // pred_check_branch
      %53 = sbr.rel (0) target = $region17
    $region16: #{tpu_custom_call.1} parent=1 // pred_region
      %s55 = ssub.s32 65536, 65536
      %56 = vsyncadd [#allocation10], %s55
      %s57 = sshll.u32 [#allocation9], 4
      %s58 = int_to_ptr.vmem [resolvable:$true] %s57
      %63 = dma.hbm_to_vmem [thread:$0]  %s3, 65536, %s58, [#allocation10], 256, 256, 16
    $region17: #{tpu_custom_call.1} parent=1 // pred_fallthru
      _
    // Predicated region
    $region18: #{tpu_custom_call.1} parent=1 // pred_check
      _
    $region19: #{tpu_custom_call.1} parent=1 // pred_check_branch
      %65 = sbr.rel (0) target = $region21
    $region20: #{tpu_custom_call.1} parent=1 // pred_region
      %s67 = ssub.s32 64, 64
      %68 = vsyncadd [#allocation10], %s67
      %s70 = sshll.u32 [#allocation11], 4
      %s71 = int_to_ptr.vmem [resolvable:$true] %s70
      %73 = dma.hbm_to_vmem [thread:$0]  %s4, 64, %s71, [#allocation10]
    $region21: #{tpu_custom_call.1} parent=1 // pred_fallthru
      _
    // Predicated region
    $region22: #{tpu_custom_call.1} parent=1 // pred_check
      _
    $region23: #{tpu_custom_call.1} parent=1 // pred_check_branch
      %75 = sbr.rel (0) target = $region25
    $region24: #{tpu_custom_call.1} parent=1 // pred_region
      %s77 = ssub.s32 65536, 65536
      %78 = vsyncadd [#allocation13], %s77
      %s79 = sshll.u32 [#allocation12], 4
      %s80 = int_to_ptr.vmem [resolvable:$true] %s79
      %85 = dma.hbm_to_vmem [thread:$0]  %s5, 65536, %s80, [#allocation13], 1024, 1024, 64
    $region25: #{tpu_custom_call.1} parent=1 // pred_fallthru
      _
    // Predicated region
    $region26: #{tpu_custom_call.1} parent=1 // pred_check
      _
    $region27: #{tpu_custom_call.1} parent=1 // pred_check_branch
      %87 = sbr.rel (0) target = $region29
    $region28: #{tpu_custom_call.1} parent=1 // pred_region
      %s89 = ssub.s32 256, 256
      %90 = vsyncadd [#allocation13], %s89
      %s92 = sshll.u32 [#allocation14], 4
      %s93 = int_to_ptr.vmem [resolvable:$true] %s92
      %95 = dma.hbm_to_vmem [thread:$0]  %s6, 256, %s93, [#allocation13]
    $region29: #{tpu_custom_call.1} parent=1 // pred_fallthru
      _
    // Predicated region
    $region30: #{tpu_custom_call.1} parent=1 // pred_check
      _
    $region31: #{tpu_custom_call.1} parent=1 // pred_check_branch
      %97 = sbr.rel (0) target = $region33
    $region32: #{tpu_custom_call.1} parent=1 // pred_region
      %s99 = ssub.s32 16384, 16384
      %100 = vsyncadd [#allocation16], %s99
      %s101 = sshll.u32 [#allocation15], 4
      %s102 = int_to_ptr.vmem [resolvable:$true] %s101
      %107 = dma.hbm_to_vmem [thread:$0]  %s7, 16384, %s102, [#allocation16], 64, 64, 4
    $region33: #{tpu_custom_call.1} parent=1 // pred_fallthru
      _
    // Predicated region
    $region34: #{tpu_custom_call.1} parent=1 // pred_check
      _
    $region35: #{tpu_custom_call.1} parent=1 // pred_check_branch
      %109 = sbr.rel (0) target = $region37
    $region36: #{tpu_custom_call.1} parent=1 // pred_region
      %s111 = ssub.s32 16, 16
      %112 = vsyncadd [#allocation16], %s111
      %s114 = sshll.u32 [#allocation17], 4
      %s115 = int_to_ptr.vmem [resolvable:$true] %s114
      %117 = dma.hbm_to_vmem [thread:$0]  %s8, 16, %s115, [#allocation16]
    $region37: #{tpu_custom_call.1} parent=1 // pred_fallthru
      _
    // Predicated region
    $region38: #{tpu_custom_call.1} parent=1 // pred_check
      _
    $region39: #{tpu_custom_call.1} parent=1 // pred_check_branch
      %119 = sbr.rel (0) target = $region41
    $region40: #{tpu_custom_call.1} parent=1 // pred_region
      %120 = dma.done [#allocation4], 64
    $region41: #{tpu_custom_call.1} parent=1 // pred_fallthru
      _
    // Predicated region
    $region42: #{tpu_custom_call.1} parent=1 // pred_check
      _
    $region43: #{tpu_custom_call.1} parent=1 // pred_check_branch
      %122 = sbr.rel (0) target = $region45
    $region44: #{tpu_custom_call.1} parent=1 // pred_region
      %123 = dma.done [#allocation7], 16384
    $region45: #{tpu_custom_call.1} parent=1 // pred_fallthru
      _
    // Predicated region
    $region46: #{tpu_custom_call.1} parent=1 // pred_check
      _
    $region47: #{tpu_custom_call.1} parent=1 // pred_check_branch
      %125 = sbr.rel (0) target = $region49
    $region48: #{tpu_custom_call.1} parent=1 // pred_region
      %126 = dma.done [#allocation7], 256
    $region49: #{tpu_custom_call.1} parent=1 // pred_fallthru
      _
    // Predicated region
    $region50: #{tpu_custom_call.1} parent=1 // pred_check
      _
    $region51: #{tpu_custom_call.1} parent=1 // pred_check_branch
      %128 = sbr.rel (0) target = $region53
    $region52: #{tpu_custom_call.1} parent=1 // pred_region
      %129 = dma.done [#allocation10], 65536
    $region53: #{tpu_custom_call.1} parent=1 // pred_fallthru
      _
    // Predicated region
    $region54: #{tpu_custom_call.1} parent=1 // pred_check
      _
    $region55: #{tpu_custom_call.1} parent=1 // pred_check_branch
      %131 = sbr.rel (0) target = $region57
    $region56: #{tpu_custom_call.1} parent=1 // pred_region
      %132 = dma.done [#allocation10], 64
    $region57: #{tpu_custom_call.1} parent=1 // pred_fallthru
      _
    // Predicated region
    $region58: #{tpu_custom_call.1} parent=1 // pred_check
      _
    $region59: #{tpu_custom_call.1} parent=1 // pred_check_branch
      %134 = sbr.rel (0) target = $region61
    $region60: #{tpu_custom_call.1} parent=1 // pred_region
      %135 = dma.done [#allocation13], 65536
    $region61: #{tpu_custom_call.1} parent=1 // pred_fallthru
      _
    // Predicated region
    $region62: #{tpu_custom_call.1} parent=1 // pred_check
      _
    $region63: #{tpu_custom_call.1} parent=1 // pred_check_branch
      %137 = sbr.rel (0) target = $region65
    $region64: #{tpu_custom_call.1} parent=1 // pred_region
      %138 = dma.done [#allocation13], 256
    $region65: #{tpu_custom_call.1} parent=1 // pred_fallthru
      _
    // Predicated region
    $region66: #{tpu_custom_call.1} parent=1 // pred_check
      _
    $region67: #{tpu_custom_call.1} parent=1 // pred_check_branch
      %140 = sbr.rel (0) target = $region69
    $region68: #{tpu_custom_call.1} parent=1 // pred_region
      %141 = dma.done [#allocation16], 16384
    $region69: #{tpu_custom_call.1} parent=1 // pred_fallthru
      _
    // Predicated region
    $region70: #{tpu_custom_call.1} parent=1 // pred_check
      _
    $region71: #{tpu_custom_call.1} parent=1 // pred_check_branch
      %143 = sbr.rel (0) target = $region73
    $region72: #{tpu_custom_call.1} parent=1 // pred_region
      %144 = dma.done [#allocation16], 16
    $region73: #{tpu_custom_call.1} parent=1 // pred_fallthru
      _
    %p146 = scmp.eq.s32.totalorder 0, 0
    // Predicated region
    $region74: #{tpu_custom_call.1} parent=1 // pred_check
      %p147 = pneg %p146
    $region75: #{tpu_custom_call.1} parent=1 // pred_check_branch
      %149 = sbr.rel (%p147) target = $region77
    $region76: #{tpu_custom_call.1} parent=1 // pred_region
      %v150 = vld [vmem:[#allocation3] sm:$0xf]
      %v151 = vld [vmem:[#allocation6] sm:$0xff]
      %v152 = vld [vmem:[#allocation6 + $0x8] sm:$0xff]
      %v153 = vld [vmem:[#allocation6 + $0x10] sm:$0xff]
      %v154 = vld [vmem:[#allocation6 + $0x18] sm:$0xff]
      %v155 = vld [vmem:[#allocation6 + $0x20] sm:$0xff]
      %v156 = vld [vmem:[#allocation6 + $0x28] sm:$0xff]
      %v157 = vld [vmem:[#allocation6 + $0x30] sm:$0xff]
      %v158 = vld [vmem:[#allocation6 + $0x38] sm:$0xff]
      %v159 = vld [vmem:[#allocation6 + $0x40] sm:$0xff]
      %v160 = vld [vmem:[#allocation6 + $0x48] sm:$0xff]
      %v161 = vld [vmem:[#allocation6 + $0x50] sm:$0xff]
      %v162 = vld [vmem:[#allocation6 + $0x58] sm:$0xff]
      %v163 = vld [vmem:[#allocation6 + $0x60] sm:$0xff]
      %v164 = vld [vmem:[#allocation6 + $0x68] sm:$0xff]
      %v165 = vld [vmem:[#allocation6 + $0x70] sm:$0xff]
      %v166 = vld [vmem:[#allocation6 + $0x78] sm:$0xff]
      %v167 = vld [vmem:[#allocation6 + $0x80] sm:$0xff]
      %v168 = vld [vmem:[#allocation6 + $0x88] sm:$0xff]
      %v169 = vld [vmem:[#allocation6 + $0x90] sm:$0xff]
      %v170 = vld [vmem:[#allocation6 + $0x98] sm:$0xff]
      %v171 = vld [vmem:[#allocation6 + $0xa0] sm:$0xff]
      %v172 = vld [vmem:[#allocation6 + $0xa8] sm:$0xff]
      %v173 = vld [vmem:[#allocation6 + $0xb0] sm:$0xff]
      %v174 = vld [vmem:[#allocation6 + $0xb8] sm:$0xff]
      %v175 = vld [vmem:[#allocation6 + $0xc0] sm:$0xff]
      %v176 = vld [vmem:[#allocation6 + $0xc8] sm:$0xff]
      %v177 = vld [vmem:[#allocation6 + $0xd0] sm:$0xff]
      %v178 = vld [vmem:[#allocation6 + $0xd8] sm:$0xff]
      %v179 = vld [vmem:[#allocation6 + $0xe0] sm:$0xff]
      %v180 = vld [vmem:[#allocation6 + $0xe8] sm:$0xff]
      %v181 = vld [vmem:[#allocation6 + $0xf0] sm:$0xff]
      %v182 = vld [vmem:[#allocation6 + $0xf8] sm:$0xff]
      %v183 = vld [vmem:[#allocation6 + $0x100] sm:$0xff]
      %v184 = vld [vmem:[#allocation6 + $0x108] sm:$0xff]
      %v185 = vld [vmem:[#allocation6 + $0x110] sm:$0xff]
      %v186 = vld [vmem:[#allocation6 + $0x118] sm:$0xff]
      %v187 = vld [vmem:[#allocation6 + $0x120] sm:$0xff]
      %v188 = vld [vmem:[#allocation6 + $0x128] sm:$0xff]
      %v189 = vld [vmem:[#allocation6 + $0x130] sm:$0xff]
      %v190 = vld [vmem:[#allocation6 + $0x138] sm:$0xff]
      %v191 = vld [vmem:[#allocation6 + $0x140] sm:$0xff]
      %v192 = vld [vmem:[#allocation6 + $0x148] sm:$0xff]
      %v193 = vld [vmem:[#allocation6 + $0x150] sm:$0xff]
      %v194 = vld [vmem:[#allocation6 + $0x158] sm:$0xff]
      %v195 = vld [vmem:[#allocation6 + $0x160] sm:$0xff]
      %v196 = vld [vmem:[#allocation6 + $0x168] sm:$0xff]
      %v197 = vld [vmem:[#allocation6 + $0x170] sm:$0xff]
      %v198 = vld [vmem:[#allocation6 + $0x178] sm:$0xff]
      %v199 = vld [vmem:[#allocation6 + $0x180] sm:$0xff]
      %v200 = vld [vmem:[#allocation6 + $0x188] sm:$0xff]
      %v201 = vld [vmem:[#allocation6 + $0x190] sm:$0xff]
      %v202 = vld [vmem:[#allocation6 + $0x198] sm:$0xff]
      %v203 = vld [vmem:[#allocation6 + $0x1a0] sm:$0xff]
      %v204 = vld [vmem:[#allocation6 + $0x1a8] sm:$0xff]
      %v205 = vld [vmem:[#allocation6 + $0x1b0] sm:$0xff]
      %v206 = vld [vmem:[#allocation6 + $0x1b8] sm:$0xff]
      %v207 = vld [vmem:[#allocation6 + $0x1c0] sm:$0xff]
      %v208 = vld [vmem:[#allocation6 + $0x1c8] sm:$0xff]
      %v209 = vld [vmem:[#allocation6 + $0x1d0] sm:$0xff]
      %v210 = vld [vmem:[#allocation6 + $0x1d8] sm:$0xff]
      %v211 = vld [vmem:[#allocation6 + $0x1e0] sm:$0xff]
      %v212 = vld [vmem:[#allocation6 + $0x1e8] sm:$0xff]
      %v213 = vld [vmem:[#allocation6 + $0x1f0] sm:$0xff]
      %v214 = vld [vmem:[#allocation6 + $0x1f8] sm:$0xff]
      %v215 = vld [vmem:[#allocation6 + $0x200] sm:$0xff]
      %v216 = vld [vmem:[#allocation6 + $0x208] sm:$0xff]
      %v217 = vld [vmem:[#allocation6 + $0x210] sm:$0xff]
      %v218 = vld [vmem:[#allocation6 + $0x218] sm:$0xff]
      %v219 = vld [vmem:[#allocation6 + $0x220] sm:$0xff]
      %v220 = vld [vmem:[#allocation6 + $0x228] sm:$0xff]
      %v221 = vld [vmem:[#allocation6 + $0x230] sm:$0xff]
      %v222 = vld [vmem:[#allocation6 + $0x238] sm:$0xff]
      %v223 = vld [vmem:[#allocation6 + $0x240] sm:$0xff]
      %v224 = vld [vmem:[#allocation6 + $0x248] sm:$0xff]
      %v225 = vld [vmem:[#allocation6 + $0x250] sm:$0xff]
      %v226 = vld [vmem:[#allocation6 + $0x258] sm:$0xff]
      %v227 = vld [vmem:[#allocation6 + $0x260] sm:$0xff]
      %v228 = vld [vmem:[#allocation6 + $0x268] sm:$0xff]
      %v229 = vld [vmem:[#allocation6 + $0x270] sm:$0xff]
      %v230 = vld [vmem:[#allocation6 + $0x278] sm:$0xff]
      %v231 = vld [vmem:[#allocation6 + $0x280] sm:$0xff]
      %v232 = vld [vmem:[#allocation6 + $0x288] sm:$0xff]
      %v233 = vld [vmem:[#allocation6 + $0x290] sm:$0xff]
      %v234 = vld [vmem:[#allocation6 + $0x298] sm:$0xff]
      %v235 = vld [vmem:[#allocation6 + $0x2a0] sm:$0xff]
      %v236 = vld [vmem:[#allocation6 + $0x2a8] sm:$0xff]
      %v237 = vld [vmem:[#allocation6 + $0x2b0] sm:$0xff]
      %v238 = vld [vmem:[#allocation6 + $0x2b8] sm:$0xff]
      %v239 = vld [vmem:[#allocation6 + $0x2c0] sm:$0xff]
      %v240 = vld [vmem:[#allocation6 + $0x2c8] sm:$0xff]
      %v241 = vld [vmem:[#allocation6 + $0x2d0] sm:$0xff]
      %v242 = vld [vmem:[#allocation6 + $0x2d8] sm:$0xff]
      %v243 = vld [vmem:[#allocation6 + $0x2e0] sm:$0xff]
      %v244 = vld [vmem:[#allocation6 + $0x2e8] sm:$0xff]
      %v245 = vld [vmem:[#allocation6 + $0x2f0] sm:$0xff]
      %v246 = vld [vmem:[#allocation6 + $0x2f8] sm:$0xff]
      %v247 = vld [vmem:[#allocation6 + $0x300] sm:$0xff]
      %v248 = vld [vmem:[#allocation6 + $0x308] sm:$0xff]
      %v249 = vld [vmem:[#allocation6 + $0x310] sm:$0xff]
      %v250 = vld [vmem:[#allocation6 + $0x318] sm:$0xff]
      %v251 = vld [vmem:[#allocation6 + $0x320] sm:$0xff]
      %v252 = vld [vmem:[#allocation6 + $0x328] sm:$0xff]
      %v253 = vld [vmem:[#allocation6 + $0x330] sm:$0xff]
      %v254 = vld [vmem:[#allocation6 + $0x338] sm:$0xff]
      %v255 = vld [vmem:[#allocation6 + $0x340] sm:$0xff]
      %v256 = vld [vmem:[#allocation6 + $0x348] sm:$0xff]
      %v257 = vld [vmem:[#allocation6 + $0x350] sm:$0xff]
      %v258 = vld [vmem:[#allocation6 + $0x358] sm:$0xff]
      %v259 = vld [vmem:[#allocation6 + $0x360] sm:$0xff]
      %v260 = vld [vmem:[#allocation6 + $0x368] sm:$0xff]
      %v261 = vld [vmem:[#allocation6 + $0x370] sm:$0xff]
      %v262 = vld [vmem:[#allocation6 + $0x378] sm:$0xff]
      %v263 = vld [vmem:[#allocation6 + $0x380] sm:$0xff]
      %v264 = vld [vmem:[#allocation6 + $0x388] sm:$0xff]
      %v265 = vld [vmem:[#allocation6 + $0x390] sm:$0xff]
      %v266 = vld [vmem:[#allocation6 + $0x398] sm:$0xff]
      %v267 = vld [vmem:[#allocation6 + $0x3a0] sm:$0xff]
      %v268 = vld [vmem:[#allocation6 + $0x3a8] sm:$0xff]
      %v269 = vld [vmem:[#allocation6 + $0x3b0] sm:$0xff]
      %v270 = vld [vmem:[#allocation6 + $0x3b8] sm:$0xff]
      %v271 = vld [vmem:[#allocation6 + $0x3c0] sm:$0xff]
      %v272 = vld [vmem:[#allocation6 + $0x3c8] sm:$0xff]
      %v273 = vld [vmem:[#allocation6 + $0x3d0] sm:$0xff]
      %v274 = vld [vmem:[#allocation6 + $0x3d8] sm:$0xff]
      %v275 = vld [vmem:[#allocation6 + $0x3e0] sm:$0xff]
      %v276 = vld [vmem:[#allocation6 + $0x3e8] sm:$0xff]
      %v277 = vld [vmem:[#allocation6 + $0x3f0] sm:$0xff]
      %v278 = vld [vmem:[#allocation6 + $0x3f8] sm:$0xff]
      %v279 = vld [vmem:[#allocation8] sm:$0xff]
      %v280 = vld [vmem:[#allocation8 + $0x8] sm:$0xff]
      %v283 = vlaneseq
      %v284 = vshrl.u32 %v283, 7
      %v285 = vsub.s32 0, %v284
      %v286 = vrot.slane %v279, %v285
      %v287 = vlaneseq
      %v288 = vshrl.u32 %v287, 7
      %v289 = vsub.s32 1, %v288
      %v290 = vrot.slane %v279, %v289
      %v291 = vlaneseq
      %v292 = vshrl.u32 %v291, 7
      %v293 = vsub.s32 2, %v292
      %v294 = vrot.slane %v279, %v293
      %v295 = vlaneseq
      %v296 = vshrl.u32 %v295, 7
      %v297 = vsub.s32 3, %v296
      %v298 = vrot.slane %v279, %v297
      %v299 = vlaneseq
      %v300 = vshrl.u32 %v299, 7
      %v301 = vsub.s32 4, %v300
      %v302 = vrot.slane %v279, %v301
      %v303 = vlaneseq
      %v304 = vshrl.u32 %v303, 7
      %v305 = vsub.s32 5, %v304
      %v306 = vrot.slane %v279, %v305
      %v307 = vlaneseq
      %v308 = vshrl.u32 %v307, 7
      %v309 = vsub.s32 6, %v308
      %v310 = vrot.slane %v279, %v309
      %v311 = vlaneseq
      %v312 = vshrl.u32 %v311, 7
      %v313 = vsub.s32 7, %v312
      %v314 = vrot.slane %v279, %v313
      %v315 = vlaneseq
      %v316 = vshrl.u32 %v315, 7
      %v317 = vsub.s32 0, %v316
      %v318 = vrot.slane %v280, %v317
      %v319 = vlaneseq
      %v320 = vshrl.u32 %v319, 7
      %v321 = vsub.s32 1, %v320
      %v322 = vrot.slane %v280, %v321
      %v323 = vlaneseq
      %v324 = vshrl.u32 %v323, 7
      %v325 = vsub.s32 2, %v324
      %v326 = vrot.slane %v280, %v325
      %v327 = vlaneseq
      %v328 = vshrl.u32 %v327, 7
      %v329 = vsub.s32 3, %v328
      %v330 = vrot.slane %v280, %v329
      %v331 = vlaneseq
      %v332 = vshrl.u32 %v331, 7
      %v333 = vsub.s32 4, %v332
      %v334 = vrot.slane %v280, %v333
      %v335 = vlaneseq
      %v336 = vshrl.u32 %v335, 7
      %v337 = vsub.s32 5, %v336
      %v338 = vrot.slane %v280, %v337
      %v339 = vlaneseq
      %v340 = vshrl.u32 %v339, 7
      %v341 = vsub.s32 6, %v340
      %v342 = vrot.slane %v280, %v341
      %v343 = vlaneseq
      %v344 = vshrl.u32 %v343, 7
      %v345 = vsub.s32 7, %v344
      %v346 = vrot.slane %v280, %v345
      %v491 = vunpack.c.l.b16 %v151
      %v492 = vunpack.c.h.b16 %v151
      %v493 = vunpack.c.l.b16 %v152
      %v494 = vunpack.c.h.b16 %v152
      %v495 = vunpack.c.l.b16 %v153
      %v496 = vunpack.c.h.b16 %v153
      %v497 = vunpack.c.l.b16 %v154
      %v498 = vunpack.c.h.b16 %v154
      %v499 = vunpack.c.l.b16 %v155
      %v500 = vunpack.c.h.b16 %v155
      %v501 = vunpack.c.l.b16 %v156
      %v502 = vunpack.c.h.b16 %v156
      %v503 = vunpack.c.l.b16 %v157
      %v504 = vunpack.c.h.b16 %v157
      %v505 = vunpack.c.l.b16 %v158
      %v506 = vunpack.c.h.b16 %v158
      %v507 = vunpack.c.l.b16 %v159
      %v508 = vunpack.c.h.b16 %v159
      %v509 = vunpack.c.l.b16 %v160
      %v510 = vunpack.c.h.b16 %v160
      %v511 = vunpack.c.l.b16 %v161
      %v512 = vunpack.c.h.b16 %v161
      %v513 = vunpack.c.l.b16 %v162
      %v514 = vunpack.c.h.b16 %v162
      %v515 = vunpack.c.l.b16 %v163
      %v516 = vunpack.c.h.b16 %v163
      %v517 = vunpack.c.l.b16 %v164
      %v518 = vunpack.c.h.b16 %v164
      %v519 = vunpack.c.l.b16 %v165
      %v520 = vunpack.c.h.b16 %v165
      %v521 = vunpack.c.l.b16 %v166
      %v522 = vunpack.c.h.b16 %v166
      %v523 = vunpack.c.l.b16 %v167
      %v524 = vunpack.c.h.b16 %v167
      %v525 = vunpack.c.l.b16 %v168
      %v526 = vunpack.c.h.b16 %v168
      %v527 = vunpack.c.l.b16 %v169
      %v528 = vunpack.c.h.b16 %v169
      %v529 = vunpack.c.l.b16 %v170
      %v530 = vunpack.c.h.b16 %v170
      %v531 = vunpack.c.l.b16 %v171
      %v532 = vunpack.c.h.b16 %v171
      %v533 = vunpack.c.l.b16 %v172
      %v534 = vunpack.c.h.b16 %v172
      %v535 = vunpack.c.l.b16 %v173
      %v536 = vunpack.c.h.b16 %v173
      %v537 = vunpack.c.l.b16 %v174
      %v538 = vunpack.c.h.b16 %v174
      %v539 = vunpack.c.l.b16 %v175
      %v540 = vunpack.c.h.b16 %v175
      %v541 = vunpack.c.l.b16 %v176
      %v542 = vunpack.c.h.b16 %v176
      %v543 = vunpack.c.l.b16 %v177
      %v544 = vunpack.c.h.b16 %v177
      %v545 = vunpack.c.l.b16 %v178
      %v546 = vunpack.c.h.b16 %v178
      %v547 = vunpack.c.l.b16 %v179
      %v548 = vunpack.c.h.b16 %v179
      %v549 = vunpack.c.l.b16 %v180
      %v550 = vunpack.c.h.b16 %v180
      %v551 = vunpack.c.l.b16 %v181
      %v552 = vunpack.c.h.b16 %v181
      %v553 = vunpack.c.l.b16 %v182
      %v554 = vunpack.c.h.b16 %v182
      %v555 = vunpack.c.l.b16 %v183
      %v556 = vunpack.c.h.b16 %v183
      %v557 = vunpack.c.l.b16 %v184
      %v558 = vunpack.c.h.b16 %v184
      %v559 = vunpack.c.l.b16 %v185
      %v560 = vunpack.c.h.b16 %v185
      %v561 = vunpack.c.l.b16 %v186
      %v562 = vunpack.c.h.b16 %v186
      %v563 = vunpack.c.l.b16 %v187
      %v564 = vunpack.c.h.b16 %v187
      %v565 = vunpack.c.l.b16 %v188
      %v566 = vunpack.c.h.b16 %v188
      %v567 = vunpack.c.l.b16 %v189
      %v568 = vunpack.c.h.b16 %v189
      %v569 = vunpack.c.l.b16 %v190
      %v570 = vunpack.c.h.b16 %v190
      %v571 = vunpack.c.l.b16 %v191
      %v572 = vunpack.c.h.b16 %v191
      %v573 = vunpack.c.l.b16 %v192
      %v574 = vunpack.c.h.b16 %v192
      %v575 = vunpack.c.l.b16 %v193
      %v576 = vunpack.c.h.b16 %v193
      %v577 = vunpack.c.l.b16 %v194
      %v578 = vunpack.c.h.b16 %v194
      %v579 = vunpack.c.l.b16 %v195
      %v580 = vunpack.c.h.b16 %v195
      %v581 = vunpack.c.l.b16 %v196
      %v582 = vunpack.c.h.b16 %v196
      %v583 = vunpack.c.l.b16 %v197
      %v584 = vunpack.c.h.b16 %v197
      %v585 = vunpack.c.l.b16 %v198
      %v586 = vunpack.c.h.b16 %v198
      %v587 = vunpack.c.l.b16 %v199
      %v588 = vunpack.c.h.b16 %v199
      %v589 = vunpack.c.l.b16 %v200
      %v590 = vunpack.c.h.b16 %v200
      %v591 = vunpack.c.l.b16 %v201
      %v592 = vunpack.c.h.b16 %v201
      %v593 = vunpack.c.l.b16 %v202
      %v594 = vunpack.c.h.b16 %v202
      %v595 = vunpack.c.l.b16 %v203
      %v596 = vunpack.c.h.b16 %v203
      %v597 = vunpack.c.l.b16 %v204
      %v598 = vunpack.c.h.b16 %v204
      %v599 = vunpack.c.l.b16 %v205
      %v600 = vunpack.c.h.b16 %v205
      %v601 = vunpack.c.l.b16 %v206
      %v602 = vunpack.c.h.b16 %v206
      %v603 = vunpack.c.l.b16 %v207
      %v604 = vunpack.c.h.b16 %v207
      %v605 = vunpack.c.l.b16 %v208
      %v606 = vunpack.c.h.b16 %v208
      %v607 = vunpack.c.l.b16 %v209
      %v608 = vunpack.c.h.b16 %v209
      %v609 = vunpack.c.l.b16 %v210
      %v610 = vunpack.c.h.b16 %v210
      %v611 = vunpack.c.l.b16 %v211
      %v612 = vunpack.c.h.b16 %v211
      %v613 = vunpack.c.l.b16 %v212
      %v614 = vunpack.c.h.b16 %v212
      %v615 = vunpack.c.l.b16 %v213
      %v616 = vunpack.c.h.b16 %v213
      %v617 = vunpack.c.l.b16 %v214
      %v618 = vunpack.c.h.b16 %v214
      %v619 = vunpack.c.l.b16 %v215
      %v620 = vunpack.c.h.b16 %v215
      %v621 = vunpack.c.l.b16 %v216
      %v622 = vunpack.c.h.b16 %v216
      %v623 = vunpack.c.l.b16 %v217
      %v624 = vunpack.c.h.b16 %v217
      %v625 = vunpack.c.l.b16 %v218
      %v626 = vunpack.c.h.b16 %v218
      %v627 = vunpack.c.l.b16 %v219
      %v628 = vunpack.c.h.b16 %v219
      %v629 = vunpack.c.l.b16 %v220
      %v630 = vunpack.c.h.b16 %v220
      %v631 = vunpack.c.l.b16 %v221
      %v632 = vunpack.c.h.b16 %v221
      %v633 = vunpack.c.l.b16 %v222
      %v634 = vunpack.c.h.b16 %v222
      %v635 = vunpack.c.l.b16 %v223
      %v636 = vunpack.c.h.b16 %v223
      %v637 = vunpack.c.l.b16 %v224
      %v638 = vunpack.c.h.b16 %v224
      %v639 = vunpack.c.l.b16 %v225
      %v640 = vunpack.c.h.b16 %v225
      %v641 = vunpack.c.l.b16 %v226
      %v642 = vunpack.c.h.b16 %v226
      %v643 = vunpack.c.l.b16 %v227
      %v644 = vunpack.c.h.b16 %v227
      %v645 = vunpack.c.l.b16 %v228
      %v646 = vunpack.c.h.b16 %v228
      %v647 = vunpack.c.l.b16 %v229
      %v648 = vunpack.c.h.b16 %v229
      %v649 = vunpack.c.l.b16 %v230
      %v650 = vunpack.c.h.b16 %v230
      %v651 = vunpack.c.l.b16 %v231
      %v652 = vunpack.c.h.b16 %v231
      %v653 = vunpack.c.l.b16 %v232
      %v654 = vunpack.c.h.b16 %v232
      %v655 = vunpack.c.l.b16 %v233
      %v656 = vunpack.c.h.b16 %v233
      %v657 = vunpack.c.l.b16 %v234
      %v658 = vunpack.c.h.b16 %v234
      %v659 = vunpack.c.l.b16 %v235
      %v660 = vunpack.c.h.b16 %v235
      %v661 = vunpack.c.l.b16 %v236
      %v662 = vunpack.c.h.b16 %v236
      %v663 = vunpack.c.l.b16 %v237
      %v664 = vunpack.c.h.b16 %v237
      %v665 = vunpack.c.l.b16 %v238
      %v666 = vunpack.c.h.b16 %v238
      %v667 = vunpack.c.l.b16 %v239
      %v668 = vunpack.c.h.b16 %v239
      %v669 = vunpack.c.l.b16 %v240
      %v670 = vunpack.c.h.b16 %v240
      %v671 = vunpack.c.l.b16 %v241
      %v672 = vunpack.c.h.b16 %v241
      %v673 = vunpack.c.l.b16 %v242
      %v674 = vunpack.c.h.b16 %v242
      %v675 = vunpack.c.l.b16 %v243
      %v676 = vunpack.c.h.b16 %v243
      %v677 = vunpack.c.l.b16 %v244
      %v678 = vunpack.c.h.b16 %v244
      %v679 = vunpack.c.l.b16 %v245
      %v680 = vunpack.c.h.b16 %v245
      %v681 = vunpack.c.l.b16 %v246
      %v682 = vunpack.c.h.b16 %v246
      %v683 = vunpack.c.l.b16 %v247
      %v684 = vunpack.c.h.b16 %v247
      %v685 = vunpack.c.l.b16 %v248
      %v686 = vunpack.c.h.b16 %v248
      %v687 = vunpack.c.l.b16 %v249
      %v688 = vunpack.c.h.b16 %v249
      %v689 = vunpack.c.l.b16 %v250
      %v690 = vunpack.c.h.b16 %v250
      %v691 = vunpack.c.l.b16 %v251
      %v692 = vunpack.c.h.b16 %v251
      %v693 = vunpack.c.l.b16 %v252
      %v694 = vunpack.c.h.b16 %v252
      %v695 = vunpack.c.l.b16 %v253
      %v696 = vunpack.c.h.b16 %v253
      %v697 = vunpack.c.l.b16 %v254
      %v698 = vunpack.c.h.b16 %v254
      %v699 = vunpack.c.l.b16 %v255
      %v700 = vunpack.c.h.b16 %v255
      %v701 = vunpack.c.l.b16 %v256
      %v702 = vunpack.c.h.b16 %v256
      %v703 = vunpack.c.l.b16 %v257
      %v704 = vunpack.c.h.b16 %v257
      %v705 = vunpack.c.l.b16 %v258
      %v706 = vunpack.c.h.b16 %v258
      %v707 = vunpack.c.l.b16 %v259
      %v708 = vunpack.c.h.b16 %v259
      %v709 = vunpack.c.l.b16 %v260
      %v710 = vunpack.c.h.b16 %v260
      %v711 = vunpack.c.l.b16 %v261
      %v712 = vunpack.c.h.b16 %v261
      %v713 = vunpack.c.l.b16 %v262
      %v714 = vunpack.c.h.b16 %v262
      %v715 = vunpack.c.l.b16 %v263
      %v716 = vunpack.c.h.b16 %v263
      %v717 = vunpack.c.l.b16 %v264
      %v718 = vunpack.c.h.b16 %v264
      %v719 = vunpack.c.l.b16 %v265
      %v720 = vunpack.c.h.b16 %v265
      %v721 = vunpack.c.l.b16 %v266
      %v722 = vunpack.c.h.b16 %v266
      %v723 = vunpack.c.l.b16 %v267
      %v724 = vunpack.c.h.b16 %v267
      %v725 = vunpack.c.l.b16 %v268
      %v726 = vunpack.c.h.b16 %v268
      %v727 = vunpack.c.l.b16 %v269
      %v728 = vunpack.c.h.b16 %v269
      %v729 = vunpack.c.l.b16 %v270
      %v730 = vunpack.c.h.b16 %v270
      %v731 = vunpack.c.l.b16 %v271
      %v732 = vunpack.c.h.b16 %v271
      %v733 = vunpack.c.l.b16 %v272
      %v734 = vunpack.c.h.b16 %v272
      %v735 = vunpack.c.l.b16 %v273
      %v736 = vunpack.c.h.b16 %v273
      %v737 = vunpack.c.l.b16 %v274
      %v738 = vunpack.c.h.b16 %v274
      %v739 = vunpack.c.l.b16 %v275
      %v740 = vunpack.c.h.b16 %v275
      %v741 = vunpack.c.l.b16 %v276
      %v742 = vunpack.c.h.b16 %v276
      %v743 = vunpack.c.l.b16 %v277
      %v744 = vunpack.c.h.b16 %v277
      %v745 = vunpack.c.l.b16 %v278
      %v746 = vunpack.c.h.b16 %v278
      %v747 = vpack.c.b16 %v507, %v491
      %v748 = vpack.c.b16 %v508, %v492
      %v749 = vpack.c.b16 %v509, %v493
      %v750 = vpack.c.b16 %v510, %v494
      %v751 = vpack.c.b16 %v511, %v495
      %v752 = vpack.c.b16 %v512, %v496
      %v753 = vpack.c.b16 %v513, %v497
      %v754 = vpack.c.b16 %v514, %v498
      %v755 = vpack.c.b16 %v515, %v499
      %v756 = vpack.c.b16 %v516, %v500
      %v757 = vpack.c.b16 %v517, %v501
      %v758 = vpack.c.b16 %v518, %v502
      %v759 = vpack.c.b16 %v519, %v503
      %v760 = vpack.c.b16 %v520, %v504
      %v761 = vpack.c.b16 %v521, %v505
      %v762 = vpack.c.b16 %v522, %v506
      %v763 = vpack.c.b16 %v539, %v523
      %v764 = vpack.c.b16 %v540, %v524
      %v765 = vpack.c.b16 %v541, %v525
      %v766 = vpack.c.b16 %v542, %v526
      %v767 = vpack.c.b16 %v543, %v527
      %v768 = vpack.c.b16 %v544, %v528
      %v769 = vpack.c.b16 %v545, %v529
      %v770 = vpack.c.b16 %v546, %v530
      %v771 = vpack.c.b16 %v547, %v531
      %v772 = vpack.c.b16 %v548, %v532
      %v773 = vpack.c.b16 %v549, %v533
      %v774 = vpack.c.b16 %v550, %v534
      %v775 = vpack.c.b16 %v551, %v535
      %v776 = vpack.c.b16 %v552, %v536
      %v777 = vpack.c.b16 %v553, %v537
      %v778 = vpack.c.b16 %v554, %v538
      %v779 = vpack.c.b16 %v571, %v555
      %v780 = vpack.c.b16 %v572, %v556
      %v781 = vpack.c.b16 %v573, %v557
      %v782 = vpack.c.b16 %v574, %v558
      %v783 = vpack.c.b16 %v575, %v559
      %v784 = vpack.c.b16 %v576, %v560
      %v785 = vpack.c.b16 %v577, %v561
      %v786 = vpack.c.b16 %v578, %v562
      %v787 = vpack.c.b16 %v579, %v563
      %v788 = vpack.c.b16 %v580, %v564
      %v789 = vpack.c.b16 %v581, %v565
      %v790 = vpack.c.b16 %v582, %v566
      %v791 = vpack.c.b16 %v583, %v567
      %v792 = vpack.c.b16 %v584, %v568
      %v793 = vpack.c.b16 %v585, %v569
      %v794 = vpack.c.b16 %v586, %v570
      %v795 = vpack.c.b16 %v603, %v587
      %v796 = vpack.c.b16 %v604, %v588
      %v797 = vpack.c.b16 %v605, %v589
      %v798 = vpack.c.b16 %v606, %v590
      %v799 = vpack.c.b16 %v607, %v591
      %v800 = vpack.c.b16 %v608, %v592
      %v801 = vpack.c.b16 %v609, %v593
      %v802 = vpack.c.b16 %v610, %v594
      %v803 = vpack.c.b16 %v611, %v595
      %v804 = vpack.c.b16 %v612, %v596
      %v805 = vpack.c.b16 %v613, %v597
      %v806 = vpack.c.b16 %v614, %v598
      %v807 = vpack.c.b16 %v615, %v599
      %v808 = vpack.c.b16 %v616, %v600
      %v809 = vpack.c.b16 %v617, %v601
      %v810 = vpack.c.b16 %v618, %v602
      %v811 = vpack.c.b16 %v635, %v619
      %v812 = vpack.c.b16 %v636, %v620
      %v813 = vpack.c.b16 %v637, %v621
      %v814 = vpack.c.b16 %v638, %v622
      %v815 = vpack.c.b16 %v639, %v623
      %v816 = vpack.c.b16 %v640, %v624
      %v817 = vpack.c.b16 %v641, %v625
      %v818 = vpack.c.b16 %v642, %v626
      %v819 = vpack.c.b16 %v643, %v627
      %v820 = vpack.c.b16 %v644, %v628
      %v821 = vpack.c.b16 %v645, %v629
      %v822 = vpack.c.b16 %v646, %v630
      %v823 = vpack.c.b16 %v647, %v631
      %v824 = vpack.c.b16 %v648, %v632
      %v825 = vpack.c.b16 %v649, %v633
      %v826 = vpack.c.b16 %v650, %v634
      %v827 = vpack.c.b16 %v667, %v651
      %v828 = vpack.c.b16 %v668, %v652
      %v829 = vpack.c.b16 %v669, %v653
      %v830 = vpack.c.b16 %v670, %v654
      %v831 = vpack.c.b16 %v671, %v655
      %v832 = vpack.c.b16 %v672, %v656
      %v833 = vpack.c.b16 %v673, %v657
      %v834 = vpack.c.b16 %v674, %v658
      %v835 = vpack.c.b16 %v675, %v659
      %v836 = vpack.c.b16 %v676, %v660
      %v837 = vpack.c.b16 %v677, %v661
      %v838 = vpack.c.b16 %v678, %v662
      %v839 = vpack.c.b16 %v679, %v663
      %v840 = vpack.c.b16 %v680, %v664
      %v841 = vpack.c.b16 %v681, %v665
      %v842 = vpack.c.b16 %v682, %v666
      %v843 = vpack.c.b16 %v699, %v683
      %v844 = vpack.c.b16 %v700, %v684
      %v845 = vpack.c.b16 %v701, %v685
      %v846 = vpack.c.b16 %v702, %v686
      %v847 = vpack.c.b16 %v703, %v687
      %v848 = vpack.c.b16 %v704, %v688
      %v849 = vpack.c.b16 %v705, %v689
      %v850 = vpack.c.b16 %v706, %v690
      %v851 = vpack.c.b16 %v707, %v691
      %v852 = vpack.c.b16 %v708, %v692
      %v853 = vpack.c.b16 %v709, %v693
      %v854 = vpack.c.b16 %v710, %v694
      %v855 = vpack.c.b16 %v711, %v695
      %v856 = vpack.c.b16 %v712, %v696
      %v857 = vpack.c.b16 %v713, %v697
      %v858 = vpack.c.b16 %v714, %v698
      %v859 = vpack.c.b16 %v731, %v715
      %v860 = vpack.c.b16 %v732, %v716
      %v861 = vpack.c.b16 %v733, %v717
      %v862 = vpack.c.b16 %v734, %v718
      %v863 = vpack.c.b16 %v735, %v719
      %v864 = vpack.c.b16 %v736, %v720
      %v865 = vpack.c.b16 %v737, %v721
      %v866 = vpack.c.b16 %v738, %v722
      %v867 = vpack.c.b16 %v739, %v723
      %v868 = vpack.c.b16 %v740, %v724
      %v869 = vpack.c.b16 %v741, %v725
      %v870 = vpack.c.b16 %v742, %v726
      %v871 = vpack.c.b16 %v743, %v727
      %v872 = vpack.c.b16 %v744, %v728
      %v873 = vpack.c.b16 %v745, %v729
      %v874 = vpack.c.b16 %v746, %v730
      %1003 = vmatprep.subr.bf16.mxu0 %v748
      %1004 = vmatpush1.bf16.msra.mxu0 %v747
      %1005 = vmatprep.subr.bf16.mxu0 %v764
      %1006 = vmatpush1.bf16.msra.mxu0 %v763
      %1007 = vmatprep.subr.bf16.mxu0 %v780
      %1008 = vmatpush1.bf16.msra.mxu0 %v779
      %1009 = vmatprep.subr.bf16.mxu0 %v796
      %1010 = vmatpush1.bf16.msra.mxu0 %v795
      %1011 = vmatprep.subr.bf16.mxu0 %v812
      %1012 = vmatpush1.bf16.msra.mxu0 %v811
      %1013 = vmatprep.subr.bf16.mxu0 %v828
      %1014 = vmatpush1.bf16.msra.mxu0 %v827
      %1015 = vmatprep.subr.bf16.mxu0 %v844
      %1016 = vmatpush1.bf16.msra.mxu0 %v843
      %1017 = vmatprep.subr.bf16.mxu0 %v860
      %1018 = vmatpush1.bf16.msra.mxu0 %v859
      %1019 = vmatprep.subr.bf16.mxu0 0
      %1020 = vmatpush1.bf16.msra.mxu0 0
      %1021 = vmatprep.subr.bf16.mxu0 0
      %1022 = vmatpush1.bf16.msra.mxu0 0
      %1023 = vmatprep.subr.bf16.mxu0 0
      %1024 = vmatpush1.bf16.msra.mxu0 0
      %1025 = vmatprep.subr.bf16.mxu0 0
      %1026 = vmatpush1.bf16.msra.mxu0 0
      %1027 = vmatprep.subr.bf16.mxu0 0
      %1028 = vmatpush1.bf16.msra.mxu0 0
      %1029 = vmatprep.subr.bf16.mxu0 0
      %1030 = vmatpush1.bf16.msra.mxu0 0
      %1031 = vmatprep.subr.bf16.mxu0 0
      %1032 = vmatpush1.bf16.msra.mxu0 0
      %1033 = vmatprep.subr.bf16.mxu0 0
      %1034 = vmatpush1.bf16.msra.mxu0 0
      %1035 = vmatprep.mubr.bf16.mxu0 0
      %1036 = vmatmul.mubr.bf16.gmra.mrb[0].mxu0 %v150
      %v1037 = vpop.f32.mrb[0].mxu0
      %v1038 = vadd.f32 %v286, %v1037
      %v1039 = vpop.f32.mrb[0].mxu0
      %v1040 = vadd.f32 %v290, %v1039
      %v1041 = vpop.f32.mrb[0].mxu0
      %v1042 = vpop.f32.mrb[0].mxu0
      %1043 = vdwg.mxu0
      %1044 = vmatprep.subr.bf16.mxu0 %v750
      %1045 = vmatpush1.bf16.msra.mxu0 %v749
      %1046 = vmatprep.subr.bf16.mxu0 %v766
      %1047 = vmatpush1.bf16.msra.mxu0 %v765
      %1048 = vmatprep.subr.bf16.mxu0 %v782
      %1049 = vmatpush1.bf16.msra.mxu0 %v781
      %1050 = vmatprep.subr.bf16.mxu0 %v798
      %1051 = vmatpush1.bf16.msra.mxu0 %v797
      %1052 = vmatprep.subr.bf16.mxu0 %v814
      %1053 = vmatpush1.bf16.msra.mxu0 %v813
      %1054 = vmatprep.subr.bf16.mxu0 %v830
      %1055 = vmatpush1.bf16.msra.mxu0 %v829
      %1056 = vmatprep.subr.bf16.mxu0 %v846
      %1057 = vmatpush1.bf16.msra.mxu0 %v845
      %1058 = vmatprep.subr.bf16.mxu0 %v862
      %1059 = vmatpush1.bf16.msra.mxu0 %v861
      %1060 = vmatprep.subr.bf16.mxu0 0
      %1061 = vmatpush1.bf16.msra.mxu0 0
      %1062 = vmatprep.subr.bf16.mxu0 0
      %1063 = vmatpush1.bf16.msra.mxu0 0
      %1064 = vmatprep.subr.bf16.mxu0 0
      %1065 = vmatpush1.bf16.msra.mxu0 0
      %1066 = vmatprep.subr.bf16.mxu0 0
      %1067 = vmatpush1.bf16.msra.mxu0 0
      %1068 = vmatprep.subr.bf16.mxu0 0
      %1069 = vmatpush1.bf16.msra.mxu0 0
      %1070 = vmatprep.subr.bf16.mxu0 0
      %1071 = vmatpush1.bf16.msra.mxu0 0
      %1072 = vmatprep.subr.bf16.mxu0 0
      %1073 = vmatpush1.bf16.msra.mxu0 0
      %1074 = vmatprep.subr.bf16.mxu0 0
      %1075 = vmatpush1.bf16.msra.mxu0 0
      %1076 = vmatprep.mubr.bf16.mxu0 0
      %1077 = vmatmul.mubr.bf16.gmra.mrb[0].mxu0 %v150
      %v1078 = vpop.f32.mrb[0].mxu0
      %v1079 = vadd.f32 %v294, %v1078
      %v1080 = vpop.f32.mrb[0].mxu0
      %v1081 = vadd.f32 %v298, %v1080
      %v1082 = vpop.f32.mrb[0].mxu0
      %v1083 = vpop.f32.mrb[0].mxu0
      %1084 = vdwg.mxu0
      %1085 = vmatprep.subr.bf16.mxu0 %v752
      %1086 = vmatpush1.bf16.msra.mxu0 %v751
      %1087 = vmatprep.subr.bf16.mxu0 %v768
      %1088 = vmatpush1.bf16.msra.mxu0 %v767
      %1089 = vmatprep.subr.bf16.mxu0 %v784
      %1090 = vmatpush1.bf16.msra.mxu0 %v783
      %1091 = vmatprep.subr.bf16.mxu0 %v800
      %1092 = vmatpush1.bf16.msra.mxu0 %v799
      %1093 = vmatprep.subr.bf16.mxu0 %v816
      %1094 = vmatpush1.bf16.msra.mxu0 %v815
      %1095 = vmatprep.subr.bf16.mxu0 %v832
      %1096 = vmatpush1.bf16.msra.mxu0 %v831
      %1097 = vmatprep.subr.bf16.mxu0 %v848
      %1098 = vmatpush1.bf16.msra.mxu0 %v847
      %1099 = vmatprep.subr.bf16.mxu0 %v864
      %1100 = vmatpush1.bf16.msra.mxu0 %v863
      %1101 = vmatprep.subr.bf16.mxu0 0
      %1102 = vmatpush1.bf16.msra.mxu0 0
      %1103 = vmatprep.subr.bf16.mxu0 0
      %1104 = vmatpush1.bf16.msra.mxu0 0
      %1105 = vmatprep.subr.bf16.mxu0 0
      %1106 = vmatpush1.bf16.msra.mxu0 0
      %1107 = vmatprep.subr.bf16.mxu0 0
      %1108 = vmatpush1.bf16.msra.mxu0 0
      %1109 = vmatprep.subr.bf16.mxu0 0
      %1110 = vmatpush1.bf16.msra.mxu0 0
      %1111 = vmatprep.subr.bf16.mxu0 0
      %1112 = vmatpush1.bf16.msra.mxu0 0
      %1113 = vmatprep.subr.bf16.mxu0 0
      %1114 = vmatpush1.bf16.msra.mxu0 0
      %1115 = vmatprep.subr.bf16.mxu0 0
      %1116 = vmatpush1.bf16.msra.mxu0 0
      %1117 = vmatprep.mubr.bf16.mxu0 0
      %1118 = vmatmul.mubr.bf16.gmra.mrb[0].mxu0 %v150
      %v1119 = vpop.f32.mrb[0].mxu0
      %v1120 = vadd.f32 %v302, %v1119
      %v1121 = vpop.f32.mrb[0].mxu0
      %v1122 = vadd.f32 %v306, %v1121
      %v1123 = vpop.f32.mrb[0].mxu0
      %v1124 = vpop.f32.mrb[0].mxu0
      %1125 = vdwg.mxu0
      %1126 = vmatprep.subr.bf16.mxu0 %v754
      %1127 = vmatpush1.bf16.msra.mxu0 %v753
      %1128 = vmatprep.subr.bf16.mxu0 %v770
      %1129 = vmatpush1.bf16.msra.mxu0 %v769
      %1130 = vmatprep.subr.bf16.mxu0 %v786
      %1131 = vmatpush1.bf16.msra.mxu0 %v785
      %1132 = vmatprep.subr.bf16.mxu0 %v802
      %1133 = vmatpush1.bf16.msra.mxu0 %v801
      %1134 = vmatprep.subr.bf16.mxu0 %v818
      %1135 = vmatpush1.bf16.msra.mxu0 %v817
      %1136 = vmatprep.subr.bf16.mxu0 %v834
      %1137 = vmatpush1.bf16.msra.mxu0 %v833
      %1138 = vmatprep.subr.bf16.mxu0 %v850
      %1139 = vmatpush1.bf16.msra.mxu0 %v849
      %1140 = vmatprep.subr.bf16.mxu0 %v866
      %1141 = vmatpush1.bf16.msra.mxu0 %v865
      %1142 = vmatprep.subr.bf16.mxu0 0
      %1143 = vmatpush1.bf16.msra.mxu0 0
      %1144 = vmatprep.subr.bf16.mxu0 0
      %1145 = vmatpush1.bf16.msra.mxu0 0
      %1146 = vmatprep.subr.bf16.mxu0 0
      %1147 = vmatpush1.bf16.msra.mxu0 0
      %1148 = vmatprep.subr.bf16.mxu0 0
      %1149 = vmatpush1.bf16.msra.mxu0 0
      %1150 = vmatprep.subr.bf16.mxu0 0
      %1151 = vmatpush1.bf16.msra.mxu0 0
      %1152 = vmatprep.subr.bf16.mxu0 0
      %1153 = vmatpush1.bf16.msra.mxu0 0
      %1154 = vmatprep.subr.bf16.mxu0 0
      %1155 = vmatpush1.bf16.msra.mxu0 0
      %1156 = vmatprep.subr.bf16.mxu0 0
      %1157 = vmatpush1.bf16.msra.mxu0 0
      %1158 = vmatprep.mubr.bf16.mxu0 0
      %1159 = vmatmul.mubr.bf16.gmra.mrb[0].mxu0 %v150
      %v1160 = vpop.f32.mrb[0].mxu0
      %v1161 = vadd.f32 %v310, %v1160
      %v1162 = vpop.f32.mrb[0].mxu0
      %v1163 = vadd.f32 %v314, %v1162
      %v1164 = vpop.f32.mrb[0].mxu0
      %v1165 = vpop.f32.mrb[0].mxu0
      %1166 = vdwg.mxu0
      %1167 = vmatprep.subr.bf16.mxu0 %v756
      %1168 = vmatpush1.bf16.msra.mxu0 %v755
      %1169 = vmatprep.subr.bf16.mxu0 %v772
      %1170 = vmatpush1.bf16.msra.mxu0 %v771
      %1171 = vmatprep.subr.bf16.mxu0 %v788
      %1172 = vmatpush1.bf16.msra.mxu0 %v787
      %1173 = vmatprep.subr.bf16.mxu0 %v804
      %1174 = vmatpush1.bf16.msra.mxu0 %v803
      %1175 = vmatprep.subr.bf16.mxu0 %v820
      %1176 = vmatpush1.bf16.msra.mxu0 %v819
      %1177 = vmatprep.subr.bf16.mxu0 %v836
      %1178 = vmatpush1.bf16.msra.mxu0 %v835
      %1179 = vmatprep.subr.bf16.mxu0 %v852
      %1180 = vmatpush1.bf16.msra.mxu0 %v851
      %1181 = vmatprep.subr.bf16.mxu0 %v868
      %1182 = vmatpush1.bf16.msra.mxu0 %v867
      %1183 = vmatprep.subr.bf16.mxu0 0
      %1184 = vmatpush1.bf16.msra.mxu0 0
      %1185 = vmatprep.subr.bf16.mxu0 0
      %1186 = vmatpush1.bf16.msra.mxu0 0
      %1187 = vmatprep.subr.bf16.mxu0 0
      %1188 = vmatpush1.bf16.msra.mxu0 0
      %1189 = vmatprep.subr.bf16.mxu0 0
      %1190 = vmatpush1.bf16.msra.mxu0 0
      %1191 = vmatprep.subr.bf16.mxu0 0
      %1192 = vmatpush1.bf16.msra.mxu0 0
      %1193 = vmatprep.subr.bf16.mxu0 0
      %1194 = vmatpush1.bf16.msra.mxu0 0
      %1195 = vmatprep.subr.bf16.mxu0 0
      %1196 = vmatpush1.bf16.msra.mxu0 0
      %1197 = vmatprep.subr.bf16.mxu0 0
      %1198 = vmatpush1.bf16.msra.mxu0 0
      %1199 = vmatprep.mubr.bf16.mxu0 0
      %1200 = vmatmul.mubr.bf16.gmra.mrb[0].mxu0 %v150
      %v1201 = vpop.f32.mrb[0].mxu0
      %v1202 = vadd.f32 %v318, %v1201
      %v1203 = vpop.f32.mrb[0].mxu0
      %v1204 = vadd.f32 %v322, %v1203
      %v1205 = vpop.f32.mrb[0].mxu0
      %v1206 = vpop.f32.mrb[0].mxu0
      %1207 = vdwg.mxu0
      %1208 = vmatprep.subr.bf16.mxu0 %v758
      %1209 = vmatpush1.bf16.msra.mxu0 %v757
      %1210 = vmatprep.subr.bf16.mxu0 %v774
      %1211 = vmatpush1.bf16.msra.mxu0 %v773
      %1212 = vmatprep.subr.bf16.mxu0 %v790
      %1213 = vmatpush1.bf16.msra.mxu0 %v789
      %1214 = vmatprep.subr.bf16.mxu0 %v806
      %1215 = vmatpush1.bf16.msra.mxu0 %v805
      %1216 = vmatprep.subr.bf16.mxu0 %v822
      %1217 = vmatpush1.bf16.msra.mxu0 %v821
      %1218 = vmatprep.subr.bf16.mxu0 %v838
      %1219 = vmatpush1.bf16.msra.mxu0 %v837
      %1220 = vmatprep.subr.bf16.mxu0 %v854
      %1221 = vmatpush1.bf16.msra.mxu0 %v853
      %1222 = vmatprep.subr.bf16.mxu0 %v870
      %1223 = vmatpush1.bf16.msra.mxu0 %v869
      %1224 = vmatprep.subr.bf16.mxu0 0
      %1225 = vmatpush1.bf16.msra.mxu0 0
      %1226 = vmatprep.subr.bf16.mxu0 0
      %1227 = vmatpush1.bf16.msra.mxu0 0
      %1228 = vmatprep.subr.bf16.mxu0 0
      %1229 = vmatpush1.bf16.msra.mxu0 0
      %1230 = vmatprep.subr.bf16.mxu0 0
      %1231 = vmatpush1.bf16.msra.mxu0 0
      %1232 = vmatprep.subr.bf16.mxu0 0
      %1233 = vmatpush1.bf16.msra.mxu0 0
      %1234 = vmatprep.subr.bf16.mxu0 0
      %1235 = vmatpush1.bf16.msra.mxu0 0
      %1236 = vmatprep.subr.bf16.mxu0 0
      %1237 = vmatpush1.bf16.msra.mxu0 0
      %1238 = vmatprep.subr.bf16.mxu0 0
      %1239 = vmatpush1.bf16.msra.mxu0 0
      %1240 = vmatprep.mubr.bf16.mxu0 0
      %1241 = vmatmul.mubr.bf16.gmra.mrb[0].mxu0 %v150
      %v1242 = vpop.f32.mrb[0].mxu0
      %v1243 = vadd.f32 %v326, %v1242
      %v1244 = vpop.f32.mrb[0].mxu0
      %v1245 = vadd.f32 %v330, %v1244
      %v1246 = vpop.f32.mrb[0].mxu0
      %v1247 = vpop.f32.mrb[0].mxu0
      %1248 = vdwg.mxu0
      %1249 = vmatprep.subr.bf16.mxu0 %v760
      %1250 = vmatpush1.bf16.msra.mxu0 %v759
      %1251 = vmatprep.subr.bf16.mxu0 %v776
      %1252 = vmatpush1.bf16.msra.mxu0 %v775
      %1253 = vmatprep.subr.bf16.mxu0 %v792
      %1254 = vmatpush1.bf16.msra.mxu0 %v791
      %1255 = vmatprep.subr.bf16.mxu0 %v808
      %1256 = vmatpush1.bf16.msra.mxu0 %v807
      %1257 = vmatprep.subr.bf16.mxu0 %v824
      %1258 = vmatpush1.bf16.msra.mxu0 %v823
      %1259 = vmatprep.subr.bf16.mxu0 %v840
      %1260 = vmatpush1.bf16.msra.mxu0 %v839
      %1261 = vmatprep.subr.bf16.mxu0 %v856
      %1262 = vmatpush1.bf16.msra.mxu0 %v855
      %1263 = vmatprep.subr.bf16.mxu0 %v872
      %1264 = vmatpush1.bf16.msra.mxu0 %v871
      %1265 = vmatprep.subr.bf16.mxu0 0
      %1266 = vmatpush1.bf16.msra.mxu0 0
      %1267 = vmatprep.subr.bf16.mxu0 0
      %1268 = vmatpush1.bf16.msra.mxu0 0
      %1269 = vmatprep.subr.bf16.mxu0 0
      %1270 = vmatpush1.bf16.msra.mxu0 0
      %1271 = vmatprep.subr.bf16.mxu0 0
      %1272 = vmatpush1.bf16.msra.mxu0 0
      %1273 = vmatprep.subr.bf16.mxu0 0
      %1274 = vmatpush1.bf16.msra.mxu0 0
      %1275 = vmatprep.subr.bf16.mxu0 0
      %1276 = vmatpush1.bf16.msra.mxu0 0
      %1277 = vmatprep.subr.bf16.mxu0 0
      %1278 = vmatpush1.bf16.msra.mxu0 0
      %1279 = vmatprep.subr.bf16.mxu0 0
      %1280 = vmatpush1.bf16.msra.mxu0 0
      %1281 = vmatprep.mubr.bf16.mxu0 0
      %1282 = vmatmul.mubr.bf16.gmra.mrb[0].mxu0 %v150
      %v1283 = vpop.f32.mrb[0].mxu0
      %v1284 = vadd.f32 %v334, %v1283
      %v1285 = vpop.f32.mrb[0].mxu0
      %v1286 = vadd.f32 %v338, %v1285
      %v1287 = vpop.f32.mrb[0].mxu0
      %v1288 = vpop.f32.mrb[0].mxu0
      %1289 = vdwg.mxu0
      %1290 = vmatprep.subr.bf16.mxu0 %v762
      %1291 = vmatpush1.bf16.msra.mxu0 %v761
      %1292 = vmatprep.subr.bf16.mxu0 %v778
      %1293 = vmatpush1.bf16.msra.mxu0 %v777
      %1294 = vmatprep.subr.bf16.mxu0 %v794
      %1295 = vmatpush1.bf16.msra.mxu0 %v793
      %1296 = vmatprep.subr.bf16.mxu0 %v810
      %1297 = vmatpush1.bf16.msra.mxu0 %v809
      %1298 = vmatprep.subr.bf16.mxu0 %v826
      %1299 = vmatpush1.bf16.msra.mxu0 %v825
      %1300 = vmatprep.subr.bf16.mxu0 %v842
      %1301 = vmatpush1.bf16.msra.mxu0 %v841
      %1302 = vmatprep.subr.bf16.mxu0 %v858
      %1303 = vmatpush1.bf16.msra.mxu0 %v857
      %1304 = vmatprep.subr.bf16.mxu0 %v874
      %1305 = vmatpush1.bf16.msra.mxu0 %v873
      %1306 = vmatprep.subr.bf16.mxu0 0
      %1307 = vmatpush1.bf16.msra.mxu0 0
      %1308 = vmatprep.subr.bf16.mxu0 0
      %1309 = vmatpush1.bf16.msra.mxu0 0
      %1310 = vmatprep.subr.bf16.mxu0 0
      %1311 = vmatpush1.bf16.msra.mxu0 0
      %1312 = vmatprep.subr.bf16.mxu0 0
      %1313 = vmatpush1.bf16.msra.mxu0 0
      %1314 = vmatprep.subr.bf16.mxu0 0
      %1315 = vmatpush1.bf16.msra.mxu0 0
      %1316 = vmatprep.subr.bf16.mxu0 0
      %1317 = vmatpush1.bf16.msra.mxu0 0
      %1318 = vmatprep.subr.bf16.mxu0 0
      %1319 = vmatpush1.bf16.msra.mxu0 0
      %1320 = vmatprep.subr.bf16.mxu0 0
      %1321 = vmatpush1.bf16.msra.mxu0 0
      %1322 = vmatprep.mubr.bf16.mxu0 0
      %1323 = vmatmul.mubr.bf16.gmra.mrb[0].mxu0 %v150
      %v1324 = vpop.f32.mrb[0].mxu0
      %v1325 = vadd.f32 %v342, %v1324
      %v1326 = vpop.f32.mrb[0].mxu0
      %v1327 = vadd.f32 %v346, %v1326
      %v1328 = vpop.f32.mrb[0].mxu0
      %v1329 = vpop.f32.mrb[0].mxu0
      %1330 = vdwg.mxu0
      %v1331 = vmax.f32 %v1038, 0.0
      %v1332 = vmax.f32 %v1040, 0.0
      %v1333 = vmax.f32 %v1079, 0.0
      %v1334 = vmax.f32 %v1081, 0.0
      %v1335 = vmax.f32 %v1120, 0.0
      %v1336 = vmax.f32 %v1122, 0.0
      %v1337 = vmax.f32 %v1161, 0.0
      %v1338 = vmax.f32 %v1163, 0.0
      %v1339 = vmax.f32 %v1202, 0.0
      %v1340 = vmax.f32 %v1204, 0.0
      %v1341 = vmax.f32 %v1243, 0.0
      %v1342 = vmax.f32 %v1245, 0.0
      %v1343 = vmax.f32 %v1284, 0.0
      %v1344 = vmax.f32 %v1286, 0.0
      %v1345 = vmax.f32 %v1325, 0.0
      %v1346 = vmax.f32 %v1327, 0.0
      %v1347 = vpack.c.bf16 %v1331, %v1331
      %v1348 = vpack.c.bf16 %v1332, %v1332
      %v1349 = vpack.c.bf16 %v1333, %v1333
      %v1350 = vpack.c.bf16 %v1334, %v1334
      %v1351 = vpack.c.bf16 %v1335, %v1335
      %v1352 = vpack.c.bf16 %v1336, %v1336
      %v1353 = vpack.c.bf16 %v1337, %v1337
      %v1354 = vpack.c.bf16 %v1338, %v1338
      %v1355 = vpack.c.bf16 %v1339, %v1339
      %v1356 = vpack.c.bf16 %v1340, %v1340
      %v1357 = vpack.c.bf16 %v1341, %v1341
      %v1358 = vpack.c.bf16 %v1342, %v1342
      %v1359 = vpack.c.bf16 %v1343, %v1343
      %v1360 = vpack.c.bf16 %v1344, %v1344
      %v1361 = vpack.c.bf16 %v1345, %v1345
      %v1362 = vpack.c.bf16 %v1346, %v1346
      %v1363 = vld [vmem:[#allocation9] sm:$0xff]
      %v1364 = vld [vmem:[#allocation9 + $0x8] sm:$0xff]
      %v1365 = vld [vmem:[#allocation9 + $0x10] sm:$0xff]
      %v1366 = vld [vmem:[#allocation9 + $0x18] sm:$0xff]
      %v1367 = vld [vmem:[#allocation9 + $0x20] sm:$0xff]
      %v1368 = vld [vmem:[#allocation9 + $0x28] sm:$0xff]
      %v1369 = vld [vmem:[#allocation9 + $0x30] sm:$0xff]
      %v1370 = vld [vmem:[#allocation9 + $0x38] sm:$0xff]
      %v1371 = vld [vmem:[#allocation9 + $0x40] sm:$0xff]
      %v1372 = vld [vmem:[#allocation9 + $0x48] sm:$0xff]
      %v1373 = vld [vmem:[#allocation9 + $0x50] sm:$0xff]
      %v1374 = vld [vmem:[#allocation9 + $0x58] sm:$0xff]
      %v1375 = vld [vmem:[#allocation9 + $0x60] sm:$0xff]
      %v1376 = vld [vmem:[#allocation9 + $0x68] sm:$0xff]
      %v1377 = vld [vmem:[#allocation9 + $0x70] sm:$0xff]
      %v1378 = vld [vmem:[#allocation9 + $0x78] sm:$0xff]
      %v1379 = vld [vmem:[#allocation9 + $0x80] sm:$0xff]
      %v1380 = vld [vmem:[#allocation9 + $0x88] sm:$0xff]
      %v1381 = vld [vmem:[#allocation9 + $0x90] sm:$0xff]
      %v1382 = vld [vmem:[#allocation9 + $0x98] sm:$0xff]
      %v1383 = vld [vmem:[#allocation9 + $0xa0] sm:$0xff]
      %v1384 = vld [vmem:[#allocation9 + $0xa8] sm:$0xff]
      %v1385 = vld [vmem:[#allocation9 + $0xb0] sm:$0xff]
      %v1386 = vld [vmem:[#allocation9 + $0xb8] sm:$0xff]
      %v1387 = vld [vmem:[#allocation9 + $0xc0] sm:$0xff]
      %v1388 = vld [vmem:[#allocation9 + $0xc8] sm:$0xff]
      %v1389 = vld [vmem:[#allocation9 + $0xd0] sm:$0xff]
      %v1390 = vld [vmem:[#allocation9 + $0xd8] sm:$0xff]
      %v1391 = vld [vmem:[#allocation9 + $0xe0] sm:$0xff]
      %v1392 = vld [vmem:[#allocation9 + $0xe8] sm:$0xff]
      %v1393 = vld [vmem:[#allocation9 + $0xf0] sm:$0xff]
      %v1394 = vld [vmem:[#allocation9 + $0xf8] sm:$0xff]
      %v1395 = vld [vmem:[#allocation9 + $0x100] sm:$0xff]
      %v1396 = vld [vmem:[#allocation9 + $0x108] sm:$0xff]
      %v1397 = vld [vmem:[#allocation9 + $0x110] sm:$0xff]
      %v1398 = vld [vmem:[#allocation9 + $0x118] sm:$0xff]
      %v1399 = vld [vmem:[#allocation9 + $0x120] sm:$0xff]
      %v1400 = vld [vmem:[#allocation9 + $0x128] sm:$0xff]
      %v1401 = vld [vmem:[#allocation9 + $0x130] sm:$0xff]
      %v1402 = vld [vmem:[#allocation9 + $0x138] sm:$0xff]
      %v1403 = vld [vmem:[#allocation9 + $0x140] sm:$0xff]
      %v1404 = vld [vmem:[#allocation9 + $0x148] sm:$0xff]
      %v1405 = vld [vmem:[#allocation9 + $0x150] sm:$0xff]
      %v1406 = vld [vmem:[#allocation9 + $0x158] sm:$0xff]
      %v1407 = vld [vmem:[#allocation9 + $0x160] sm:$0xff]
      %v1408 = vld [vmem:[#allocation9 + $0x168] sm:$0xff]
      %v1409 = vld [vmem:[#allocation9 + $0x170] sm:$0xff]
      %v1410 = vld [vmem:[#allocation9 + $0x178] sm:$0xff]
      %v1411 = vld [vmem:[#allocation9 + $0x180] sm:$0xff]
      %v1412 = vld [vmem:[#allocation9 + $0x188] sm:$0xff]
      %v1413 = vld [vmem:[#allocation9 + $0x190] sm:$0xff]
      %v1414 = vld [vmem:[#allocation9 + $0x198] sm:$0xff]
      %v1415 = vld [vmem:[#allocation9 + $0x1a0] sm:$0xff]
      %v1416 = vld [vmem:[#allocation9 + $0x1a8] sm:$0xff]
      %v1417 = vld [vmem:[#allocation9 + $0x1b0] sm:$0xff]
      %v1418 = vld [vmem:[#allocation9 + $0x1b8] sm:$0xff]
      %v1419 = vld [vmem:[#allocation9 + $0x1c0] sm:$0xff]
      %v1420 = vld [vmem:[#allocation9 + $0x1c8] sm:$0xff]
      %v1421 = vld [vmem:[#allocation9 + $0x1d0] sm:$0xff]
      %v1422 = vld [vmem:[#allocation9 + $0x1d8] sm:$0xff]
      %v1423 = vld [vmem:[#allocation9 + $0x1e0] sm:$0xff]
      %v1424 = vld [vmem:[#allocation9 + $0x1e8] sm:$0xff]
      %v1425 = vld [vmem:[#allocation9 + $0x1f0] sm:$0xff]
      %v1426 = vld [vmem:[#allocation9 + $0x1f8] sm:$0xff]
      %v1427 = vld [vmem:[#allocation9 + $0x200] sm:$0xff]
      %v1428 = vld [vmem:[#allocation9 + $0x208] sm:$0xff]
      %v1429 = vld [vmem:[#allocation9 + $0x210] sm:$0xff]
      %v1430 = vld [vmem:[#allocation9 + $0x218] sm:$0xff]
      %v1431 = vld [vmem:[#allocation9 + $0x220] sm:$0xff]
      %v1432 = vld [vmem:[#allocation9 + $0x228] sm:$0xff]
      %v1433 = vld [vmem:[#allocation9 + $0x230] sm:$0xff]
      %v1434 = vld [vmem:[#allocation9 + $0x238] sm:$0xff]
      %v1435 = vld [vmem:[#allocation9 + $0x240] sm:$0xff]
      %v1436 = vld [vmem:[#allocation9 + $0x248] sm:$0xff]
      %v1437 = vld [vmem:[#allocation9 + $0x250] sm:$0xff]
      %v1438 = vld [vmem:[#allocation9 + $0x258] sm:$0xff]
      %v1439 = vld [vmem:[#allocation9 + $0x260] sm:$0xff]
      %v1440 = vld [vmem:[#allocation9 + $0x268] sm:$0xff]
      %v1441 = vld [vmem:[#allocation9 + $0x270] sm:$0xff]
      %v1442 = vld [vmem:[#allocation9 + $0x278] sm:$0xff]
      %v1443 = vld [vmem:[#allocation9 + $0x280] sm:$0xff]
      %v1444 = vld [vmem:[#allocation9 + $0x288] sm:$0xff]
      %v1445 = vld [vmem:[#allocation9 + $0x290] sm:$0xff]
      %v1446 = vld [vmem:[#allocation9 + $0x298] sm:$0xff]
      %v1447 = vld [vmem:[#allocation9 + $0x2a0] sm:$0xff]
      %v1448 = vld [vmem:[#allocation9 + $0x2a8] sm:$0xff]
      %v1449 = vld [vmem:[#allocation9 + $0x2b0] sm:$0xff]
      %v1450 = vld [vmem:[#allocation9 + $0x2b8] sm:$0xff]
      %v1451 = vld [vmem:[#allocation9 + $0x2c0] sm:$0xff]
      %v1452 = vld [vmem:[#allocation9 + $0x2c8] sm:$0xff]
      %v1453 = vld [vmem:[#allocation9 + $0x2d0] sm:$0xff]
      %v1454 = vld [vmem:[#allocation9 + $0x2d8] sm:$0xff]
      %v1455 = vld [vmem:[#allocation9 + $0x2e0] sm:$0xff]
      %v1456 = vld [vmem:[#allocation9 + $0x2e8] sm:$0xff]
      %v1457 = vld [vmem:[#allocation9 + $0x2f0] sm:$0xff]
      %v1458 = vld [vmem:[#allocation9 + $0x2f8] sm:$0xff]
      %v1459 = vld [vmem:[#allocation9 + $0x300] sm:$0xff]
      %v1460 = vld [vmem:[#allocation9 + $0x308] sm:$0xff]
      %v1461 = vld [vmem:[#allocation9 + $0x310] sm:$0xff]
      %v1462 = vld [vmem:[#allocation9 + $0x318] sm:$0xff]
      %v1463 = vld [vmem:[#allocation9 + $0x320] sm:$0xff]
      %v1464 = vld [vmem:[#allocation9 + $0x328] sm:$0xff]
      %v1465 = vld [vmem:[#allocation9 + $0x330] sm:$0xff]
      %v1466 = vld [vmem:[#allocation9 + $0x338] sm:$0xff]
      %v1467 = vld [vmem:[#allocation9 + $0x340] sm:$0xff]
      %v1468 = vld [vmem:[#allocation9 + $0x348] sm:$0xff]
      %v1469 = vld [vmem:[#allocation9 + $0x350] sm:$0xff]
      %v1470 = vld [vmem:[#allocation9 + $0x358] sm:$0xff]
      %v1471 = vld [vmem:[#allocation9 + $0x360] sm:$0xff]
      %v1472 = vld [vmem:[#allocation9 + $0x368] sm:$0xff]
      %v1473 = vld [vmem:[#allocation9 + $0x370] sm:$0xff]
      %v1474 = vld [vmem:[#allocation9 + $0x378] sm:$0xff]
      %v1475 = vld [vmem:[#allocation9 + $0x380] sm:$0xff]
      %v1476 = vld [vmem:[#allocation9 + $0x388] sm:$0xff]
      %v1477 = vld [vmem:[#allocation9 + $0x390] sm:$0xff]
      %v1478 = vld [vmem:[#allocation9 + $0x398] sm:$0xff]
      %v1479 = vld [vmem:[#allocation9 + $0x3a0] sm:$0xff]
      %v1480 = vld [vmem:[#allocation9 + $0x3a8] sm:$0xff]
      %v1481 = vld [vmem:[#allocation9 + $0x3b0] sm:$0xff]
      %v1482 = vld [vmem:[#allocation9 + $0x3b8] sm:$0xff]
      %v1483 = vld [vmem:[#allocation9 + $0x3c0] sm:$0xff]
      %v1484 = vld [vmem:[#allocation9 + $0x3c8] sm:$0xff]
      %v1485 = vld [vmem:[#allocation9 + $0x3d0] sm:$0xff]
      %v1486 = vld [vmem:[#allocation9 + $0x3d8] sm:$0xff]
      %v1487 = vld [vmem:[#allocation9 + $0x3e0] sm:$0xff]
      %v1488 = vld [vmem:[#allocation9 + $0x3e8] sm:$0xff]
      %v1489 = vld [vmem:[#allocation9 + $0x3f0] sm:$0xff]
      %v1490 = vld [vmem:[#allocation9 + $0x3f8] sm:$0xff]
      %v1491 = vld [vmem:[#allocation9 + $0x400] sm:$0xff]
      %v1492 = vld [vmem:[#allocation9 + $0x408] sm:$0xff]
      %v1493 = vld [vmem:[#allocation9 + $0x410] sm:$0xff]
      %v1494 = vld [vmem:[#allocation9 + $0x418] sm:$0xff]
      %v1495 = vld [vmem:[#allocation9 + $0x420] sm:$0xff]
      %v1496 = vld [vmem:[#allocation9 + $0x428] sm:$0xff]
      %v1497 = vld [vmem:[#allocation9 + $0x430] sm:$0xff]
      %v1498 = vld [vmem:[#allocation9 + $0x438] sm:$0xff]
      %v1499 = vld [vmem:[#allocation9 + $0x440] sm:$0xff]
      %v1500 = vld [vmem:[#allocation9 + $0x448] sm:$0xff]
      %v1501 = vld [vmem:[#allocation9 + $0x450] sm:$0xff]
      %v1502 = vld [vmem:[#allocation9 + $0x458] sm:$0xff]
      %v1503 = vld [vmem:[#allocation9 + $0x460] sm:$0xff]
      %v1504 = vld [vmem:[#allocation9 + $0x468] sm:$0xff]
      %v1505 = vld [vmem:[#allocation9 + $0x470] sm:$0xff]
      %v1506 = vld [vmem:[#allocation9 + $0x478] sm:$0xff]
      %v1507 = vld [vmem:[#allocation9 + $0x480] sm:$0xff]
      %v1508 = vld [vmem:[#allocation9 + $0x488] sm:$0xff]
      %v1509 = vld [vmem:[#allocation9 + $0x490] sm:$0xff]
      %v1510 = vld [vmem:[#allocation9 + $0x498] sm:$0xff]
      %v1511 = vld [vmem:[#allocation9 + $0x4a0] sm:$0xff]
      %v1512 = vld [vmem:[#allocation9 + $0x4a8] sm:$0xff]
      %v1513 = vld [vmem:[#allocation9 + $0x4b0] sm:$0xff]
      %v1514 = vld [vmem:[#allocation9 + $0x4b8] sm:$0xff]
      %v1515 = vld [vmem:[#allocation9 + $0x4c0] sm:$0xff]
      %v1516 = vld [vmem:[#allocation9 + $0x4c8] sm:$0xff]
      %v1517 = vld [vmem:[#allocation9 + $0x4d0] sm:$0xff]
      %v1518 = vld [vmem:[#allocation9 + $0x4d8] sm:$0xff]
      %v1519 = vld [vmem:[#allocation9 + $0x4e0] sm:$0xff]
      %v1520 = vld [vmem:[#allocation9 + $0x4e8] sm:$0xff]
      %v1521 = vld [vmem:[#allocation9 + $0x4f0] sm:$0xff]
      %v1522 = vld [vmem:[#allocation9 + $0x4f8] sm:$0xff]
      %v1523 = vld [vmem:[#allocation9 + $0x500] sm:$0xff]
      %v1524 = vld [vmem:[#allocation9 + $0x508] sm:$0xff]
      %v1525 = vld [vmem:[#allocation9 + $0x510] sm:$0xff]
      %v1526 = vld [vmem:[#allocation9 + $0x518] sm:$0xff]
      %v1527 = vld [vmem:[#allocation9 + $0x520] sm:$0xff]
      %v1528 = vld [vmem:[#allocation9 + $0x528] sm:$0xff]
      %v1529 = vld [vmem:[#allocation9 + $0x530] sm:$0xff]
      %v1530 = vld [vmem:[#allocation9 + $0x538] sm:$0xff]
      %v1531 = vld [vmem:[#allocation9 + $0x540] sm:$0xff]
      %v1532 = vld [vmem:[#allocation9 + $0x548] sm:$0xff]
      %v1533 = vld [vmem:[#allocation9 + $0x550] sm:$0xff]
      %v1534 = vld [vmem:[#allocation9 + $0x558] sm:$0xff]
      %v1535 = vld [vmem:[#allocation9 + $0x560] sm:$0xff]
      %v1536 = vld [vmem:[#allocation9 + $0x568] sm:$0xff]
      %v1537 = vld [vmem:[#allocation9 + $0x570] sm:$0xff]
      %v1538 = vld [vmem:[#allocation9 + $0x578] sm:$0xff]
      %v1539 = vld [vmem:[#allocation9 + $0x580] sm:$0xff]
      %v1540 = vld [vmem:[#allocation9 + $0x588] sm:$0xff]
      %v1541 = vld [vmem:[#allocation9 + $0x590] sm:$0xff]
      %v1542 = vld [vmem:[#allocation9 + $0x598] sm:$0xff]
      %v1543 = vld [vmem:[#allocation9 + $0x5a0] sm:$0xff]
      %v1544 = vld [vmem:[#allocation9 + $0x5a8] sm:$0xff]
      %v1545 = vld [vmem:[#allocation9 + $0x5b0] sm:$0xff]
      %v1546 = vld [vmem:[#allocation9 + $0x5b8] sm:$0xff]
      %v1547 = vld [vmem:[#allocation9 + $0x5c0] sm:$0xff]
      %v1548 = vld [vmem:[#allocation9 + $0x5c8] sm:$0xff]
      %v1549 = vld [vmem:[#allocation9 + $0x5d0] sm:$0xff]
      %v1550 = vld [vmem:[#allocation9 + $0x5d8] sm:$0xff]
      %v1551 = vld [vmem:[#allocation9 + $0x5e0] sm:$0xff]
      %v1552 = vld [vmem:[#allocation9 + $0x5e8] sm:$0xff]
      %v1553 = vld [vmem:[#allocation9 + $0x5f0] sm:$0xff]
      %v1554 = vld [vmem:[#allocation9 + $0x5f8] sm:$0xff]
      %v1555 = vld [vmem:[#allocation9 + $0x600] sm:$0xff]
      %v1556 = vld [vmem:[#allocation9 + $0x608] sm:$0xff]
      %v1557 = vld [vmem:[#allocation9 + $0x610] sm:$0xff]
      %v1558 = vld [vmem:[#allocation9 + $0x618] sm:$0xff]
      %v1559 = vld [vmem:[#allocation9 + $0x620] sm:$0xff]
      %v1560 = vld [vmem:[#allocation9 + $0x628] sm:$0xff]
      %v1561 = vld [vmem:[#allocation9 + $0x630] sm:$0xff]
      %v1562 = vld [vmem:[#allocation9 + $0x638] sm:$0xff]
      %v1563 = vld [vmem:[#allocation9 + $0x640] sm:$0xff]
      %v1564 = vld [vmem:[#allocation9 + $0x648] sm:$0xff]
      %v1565 = vld [vmem:[#allocation9 + $0x650] sm:$0xff]
      %v1566 = vld [vmem:[#allocation9 + $0x658] sm:$0xff]
      %v1567 = vld [vmem:[#allocation9 + $0x660] sm:$0xff]
      %v1568 = vld [vmem:[#allocation9 + $0x668] sm:$0xff]
      %v1569 = vld [vmem:[#allocation9 + $0x670] sm:$0xff]
      %v1570 = vld [vmem:[#allocation9 + $0x678] sm:$0xff]
      %v1571 = vld [vmem:[#allocation9 + $0x680] sm:$0xff]
      %v1572 = vld [vmem:[#allocation9 + $0x688] sm:$0xff]
      %v1573 = vld [vmem:[#allocation9 + $0x690] sm:$0xff]
      %v1574 = vld [vmem:[#allocation9 + $0x698] sm:$0xff]
      %v1575 = vld [vmem:[#allocation9 + $0x6a0] sm:$0xff]
      %v1576 = vld [vmem:[#allocation9 + $0x6a8] sm:$0xff]
      %v1577 = vld [vmem:[#allocation9 + $0x6b0] sm:$0xff]
      %v1578 = vld [vmem:[#allocation9 + $0x6b8] sm:$0xff]
      %v1579 = vld [vmem:[#allocation9 + $0x6c0] sm:$0xff]
      %v1580 = vld [vmem:[#allocation9 + $0x6c8] sm:$0xff]
      %v1581 = vld [vmem:[#allocation9 + $0x6d0] sm:$0xff]
      %v1582 = vld [vmem:[#allocation9 + $0x6d8] sm:$0xff]
      %v1583 = vld [vmem:[#allocation9 + $0x6e0] sm:$0xff]
      %v1584 = vld [vmem:[#allocation9 + $0x6e8] sm:$0xff]
      %v1585 = vld [vmem:[#allocation9 + $0x6f0] sm:$0xff]
      %v1586 = vld [vmem:[#allocation9 + $0x6f8] sm:$0xff]
      %v1587 = vld [vmem:[#allocation9 + $0x700] sm:$0xff]
      %v1588 = vld [vmem:[#allocation9 + $0x708] sm:$0xff]
      %v1589 = vld [vmem:[#allocation9 + $0x710] sm:$0xff]
      %v1590 = vld [vmem:[#allocation9 + $0x718] sm:$0xff]
      %v1591 = vld [vmem:[#allocation9 + $0x720] sm:$0xff]
      %v1592 = vld [vmem:[#allocation9 + $0x728] sm:$0xff]
      %v1593 = vld [vmem:[#allocation9 + $0x730] sm:$0xff]
      %v1594 = vld [vmem:[#allocation9 + $0x738] sm:$0xff]
      %v1595 = vld [vmem:[#allocation9 + $0x740] sm:$0xff]
      %v1596 = vld [vmem:[#allocation9 + $0x748] sm:$0xff]
      %v1597 = vld [vmem:[#allocation9 + $0x750] sm:$0xff]
      %v1598 = vld [vmem:[#allocation9 + $0x758] sm:$0xff]
      %v1599 = vld [vmem:[#allocation9 + $0x760] sm:$0xff]
      %v1600 = vld [vmem:[#allocation9 + $0x768] sm:$0xff]
      %v1601 = vld [vmem:[#allocation9 + $0x770] sm:$0xff]
      %v1602 = vld [vmem:[#allocation9 + $0x778] sm:$0xff]
      %v1603 = vld [vmem:[#allocation9 + $0x780] sm:$0xff]
      %v1604 = vld [vmem:[#allocation9 + $0x788] sm:$0xff]
      %v1605 = vld [vmem:[#allocation9 + $0x790] sm:$0xff]
      %v1606 = vld [vmem:[#allocation9 + $0x798] sm:$0xff]
      %v1607 = vld [vmem:[#allocation9 + $0x7a0] sm:$0xff]
      %v1608 = vld [vmem:[#allocation9 + $0x7a8] sm:$0xff]
      %v1609 = vld [vmem:[#allocation9 + $0x7b0] sm:$0xff]
      %v1610 = vld [vmem:[#allocation9 + $0x7b8] sm:$0xff]
      %v1611 = vld [vmem:[#allocation9 + $0x7c0] sm:$0xff]
      %v1612 = vld [vmem:[#allocation9 + $0x7c8] sm:$0xff]
      %v1613 = vld [vmem:[#allocation9 + $0x7d0] sm:$0xff]
      %v1614 = vld [vmem:[#allocation9 + $0x7d8] sm:$0xff]
      %v1615 = vld [vmem:[#allocation9 + $0x7e0] sm:$0xff]
      %v1616 = vld [vmem:[#allocation9 + $0x7e8] sm:$0xff]
      %v1617 = vld [vmem:[#allocation9 + $0x7f0] sm:$0xff]
      %v1618 = vld [vmem:[#allocation9 + $0x7f8] sm:$0xff]
      %v1619 = vld [vmem:[#allocation9 + $0x800] sm:$0xff]
      %v1620 = vld [vmem:[#allocation9 + $0x808] sm:$0xff]
      %v1621 = vld [vmem:[#allocation9 + $0x810] sm:$0xff]
      %v1622 = vld [vmem:[#allocation9 + $0x818] sm:$0xff]
      %v1623 = vld [vmem:[#allocation9 + $0x820] sm:$0xff]
      %v1624 = vld [vmem:[#allocation9 + $0x828] sm:$0xff]
      %v1625 = vld [vmem:[#allocation9 + $0x830] sm:$0xff]
      %v1626 = vld [vmem:[#allocation9 + $0x838] sm:$0xff]
      %v1627 = vld [vmem:[#allocation9 + $0x840] sm:$0xff]
      %v1628 = vld [vmem:[#allocation9 + $0x848] sm:$0xff]
      %v1629 = vld [vmem:[#allocation9 + $0x850] sm:$0xff]
      %v1630 = vld [vmem:[#allocation9 + $0x858] sm:$0xff]
      %v1631 = vld [vmem:[#allocation9 + $0x860] sm:$0xff]
      %v1632 = vld [vmem:[#allocation9 + $0x868] sm:$0xff]
      %v1633 = vld [vmem:[#allocation9 + $0x870] sm:$0xff]
      %v1634 = vld [vmem:[#allocation9 + $0x878] sm:$0xff]
      %v1635 = vld [vmem:[#allocation9 + $0x880] sm:$0xff]
      %v1636 = vld [vmem:[#allocation9 + $0x888] sm:$0xff]
      %v1637 = vld [vmem:[#allocation9 + $0x890] sm:$0xff]
      %v1638 = vld [vmem:[#allocation9 + $0x898] sm:$0xff]
      %v1639 = vld [vmem:[#allocation9 + $0x8a0] sm:$0xff]
      %v1640 = vld [vmem:[#allocation9 + $0x8a8] sm:$0xff]
      %v1641 = vld [vmem:[#allocation9 + $0x8b0] sm:$0xff]
      %v1642 = vld [vmem:[#allocation9 + $0x8b8] sm:$0xff]
      %v1643 = vld [vmem:[#allocation9 + $0x8c0] sm:$0xff]
      %v1644 = vld [vmem:[#allocation9 + $0x8c8] sm:$0xff]
      %v1645 = vld [vmem:[#allocation9 + $0x8d0] sm:$0xff]
      %v1646 = vld [vmem:[#allocation9 + $0x8d8] sm:$0xff]
      %v1647 = vld [vmem:[#allocation9 + $0x8e0] sm:$0xff]
      %v1648 = vld [vmem:[#allocation9 + $0x8e8] sm:$0xff]
      %v1649 = vld [vmem:[#allocation9 + $0x8f0] sm:$0xff]
      %v1650 = vld [vmem:[#allocation9 + $0x8f8] sm:$0xff]
      %v1651 = vld [vmem:[#allocation9 + $0x900] sm:$0xff]
      %v1652 = vld [vmem:[#allocation9 + $0x908] sm:$0xff]
      %v1653 = vld [vmem:[#allocation9 + $0x910] sm:$0xff]
      %v1654 = vld [vmem:[#allocation9 + $0x918] sm:$0xff]
      %v1655 = vld [vmem:[#allocation9 + $0x920] sm:$0xff]
      %v1656 = vld [vmem:[#allocation9 + $0x928] sm:$0xff]
      %v1657 = vld [vmem:[#allocation9 + $0x930] sm:$0xff]
      %v1658 = vld [vmem:[#allocation9 + $0x938] sm:$0xff]
      %v1659 = vld [vmem:[#allocation9 + $0x940] sm:$0xff]
      %v1660 = vld [vmem:[#allocation9 + $0x948] sm:$0xff]
      %v1661 = vld [vmem:[#allocation9 + $0x950] sm:$0xff]
      %v1662 = vld [vmem:[#allocation9 + $0x958] sm:$0xff]
      %v1663 = vld [vmem:[#allocation9 + $0x960] sm:$0xff]
      %v1664 = vld [vmem:[#allocation9 + $0x968] sm:$0xff]
      %v1665 = vld [vmem:[#allocation9 + $0x970] sm:$0xff]
      %v1666 = vld [vmem:[#allocation9 + $0x978] sm:$0xff]
      %v1667 = vld [vmem:[#allocation9 + $0x980] sm:$0xff]
      %v1668 = vld [vmem:[#allocation9 + $0x988] sm:$0xff]
      %v1669 = vld [vmem:[#allocation9 + $0x990] sm:$0xff]
      %v1670 = vld [vmem:[#allocation9 + $0x998] sm:$0xff]
      %v1671 = vld [vmem:[#allocation9 + $0x9a0] sm:$0xff]
      %v1672 = vld [vmem:[#allocation9 + $0x9a8] sm:$0xff]
      %v1673 = vld [vmem:[#allocation9 + $0x9b0] sm:$0xff]
      %v1674 = vld [vmem:[#allocation9 + $0x9b8] sm:$0xff]
      %v1675 = vld [vmem:[#allocation9 + $0x9c0] sm:$0xff]
      %v1676 = vld [vmem:[#allocation9 + $0x9c8] sm:$0xff]
      %v1677 = vld [vmem:[#allocation9 + $0x9d0] sm:$0xff]
      %v1678 = vld [vmem:[#allocation9 + $0x9d8] sm:$0xff]
      %v1679 = vld [vmem:[#allocation9 + $0x9e0] sm:$0xff]
      %v1680 = vld [vmem:[#allocation9 + $0x9e8] sm:$0xff]
      %v1681 = vld [vmem:[#allocation9 + $0x9f0] sm:$0xff]
      %v1682 = vld [vmem:[#allocation9 + $0x9f8] sm:$0xff]
      %v1683 = vld [vmem:[#allocation9 + $0xa00] sm:$0xff]
      %v1684 = vld [vmem:[#allocation9 + $0xa08] sm:$0xff]
      %v1685 = vld [vmem:[#allocation9 + $0xa10] sm:$0xff]
      %v1686 = vld [vmem:[#allocation9 + $0xa18] sm:$0xff]
      %v1687 = vld [vmem:[#allocation9 + $0xa20] sm:$0xff]
      %v1688 = vld [vmem:[#allocation9 + $0xa28] sm:$0xff]
      %v1689 = vld [vmem:[#allocation9 + $0xa30] sm:$0xff]
      %v1690 = vld [vmem:[#allocation9 + $0xa38] sm:$0xff]
      %v1691 = vld [vmem:[#allocation9 + $0xa40] sm:$0xff]
      %v1692 = vld [vmem:[#allocation9 + $0xa48] sm:$0xff]
      %v1693 = vld [vmem:[#allocation9 + $0xa50] sm:$0xff]
      %v1694 = vld [vmem:[#allocation9 + $0xa58] sm:$0xff]
      %v1695 = vld [vmem:[#allocation9 + $0xa60] sm:$0xff]
      %v1696 = vld [vmem:[#allocation9 + $0xa68] sm:$0xff]
      %v1697 = vld [vmem:[#allocation9 + $0xa70] sm:$0xff]
      %v1698 = vld [vmem:[#allocation9 + $0xa78] sm:$0xff]
      %v1699 = vld [vmem:[#allocation9 + $0xa80] sm:$0xff]
      %v1700 = vld [vmem:[#allocation9 + $0xa88] sm:$0xff]
      %v1701 = vld [vmem:[#allocation9 + $0xa90] sm:$0xff]
      %v1702 = vld [vmem:[#allocation9 + $0xa98] sm:$0xff]
      %v1703 = vld [vmem:[#allocation9 + $0xaa0] sm:$0xff]
      %v1704 = vld [vmem:[#allocation9 + $0xaa8] sm:$0xff]
      %v1705 = vld [vmem:[#allocation9 + $0xab0] sm:$0xff]
      %v1706 = vld [vmem:[#allocation9 + $0xab8] sm:$0xff]
      %v1707 = vld [vmem:[#allocation9 + $0xac0] sm:$0xff]
      %v1708 = vld [vmem:[#allocation9 + $0xac8] sm:$0xff]
      %v1709 = vld [vmem:[#allocation9 + $0xad0] sm:$0xff]
      %v1710 = vld [vmem:[#allocation9 + $0xad8] sm:$0xff]
      %v1711 = vld [vmem:[#allocation9 + $0xae0] sm:$0xff]
      %v1712 = vld [vmem:[#allocation9 + $0xae8] sm:$0xff]
      %v1713 = vld [vmem:[#allocation9 + $0xaf0] sm:$0xff]
      %v1714 = vld [vmem:[#allocation9 + $0xaf8] sm:$0xff]
      %v1715 = vld [vmem:[#allocation9 + $0xb00] sm:$0xff]
      %v1716 = vld [vmem:[#allocation9 + $0xb08] sm:$0xff]
      %v1717 = vld [vmem:[#allocation9 + $0xb10] sm:$0xff]
      %v1718 = vld [vmem:[#allocation9 + $0xb18] sm:$0xff]
      %v1719 = vld [vmem:[#allocation9 + $0xb20] sm:$0xff]
      %v1720 = vld [vmem:[#allocation9 + $0xb28] sm:$0xff]
      %v1721 = vld [vmem:[#allocation9 + $0xb30] sm:$0xff]
      %v1722 = vld [vmem:[#allocation9 + $0xb38] sm:$0xff]
      %v1723 = vld [vmem:[#allocation9 + $0xb40] sm:$0xff]
      %v1724 = vld [vmem:[#allocation9 + $0xb48] sm:$0xff]
      %v1725 = vld [vmem:[#allocation9 + $0xb50] sm:$0xff]
      %v1726 = vld [vmem:[#allocation9 + $0xb58] sm:$0xff]
      %v1727 = vld [vmem:[#allocation9 + $0xb60] sm:$0xff]
      %v1728 = vld [vmem:[#allocation9 + $0xb68] sm:$0xff]
      %v1729 = vld [vmem:[#allocation9 + $0xb70] sm:$0xff]
      %v1730 = vld [vmem:[#allocation9 + $0xb78] sm:$0xff]
      %v1731 = vld [vmem:[#allocation9 + $0xb80] sm:$0xff]
      %v1732 = vld [vmem:[#allocation9 + $0xb88] sm:$0xff]
      %v1733 = vld [vmem:[#allocation9 + $0xb90] sm:$0xff]
      %v1734 = vld [vmem:[#allocation9 + $0xb98] sm:$0xff]
      %v1735 = vld [vmem:[#allocation9 + $0xba0] sm:$0xff]
      %v1736 = vld [vmem:[#allocation9 + $0xba8] sm:$0xff]
      %v1737 = vld [vmem:[#allocation9 + $0xbb0] sm:$0xff]
      %v1738 = vld [vmem:[#allocation9 + $0xbb8] sm:$0xff]
      %v1739 = vld [vmem:[#allocation9 + $0xbc0] sm:$0xff]
      %v1740 = vld [vmem:[#allocation9 + $0xbc8] sm:$0xff]
      %v1741 = vld [vmem:[#allocation9 + $0xbd0] sm:$0xff]
      %v1742 = vld [vmem:[#allocation9 + $0xbd8] sm:$0xff]
      %v1743 = vld [vmem:[#allocation9 + $0xbe0] sm:$0xff]
      %v1744 = vld [vmem:[#allocation9 + $0xbe8] sm:$0xff]
      %v1745 = vld [vmem:[#allocation9 + $0xbf0] sm:$0xff]
      %v1746 = vld [vmem:[#allocation9 + $0xbf8] sm:$0xff]
      %v1747 = vld [vmem:[#allocation9 + $0xc00] sm:$0xff]
      %v1748 = vld [vmem:[#allocation9 + $0xc08] sm:$0xff]
      %v1749 = vld [vmem:[#allocation9 + $0xc10] sm:$0xff]
      %v1750 = vld [vmem:[#allocation9 + $0xc18] sm:$0xff]
      %v1751 = vld [vmem:[#allocation9 + $0xc20] sm:$0xff]
      %v1752 = vld [vmem:[#allocation9 + $0xc28] sm:$0xff]
      %v1753 = vld [vmem:[#allocation9 + $0xc30] sm:$0xff]
      %v1754 = vld [vmem:[#allocation9 + $0xc38] sm:$0xff]
      %v1755 = vld [vmem:[#allocation9 + $0xc40] sm:$0xff]
      %v1756 = vld [vmem:[#allocation9 + $0xc48] sm:$0xff]
      %v1757 = vld [vmem:[#allocation9 + $0xc50] sm:$0xff]
      %v1758 = vld [vmem:[#allocation9 + $0xc58] sm:$0xff]
      %v1759 = vld [vmem:[#allocation9 + $0xc60] sm:$0xff]
      %v1760 = vld [vmem:[#allocation9 + $0xc68] sm:$0xff]
      %v1761 = vld [vmem:[#allocation9 + $0xc70] sm:$0xff]
      %v1762 = vld [vmem:[#allocation9 + $0xc78] sm:$0xff]
      %v1763 = vld [vmem:[#allocation9 + $0xc80] sm:$0xff]
      %v1764 = vld [vmem:[#allocation9 + $0xc88] sm:$0xff]
      %v1765 = vld [vmem:[#allocation9 + $0xc90] sm:$0xff]
      %v1766 = vld [vmem:[#allocation9 + $0xc98] sm:$0xff]
      %v1767 = vld [vmem:[#allocation9 + $0xca0] sm:$0xff]
      %v1768 = vld [vmem:[#allocation9 + $0xca8] sm:$0xff]
      %v1769 = vld [vmem:[#allocation9 + $0xcb0] sm:$0xff]
      %v1770 = vld [vmem:[#allocation9 + $0xcb8] sm:$0xff]
      %v1771 = vld [vmem:[#allocation9 + $0xcc0] sm:$0xff]
      %v1772 = vld [vmem:[#allocation9 + $0xcc8] sm:$0xff]
      %v1773 = vld [vmem:[#allocation9 + $0xcd0] sm:$0xff]
      %v1774 = vld [vmem:[#allocation9 + $0xcd8] sm:$0xff]
      %v1775 = vld [vmem:[#allocation9 + $0xce0] sm:$0xff]
      %v1776 = vld [vmem:[#allocation9 + $0xce8] sm:$0xff]
      %v1777 = vld [vmem:[#allocation9 + $0xcf0] sm:$0xff]
      %v1778 = vld [vmem:[#allocation9 + $0xcf8] sm:$0xff]
      %v1779 = vld [vmem:[#allocation9 + $0xd00] sm:$0xff]
      %v1780 = vld [vmem:[#allocation9 + $0xd08] sm:$0xff]
      %v1781 = vld [vmem:[#allocation9 + $0xd10] sm:$0xff]
      %v1782 = vld [vmem:[#allocation9 + $0xd18] sm:$0xff]
      %v1783 = vld [vmem:[#allocation9 + $0xd20] sm:$0xff]
      %v1784 = vld [vmem:[#allocation9 + $0xd28] sm:$0xff]
      %v1785 = vld [vmem:[#allocation9 + $0xd30] sm:$0xff]
      %v1786 = vld [vmem:[#allocation9 + $0xd38] sm:$0xff]
      %v1787 = vld [vmem:[#allocation9 + $0xd40] sm:$0xff]
      %v1788 = vld [vmem:[#allocation9 + $0xd48] sm:$0xff]
      %v1789 = vld [vmem:[#allocation9 + $0xd50] sm:$0xff]
      %v1790 = vld [vmem:[#allocation9 + $0xd58] sm:$0xff]
      %v1791 = vld [vmem:[#allocation9 + $0xd60] sm:$0xff]
      %v1792 = vld [vmem:[#allocation9 + $0xd68] sm:$0xff]
      %v1793 = vld [vmem:[#allocation9 + $0xd70] sm:$0xff]
      %v1794 = vld [vmem:[#allocation9 + $0xd78] sm:$0xff]
      %v1795 = vld [vmem:[#allocation9 + $0xd80] sm:$0xff]
      %v1796 = vld [vmem:[#allocation9 + $0xd88] sm:$0xff]
      %v1797 = vld [vmem:[#allocation9 + $0xd90] sm:$0xff]
      %v1798 = vld [vmem:[#allocation9 + $0xd98] sm:$0xff]
      %v1799 = vld [vmem:[#allocation9 + $0xda0] sm:$0xff]
      %v1800 = vld [vmem:[#allocation9 + $0xda8] sm:$0xff]
      %v1801 = vld [vmem:[#allocation9 + $0xdb0] sm:$0xff]
      %v1802 = vld [vmem:[#allocation9 + $0xdb8] sm:$0xff]
      %v1803 = vld [vmem:[#allocation9 + $0xdc0] sm:$0xff]
      %v1804 = vld [vmem:[#allocation9 + $0xdc8] sm:$0xff]
      %v1805 = vld [vmem:[#allocation9 + $0xdd0] sm:$0xff]
      %v1806 = vld [vmem:[#allocation9 + $0xdd8] sm:$0xff]
      %v1807 = vld [vmem:[#allocation9 + $0xde0] sm:$0xff]
      %v1808 = vld [vmem:[#allocation9 + $0xde8] sm:$0xff]
      %v1809 = vld [vmem:[#allocation9 + $0xdf0] sm:$0xff]
      %v1810 = vld [vmem:[#allocation9 + $0xdf8] sm:$0xff]
      %v1811 = vld [vmem:[#allocation9 + $0xe00] sm:$0xff]
      %v1812 = vld [vmem:[#allocation9 + $0xe08] sm:$0xff]
      %v1813 = vld [vmem:[#allocation9 + $0xe10] sm:$0xff]
      %v1814 = vld [vmem:[#allocation9 + $0xe18] sm:$0xff]
      %v1815 = vld [vmem:[#allocation9 + $0xe20] sm:$0xff]
      %v1816 = vld [vmem:[#allocation9 + $0xe28] sm:$0xff]
      %v1817 = vld [vmem:[#allocation9 + $0xe30] sm:$0xff]
      %v1818 = vld [vmem:[#allocation9 + $0xe38] sm:$0xff]
      %v1819 = vld [vmem:[#allocation9 + $0xe40] sm:$0xff]
      %v1820 = vld [vmem:[#allocation9 + $0xe48] sm:$0xff]
      %v1821 = vld [vmem:[#allocation9 + $0xe50] sm:$0xff]
      %v1822 = vld [vmem:[#allocation9 + $0xe58] sm:$0xff]
      %v1823 = vld [vmem:[#allocation9 + $0xe60] sm:$0xff]
      %v1824 = vld [vmem:[#allocation9 + $0xe68] sm:$0xff]
      %v1825 = vld [vmem:[#allocation9 + $0xe70] sm:$0xff]
      %v1826 = vld [vmem:[#allocation9 + $0xe78] sm:$0xff]
      %v1827 = vld [vmem:[#allocation9 + $0xe80] sm:$0xff]
      %v1828 = vld [vmem:[#allocation9 + $0xe88] sm:$0xff]
      %v1829 = vld [vmem:[#allocation9 + $0xe90] sm:$0xff]
      %v1830 = vld [vmem:[#allocation9 + $0xe98] sm:$0xff]
      %v1831 = vld [vmem:[#allocation9 + $0xea0] sm:$0xff]
      %v1832 = vld [vmem:[#allocation9 + $0xea8] sm:$0xff]
      %v1833 = vld [vmem:[#allocation9 + $0xeb0] sm:$0xff]
      %v1834 = vld [vmem:[#allocation9 + $0xeb8] sm:$0xff]
      %v1835 = vld [vmem:[#allocation9 + $0xec0] sm:$0xff]
      %v1836 = vld [vmem:[#allocation9 + $0xec8] sm:$0xff]
      %v1837 = vld [vmem:[#allocation9 + $0xed0] sm:$0xff]
      %v1838 = vld [vmem:[#allocation9 + $0xed8] sm:$0xff]
      %v1839 = vld [vmem:[#allocation9 + $0xee0] sm:$0xff]
      %v1840 = vld [vmem:[#allocation9 + $0xee8] sm:$0xff]
      %v1841 = vld [vmem:[#allocation9 + $0xef0] sm:$0xff]
      %v1842 = vld [vmem:[#allocation9 + $0xef8] sm:$0xff]
      %v1843 = vld [vmem:[#allocation9 + $0xf00] sm:$0xff]
      %v1844 = vld [vmem:[#allocation9 + $0xf08] sm:$0xff]
      %v1845 = vld [vmem:[#allocation9 + $0xf10] sm:$0xff]
      %v1846 = vld [vmem:[#allocation9 + $0xf18] sm:$0xff]
      %v1847 = vld [vmem:[#allocation9 + $0xf20] sm:$0xff]
      %v1848 = vld [vmem:[#allocation9 + $0xf28] sm:$0xff]
      %v1849 = vld [vmem:[#allocation9 + $0xf30] sm:$0xff]
      %v1850 = vld [vmem:[#allocation9 + $0xf38] sm:$0xff]
      %v1851 = vld [vmem:[#allocation9 + $0xf40] sm:$0xff]
      %v1852 = vld [vmem:[#allocation9 + $0xf48] sm:$0xff]
      %v1853 = vld [vmem:[#allocation9 + $0xf50] sm:$0xff]
      %v1854 = vld [vmem:[#allocation9 + $0xf58] sm:$0xff]
      %v1855 = vld [vmem:[#allocation9 + $0xf60] sm:$0xff]
      %v1856 = vld [vmem:[#allocation9 + $0xf68] sm:$0xff]
      %v1857 = vld [vmem:[#allocation9 + $0xf70] sm:$0xff]
      %v1858 = vld [vmem:[#allocation9 + $0xf78] sm:$0xff]
      %v1859 = vld [vmem:[#allocation9 + $0xf80] sm:$0xff]
      %v1860 = vld [vmem:[#allocation9 + $0xf88] sm:$0xff]
      %v1861 = vld [vmem:[#allocation9 + $0xf90] sm:$0xff]
      %v1862 = vld [vmem:[#allocation9 + $0xf98] sm:$0xff]
      %v1863 = vld [vmem:[#allocation9 + $0xfa0] sm:$0xff]
      %v1864 = vld [vmem:[#allocation9 + $0xfa8] sm:$0xff]
      %v1865 = vld [vmem:[#allocation9 + $0xfb0] sm:$0xff]
      %v1866 = vld [vmem:[#allocation9 + $0xfb8] sm:$0xff]
      %v1867 = vld [vmem:[#allocation9 + $0xfc0] sm:$0xff]
      %v1868 = vld [vmem:[#allocation9 + $0xfc8] sm:$0xff]
      %v1869 = vld [vmem:[#allocation9 + $0xfd0] sm:$0xff]
      %v1870 = vld [vmem:[#allocation9 + $0xfd8] sm:$0xff]
      %v1871 = vld [vmem:[#allocation9 + $0xfe0] sm:$0xff]
      %v1872 = vld [vmem:[#allocation9 + $0xfe8] sm:$0xff]
      %v1873 = vld [vmem:[#allocation9 + $0xff0] sm:$0xff]
      %v1874 = vld [vmem:[#allocation9 + $0xff8] sm:$0xff]
      %v1875 = vld [vmem:[#allocation11] sm:$0xf]
      %v1877 = vlaneseq
      %v1878 = vshrl.u32 %v1877, 7
      %v1879 = vsub.s32 0, %v1878
      %v1880 = vrot.slane %v1875, %v1879
      %v1881 = vlaneseq
      %v1882 = vshrl.u32 %v1881, 7
      %v1883 = vsub.s32 1, %v1882
      %v1884 = vrot.slane %v1875, %v1883
      %v1885 = vlaneseq
      %v1886 = vshrl.u32 %v1885, 7
      %v1887 = vsub.s32 2, %v1886
      %v1888 = vrot.slane %v1875, %v1887
      %v1889 = vlaneseq
      %v1890 = vshrl.u32 %v1889, 7
      %v1891 = vsub.s32 3, %v1890
      %v1892 = vrot.slane %v1875, %v1891
      %v2409 = vunpack.c.l.b16 %v1363
      %v2410 = vunpack.c.h.b16 %v1363
      %v2411 = vunpack.c.l.b16 %v1364
      %v2412 = vunpack.c.h.b16 %v1364
      %v2413 = vunpack.c.l.b16 %v1365
      %v2414 = vunpack.c.h.b16 %v1365
      %v2415 = vunpack.c.l.b16 %v1366
      %v2416 = vunpack.c.h.b16 %v1366
      %v2417 = vunpack.c.l.b16 %v1367
      %v2418 = vunpack.c.h.b16 %v1367
      %v2419 = vunpack.c.l.b16 %v1368
      %v2420 = vunpack.c.h.b16 %v1368
      %v2421 = vunpack.c.l.b16 %v1369
      %v2422 = vunpack.c.h.b16 %v1369
      %v2423 = vunpack.c.l.b16 %v1370
      %v2424 = vunpack.c.h.b16 %v1370
      %v2425 = vunpack.c.l.b16 %v1371
      %v2426 = vunpack.c.h.b16 %v1371
      %v2427 = vunpack.c.l.b16 %v1372
      %v2428 = vunpack.c.h.b16 %v1372
      %v2429 = vunpack.c.l.b16 %v1373
      %v2430 = vunpack.c.h.b16 %v1373
      %v2431 = vunpack.c.l.b16 %v1374
      %v2432 = vunpack.c.h.b16 %v1374
      %v2433 = vunpack.c.l.b16 %v1375
      %v2434 = vunpack.c.h.b16 %v1375
      %v2435 = vunpack.c.l.b16 %v1376
      %v2436 = vunpack.c.h.b16 %v1376
      %v2437 = vunpack.c.l.b16 %v1377
      %v2438 = vunpack.c.h.b16 %v1377
      %v2439 = vunpack.c.l.b16 %v1378
      %v2440 = vunpack.c.h.b16 %v1378
      %v2441 = vunpack.c.l.b16 %v1379
      %v2442 = vunpack.c.h.b16 %v1379
      %v2443 = vunpack.c.l.b16 %v1380
      %v2444 = vunpack.c.h.b16 %v1380
      %v2445 = vunpack.c.l.b16 %v1381
      %v2446 = vunpack.c.h.b16 %v1381
      %v2447 = vunpack.c.l.b16 %v1382
      %v2448 = vunpack.c.h.b16 %v1382
      %v2449 = vunpack.c.l.b16 %v1383
      %v2450 = vunpack.c.h.b16 %v1383
      %v2451 = vunpack.c.l.b16 %v1384
      %v2452 = vunpack.c.h.b16 %v1384
      %v2453 = vunpack.c.l.b16 %v1385
      %v2454 = vunpack.c.h.b16 %v1385
      %v2455 = vunpack.c.l.b16 %v1386
      %v2456 = vunpack.c.h.b16 %v1386
      %v2457 = vunpack.c.l.b16 %v1387
      %v2458 = vunpack.c.h.b16 %v1387
      %v2459 = vunpack.c.l.b16 %v1388
      %v2460 = vunpack.c.h.b16 %v1388
      %v2461 = vunpack.c.l.b16 %v1389
      %v2462 = vunpack.c.h.b16 %v1389
      %v2463 = vunpack.c.l.b16 %v1390
      %v2464 = vunpack.c.h.b16 %v1390
      %v2465 = vunpack.c.l.b16 %v1391
      %v2466 = vunpack.c.h.b16 %v1391
      %v2467 = vunpack.c.l.b16 %v1392
      %v2468 = vunpack.c.h.b16 %v1392
      %v2469 = vunpack.c.l.b16 %v1393
      %v2470 = vunpack.c.h.b16 %v1393
      %v2471 = vunpack.c.l.b16 %v1394
      %v2472 = vunpack.c.h.b16 %v1394
      %v2473 = vunpack.c.l.b16 %v1395
      %v2474 = vunpack.c.h.b16 %v1395
      %v2475 = vunpack.c.l.b16 %v1396
      %v2476 = vunpack.c.h.b16 %v1396
      %v2477 = vunpack.c.l.b16 %v1397
      %v2478 = vunpack.c.h.b16 %v1397
      %v2479 = vunpack.c.l.b16 %v1398
      %v2480 = vunpack.c.h.b16 %v1398
      %v2481 = vunpack.c.l.b16 %v1399
      %v2482 = vunpack.c.h.b16 %v1399
      %v2483 = vunpack.c.l.b16 %v1400
      %v2484 = vunpack.c.h.b16 %v1400
      %v2485 = vunpack.c.l.b16 %v1401
      %v2486 = vunpack.c.h.b16 %v1401
      %v2487 = vunpack.c.l.b16 %v1402
      %v2488 = vunpack.c.h.b16 %v1402
      %v2489 = vunpack.c.l.b16 %v1403
      %v2490 = vunpack.c.h.b16 %v1403
      %v2491 = vunpack.c.l.b16 %v1404
      %v2492 = vunpack.c.h.b16 %v1404
      %v2493 = vunpack.c.l.b16 %v1405
      %v2494 = vunpack.c.h.b16 %v1405
      %v2495 = vunpack.c.l.b16 %v1406
      %v2496 = vunpack.c.h.b16 %v1406
      %v2497 = vunpack.c.l.b16 %v1407
      %v2498 = vunpack.c.h.b16 %v1407
      %v2499 = vunpack.c.l.b16 %v1408
      %v2500 = vunpack.c.h.b16 %v1408
      %v2501 = vunpack.c.l.b16 %v1409
      %v2502 = vunpack.c.h.b16 %v1409
      %v2503 = vunpack.c.l.b16 %v1410
      %v2504 = vunpack.c.h.b16 %v1410
      %v2505 = vunpack.c.l.b16 %v1411
      %v2506 = vunpack.c.h.b16 %v1411
      %v2507 = vunpack.c.l.b16 %v1412
      %v2508 = vunpack.c.h.b16 %v1412
      %v2509 = vunpack.c.l.b16 %v1413
      %v2510 = vunpack.c.h.b16 %v1413
      %v2511 = vunpack.c.l.b16 %v1414
      %v2512 = vunpack.c.h.b16 %v1414
      %v2513 = vunpack.c.l.b16 %v1415
      %v2514 = vunpack.c.h.b16 %v1415
      %v2515 = vunpack.c.l.b16 %v1416
      %v2516 = vunpack.c.h.b16 %v1416
      %v2517 = vunpack.c.l.b16 %v1417
      %v2518 = vunpack.c.h.b16 %v1417
      %v2519 = vunpack.c.l.b16 %v1418
      %v2520 = vunpack.c.h.b16 %v1418
      %v2521 = vunpack.c.l.b16 %v1419
      %v2522 = vunpack.c.h.b16 %v1419
      %v2523 = vunpack.c.l.b16 %v1420
      %v2524 = vunpack.c.h.b16 %v1420
      %v2525 = vunpack.c.l.b16 %v1421
      %v2526 = vunpack.c.h.b16 %v1421
      %v2527 = vunpack.c.l.b16 %v1422
      %v2528 = vunpack.c.h.b16 %v1422
      %v2529 = vunpack.c.l.b16 %v1423
      %v2530 = vunpack.c.h.b16 %v1423
      %v2531 = vunpack.c.l.b16 %v1424
      %v2532 = vunpack.c.h.b16 %v1424
      %v2533 = vunpack.c.l.b16 %v1425
      %v2534 = vunpack.c.h.b16 %v1425
      %v2535 = vunpack.c.l.b16 %v1426
      %v2536 = vunpack.c.h.b16 %v1426
      %v2537 = vunpack.c.l.b16 %v1427
      %v2538 = vunpack.c.h.b16 %v1427
      %v2539 = vunpack.c.l.b16 %v1428
      %v2540 = vunpack.c.h.b16 %v1428
      %v2541 = vunpack.c.l.b16 %v1429
      %v2542 = vunpack.c.h.b16 %v1429
      %v2543 = vunpack.c.l.b16 %v1430
      %v2544 = vunpack.c.h.b16 %v1430
      %v2545 = vunpack.c.l.b16 %v1431
      %v2546 = vunpack.c.h.b16 %v1431
      %v2547 = vunpack.c.l.b16 %v1432
      %v2548 = vunpack.c.h.b16 %v1432
      %v2549 = vunpack.c.l.b16 %v1433
      %v2550 = vunpack.c.h.b16 %v1433
      %v2551 = vunpack.c.l.b16 %v1434
      %v2552 = vunpack.c.h.b16 %v1434
      %v2553 = vunpack.c.l.b16 %v1435
      %v2554 = vunpack.c.h.b16 %v1435
      %v2555 = vunpack.c.l.b16 %v1436
      %v2556 = vunpack.c.h.b16 %v1436
      %v2557 = vunpack.c.l.b16 %v1437
      %v2558 = vunpack.c.h.b16 %v1437
      %v2559 = vunpack.c.l.b16 %v1438
      %v2560 = vunpack.c.h.b16 %v1438
      %v2561 = vunpack.c.l.b16 %v1439
      %v2562 = vunpack.c.h.b16 %v1439
      %v2563 = vunpack.c.l.b16 %v1440
      %v2564 = vunpack.c.h.b16 %v1440
      %v2565 = vunpack.c.l.b16 %v1441
      %v2566 = vunpack.c.h.b16 %v1441
      %v2567 = vunpack.c.l.b16 %v1442
      %v2568 = vunpack.c.h.b16 %v1442
      %v2569 = vunpack.c.l.b16 %v1443
      %v2570 = vunpack.c.h.b16 %v1443
      %v2571 = vunpack.c.l.b16 %v1444
      %v2572 = vunpack.c.h.b16 %v1444
      %v2573 = vunpack.c.l.b16 %v1445
      %v2574 = vunpack.c.h.b16 %v1445
      %v2575 = vunpack.c.l.b16 %v1446
      %v2576 = vunpack.c.h.b16 %v1446
      %v2577 = vunpack.c.l.b16 %v1447
      %v2578 = vunpack.c.h.b16 %v1447
      %v2579 = vunpack.c.l.b16 %v1448
      %v2580 = vunpack.c.h.b16 %v1448
      %v2581 = vunpack.c.l.b16 %v1449
      %v2582 = vunpack.c.h.b16 %v1449
      %v2583 = vunpack.c.l.b16 %v1450
      %v2584 = vunpack.c.h.b16 %v1450
      %v2585 = vunpack.c.l.b16 %v1451
      %v2586 = vunpack.c.h.b16 %v1451
      %v2587 = vunpack.c.l.b16 %v1452
      %v2588 = vunpack.c.h.b16 %v1452
      %v2589 = vunpack.c.l.b16 %v1453
      %v2590 = vunpack.c.h.b16 %v1453
      %v2591 = vunpack.c.l.b16 %v1454
      %v2592 = vunpack.c.h.b16 %v1454
      %v2593 = vunpack.c.l.b16 %v1455
      %v2594 = vunpack.c.h.b16 %v1455
      %v2595 = vunpack.c.l.b16 %v1456
      %v2596 = vunpack.c.h.b16 %v1456
      %v2597 = vunpack.c.l.b16 %v1457
      %v2598 = vunpack.c.h.b16 %v1457
      %v2599 = vunpack.c.l.b16 %v1458
      %v2600 = vunpack.c.h.b16 %v1458
      %v2601 = vunpack.c.l.b16 %v1459
      %v2602 = vunpack.c.h.b16 %v1459
      %v2603 = vunpack.c.l.b16 %v1460
      %v2604 = vunpack.c.h.b16 %v1460
      %v2605 = vunpack.c.l.b16 %v1461
      %v2606 = vunpack.c.h.b16 %v1461
      %v2607 = vunpack.c.l.b16 %v1462
      %v2608 = vunpack.c.h.b16 %v1462
      %v2609 = vunpack.c.l.b16 %v1463
      %v2610 = vunpack.c.h.b16 %v1463
      %v2611 = vunpack.c.l.b16 %v1464
      %v2612 = vunpack.c.h.b16 %v1464
      %v2613 = vunpack.c.l.b16 %v1465
      %v2614 = vunpack.c.h.b16 %v1465
      %v2615 = vunpack.c.l.b16 %v1466
      %v2616 = vunpack.c.h.b16 %v1466
      %v2617 = vunpack.c.l.b16 %v1467
      %v2618 = vunpack.c.h.b16 %v1467
      %v2619 = vunpack.c.l.b16 %v1468
      %v2620 = vunpack.c.h.b16 %v1468
      %v2621 = vunpack.c.l.b16 %v1469
      %v2622 = vunpack.c.h.b16 %v1469
      %v2623 = vunpack.c.l.b16 %v1470
      %v2624 = vunpack.c.h.b16 %v1470
      %v2625 = vunpack.c.l.b16 %v1471
      %v2626 = vunpack.c.h.b16 %v1471
      %v2627 = vunpack.c.l.b16 %v1472
      %v2628 = vunpack.c.h.b16 %v1472
      %v2629 = vunpack.c.l.b16 %v1473
      %v2630 = vunpack.c.h.b16 %v1473
      %v2631 = vunpack.c.l.b16 %v1474
      %v2632 = vunpack.c.h.b16 %v1474
      %v2633 = vunpack.c.l.b16 %v1475
      %v2634 = vunpack.c.h.b16 %v1475
      %v2635 = vunpack.c.l.b16 %v1476
      %v2636 = vunpack.c.h.b16 %v1476
      %v2637 = vunpack.c.l.b16 %v1477
      %v2638 = vunpack.c.h.b16 %v1477
      %v2639 = vunpack.c.l.b16 %v1478
      %v2640 = vunpack.c.h.b16 %v1478
      %v2641 = vunpack.c.l.b16 %v1479
      %v2642 = vunpack.c.h.b16 %v1479
      %v2643 = vunpack.c.l.b16 %v1480
      %v2644 = vunpack.c.h.b16 %v1480
      %v2645 = vunpack.c.l.b16 %v1481
      %v2646 = vunpack.c.h.b16 %v1481
      %v2647 = vunpack.c.l.b16 %v1482
      %v2648 = vunpack.c.h.b16 %v1482
      %v2649 = vunpack.c.l.b16 %v1483
      %v2650 = vunpack.c.h.b16 %v1483
      %v2651 = vunpack.c.l.b16 %v1484
      %v2652 = vunpack.c.h.b16 %v1484
      %v2653 = vunpack.c.l.b16 %v1485
      %v2654 = vunpack.c.h.b16 %v1485
      %v2655 = vunpack.c.l.b16 %v1486
      %v2656 = vunpack.c.h.b16 %v1486
      %v2657 = vunpack.c.l.b16 %v1487
      %v2658 = vunpack.c.h.b16 %v1487
      %v2659 = vunpack.c.l.b16 %v1488
      %v2660 = vunpack.c.h.b16 %v1488
      %v2661 = vunpack.c.l.b16 %v1489
      %v2662 = vunpack.c.h.b16 %v1489
      %v2663 = vunpack.c.l.b16 %v1490
      %v2664 = vunpack.c.h.b16 %v1490
      %v2665 = vunpack.c.l.b16 %v1491
      %v2666 = vunpack.c.h.b16 %v1491
      %v2667 = vunpack.c.l.b16 %v1492
      %v2668 = vunpack.c.h.b16 %v1492
      %v2669 = vunpack.c.l.b16 %v1493
      %v2670 = vunpack.c.h.b16 %v1493
      %v2671 = vunpack.c.l.b16 %v1494
      %v2672 = vunpack.c.h.b16 %v1494
      %v2673 = vunpack.c.l.b16 %v1495
      %v2674 = vunpack.c.h.b16 %v1495
      %v2675 = vunpack.c.l.b16 %v1496
      %v2676 = vunpack.c.h.b16 %v1496
      %v2677 = vunpack.c.l.b16 %v1497
      %v2678 = vunpack.c.h.b16 %v1497
      %v2679 = vunpack.c.l.b16 %v1498
      %v2680 = vunpack.c.h.b16 %v1498
      %v2681 = vunpack.c.l.b16 %v1499
      %v2682 = vunpack.c.h.b16 %v1499
      %v2683 = vunpack.c.l.b16 %v1500
      %v2684 = vunpack.c.h.b16 %v1500
      %v2685 = vunpack.c.l.b16 %v1501
      %v2686 = vunpack.c.h.b16 %v1501
      %v2687 = vunpack.c.l.b16 %v1502
      %v2688 = vunpack.c.h.b16 %v1502
      %v2689 = vunpack.c.l.b16 %v1503
      %v2690 = vunpack.c.h.b16 %v1503
      %v2691 = vunpack.c.l.b16 %v1504
      %v2692 = vunpack.c.h.b16 %v1504
      %v2693 = vunpack.c.l.b16 %v1505
      %v2694 = vunpack.c.h.b16 %v1505
      %v2695 = vunpack.c.l.b16 %v1506
      %v2696 = vunpack.c.h.b16 %v1506
      %v2697 = vunpack.c.l.b16 %v1507
      %v2698 = vunpack.c.h.b16 %v1507
      %v2699 = vunpack.c.l.b16 %v1508
      %v2700 = vunpack.c.h.b16 %v1508
      %v2701 = vunpack.c.l.b16 %v1509
      %v2702 = vunpack.c.h.b16 %v1509
      %v2703 = vunpack.c.l.b16 %v1510
      %v2704 = vunpack.c.h.b16 %v1510
      %v2705 = vunpack.c.l.b16 %v1511
      %v2706 = vunpack.c.h.b16 %v1511
      %v2707 = vunpack.c.l.b16 %v1512
      %v2708 = vunpack.c.h.b16 %v1512
      %v2709 = vunpack.c.l.b16 %v1513
      %v2710 = vunpack.c.h.b16 %v1513
      %v2711 = vunpack.c.l.b16 %v1514
      %v2712 = vunpack.c.h.b16 %v1514
      %v2713 = vunpack.c.l.b16 %v1515
      %v2714 = vunpack.c.h.b16 %v1515
      %v2715 = vunpack.c.l.b16 %v1516
      %v2716 = vunpack.c.h.b16 %v1516
      %v2717 = vunpack.c.l.b16 %v1517
      %v2718 = vunpack.c.h.b16 %v1517
      %v2719 = vunpack.c.l.b16 %v1518
      %v2720 = vunpack.c.h.b16 %v1518
      %v2721 = vunpack.c.l.b16 %v1519
      %v2722 = vunpack.c.h.b16 %v1519
      %v2723 = vunpack.c.l.b16 %v1520
      %v2724 = vunpack.c.h.b16 %v1520
      %v2725 = vunpack.c.l.b16 %v1521
      %v2726 = vunpack.c.h.b16 %v1521
      %v2727 = vunpack.c.l.b16 %v1522
      %v2728 = vunpack.c.h.b16 %v1522
      %v2729 = vunpack.c.l.b16 %v1523
      %v2730 = vunpack.c.h.b16 %v1523
      %v2731 = vunpack.c.l.b16 %v1524
      %v2732 = vunpack.c.h.b16 %v1524
      %v2733 = vunpack.c.l.b16 %v1525
      %v2734 = vunpack.c.h.b16 %v1525
      %v2735 = vunpack.c.l.b16 %v1526
      %v2736 = vunpack.c.h.b16 %v1526
      %v2737 = vunpack.c.l.b16 %v1527
      %v2738 = vunpack.c.h.b16 %v1527
      %v2739 = vunpack.c.l.b16 %v1528
      %v2740 = vunpack.c.h.b16 %v1528
      %v2741 = vunpack.c.l.b16 %v1529
      %v2742 = vunpack.c.h.b16 %v1529
      %v2743 = vunpack.c.l.b16 %v1530
      %v2744 = vunpack.c.h.b16 %v1530
      %v2745 = vunpack.c.l.b16 %v1531
      %v2746 = vunpack.c.h.b16 %v1531
      %v2747 = vunpack.c.l.b16 %v1532
      %v2748 = vunpack.c.h.b16 %v1532
      %v2749 = vunpack.c.l.b16 %v1533
      %v2750 = vunpack.c.h.b16 %v1533
      %v2751 = vunpack.c.l.b16 %v1534
      %v2752 = vunpack.c.h.b16 %v1534
      %v2753 = vunpack.c.l.b16 %v1535
      %v2754 = vunpack.c.h.b16 %v1535
      %v2755 = vunpack.c.l.b16 %v1536
      %v2756 = vunpack.c.h.b16 %v1536
      %v2757 = vunpack.c.l.b16 %v1537
      %v2758 = vunpack.c.h.b16 %v1537
      %v2759 = vunpack.c.l.b16 %v1538
      %v2760 = vunpack.c.h.b16 %v1538
      %v2761 = vunpack.c.l.b16 %v1539
      %v2762 = vunpack.c.h.b16 %v1539
      %v2763 = vunpack.c.l.b16 %v1540
      %v2764 = vunpack.c.h.b16 %v1540
      %v2765 = vunpack.c.l.b16 %v1541
      %v2766 = vunpack.c.h.b16 %v1541
      %v2767 = vunpack.c.l.b16 %v1542
      %v2768 = vunpack.c.h.b16 %v1542
      %v2769 = vunpack.c.l.b16 %v1543
      %v2770 = vunpack.c.h.b16 %v1543
      %v2771 = vunpack.c.l.b16 %v1544
      %v2772 = vunpack.c.h.b16 %v1544
      %v2773 = vunpack.c.l.b16 %v1545
      %v2774 = vunpack.c.h.b16 %v1545
      %v2775 = vunpack.c.l.b16 %v1546
      %v2776 = vunpack.c.h.b16 %v1546
      %v2777 = vunpack.c.l.b16 %v1547
      %v2778 = vunpack.c.h.b16 %v1547
      %v2779 = vunpack.c.l.b16 %v1548
      %v2780 = vunpack.c.h.b16 %v1548
      %v2781 = vunpack.c.l.b16 %v1549
      %v2782 = vunpack.c.h.b16 %v1549
      %v2783 = vunpack.c.l.b16 %v1550
      %v2784 = vunpack.c.h.b16 %v1550
      %v2785 = vunpack.c.l.b16 %v1551
      %v2786 = vunpack.c.h.b16 %v1551
      %v2787 = vunpack.c.l.b16 %v1552
      %v2788 = vunpack.c.h.b16 %v1552
      %v2789 = vunpack.c.l.b16 %v1553
      %v2790 = vunpack.c.h.b16 %v1553
      %v2791 = vunpack.c.l.b16 %v1554
      %v2792 = vunpack.c.h.b16 %v1554
      %v2793 = vunpack.c.l.b16 %v1555
      %v2794 = vunpack.c.h.b16 %v1555
      %v2795 = vunpack.c.l.b16 %v1556
      %v2796 = vunpack.c.h.b16 %v1556
      %v2797 = vunpack.c.l.b16 %v1557
      %v2798 = vunpack.c.h.b16 %v1557
      %v2799 = vunpack.c.l.b16 %v1558
      %v2800 = vunpack.c.h.b16 %v1558
      %v2801 = vunpack.c.l.b16 %v1559
      %v2802 = vunpack.c.h.b16 %v1559
      %v2803 = vunpack.c.l.b16 %v1560
      %v2804 = vunpack.c.h.b16 %v1560
      %v2805 = vunpack.c.l.b16 %v1561
      %v2806 = vunpack.c.h.b16 %v1561
      %v2807 = vunpack.c.l.b16 %v1562
      %v2808 = vunpack.c.h.b16 %v1562
      %v2809 = vunpack.c.l.b16 %v1563
      %v2810 = vunpack.c.h.b16 %v1563
      %v2811 = vunpack.c.l.b16 %v1564
      %v2812 = vunpack.c.h.b16 %v1564
      %v2813 = vunpack.c.l.b16 %v1565
      %v2814 = vunpack.c.h.b16 %v1565
      %v2815 = vunpack.c.l.b16 %v1566
      %v2816 = vunpack.c.h.b16 %v1566
      %v2817 = vunpack.c.l.b16 %v1567
      %v2818 = vunpack.c.h.b16 %v1567
      %v2819 = vunpack.c.l.b16 %v1568
      %v2820 = vunpack.c.h.b16 %v1568
      %v2821 = vunpack.c.l.b16 %v1569
      %v2822 = vunpack.c.h.b16 %v1569
      %v2823 = vunpack.c.l.b16 %v1570
      %v2824 = vunpack.c.h.b16 %v1570
      %v2825 = vunpack.c.l.b16 %v1571
      %v2826 = vunpack.c.h.b16 %v1571
      %v2827 = vunpack.c.l.b16 %v1572
      %v2828 = vunpack.c.h.b16 %v1572
      %v2829 = vunpack.c.l.b16 %v1573
      %v2830 = vunpack.c.h.b16 %v1573
      %v2831 = vunpack.c.l.b16 %v1574
      %v2832 = vunpack.c.h.b16 %v1574
      %v2833 = vunpack.c.l.b16 %v1575
      %v2834 = vunpack.c.h.b16 %v1575
      %v2835 = vunpack.c.l.b16 %v1576
      %v2836 = vunpack.c.h.b16 %v1576
      %v2837 = vunpack.c.l.b16 %v1577
      %v2838 = vunpack.c.h.b16 %v1577
      %v2839 = vunpack.c.l.b16 %v1578
      %v2840 = vunpack.c.h.b16 %v1578
      %v2841 = vunpack.c.l.b16 %v1579
      %v2842 = vunpack.c.h.b16 %v1579
      %v2843 = vunpack.c.l.b16 %v1580
      %v2844 = vunpack.c.h.b16 %v1580
      %v2845 = vunpack.c.l.b16 %v1581
      %v2846 = vunpack.c.h.b16 %v1581
      %v2847 = vunpack.c.l.b16 %v1582
      %v2848 = vunpack.c.h.b16 %v1582
      %v2849 = vunpack.c.l.b16 %v1583
      %v2850 = vunpack.c.h.b16 %v1583
      %v2851 = vunpack.c.l.b16 %v1584
      %v2852 = vunpack.c.h.b16 %v1584
      %v2853 = vunpack.c.l.b16 %v1585
      %v2854 = vunpack.c.h.b16 %v1585
      %v2855 = vunpack.c.l.b16 %v1586
      %v2856 = vunpack.c.h.b16 %v1586
      %v2857 = vunpack.c.l.b16 %v1587
      %v2858 = vunpack.c.h.b16 %v1587
      %v2859 = vunpack.c.l.b16 %v1588
      %v2860 = vunpack.c.h.b16 %v1588
      %v2861 = vunpack.c.l.b16 %v1589
      %v2862 = vunpack.c.h.b16 %v1589
      %v2863 = vunpack.c.l.b16 %v1590
      %v2864 = vunpack.c.h.b16 %v1590
      %v2865 = vunpack.c.l.b16 %v1591
      %v2866 = vunpack.c.h.b16 %v1591
      %v2867 = vunpack.c.l.b16 %v1592
      %v2868 = vunpack.c.h.b16 %v1592
      %v2869 = vunpack.c.l.b16 %v1593
      %v2870 = vunpack.c.h.b16 %v1593
      %v2871 = vunpack.c.l.b16 %v1594
      %v2872 = vunpack.c.h.b16 %v1594
      %v2873 = vunpack.c.l.b16 %v1595
      %v2874 = vunpack.c.h.b16 %v1595
      %v2875 = vunpack.c.l.b16 %v1596
      %v2876 = vunpack.c.h.b16 %v1596
      %v2877 = vunpack.c.l.b16 %v1597
      %v2878 = vunpack.c.h.b16 %v1597
      %v2879 = vunpack.c.l.b16 %v1598
      %v2880 = vunpack.c.h.b16 %v1598
      %v2881 = vunpack.c.l.b16 %v1599
      %v2882 = vunpack.c.h.b16 %v1599
      %v2883 = vunpack.c.l.b16 %v1600
      %v2884 = vunpack.c.h.b16 %v1600
      %v2885 = vunpack.c.l.b16 %v1601
      %v2886 = vunpack.c.h.b16 %v1601
      %v2887 = vunpack.c.l.b16 %v1602
      %v2888 = vunpack.c.h.b16 %v1602
      %v2889 = vunpack.c.l.b16 %v1603
      %v2890 = vunpack.c.h.b16 %v1603
      %v2891 = vunpack.c.l.b16 %v1604
      %v2892 = vunpack.c.h.b16 %v1604
      %v2893 = vunpack.c.l.b16 %v1605
      %v2894 = vunpack.c.h.b16 %v1605
      %v2895 = vunpack.c.l.b16 %v1606
      %v2896 = vunpack.c.h.b16 %v1606
      %v2897 = vunpack.c.l.b16 %v1607
      %v2898 = vunpack.c.h.b16 %v1607
      %v2899 = vunpack.c.l.b16 %v1608
      %v2900 = vunpack.c.h.b16 %v1608
      %v2901 = vunpack.c.l.b16 %v1609
      %v2902 = vunpack.c.h.b16 %v1609
      %v2903 = vunpack.c.l.b16 %v1610
      %v2904 = vunpack.c.h.b16 %v1610
      %v2905 = vunpack.c.l.b16 %v1611
      %v2906 = vunpack.c.h.b16 %v1611
      %v2907 = vunpack.c.l.b16 %v1612
      %v2908 = vunpack.c.h.b16 %v1612
      %v2909 = vunpack.c.l.b16 %v1613
      %v2910 = vunpack.c.h.b16 %v1613
      %v2911 = vunpack.c.l.b16 %v1614
      %v2912 = vunpack.c.h.b16 %v1614
      %v2913 = vunpack.c.l.b16 %v1615
      %v2914 = vunpack.c.h.b16 %v1615
      %v2915 = vunpack.c.l.b16 %v1616
      %v2916 = vunpack.c.h.b16 %v1616
      %v2917 = vunpack.c.l.b16 %v1617
      %v2918 = vunpack.c.h.b16 %v1617
      %v2919 = vunpack.c.l.b16 %v1618
      %v2920 = vunpack.c.h.b16 %v1618
      %v2921 = vunpack.c.l.b16 %v1619
      %v2922 = vunpack.c.h.b16 %v1619
      %v2923 = vunpack.c.l.b16 %v1620
      %v2924 = vunpack.c.h.b16 %v1620
      %v2925 = vunpack.c.l.b16 %v1621
      %v2926 = vunpack.c.h.b16 %v1621
      %v2927 = vunpack.c.l.b16 %v1622
      %v2928 = vunpack.c.h.b16 %v1622
      %v2929 = vunpack.c.l.b16 %v1623
      %v2930 = vunpack.c.h.b16 %v1623
      %v2931 = vunpack.c.l.b16 %v1624
      %v2932 = vunpack.c.h.b16 %v1624
      %v2933 = vunpack.c.l.b16 %v1625
      %v2934 = vunpack.c.h.b16 %v1625
      %v2935 = vunpack.c.l.b16 %v1626
      %v2936 = vunpack.c.h.b16 %v1626
      %v2937 = vunpack.c.l.b16 %v1627
      %v2938 = vunpack.c.h.b16 %v1627
      %v2939 = vunpack.c.l.b16 %v1628
      %v2940 = vunpack.c.h.b16 %v1628
      %v2941 = vunpack.c.l.b16 %v1629
      %v2942 = vunpack.c.h.b16 %v1629
      %v2943 = vunpack.c.l.b16 %v1630
      %v2944 = vunpack.c.h.b16 %v1630
      %v2945 = vunpack.c.l.b16 %v1631
      %v2946 = vunpack.c.h.b16 %v1631
      %v2947 = vunpack.c.l.b16 %v1632
      %v2948 = vunpack.c.h.b16 %v1632
      %v2949 = vunpack.c.l.b16 %v1633
      %v2950 = vunpack.c.h.b16 %v1633
      %v2951 = vunpack.c.l.b16 %v1634
      %v2952 = vunpack.c.h.b16 %v1634
      %v2953 = vunpack.c.l.b16 %v1635
      %v2954 = vunpack.c.h.b16 %v1635
      %v2955 = vunpack.c.l.b16 %v1636
      %v2956 = vunpack.c.h.b16 %v1636
      %v2957 = vunpack.c.l.b16 %v1637
      %v2958 = vunpack.c.h.b16 %v1637
      %v2959 = vunpack.c.l.b16 %v1638
      %v2960 = vunpack.c.h.b16 %v1638
      %v2961 = vunpack.c.l.b16 %v1639
      %v2962 = vunpack.c.h.b16 %v1639
      %v2963 = vunpack.c.l.b16 %v1640
      %v2964 = vunpack.c.h.b16 %v1640
      %v2965 = vunpack.c.l.b16 %v1641
      %v2966 = vunpack.c.h.b16 %v1641
      %v2967 = vunpack.c.l.b16 %v1642
      %v2968 = vunpack.c.h.b16 %v1642
      %v2969 = vunpack.c.l.b16 %v1643
      %v2970 = vunpack.c.h.b16 %v1643
      %v2971 = vunpack.c.l.b16 %v1644
      %v2972 = vunpack.c.h.b16 %v1644
      %v2973 = vunpack.c.l.b16 %v1645
      %v2974 = vunpack.c.h.b16 %v1645
      %v2975 = vunpack.c.l.b16 %v1646
      %v2976 = vunpack.c.h.b16 %v1646
      %v2977 = vunpack.c.l.b16 %v1647
      %v2978 = vunpack.c.h.b16 %v1647
      %v2979 = vunpack.c.l.b16 %v1648
      %v2980 = vunpack.c.h.b16 %v1648
      %v2981 = vunpack.c.l.b16 %v1649
      %v2982 = vunpack.c.h.b16 %v1649
      %v2983 = vunpack.c.l.b16 %v1650
      %v2984 = vunpack.c.h.b16 %v1650
      %v2985 = vunpack.c.l.b16 %v1651
      %v2986 = vunpack.c.h.b16 %v1651
      %v2987 = vunpack.c.l.b16 %v1652
      %v2988 = vunpack.c.h.b16 %v1652
      %v2989 = vunpack.c.l.b16 %v1653
      %v2990 = vunpack.c.h.b16 %v1653
      %v2991 = vunpack.c.l.b16 %v1654
      %v2992 = vunpack.c.h.b16 %v1654
      %v2993 = vunpack.c.l.b16 %v1655
      %v2994 = vunpack.c.h.b16 %v1655
      %v2995 = vunpack.c.l.b16 %v1656
      %v2996 = vunpack.c.h.b16 %v1656
      %v2997 = vunpack.c.l.b16 %v1657
      %v2998 = vunpack.c.h.b16 %v1657
      %v2999 = vunpack.c.l.b16 %v1658
      %v3000 = vunpack.c.h.b16 %v1658
      %v3001 = vunpack.c.l.b16 %v1659
      %v3002 = vunpack.c.h.b16 %v1659
      %v3003 = vunpack.c.l.b16 %v1660
      %v3004 = vunpack.c.h.b16 %v1660
      %v3005 = vunpack.c.l.b16 %v1661
      %v3006 = vunpack.c.h.b16 %v1661
      %v3007 = vunpack.c.l.b16 %v1662
      %v3008 = vunpack.c.h.b16 %v1662
      %v3009 = vunpack.c.l.b16 %v1663
      %v3010 = vunpack.c.h.b16 %v1663
      %v3011 = vunpack.c.l.b16 %v1664
      %v3012 = vunpack.c.h.b16 %v1664
      %v3013 = vunpack.c.l.b16 %v1665
      %v3014 = vunpack.c.h.b16 %v1665
      %v3015 = vunpack.c.l.b16 %v1666
      %v3016 = vunpack.c.h.b16 %v1666
      %v3017 = vunpack.c.l.b16 %v1667
      %v3018 = vunpack.c.h.b16 %v1667
      %v3019 = vunpack.c.l.b16 %v1668
      %v3020 = vunpack.c.h.b16 %v1668
      %v3021 = vunpack.c.l.b16 %v1669
      %v3022 = vunpack.c.h.b16 %v1669
      %v3023 = vunpack.c.l.b16 %v1670
      %v3024 = vunpack.c.h.b16 %v1670
      %v3025 = vunpack.c.l.b16 %v1671
      %v3026 = vunpack.c.h.b16 %v1671
      %v3027 = vunpack.c.l.b16 %v1672
      %v3028 = vunpack.c.h.b16 %v1672
      %v3029 = vunpack.c.l.b16 %v1673
      %v3030 = vunpack.c.h.b16 %v1673
      %v3031 = vunpack.c.l.b16 %v1674
      %v3032 = vunpack.c.h.b16 %v1674
      %v3033 = vunpack.c.l.b16 %v1675
      %v3034 = vunpack.c.h.b16 %v1675
      %v3035 = vunpack.c.l.b16 %v1676
      %v3036 = vunpack.c.h.b16 %v1676
      %v3037 = vunpack.c.l.b16 %v1677
      %v3038 = vunpack.c.h.b16 %v1677
      %v3039 = vunpack.c.l.b16 %v1678
      %v3040 = vunpack.c.h.b16 %v1678
      %v3041 = vunpack.c.l.b16 %v1679
      %v3042 = vunpack.c.h.b16 %v1679
      %v3043 = vunpack.c.l.b16 %v1680
      %v3044 = vunpack.c.h.b16 %v1680
      %v3045 = vunpack.c.l.b16 %v1681
      %v3046 = vunpack.c.h.b16 %v1681
      %v3047 = vunpack.c.l.b16 %v1682
      %v3048 = vunpack.c.h.b16 %v1682
      %v3049 = vunpack.c.l.b16 %v1683
      %v3050 = vunpack.c.h.b16 %v1683
      %v3051 = vunpack.c.l.b16 %v1684
      %v3052 = vunpack.c.h.b16 %v1684
      %v3053 = vunpack.c.l.b16 %v1685
      %v3054 = vunpack.c.h.b16 %v1685
      %v3055 = vunpack.c.l.b16 %v1686
      %v3056 = vunpack.c.h.b16 %v1686
      %v3057 = vunpack.c.l.b16 %v1687
      %v3058 = vunpack.c.h.b16 %v1687
      %v3059 = vunpack.c.l.b16 %v1688
      %v3060 = vunpack.c.h.b16 %v1688
      %v3061 = vunpack.c.l.b16 %v1689
      %v3062 = vunpack.c.h.b16 %v1689
      %v3063 = vunpack.c.l.b16 %v1690
      %v3064 = vunpack.c.h.b16 %v1690
      %v3065 = vunpack.c.l.b16 %v1691
      %v3066 = vunpack.c.h.b16 %v1691
      %v3067 = vunpack.c.l.b16 %v1692
      %v3068 = vunpack.c.h.b16 %v1692
      %v3069 = vunpack.c.l.b16 %v1693
      %v3070 = vunpack.c.h.b16 %v1693
      %v3071 = vunpack.c.l.b16 %v1694
      %v3072 = vunpack.c.h.b16 %v1694
      %v3073 = vunpack.c.l.b16 %v1695
      %v3074 = vunpack.c.h.b16 %v1695
      %v3075 = vunpack.c.l.b16 %v1696
      %v3076 = vunpack.c.h.b16 %v1696
      %v3077 = vunpack.c.l.b16 %v1697
      %v3078 = vunpack.c.h.b16 %v1697
      %v3079 = vunpack.c.l.b16 %v1698
      %v3080 = vunpack.c.h.b16 %v1698
      %v3081 = vunpack.c.l.b16 %v1699
      %v3082 = vunpack.c.h.b16 %v1699
      %v3083 = vunpack.c.l.b16 %v1700
      %v3084 = vunpack.c.h.b16 %v1700
      %v3085 = vunpack.c.l.b16 %v1701
      %v3086 = vunpack.c.h.b16 %v1701
      %v3087 = vunpack.c.l.b16 %v1702
      %v3088 = vunpack.c.h.b16 %v1702
      %v3089 = vunpack.c.l.b16 %v1703
      %v3090 = vunpack.c.h.b16 %v1703
      %v3091 = vunpack.c.l.b16 %v1704
      %v3092 = vunpack.c.h.b16 %v1704
      %v3093 = vunpack.c.l.b16 %v1705
      %v3094 = vunpack.c.h.b16 %v1705
      %v3095 = vunpack.c.l.b16 %v1706
      %v3096 = vunpack.c.h.b16 %v1706
      %v3097 = vunpack.c.l.b16 %v1707
      %v3098 = vunpack.c.h.b16 %v1707
      %v3099 = vunpack.c.l.b16 %v1708
      %v3100 = vunpack.c.h.b16 %v1708
      %v3101 = vunpack.c.l.b16 %v1709
      %v3102 = vunpack.c.h.b16 %v1709
      %v3103 = vunpack.c.l.b16 %v1710
      %v3104 = vunpack.c.h.b16 %v1710
      %v3105 = vunpack.c.l.b16 %v1711
      %v3106 = vunpack.c.h.b16 %v1711
      %v3107 = vunpack.c.l.b16 %v1712
      %v3108 = vunpack.c.h.b16 %v1712
      %v3109 = vunpack.c.l.b16 %v1713
      %v3110 = vunpack.c.h.b16 %v1713
      %v3111 = vunpack.c.l.b16 %v1714
      %v3112 = vunpack.c.h.b16 %v1714
      %v3113 = vunpack.c.l.b16 %v1715
      %v3114 = vunpack.c.h.b16 %v1715
      %v3115 = vunpack.c.l.b16 %v1716
      %v3116 = vunpack.c.h.b16 %v1716
      %v3117 = vunpack.c.l.b16 %v1717
      %v3118 = vunpack.c.h.b16 %v1717
      %v3119 = vunpack.c.l.b16 %v1718
      %v3120 = vunpack.c.h.b16 %v1718
      %v3121 = vunpack.c.l.b16 %v1719
      %v3122 = vunpack.c.h.b16 %v1719
      %v3123 = vunpack.c.l.b16 %v1720
      %v3124 = vunpack.c.h.b16 %v1720
      %v3125 = vunpack.c.l.b16 %v1721
      %v3126 = vunpack.c.h.b16 %v1721
      %v3127 = vunpack.c.l.b16 %v1722
      %v3128 = vunpack.c.h.b16 %v1722
      %v3129 = vunpack.c.l.b16 %v1723
      %v3130 = vunpack.c.h.b16 %v1723
      %v3131 = vunpack.c.l.b16 %v1724
      %v3132 = vunpack.c.h.b16 %v1724
      %v3133 = vunpack.c.l.b16 %v1725
      %v3134 = vunpack.c.h.b16 %v1725
      %v3135 = vunpack.c.l.b16 %v1726
      %v3136 = vunpack.c.h.b16 %v1726
      %v3137 = vunpack.c.l.b16 %v1727
      %v3138 = vunpack.c.h.b16 %v1727
      %v3139 = vunpack.c.l.b16 %v1728
      %v3140 = vunpack.c.h.b16 %v1728
      %v3141 = vunpack.c.l.b16 %v1729
      %v3142 = vunpack.c.h.b16 %v1729
      %v3143 = vunpack.c.l.b16 %v1730
      %v3144 = vunpack.c.h.b16 %v1730
      %v3145 = vunpack.c.l.b16 %v1731
      %v3146 = vunpack.c.h.b16 %v1731
      %v3147 = vunpack.c.l.b16 %v1732
      %v3148 = vunpack.c.h.b16 %v1732
      %v3149 = vunpack.c.l.b16 %v1733
      %v3150 = vunpack.c.h.b16 %v1733
      %v3151 = vunpack.c.l.b16 %v1734
      %v3152 = vunpack.c.h.b16 %v1734
      %v3153 = vunpack.c.l.b16 %v1735
      %v3154 = vunpack.c.h.b16 %v1735
      %v3155 = vunpack.c.l.b16 %v1736
      %v3156 = vunpack.c.h.b16 %v1736
      %v3157 = vunpack.c.l.b16 %v1737
      %v3158 = vunpack.c.h.b16 %v1737
      %v3159 = vunpack.c.l.b16 %v1738
      %v3160 = vunpack.c.h.b16 %v1738
      %v3161 = vunpack.c.l.b16 %v1739
      %v3162 = vunpack.c.h.b16 %v1739
      %v3163 = vunpack.c.l.b16 %v1740
      %v3164 = vunpack.c.h.b16 %v1740
      %v3165 = vunpack.c.l.b16 %v1741
      %v3166 = vunpack.c.h.b16 %v1741
      %v3167 = vunpack.c.l.b16 %v1742
      %v3168 = vunpack.c.h.b16 %v1742
      %v3169 = vunpack.c.l.b16 %v1743
      %v3170 = vunpack.c.h.b16 %v1743
      %v3171 = vunpack.c.l.b16 %v1744
      %v3172 = vunpack.c.h.b16 %v1744
      %v3173 = vunpack.c.l.b16 %v1745
      %v3174 = vunpack.c.h.b16 %v1745
      %v3175 = vunpack.c.l.b16 %v1746
      %v3176 = vunpack.c.h.b16 %v1746
      %v3177 = vunpack.c.l.b16 %v1747
      %v3178 = vunpack.c.h.b16 %v1747
      %v3179 = vunpack.c.l.b16 %v1748
      %v3180 = vunpack.c.h.b16 %v1748
      %v3181 = vunpack.c.l.b16 %v1749
      %v3182 = vunpack.c.h.b16 %v1749
      %v3183 = vunpack.c.l.b16 %v1750
      %v3184 = vunpack.c.h.b16 %v1750
      %v3185 = vunpack.c.l.b16 %v1751
      %v3186 = vunpack.c.h.b16 %v1751
      %v3187 = vunpack.c.l.b16 %v1752
      %v3188 = vunpack.c.h.b16 %v1752
      %v3189 = vunpack.c.l.b16 %v1753
      %v3190 = vunpack.c.h.b16 %v1753
      %v3191 = vunpack.c.l.b16 %v1754
      %v3192 = vunpack.c.h.b16 %v1754
      %v3193 = vunpack.c.l.b16 %v1755
      %v3194 = vunpack.c.h.b16 %v1755
      %v3195 = vunpack.c.l.b16 %v1756
      %v3196 = vunpack.c.h.b16 %v1756
      %v3197 = vunpack.c.l.b16 %v1757
      %v3198 = vunpack.c.h.b16 %v1757
      %v3199 = vunpack.c.l.b16 %v1758
      %v3200 = vunpack.c.h.b16 %v1758
      %v3201 = vunpack.c.l.b16 %v1759
      %v3202 = vunpack.c.h.b16 %v1759
      %v3203 = vunpack.c.l.b16 %v1760
      %v3204 = vunpack.c.h.b16 %v1760
      %v3205 = vunpack.c.l.b16 %v1761
      %v3206 = vunpack.c.h.b16 %v1761
      %v3207 = vunpack.c.l.b16 %v1762
      %v3208 = vunpack.c.h.b16 %v1762
      %v3209 = vunpack.c.l.b16 %v1763
      %v3210 = vunpack.c.h.b16 %v1763
      %v3211 = vunpack.c.l.b16 %v1764
      %v3212 = vunpack.c.h.b16 %v1764
      %v3213 = vunpack.c.l.b16 %v1765
      %v3214 = vunpack.c.h.b16 %v1765
      %v3215 = vunpack.c.l.b16 %v1766
      %v3216 = vunpack.c.h.b16 %v1766
      %v3217 = vunpack.c.l.b16 %v1767
      %v3218 = vunpack.c.h.b16 %v1767
      %v3219 = vunpack.c.l.b16 %v1768
      %v3220 = vunpack.c.h.b16 %v1768
      %v3221 = vunpack.c.l.b16 %v1769
      %v3222 = vunpack.c.h.b16 %v1769
      %v3223 = vunpack.c.l.b16 %v1770
      %v3224 = vunpack.c.h.b16 %v1770
      %v3225 = vunpack.c.l.b16 %v1771
      %v3226 = vunpack.c.h.b16 %v1771
      %v3227 = vunpack.c.l.b16 %v1772
      %v3228 = vunpack.c.h.b16 %v1772
      %v3229 = vunpack.c.l.b16 %v1773
      %v3230 = vunpack.c.h.b16 %v1773
      %v3231 = vunpack.c.l.b16 %v1774
      %v3232 = vunpack.c.h.b16 %v1774
      %v3233 = vunpack.c.l.b16 %v1775
      %v3234 = vunpack.c.h.b16 %v1775
      %v3235 = vunpack.c.l.b16 %v1776
      %v3236 = vunpack.c.h.b16 %v1776
      %v3237 = vunpack.c.l.b16 %v1777
      %v3238 = vunpack.c.h.b16 %v1777
      %v3239 = vunpack.c.l.b16 %v1778
      %v3240 = vunpack.c.h.b16 %v1778
      %v3241 = vunpack.c.l.b16 %v1779
      %v3242 = vunpack.c.h.b16 %v1779
      %v3243 = vunpack.c.l.b16 %v1780
      %v3244 = vunpack.c.h.b16 %v1780
      %v3245 = vunpack.c.l.b16 %v1781
      %v3246 = vunpack.c.h.b16 %v1781
      %v3247 = vunpack.c.l.b16 %v1782
      %v3248 = vunpack.c.h.b16 %v1782
      %v3249 = vunpack.c.l.b16 %v1783
      %v3250 = vunpack.c.h.b16 %v1783
      %v3251 = vunpack.c.l.b16 %v1784
      %v3252 = vunpack.c.h.b16 %v1784
      %v3253 = vunpack.c.l.b16 %v1785
      %v3254 = vunpack.c.h.b16 %v1785
      %v3255 = vunpack.c.l.b16 %v1786
      %v3256 = vunpack.c.h.b16 %v1786
      %v3257 = vunpack.c.l.b16 %v1787
      %v3258 = vunpack.c.h.b16 %v1787
      %v3259 = vunpack.c.l.b16 %v1788
      %v3260 = vunpack.c.h.b16 %v1788
      %v3261 = vunpack.c.l.b16 %v1789
      %v3262 = vunpack.c.h.b16 %v1789
      %v3263 = vunpack.c.l.b16 %v1790
      %v3264 = vunpack.c.h.b16 %v1790
      %v3265 = vunpack.c.l.b16 %v1791
      %v3266 = vunpack.c.h.b16 %v1791
      %v3267 = vunpack.c.l.b16 %v1792
      %v3268 = vunpack.c.h.b16 %v1792
      %v3269 = vunpack.c.l.b16 %v1793
      %v3270 = vunpack.c.h.b16 %v1793
      %v3271 = vunpack.c.l.b16 %v1794
      %v3272 = vunpack.c.h.b16 %v1794
      %v3273 = vunpack.c.l.b16 %v1795
      %v3274 = vunpack.c.h.b16 %v1795
      %v3275 = vunpack.c.l.b16 %v1796
      %v3276 = vunpack.c.h.b16 %v1796
      %v3277 = vunpack.c.l.b16 %v1797
      %v3278 = vunpack.c.h.b16 %v1797
      %v3279 = vunpack.c.l.b16 %v1798
      %v3280 = vunpack.c.h.b16 %v1798
      %v3281 = vunpack.c.l.b16 %v1799
      %v3282 = vunpack.c.h.b16 %v1799
      %v3283 = vunpack.c.l.b16 %v1800
      %v3284 = vunpack.c.h.b16 %v1800
      %v3285 = vunpack.c.l.b16 %v1801
      %v3286 = vunpack.c.h.b16 %v1801
      %v3287 = vunpack.c.l.b16 %v1802
      %v3288 = vunpack.c.h.b16 %v1802
      %v3289 = vunpack.c.l.b16 %v1803
      %v3290 = vunpack.c.h.b16 %v1803
      %v3291 = vunpack.c.l.b16 %v1804
      %v3292 = vunpack.c.h.b16 %v1804
      %v3293 = vunpack.c.l.b16 %v1805
      %v3294 = vunpack.c.h.b16 %v1805
      %v3295 = vunpack.c.l.b16 %v1806
      %v3296 = vunpack.c.h.b16 %v1806
      %v3297 = vunpack.c.l.b16 %v1807
      %v3298 = vunpack.c.h.b16 %v1807
      %v3299 = vunpack.c.l.b16 %v1808
      %v3300 = vunpack.c.h.b16 %v1808
      %v3301 = vunpack.c.l.b16 %v1809
      %v3302 = vunpack.c.h.b16 %v1809
      %v3303 = vunpack.c.l.b16 %v1810
      %v3304 = vunpack.c.h.b16 %v1810
      %v3305 = vunpack.c.l.b16 %v1811
      %v3306 = vunpack.c.h.b16 %v1811
      %v3307 = vunpack.c.l.b16 %v1812
      %v3308 = vunpack.c.h.b16 %v1812
      %v3309 = vunpack.c.l.b16 %v1813
      %v3310 = vunpack.c.h.b16 %v1813
      %v3311 = vunpack.c.l.b16 %v1814
      %v3312 = vunpack.c.h.b16 %v1814
      %v3313 = vunpack.c.l.b16 %v1815
      %v3314 = vunpack.c.h.b16 %v1815
      %v3315 = vunpack.c.l.b16 %v1816
      %v3316 = vunpack.c.h.b16 %v1816
      %v3317 = vunpack.c.l.b16 %v1817
      %v3318 = vunpack.c.h.b16 %v1817
      %v3319 = vunpack.c.l.b16 %v1818
      %v3320 = vunpack.c.h.b16 %v1818
      %v3321 = vunpack.c.l.b16 %v1819
      %v3322 = vunpack.c.h.b16 %v1819
      %v3323 = vunpack.c.l.b16 %v1820
      %v3324 = vunpack.c.h.b16 %v1820
      %v3325 = vunpack.c.l.b16 %v1821
      %v3326 = vunpack.c.h.b16 %v1821
      %v3327 = vunpack.c.l.b16 %v1822
      %v3328 = vunpack.c.h.b16 %v1822
      %v3329 = vunpack.c.l.b16 %v1823
      %v3330 = vunpack.c.h.b16 %v1823
      %v3331 = vunpack.c.l.b16 %v1824
      %v3332 = vunpack.c.h.b16 %v1824
      %v3333 = vunpack.c.l.b16 %v1825
      %v3334 = vunpack.c.h.b16 %v1825
      %v3335 = vunpack.c.l.b16 %v1826
      %v3336 = vunpack.c.h.b16 %v1826
      %v3337 = vunpack.c.l.b16 %v1827
      %v3338 = vunpack.c.h.b16 %v1827
      %v3339 = vunpack.c.l.b16 %v1828
      %v3340 = vunpack.c.h.b16 %v1828
      %v3341 = vunpack.c.l.b16 %v1829
      %v3342 = vunpack.c.h.b16 %v1829
      %v3343 = vunpack.c.l.b16 %v1830
      %v3344 = vunpack.c.h.b16 %v1830
      %v3345 = vunpack.c.l.b16 %v1831
      %v3346 = vunpack.c.h.b16 %v1831
      %v3347 = vunpack.c.l.b16 %v1832
      %v3348 = vunpack.c.h.b16 %v1832
      %v3349 = vunpack.c.l.b16 %v1833
      %v3350 = vunpack.c.h.b16 %v1833
      %v3351 = vunpack.c.l.b16 %v1834
      %v3352 = vunpack.c.h.b16 %v1834
      %v3353 = vunpack.c.l.b16 %v1835
      %v3354 = vunpack.c.h.b16 %v1835
      %v3355 = vunpack.c.l.b16 %v1836
      %v3356 = vunpack.c.h.b16 %v1836
      %v3357 = vunpack.c.l.b16 %v1837
      %v3358 = vunpack.c.h.b16 %v1837
      %v3359 = vunpack.c.l.b16 %v1838
      %v3360 = vunpack.c.h.b16 %v1838
      %v3361 = vunpack.c.l.b16 %v1839
      %v3362 = vunpack.c.h.b16 %v1839
      %v3363 = vunpack.c.l.b16 %v1840
      %v3364 = vunpack.c.h.b16 %v1840
      %v3365 = vunpack.c.l.b16 %v1841
      %v3366 = vunpack.c.h.b16 %v1841
      %v3367 = vunpack.c.l.b16 %v1842
      %v3368 = vunpack.c.h.b16 %v1842
      %v3369 = vunpack.c.l.b16 %v1843
      %v3370 = vunpack.c.h.b16 %v1843
      %v3371 = vunpack.c.l.b16 %v1844
      %v3372 = vunpack.c.h.b16 %v1844
      %v3373 = vunpack.c.l.b16 %v1845
      %v3374 = vunpack.c.h.b16 %v1845
      %v3375 = vunpack.c.l.b16 %v1846
      %v3376 = vunpack.c.h.b16 %v1846
      %v3377 = vunpack.c.l.b16 %v1847
      %v3378 = vunpack.c.h.b16 %v1847
      %v3379 = vunpack.c.l.b16 %v1848
      %v3380 = vunpack.c.h.b16 %v1848
      %v3381 = vunpack.c.l.b16 %v1849
      %v3382 = vunpack.c.h.b16 %v1849
      %v3383 = vunpack.c.l.b16 %v1850
      %v3384 = vunpack.c.h.b16 %v1850
      %v3385 = vunpack.c.l.b16 %v1851
      %v3386 = vunpack.c.h.b16 %v1851
      %v3387 = vunpack.c.l.b16 %v1852
      %v3388 = vunpack.c.h.b16 %v1852
      %v3389 = vunpack.c.l.b16 %v1853
      %v3390 = vunpack.c.h.b16 %v1853
      %v3391 = vunpack.c.l.b16 %v1854
      %v3392 = vunpack.c.h.b16 %v1854
      %v3393 = vunpack.c.l.b16 %v1855
      %v3394 = vunpack.c.h.b16 %v1855
      %v3395 = vunpack.c.l.b16 %v1856
      %v3396 = vunpack.c.h.b16 %v1856
      %v3397 = vunpack.c.l.b16 %v1857
      %v3398 = vunpack.c.h.b16 %v1857
      %v3399 = vunpack.c.l.b16 %v1858
      %v3400 = vunpack.c.h.b16 %v1858
      %v3401 = vunpack.c.l.b16 %v1859
      %v3402 = vunpack.c.h.b16 %v1859
      %v3403 = vunpack.c.l.b16 %v1860
      %v3404 = vunpack.c.h.b16 %v1860
      %v3405 = vunpack.c.l.b16 %v1861
      %v3406 = vunpack.c.h.b16 %v1861
      %v3407 = vunpack.c.l.b16 %v1862
      %v3408 = vunpack.c.h.b16 %v1862
      %v3409 = vunpack.c.l.b16 %v1863
      %v3410 = vunpack.c.h.b16 %v1863
      %v3411 = vunpack.c.l.b16 %v1864
      %v3412 = vunpack.c.h.b16 %v1864
      %v3413 = vunpack.c.l.b16 %v1865
      %v3414 = vunpack.c.h.b16 %v1865
      %v3415 = vunpack.c.l.b16 %v1866
      %v3416 = vunpack.c.h.b16 %v1866
      %v3417 = vunpack.c.l.b16 %v1867
      %v3418 = vunpack.c.h.b16 %v1867
      %v3419 = vunpack.c.l.b16 %v1868
      %v3420 = vunpack.c.h.b16 %v1868
      %v3421 = vunpack.c.l.b16 %v1869
      %v3422 = vunpack.c.h.b16 %v1869
      %v3423 = vunpack.c.l.b16 %v1870
      %v3424 = vunpack.c.h.b16 %v1870
      %v3425 = vunpack.c.l.b16 %v1871
      %v3426 = vunpack.c.h.b16 %v1871
      %v3427 = vunpack.c.l.b16 %v1872
      %v3428 = vunpack.c.h.b16 %v1872
      %v3429 = vunpack.c.l.b16 %v1873
      %v3430 = vunpack.c.h.b16 %v1873
      %v3431 = vunpack.c.l.b16 %v1874
      %v3432 = vunpack.c.h.b16 %v1874
      %v3433 = vpack.c.b16 %v2413, %v2409
      %v3434 = vpack.c.b16 %v2414, %v2410
      %v3435 = vpack.c.b16 %v2415, %v2411
      %v3436 = vpack.c.b16 %v2416, %v2412
      %v3437 = vpack.c.b16 %v2421, %v2417
      %v3438 = vpack.c.b16 %v2422, %v2418
      %v3439 = vpack.c.b16 %v2423, %v2419
      %v3440 = vpack.c.b16 %v2424, %v2420
      %v3441 = vpack.c.b16 %v2429, %v2425
      %v3442 = vpack.c.b16 %v2430, %v2426
      %v3443 = vpack.c.b16 %v2431, %v2427
      %v3444 = vpack.c.b16 %v2432, %v2428
      %v3445 = vpack.c.b16 %v2437, %v2433
      %v3446 = vpack.c.b16 %v2438, %v2434
      %v3447 = vpack.c.b16 %v2439, %v2435
      %v3448 = vpack.c.b16 %v2440, %v2436
      %v3449 = vpack.c.b16 %v2445, %v2441
      %v3450 = vpack.c.b16 %v2446, %v2442
      %v3451 = vpack.c.b16 %v2447, %v2443
      %v3452 = vpack.c.b16 %v2448, %v2444
      %v3453 = vpack.c.b16 %v2453, %v2449
      %v3454 = vpack.c.b16 %v2454, %v2450
      %v3455 = vpack.c.b16 %v2455, %v2451
      %v3456 = vpack.c.b16 %v2456, %v2452
      %v3457 = vpack.c.b16 %v2461, %v2457
      %v3458 = vpack.c.b16 %v2462, %v2458
      %v3459 = vpack.c.b16 %v2463, %v2459
      %v3460 = vpack.c.b16 %v2464, %v2460
      %v3461 = vpack.c.b16 %v2469, %v2465
      %v3462 = vpack.c.b16 %v2470, %v2466
      %v3463 = vpack.c.b16 %v2471, %v2467
      %v3464 = vpack.c.b16 %v2472, %v2468
      %v3465 = vpack.c.b16 %v2477, %v2473
      %v3466 = vpack.c.b16 %v2478, %v2474
      %v3467 = vpack.c.b16 %v2479, %v2475
      %v3468 = vpack.c.b16 %v2480, %v2476
      %v3469 = vpack.c.b16 %v2485, %v2481
      %v3470 = vpack.c.b16 %v2486, %v2482
      %v3471 = vpack.c.b16 %v2487, %v2483
      %v3472 = vpack.c.b16 %v2488, %v2484
      %v3473 = vpack.c.b16 %v2493, %v2489
      %v3474 = vpack.c.b16 %v2494, %v2490
      %v3475 = vpack.c.b16 %v2495, %v2491
      %v3476 = vpack.c.b16 %v2496, %v2492
      %v3477 = vpack.c.b16 %v2501, %v2497
      %v3478 = vpack.c.b16 %v2502, %v2498
      %v3479 = vpack.c.b16 %v2503, %v2499
      %v3480 = vpack.c.b16 %v2504, %v2500
      %v3481 = vpack.c.b16 %v2509, %v2505
      %v3482 = vpack.c.b16 %v2510, %v2506
      %v3483 = vpack.c.b16 %v2511, %v2507
      %v3484 = vpack.c.b16 %v2512, %v2508
      %v3485 = vpack.c.b16 %v2517, %v2513
      %v3486 = vpack.c.b16 %v2518, %v2514
      %v3487 = vpack.c.b16 %v2519, %v2515
      %v3488 = vpack.c.b16 %v2520, %v2516
      %v3489 = vpack.c.b16 %v2525, %v2521
      %v3490 = vpack.c.b16 %v2526, %v2522
      %v3491 = vpack.c.b16 %v2527, %v2523
      %v3492 = vpack.c.b16 %v2528, %v2524
      %v3493 = vpack.c.b16 %v2533, %v2529
      %v3494 = vpack.c.b16 %v2534, %v2530
      %v3495 = vpack.c.b16 %v2535, %v2531
      %v3496 = vpack.c.b16 %v2536, %v2532
      %v3497 = vpack.c.b16 %v2541, %v2537
      %v3498 = vpack.c.b16 %v2542, %v2538
      %v3499 = vpack.c.b16 %v2543, %v2539
      %v3500 = vpack.c.b16 %v2544, %v2540
      %v3501 = vpack.c.b16 %v2549, %v2545
      %v3502 = vpack.c.b16 %v2550, %v2546
      %v3503 = vpack.c.b16 %v2551, %v2547
      %v3504 = vpack.c.b16 %v2552, %v2548
      %v3505 = vpack.c.b16 %v2557, %v2553
      %v3506 = vpack.c.b16 %v2558, %v2554
      %v3507 = vpack.c.b16 %v2559, %v2555
      %v3508 = vpack.c.b16 %v2560, %v2556
      %v3509 = vpack.c.b16 %v2565, %v2561
      %v3510 = vpack.c.b16 %v2566, %v2562
      %v3511 = vpack.c.b16 %v2567, %v2563
      %v3512 = vpack.c.b16 %v2568, %v2564
      %v3513 = vpack.c.b16 %v2573, %v2569
      %v3514 = vpack.c.b16 %v2574, %v2570
      %v3515 = vpack.c.b16 %v2575, %v2571
      %v3516 = vpack.c.b16 %v2576, %v2572
      %v3517 = vpack.c.b16 %v2581, %v2577
      %v3518 = vpack.c.b16 %v2582, %v2578
      %v3519 = vpack.c.b16 %v2583, %v2579
      %v3520 = vpack.c.b16 %v2584, %v2580
      %v3521 = vpack.c.b16 %v2589, %v2585
      %v3522 = vpack.c.b16 %v2590, %v2586
      %v3523 = vpack.c.b16 %v2591, %v2587
      %v3524 = vpack.c.b16 %v2592, %v2588
      %v3525 = vpack.c.b16 %v2597, %v2593
      %v3526 = vpack.c.b16 %v2598, %v2594
      %v3527 = vpack.c.b16 %v2599, %v2595
      %v3528 = vpack.c.b16 %v2600, %v2596
      %v3529 = vpack.c.b16 %v2605, %v2601
      %v3530 = vpack.c.b16 %v2606, %v2602
      %v3531 = vpack.c.b16 %v2607, %v2603
      %v3532 = vpack.c.b16 %v2608, %v2604
      %v3533 = vpack.c.b16 %v2613, %v2609
      %v3534 = vpack.c.b16 %v2614, %v2610
      %v3535 = vpack.c.b16 %v2615, %v2611
      %v3536 = vpack.c.b16 %v2616, %v2612
      %v3537 = vpack.c.b16 %v2621, %v2617
      %v3538 = vpack.c.b16 %v2622, %v2618
      %v3539 = vpack.c.b16 %v2623, %v2619
      %v3540 = vpack.c.b16 %v2624, %v2620
      %v3541 = vpack.c.b16 %v2629, %v2625
      %v3542 = vpack.c.b16 %v2630, %v2626
      %v3543 = vpack.c.b16 %v2631, %v2627
      %v3544 = vpack.c.b16 %v2632, %v2628
      %v3545 = vpack.c.b16 %v2637, %v2633
      %v3546 = vpack.c.b16 %v2638, %v2634
      %v3547 = vpack.c.b16 %v2639, %v2635
      %v3548 = vpack.c.b16 %v2640, %v2636
      %v3549 = vpack.c.b16 %v2645, %v2641
      %v3550 = vpack.c.b16 %v2646, %v2642
      %v3551 = vpack.c.b16 %v2647, %v2643
      %v3552 = vpack.c.b16 %v2648, %v2644
      %v3553 = vpack.c.b16 %v2653, %v2649
      %v3554 = vpack.c.b16 %v2654, %v2650
      %v3555 = vpack.c.b16 %v2655, %v2651
      %v3556 = vpack.c.b16 %v2656, %v2652
      %v3557 = vpack.c.b16 %v2661, %v2657
      %v3558 = vpack.c.b16 %v2662, %v2658
      %v3559 = vpack.c.b16 %v2663, %v2659
      %v3560 = vpack.c.b16 %v2664, %v2660
      %v3561 = vpack.c.b16 %v2669, %v2665
      %v3562 = vpack.c.b16 %v2670, %v2666
      %v3563 = vpack.c.b16 %v2671, %v2667
      %v3564 = vpack.c.b16 %v2672, %v2668
      %v3565 = vpack.c.b16 %v2677, %v2673
      %v3566 = vpack.c.b16 %v2678, %v2674
      %v3567 = vpack.c.b16 %v2679, %v2675
      %v3568 = vpack.c.b16 %v2680, %v2676
      %v3569 = vpack.c.b16 %v2685, %v2681
      %v3570 = vpack.c.b16 %v2686, %v2682
      %v3571 = vpack.c.b16 %v2687, %v2683
      %v3572 = vpack.c.b16 %v2688, %v2684
      %v3573 = vpack.c.b16 %v2693, %v2689
      %v3574 = vpack.c.b16 %v2694, %v2690
      %v3575 = vpack.c.b16 %v2695, %v2691
      %v3576 = vpack.c.b16 %v2696, %v2692
      %v3577 = vpack.c.b16 %v2701, %v2697
      %v3578 = vpack.c.b16 %v2702, %v2698
      %v3579 = vpack.c.b16 %v2703, %v2699
      %v3580 = vpack.c.b16 %v2704, %v2700
      %v3581 = vpack.c.b16 %v2709, %v2705
      %v3582 = vpack.c.b16 %v2710, %v2706
      %v3583 = vpack.c.b16 %v2711, %v2707
      %v3584 = vpack.c.b16 %v2712, %v2708
      %v3585 = vpack.c.b16 %v2717, %v2713
      %v3586 = vpack.c.b16 %v2718, %v2714
      %v3587 = vpack.c.b16 %v2719, %v2715
      %v3588 = vpack.c.b16 %v2720, %v2716
      %v3589 = vpack.c.b16 %v2725, %v2721
      %v3590 = vpack.c.b16 %v2726, %v2722
      %v3591 = vpack.c.b16 %v2727, %v2723
      %v3592 = vpack.c.b16 %v2728, %v2724
      %v3593 = vpack.c.b16 %v2733, %v2729
      %v3594 = vpack.c.b16 %v2734, %v2730
      %v3595 = vpack.c.b16 %v2735, %v2731
      %v3596 = vpack.c.b16 %v2736, %v2732
      %v3597 = vpack.c.b16 %v2741, %v2737
      %v3598 = vpack.c.b16 %v2742, %v2738
      %v3599 = vpack.c.b16 %v2743, %v2739
      %v3600 = vpack.c.b16 %v2744, %v2740
      %v3601 = vpack.c.b16 %v2749, %v2745
      %v3602 = vpack.c.b16 %v2750, %v2746
      %v3603 = vpack.c.b16 %v2751, %v2747
      %v3604 = vpack.c.b16 %v2752, %v2748
      %v3605 = vpack.c.b16 %v2757, %v2753
      %v3606 = vpack.c.b16 %v2758, %v2754
      %v3607 = vpack.c.b16 %v2759, %v2755
      %v3608 = vpack.c.b16 %v2760, %v2756
      %v3609 = vpack.c.b16 %v2765, %v2761
      %v3610 = vpack.c.b16 %v2766, %v2762
      %v3611 = vpack.c.b16 %v2767, %v2763
      %v3612 = vpack.c.b16 %v2768, %v2764
      %v3613 = vpack.c.b16 %v2773, %v2769
      %v3614 = vpack.c.b16 %v2774, %v2770
      %v3615 = vpack.c.b16 %v2775, %v2771
      %v3616 = vpack.c.b16 %v2776, %v2772
      %v3617 = vpack.c.b16 %v2781, %v2777
      %v3618 = vpack.c.b16 %v2782, %v2778
      %v3619 = vpack.c.b16 %v2783, %v2779
      %v3620 = vpack.c.b16 %v2784, %v2780
      %v3621 = vpack.c.b16 %v2789, %v2785
      %v3622 = vpack.c.b16 %v2790, %v2786
      %v3623 = vpack.c.b16 %v2791, %v2787
      %v3624 = vpack.c.b16 %v2792, %v2788
      %v3625 = vpack.c.b16 %v2797, %v2793
      %v3626 = vpack.c.b16 %v2798, %v2794
      %v3627 = vpack.c.b16 %v2799, %v2795
      %v3628 = vpack.c.b16 %v2800, %v2796
      %v3629 = vpack.c.b16 %v2805, %v2801
      %v3630 = vpack.c.b16 %v2806, %v2802
      %v3631 = vpack.c.b16 %v2807, %v2803
      %v3632 = vpack.c.b16 %v2808, %v2804
      %v3633 = vpack.c.b16 %v2813, %v2809
      %v3634 = vpack.c.b16 %v2814, %v2810
      %v3635 = vpack.c.b16 %v2815, %v2811
      %v3636 = vpack.c.b16 %v2816, %v2812
      %v3637 = vpack.c.b16 %v2821, %v2817
      %v3638 = vpack.c.b16 %v2822, %v2818
      %v3639 = vpack.c.b16 %v2823, %v2819
      %v3640 = vpack.c.b16 %v2824, %v2820
      %v3641 = vpack.c.b16 %v2829, %v2825
      %v3642 = vpack.c.b16 %v2830, %v2826
      %v3643 = vpack.c.b16 %v2831, %v2827
      %v3644 = vpack.c.b16 %v2832, %v2828
      %v3645 = vpack.c.b16 %v2837, %v2833
      %v3646 = vpack.c.b16 %v2838, %v2834
      %v3647 = vpack.c.b16 %v2839, %v2835
      %v3648 = vpack.c.b16 %v2840, %v2836
      %v3649 = vpack.c.b16 %v2845, %v2841
      %v3650 = vpack.c.b16 %v2846, %v2842
      %v3651 = vpack.c.b16 %v2847, %v2843
      %v3652 = vpack.c.b16 %v2848, %v2844
      %v3653 = vpack.c.b16 %v2853, %v2849
      %v3654 = vpack.c.b16 %v2854, %v2850
      %v3655 = vpack.c.b16 %v2855, %v2851
      %v3656 = vpack.c.b16 %v2856, %v2852
      %v3657 = vpack.c.b16 %v2861, %v2857
      %v3658 = vpack.c.b16 %v2862, %v2858
      %v3659 = vpack.c.b16 %v2863, %v2859
      %v3660 = vpack.c.b16 %v2864, %v2860
      %v3661 = vpack.c.b16 %v2869, %v2865
      %v3662 = vpack.c.b16 %v2870, %v2866
      %v3663 = vpack.c.b16 %v2871, %v2867
      %v3664 = vpack.c.b16 %v2872, %v2868
      %v3665 = vpack.c.b16 %v2877, %v2873
      %v3666 = vpack.c.b16 %v2878, %v2874
      %v3667 = vpack.c.b16 %v2879, %v2875
      %v3668 = vpack.c.b16 %v2880, %v2876
      %v3669 = vpack.c.b16 %v2885, %v2881
      %v3670 = vpack.c.b16 %v2886, %v2882
      %v3671 = vpack.c.b16 %v2887, %v2883
      %v3672 = vpack.c.b16 %v2888, %v2884
      %v3673 = vpack.c.b16 %v2893, %v2889
      %v3674 = vpack.c.b16 %v2894, %v2890
      %v3675 = vpack.c.b16 %v2895, %v2891
      %v3676 = vpack.c.b16 %v2896, %v2892
      %v3677 = vpack.c.b16 %v2901, %v2897
      %v3678 = vpack.c.b16 %v2902, %v2898
      %v3679 = vpack.c.b16 %v2903, %v2899
      %v3680 = vpack.c.b16 %v2904, %v2900
      %v3681 = vpack.c.b16 %v2909, %v2905
      %v3682 = vpack.c.b16 %v2910, %v2906
      %v3683 = vpack.c.b16 %v2911, %v2907
      %v3684 = vpack.c.b16 %v2912, %v2908
      %v3685 = vpack.c.b16 %v2917, %v2913
      %v3686 = vpack.c.b16 %v2918, %v2914
      %v3687 = vpack.c.b16 %v2919, %v2915
      %v3688 = vpack.c.b16 %v2920, %v2916
      %v3689 = vpack.c.b16 %v2925, %v2921
      %v3690 = vpack.c.b16 %v2926, %v2922
      %v3691 = vpack.c.b16 %v2927, %v2923
      %v3692 = vpack.c.b16 %v2928, %v2924
      %v3693 = vpack.c.b16 %v2933, %v2929
      %v3694 = vpack.c.b16 %v2934, %v2930
      %v3695 = vpack.c.b16 %v2935, %v2931
      %v3696 = vpack.c.b16 %v2936, %v2932
      %v3697 = vpack.c.b16 %v2941, %v2937
      %v3698 = vpack.c.b16 %v2942, %v2938
      %v3699 = vpack.c.b16 %v2943, %v2939
      %v3700 = vpack.c.b16 %v2944, %v2940
      %v3701 = vpack.c.b16 %v2949, %v2945
      %v3702 = vpack.c.b16 %v2950, %v2946
      %v3703 = vpack.c.b16 %v2951, %v2947
      %v3704 = vpack.c.b16 %v2952, %v2948
      %v3705 = vpack.c.b16 %v2957, %v2953
      %v3706 = vpack.c.b16 %v2958, %v2954
      %v3707 = vpack.c.b16 %v2959, %v2955
      %v3708 = vpack.c.b16 %v2960, %v2956
      %v3709 = vpack.c.b16 %v2965, %v2961
      %v3710 = vpack.c.b16 %v2966, %v2962
      %v3711 = vpack.c.b16 %v2967, %v2963
      %v3712 = vpack.c.b16 %v2968, %v2964
      %v3713 = vpack.c.b16 %v2973, %v2969
      %v3714 = vpack.c.b16 %v2974, %v2970
      %v3715 = vpack.c.b16 %v2975, %v2971
      %v3716 = vpack.c.b16 %v2976, %v2972
      %v3717 = vpack.c.b16 %v2981, %v2977
      %v3718 = vpack.c.b16 %v2982, %v2978
      %v3719 = vpack.c.b16 %v2983, %v2979
      %v3720 = vpack.c.b16 %v2984, %v2980
      %v3721 = vpack.c.b16 %v2989, %v2985
      %v3722 = vpack.c.b16 %v2990, %v2986
      %v3723 = vpack.c.b16 %v2991, %v2987
      %v3724 = vpack.c.b16 %v2992, %v2988
      %v3725 = vpack.c.b16 %v2997, %v2993
      %v3726 = vpack.c.b16 %v2998, %v2994
      %v3727 = vpack.c.b16 %v2999, %v2995
      %v3728 = vpack.c.b16 %v3000, %v2996
      %v3729 = vpack.c.b16 %v3005, %v3001
      %v3730 = vpack.c.b16 %v3006, %v3002
      %v3731 = vpack.c.b16 %v3007, %v3003
      %v3732 = vpack.c.b16 %v3008, %v3004
      %v3733 = vpack.c.b16 %v3013, %v3009
      %v3734 = vpack.c.b16 %v3014, %v3010
      %v3735 = vpack.c.b16 %v3015, %v3011
      %v3736 = vpack.c.b16 %v3016, %v3012
      %v3737 = vpack.c.b16 %v3021, %v3017
      %v3738 = vpack.c.b16 %v3022, %v3018
      %v3739 = vpack.c.b16 %v3023, %v3019
      %v3740 = vpack.c.b16 %v3024, %v3020
      %v3741 = vpack.c.b16 %v3029, %v3025
      %v3742 = vpack.c.b16 %v3030, %v3026
      %v3743 = vpack.c.b16 %v3031, %v3027
      %v3744 = vpack.c.b16 %v3032, %v3028
      %v3745 = vpack.c.b16 %v3037, %v3033
      %v3746 = vpack.c.b16 %v3038, %v3034
      %v3747 = vpack.c.b16 %v3039, %v3035
      %v3748 = vpack.c.b16 %v3040, %v3036
      %v3749 = vpack.c.b16 %v3045, %v3041
      %v3750 = vpack.c.b16 %v3046, %v3042
      %v3751 = vpack.c.b16 %v3047, %v3043
      %v3752 = vpack.c.b16 %v3048, %v3044
      %v3753 = vpack.c.b16 %v3053, %v3049
      %v3754 = vpack.c.b16 %v3054, %v3050
      %v3755 = vpack.c.b16 %v3055, %v3051
      %v3756 = vpack.c.b16 %v3056, %v3052
      %v3757 = vpack.c.b16 %v3061, %v3057
      %v3758 = vpack.c.b16 %v3062, %v3058
      %v3759 = vpack.c.b16 %v3063, %v3059
      %v3760 = vpack.c.b16 %v3064, %v3060
      %v3761 = vpack.c.b16 %v3069, %v3065
      %v3762 = vpack.c.b16 %v3070, %v3066
      %v3763 = vpack.c.b16 %v3071, %v3067
      %v3764 = vpack.c.b16 %v3072, %v3068
      %v3765 = vpack.c.b16 %v3077, %v3073
      %v3766 = vpack.c.b16 %v3078, %v3074
      %v3767 = vpack.c.b16 %v3079, %v3075
      %v3768 = vpack.c.b16 %v3080, %v3076
      %v3769 = vpack.c.b16 %v3085, %v3081
      %v3770 = vpack.c.b16 %v3086, %v3082
      %v3771 = vpack.c.b16 %v3087, %v3083
      %v3772 = vpack.c.b16 %v3088, %v3084
      %v3773 = vpack.c.b16 %v3093, %v3089
      %v3774 = vpack.c.b16 %v3094, %v3090
      %v3775 = vpack.c.b16 %v3095, %v3091
      %v3776 = vpack.c.b16 %v3096, %v3092
      %v3777 = vpack.c.b16 %v3101, %v3097
      %v3778 = vpack.c.b16 %v3102, %v3098
      %v3779 = vpack.c.b16 %v3103, %v3099
      %v3780 = vpack.c.b16 %v3104, %v3100
      %v3781 = vpack.c.b16 %v3109, %v3105
      %v3782 = vpack.c.b16 %v3110, %v3106
      %v3783 = vpack.c.b16 %v3111, %v3107
      %v3784 = vpack.c.b16 %v3112, %v3108
      %v3785 = vpack.c.b16 %v3117, %v3113
      %v3786 = vpack.c.b16 %v3118, %v3114
      %v3787 = vpack.c.b16 %v3119, %v3115
      %v3788 = vpack.c.b16 %v3120, %v3116
      %v3789 = vpack.c.b16 %v3125, %v3121
      %v3790 = vpack.c.b16 %v3126, %v3122
      %v3791 = vpack.c.b16 %v3127, %v3123
      %v3792 = vpack.c.b16 %v3128, %v3124
      %v3793 = vpack.c.b16 %v3133, %v3129
      %v3794 = vpack.c.b16 %v3134, %v3130
      %v3795 = vpack.c.b16 %v3135, %v3131
      %v3796 = vpack.c.b16 %v3136, %v3132
      %v3797 = vpack.c.b16 %v3141, %v3137
      %v3798 = vpack.c.b16 %v3142, %v3138
      %v3799 = vpack.c.b16 %v3143, %v3139
      %v3800 = vpack.c.b16 %v3144, %v3140
      %v3801 = vpack.c.b16 %v3149, %v3145
      %v3802 = vpack.c.b16 %v3150, %v3146
      %v3803 = vpack.c.b16 %v3151, %v3147
      %v3804 = vpack.c.b16 %v3152, %v3148
      %v3805 = vpack.c.b16 %v3157, %v3153
      %v3806 = vpack.c.b16 %v3158, %v3154
      %v3807 = vpack.c.b16 %v3159, %v3155
      %v3808 = vpack.c.b16 %v3160, %v3156
      %v3809 = vpack.c.b16 %v3165, %v3161
      %v3810 = vpack.c.b16 %v3166, %v3162
      %v3811 = vpack.c.b16 %v3167, %v3163
      %v3812 = vpack.c.b16 %v3168, %v3164
      %v3813 = vpack.c.b16 %v3173, %v3169
      %v3814 = vpack.c.b16 %v3174, %v3170
      %v3815 = vpack.c.b16 %v3175, %v3171
      %v3816 = vpack.c.b16 %v3176, %v3172
      %v3817 = vpack.c.b16 %v3181, %v3177
      %v3818 = vpack.c.b16 %v3182, %v3178
      %v3819 = vpack.c.b16 %v3183, %v3179
      %v3820 = vpack.c.b16 %v3184, %v3180
      %v3821 = vpack.c.b16 %v3189, %v3185
      %v3822 = vpack.c.b16 %v3190, %v3186
      %v3823 = vpack.c.b16 %v3191, %v3187
      %v3824 = vpack.c.b16 %v3192, %v3188
      %v3825 = vpack.c.b16 %v3197, %v3193
      %v3826 = vpack.c.b16 %v3198, %v3194
      %v3827 = vpack.c.b16 %v3199, %v3195
      %v3828 = vpack.c.b16 %v3200, %v3196
      %v3829 = vpack.c.b16 %v3205, %v3201
      %v3830 = vpack.c.b16 %v3206, %v3202
      %v3831 = vpack.c.b16 %v3207, %v3203
      %v3832 = vpack.c.b16 %v3208, %v3204
      %v3833 = vpack.c.b16 %v3213, %v3209
      %v3834 = vpack.c.b16 %v3214, %v3210
      %v3835 = vpack.c.b16 %v3215, %v3211
      %v3836 = vpack.c.b16 %v3216, %v3212
      %v3837 = vpack.c.b16 %v3221, %v3217
      %v3838 = vpack.c.b16 %v3222, %v3218
      %v3839 = vpack.c.b16 %v3223, %v3219
      %v3840 = vpack.c.b16 %v3224, %v3220
      %v3841 = vpack.c.b16 %v3229, %v3225
      %v3842 = vpack.c.b16 %v3230, %v3226
      %v3843 = vpack.c.b16 %v3231, %v3227
      %v3844 = vpack.c.b16 %v3232, %v3228
      %v3845 = vpack.c.b16 %v3237, %v3233
      %v3846 = vpack.c.b16 %v3238, %v3234
      %v3847 = vpack.c.b16 %v3239, %v3235
      %v3848 = vpack.c.b16 %v3240, %v3236
      %v3849 = vpack.c.b16 %v3245, %v3241
      %v3850 = vpack.c.b16 %v3246, %v3242
      %v3851 = vpack.c.b16 %v3247, %v3243
      %v3852 = vpack.c.b16 %v3248, %v3244
      %v3853 = vpack.c.b16 %v3253, %v3249
      %v3854 = vpack.c.b16 %v3254, %v3250
      %v3855 = vpack.c.b16 %v3255, %v3251
      %v3856 = vpack.c.b16 %v3256, %v3252
      %v3857 = vpack.c.b16 %v3261, %v3257
      %v3858 = vpack.c.b16 %v3262, %v3258
      %v3859 = vpack.c.b16 %v3263, %v3259
      %v3860 = vpack.c.b16 %v3264, %v3260
      %v3861 = vpack.c.b16 %v3269, %v3265
      %v3862 = vpack.c.b16 %v3270, %v3266
      %v3863 = vpack.c.b16 %v3271, %v3267
      %v3864 = vpack.c.b16 %v3272, %v3268
      %v3865 = vpack.c.b16 %v3277, %v3273
      %v3866 = vpack.c.b16 %v3278, %v3274
      %v3867 = vpack.c.b16 %v3279, %v3275
      %v3868 = vpack.c.b16 %v3280, %v3276
      %v3869 = vpack.c.b16 %v3285, %v3281
      %v3870 = vpack.c.b16 %v3286, %v3282
      %v3871 = vpack.c.b16 %v3287, %v3283
      %v3872 = vpack.c.b16 %v3288, %v3284
      %v3873 = vpack.c.b16 %v3293, %v3289
      %v3874 = vpack.c.b16 %v3294, %v3290
      %v3875 = vpack.c.b16 %v3295, %v3291
      %v3876 = vpack.c.b16 %v3296, %v3292
      %v3877 = vpack.c.b16 %v3301, %v3297
      %v3878 = vpack.c.b16 %v3302, %v3298
      %v3879 = vpack.c.b16 %v3303, %v3299
      %v3880 = vpack.c.b16 %v3304, %v3300
      %v3881 = vpack.c.b16 %v3309, %v3305
      %v3882 = vpack.c.b16 %v3310, %v3306
      %v3883 = vpack.c.b16 %v3311, %v3307
      %v3884 = vpack.c.b16 %v3312, %v3308
      %v3885 = vpack.c.b16 %v3317, %v3313
      %v3886 = vpack.c.b16 %v3318, %v3314
      %v3887 = vpack.c.b16 %v3319, %v3315
      %v3888 = vpack.c.b16 %v3320, %v3316
      %v3889 = vpack.c.b16 %v3325, %v3321
      %v3890 = vpack.c.b16 %v3326, %v3322
      %v3891 = vpack.c.b16 %v3327, %v3323
      %v3892 = vpack.c.b16 %v3328, %v3324
      %v3893 = vpack.c.b16 %v3333, %v3329
      %v3894 = vpack.c.b16 %v3334, %v3330
      %v3895 = vpack.c.b16 %v3335, %v3331
      %v3896 = vpack.c.b16 %v3336, %v3332
      %v3897 = vpack.c.b16 %v3341, %v3337
      %v3898 = vpack.c.b16 %v3342, %v3338
      %v3899 = vpack.c.b16 %v3343, %v3339
      %v3900 = vpack.c.b16 %v3344, %v3340
      %v3901 = vpack.c.b16 %v3349, %v3345
      %v3902 = vpack.c.b16 %v3350, %v3346
      %v3903 = vpack.c.b16 %v3351, %v3347
      %v3904 = vpack.c.b16 %v3352, %v3348
      %v3905 = vpack.c.b16 %v3357, %v3353
      %v3906 = vpack.c.b16 %v3358, %v3354
      %v3907 = vpack.c.b16 %v3359, %v3355
      %v3908 = vpack.c.b16 %v3360, %v3356
      %v3909 = vpack.c.b16 %v3365, %v3361
      %v3910 = vpack.c.b16 %v3366, %v3362
      %v3911 = vpack.c.b16 %v3367, %v3363
      %v3912 = vpack.c.b16 %v3368, %v3364
      %v3913 = vpack.c.b16 %v3373, %v3369
      %v3914 = vpack.c.b16 %v3374, %v3370
      %v3915 = vpack.c.b16 %v3375, %v3371
      %v3916 = vpack.c.b16 %v3376, %v3372
      %v3917 = vpack.c.b16 %v3381, %v3377
      %v3918 = vpack.c.b16 %v3382, %v3378
      %v3919 = vpack.c.b16 %v3383, %v3379
      %v3920 = vpack.c.b16 %v3384, %v3380
      %v3921 = vpack.c.b16 %v3389, %v3385
      %v3922 = vpack.c.b16 %v3390, %v3386
      %v3923 = vpack.c.b16 %v3391, %v3387
      %v3924 = vpack.c.b16 %v3392, %v3388
      %v3925 = vpack.c.b16 %v3397, %v3393
      %v3926 = vpack.c.b16 %v3398, %v3394
      %v3927 = vpack.c.b16 %v3399, %v3395
      %v3928 = vpack.c.b16 %v3400, %v3396
      %v3929 = vpack.c.b16 %v3405, %v3401
      %v3930 = vpack.c.b16 %v3406, %v3402
      %v3931 = vpack.c.b16 %v3407, %v3403
      %v3932 = vpack.c.b16 %v3408, %v3404
      %v3933 = vpack.c.b16 %v3413, %v3409
      %v3934 = vpack.c.b16 %v3414, %v3410
      %v3935 = vpack.c.b16 %v3415, %v3411
      %v3936 = vpack.c.b16 %v3416, %v3412
      %v3937 = vpack.c.b16 %v3421, %v3417
      %v3938 = vpack.c.b16 %v3422, %v3418
      %v3939 = vpack.c.b16 %v3423, %v3419
      %v3940 = vpack.c.b16 %v3424, %v3420
      %v3941 = vpack.c.b16 %v3429, %v3425
      %v3942 = vpack.c.b16 %v3430, %v3426
      %v3943 = vpack.c.b16 %v3431, %v3427
      %v3944 = vpack.c.b16 %v3432, %v3428
      %4457 = vmatprep.subr.bf16.mxu0 %v3434
      %4458 = vmatpush1.bf16.msra.mxu0 %v3433
      %4459 = vmatprep.subr.bf16.mxu0 %v3438
      %4460 = vmatpush1.bf16.msra.mxu0 %v3437
      %4461 = vmatprep.subr.bf16.mxu0 %v3442
      %4462 = vmatpush1.bf16.msra.mxu0 %v3441
      %4463 = vmatprep.subr.bf16.mxu0 %v3446
      %4464 = vmatpush1.bf16.msra.mxu0 %v3445
      %4465 = vmatprep.subr.bf16.mxu0 %v3450
      %4466 = vmatpush1.bf16.msra.mxu0 %v3449
      %4467 = vmatprep.subr.bf16.mxu0 %v3454
      %4468 = vmatpush1.bf16.msra.mxu0 %v3453
      %4469 = vmatprep.subr.bf16.mxu0 %v3458
      %4470 = vmatpush1.bf16.msra.mxu0 %v3457
      %4471 = vmatprep.subr.bf16.mxu0 %v3462
      %4472 = vmatpush1.bf16.msra.mxu0 %v3461
      %4473 = vmatprep.subr.bf16.mxu0 %v3466
      %4474 = vmatpush1.bf16.msra.mxu0 %v3465
      %4475 = vmatprep.subr.bf16.mxu0 %v3470
      %4476 = vmatpush1.bf16.msra.mxu0 %v3469
      %4477 = vmatprep.subr.bf16.mxu0 %v3474
      %4478 = vmatpush1.bf16.msra.mxu0 %v3473
      %4479 = vmatprep.subr.bf16.mxu0 %v3478
      %4480 = vmatpush1.bf16.msra.mxu0 %v3477
      %4481 = vmatprep.subr.bf16.mxu0 %v3482
      %4482 = vmatpush1.bf16.msra.mxu0 %v3481
      %4483 = vmatprep.subr.bf16.mxu0 %v3486
      %4484 = vmatpush1.bf16.msra.mxu0 %v3485
      %4485 = vmatprep.subr.bf16.mxu0 %v3490
      %4486 = vmatpush1.bf16.msra.mxu0 %v3489
      %4487 = vmatprep.subr.bf16.mxu0 %v3494
      %4488 = vmatpush1.bf16.msra.mxu0 %v3493
      %4489 = vmatprep.mubr.bf16.mxu0 %v1348
      %4490 = vmatmul.mubr.bf16.gmra.mrb[0].mxu0 %v1347
      %v4491 = vpop.f32.mrb[0].mxu0
      %v4492 = vadd.f32 %v1880, %v4491
      %v4493 = vpop.f32.mrb[0].mxu0
      %v4494 = vadd.f32 %v1884, %v4493
      %v4495 = vpop.f32.mrb[0].mxu0
      %v4496 = vpop.f32.mrb[0].mxu0
      %4497 = vdwg.mxu0
      %4498 = vmatprep.subr.bf16.mxu0 %v3498
      %4499 = vmatpush1.bf16.msra.mxu0 %v3497
      %4500 = vmatprep.subr.bf16.mxu0 %v3502
      %4501 = vmatpush1.bf16.msra.mxu0 %v3501
      %4502 = vmatprep.subr.bf16.mxu0 %v3506
      %4503 = vmatpush1.bf16.msra.mxu0 %v3505
      %4504 = vmatprep.subr.bf16.mxu0 %v3510
      %4505 = vmatpush1.bf16.msra.mxu0 %v3509
      %4506 = vmatprep.subr.bf16.mxu0 %v3514
      %4507 = vmatpush1.bf16.msra.mxu0 %v3513
      %4508 = vmatprep.subr.bf16.mxu0 %v3518
      %4509 = vmatpush1.bf16.msra.mxu0 %v3517
      %4510 = vmatprep.subr.bf16.mxu0 %v3522
      %4511 = vmatpush1.bf16.msra.mxu0 %v3521
      %4512 = vmatprep.subr.bf16.mxu0 %v3526
      %4513 = vmatpush1.bf16.msra.mxu0 %v3525
      %4514 = vmatprep.subr.bf16.mxu0 %v3530
      %4515 = vmatpush1.bf16.msra.mxu0 %v3529
      %4516 = vmatprep.subr.bf16.mxu0 %v3534
      %4517 = vmatpush1.bf16.msra.mxu0 %v3533
      %4518 = vmatprep.subr.bf16.mxu0 %v3538
      %4519 = vmatpush1.bf16.msra.mxu0 %v3537
      %4520 = vmatprep.subr.bf16.mxu0 %v3542
      %4521 = vmatpush1.bf16.msra.mxu0 %v3541
      %4522 = vmatprep.subr.bf16.mxu0 %v3546
      %4523 = vmatpush1.bf16.msra.mxu0 %v3545
      %4524 = vmatprep.subr.bf16.mxu0 %v3550
      %4525 = vmatpush1.bf16.msra.mxu0 %v3549
      %4526 = vmatprep.subr.bf16.mxu0 %v3554
      %4527 = vmatpush1.bf16.msra.mxu0 %v3553
      %4528 = vmatprep.subr.bf16.mxu0 %v3558
      %4529 = vmatpush1.bf16.msra.mxu0 %v3557
      %4530 = vmatprep.mubr.bf16.mxu0 %v1350
      %4531 = vmatmul.mubr.bf16.gmra.mrb[0].mxu0 %v1349
      %v4532 = vpop.f32.mrb[0].mxu0
      %v4533 = vadd.f32 %v4492, %v4532
      %v4534 = vpop.f32.mrb[0].mxu0
      %v4535 = vadd.f32 %v4494, %v4534
      %v4536 = vpop.f32.mrb[0].mxu0
      %v4537 = vpop.f32.mrb[0].mxu0
      %4538 = vdwg.mxu0
      %4539 = vmatprep.subr.bf16.mxu0 %v3562
      %4540 = vmatpush1.bf16.msra.mxu0 %v3561
      %4541 = vmatprep.subr.bf16.mxu0 %v3566
      %4542 = vmatpush1.bf16.msra.mxu0 %v3565
      %4543 = vmatprep.subr.bf16.mxu0 %v3570
      %4544 = vmatpush1.bf16.msra.mxu0 %v3569
      %4545 = vmatprep.subr.bf16.mxu0 %v3574
      %4546 = vmatpush1.bf16.msra.mxu0 %v3573
      %4547 = vmatprep.subr.bf16.mxu0 %v3578
      %4548 = vmatpush1.bf16.msra.mxu0 %v3577
      %4549 = vmatprep.subr.bf16.mxu0 %v3582
      %4550 = vmatpush1.bf16.msra.mxu0 %v3581
      %4551 = vmatprep.subr.bf16.mxu0 %v3586
      %4552 = vmatpush1.bf16.msra.mxu0 %v3585
      %4553 = vmatprep.subr.bf16.mxu0 %v3590
      %4554 = vmatpush1.bf16.msra.mxu0 %v3589
      %4555 = vmatprep.subr.bf16.mxu0 %v3594
      %4556 = vmatpush1.bf16.msra.mxu0 %v3593
      %4557 = vmatprep.subr.bf16.mxu0 %v3598
      %4558 = vmatpush1.bf16.msra.mxu0 %v3597
      %4559 = vmatprep.subr.bf16.mxu0 %v3602
      %4560 = vmatpush1.bf16.msra.mxu0 %v3601
      %4561 = vmatprep.subr.bf16.mxu0 %v3606
      %4562 = vmatpush1.bf16.msra.mxu0 %v3605
      %4563 = vmatprep.subr.bf16.mxu0 %v3610
      %4564 = vmatpush1.bf16.msra.mxu0 %v3609
      %4565 = vmatprep.subr.bf16.mxu0 %v3614
      %4566 = vmatpush1.bf16.msra.mxu0 %v3613
      %4567 = vmatprep.subr.bf16.mxu0 %v3618
      %4568 = vmatpush1.bf16.msra.mxu0 %v3617
      %4569 = vmatprep.subr.bf16.mxu0 %v3622
      %4570 = vmatpush1.bf16.msra.mxu0 %v3621
      %4571 = vmatprep.mubr.bf16.mxu0 %v1352
      %4572 = vmatmul.mubr.bf16.gmra.mrb[0].mxu0 %v1351
      %v4573 = vpop.f32.mrb[0].mxu0
      %v4574 = vadd.f32 %v4533, %v4573
      %v4575 = vpop.f32.mrb[0].mxu0
      %v4576 = vadd.f32 %v4535, %v4575
      %v4577 = vpop.f32.mrb[0].mxu0
      %v4578 = vpop.f32.mrb[0].mxu0
      %4579 = vdwg.mxu0
      %4580 = vmatprep.subr.bf16.mxu0 %v3626
      %4581 = vmatpush1.bf16.msra.mxu0 %v3625
      %4582 = vmatprep.subr.bf16.mxu0 %v3630
      %4583 = vmatpush1.bf16.msra.mxu0 %v3629
      %4584 = vmatprep.subr.bf16.mxu0 %v3634
      %4585 = vmatpush1.bf16.msra.mxu0 %v3633
      %4586 = vmatprep.subr.bf16.mxu0 %v3638
      %4587 = vmatpush1.bf16.msra.mxu0 %v3637
      %4588 = vmatprep.subr.bf16.mxu0 %v3642
      %4589 = vmatpush1.bf16.msra.mxu0 %v3641
      %4590 = vmatprep.subr.bf16.mxu0 %v3646
      %4591 = vmatpush1.bf16.msra.mxu0 %v3645
      %4592 = vmatprep.subr.bf16.mxu0 %v3650
      %4593 = vmatpush1.bf16.msra.mxu0 %v3649
      %4594 = vmatprep.subr.bf16.mxu0 %v3654
      %4595 = vmatpush1.bf16.msra.mxu0 %v3653
      %4596 = vmatprep.subr.bf16.mxu0 %v3658
      %4597 = vmatpush1.bf16.msra.mxu0 %v3657
      %4598 = vmatprep.subr.bf16.mxu0 %v3662
      %4599 = vmatpush1.bf16.msra.mxu0 %v3661
      %4600 = vmatprep.subr.bf16.mxu0 %v3666
      %4601 = vmatpush1.bf16.msra.mxu0 %v3665
      %4602 = vmatprep.subr.bf16.mxu0 %v3670
      %4603 = vmatpush1.bf16.msra.mxu0 %v3669
      %4604 = vmatprep.subr.bf16.mxu0 %v3674
      %4605 = vmatpush1.bf16.msra.mxu0 %v3673
      %4606 = vmatprep.subr.bf16.mxu0 %v3678
      %4607 = vmatpush1.bf16.msra.mxu0 %v3677
      %4608 = vmatprep.subr.bf16.mxu0 %v3682
      %4609 = vmatpush1.bf16.msra.mxu0 %v3681
      %4610 = vmatprep.subr.bf16.mxu0 %v3686
      %4611 = vmatpush1.bf16.msra.mxu0 %v3685
      %4612 = vmatprep.mubr.bf16.mxu0 %v1354
      %4613 = vmatmul.mubr.bf16.gmra.mrb[0].mxu0 %v1353
      %v4614 = vpop.f32.mrb[0].mxu0
      %v4615 = vadd.f32 %v4574, %v4614
      %v4616 = vpop.f32.mrb[0].mxu0
      %v4617 = vadd.f32 %v4576, %v4616
      %v4618 = vpop.f32.mrb[0].mxu0
      %v4619 = vpop.f32.mrb[0].mxu0
      %4620 = vdwg.mxu0
      %4621 = vmatprep.subr.bf16.mxu0 %v3690
      %4622 = vmatpush1.bf16.msra.mxu0 %v3689
      %4623 = vmatprep.subr.bf16.mxu0 %v3694
      %4624 = vmatpush1.bf16.msra.mxu0 %v3693
      %4625 = vmatprep.subr.bf16.mxu0 %v3698
      %4626 = vmatpush1.bf16.msra.mxu0 %v3697
      %4627 = vmatprep.subr.bf16.mxu0 %v3702
      %4628 = vmatpush1.bf16.msra.mxu0 %v3701
      %4629 = vmatprep.subr.bf16.mxu0 %v3706
      %4630 = vmatpush1.bf16.msra.mxu0 %v3705
      %4631 = vmatprep.subr.bf16.mxu0 %v3710
      %4632 = vmatpush1.bf16.msra.mxu0 %v3709
      %4633 = vmatprep.subr.bf16.mxu0 %v3714
      %4634 = vmatpush1.bf16.msra.mxu0 %v3713
      %4635 = vmatprep.subr.bf16.mxu0 %v3718
      %4636 = vmatpush1.bf16.msra.mxu0 %v3717
      %4637 = vmatprep.subr.bf16.mxu0 %v3722
      %4638 = vmatpush1.bf16.msra.mxu0 %v3721
      %4639 = vmatprep.subr.bf16.mxu0 %v3726
      %4640 = vmatpush1.bf16.msra.mxu0 %v3725
      %4641 = vmatprep.subr.bf16.mxu0 %v3730
      %4642 = vmatpush1.bf16.msra.mxu0 %v3729
      %4643 = vmatprep.subr.bf16.mxu0 %v3734
      %4644 = vmatpush1.bf16.msra.mxu0 %v3733
      %4645 = vmatprep.subr.bf16.mxu0 %v3738
      %4646 = vmatpush1.bf16.msra.mxu0 %v3737
      %4647 = vmatprep.subr.bf16.mxu0 %v3742
      %4648 = vmatpush1.bf16.msra.mxu0 %v3741
      %4649 = vmatprep.subr.bf16.mxu0 %v3746
      %4650 = vmatpush1.bf16.msra.mxu0 %v3745
      %4651 = vmatprep.subr.bf16.mxu0 %v3750
      %4652 = vmatpush1.bf16.msra.mxu0 %v3749
      %4653 = vmatprep.mubr.bf16.mxu0 %v1356
      %4654 = vmatmul.mubr.bf16.gmra.mrb[0].mxu0 %v1355
      %v4655 = vpop.f32.mrb[0].mxu0
      %v4656 = vadd.f32 %v4615, %v4655
      %v4657 = vpop.f32.mrb[0].mxu0
      %v4658 = vadd.f32 %v4617, %v4657
      %v4659 = vpop.f32.mrb[0].mxu0
      %v4660 = vpop.f32.mrb[0].mxu0
      %4661 = vdwg.mxu0
      %4662 = vmatprep.subr.bf16.mxu0 %v3754
      %4663 = vmatpush1.bf16.msra.mxu0 %v3753
      %4664 = vmatprep.subr.bf16.mxu0 %v3758
      %4665 = vmatpush1.bf16.msra.mxu0 %v3757
      %4666 = vmatprep.subr.bf16.mxu0 %v3762
      %4667 = vmatpush1.bf16.msra.mxu0 %v3761
      %4668 = vmatprep.subr.bf16.mxu0 %v3766
      %4669 = vmatpush1.bf16.msra.mxu0 %v3765
      %4670 = vmatprep.subr.bf16.mxu0 %v3770
      %4671 = vmatpush1.bf16.msra.mxu0 %v3769
      %4672 = vmatprep.subr.bf16.mxu0 %v3774
      %4673 = vmatpush1.bf16.msra.mxu0 %v3773
      %4674 = vmatprep.subr.bf16.mxu0 %v3778
      %4675 = vmatpush1.bf16.msra.mxu0 %v3777
      %4676 = vmatprep.subr.bf16.mxu0 %v3782
      %4677 = vmatpush1.bf16.msra.mxu0 %v3781
      %4678 = vmatprep.subr.bf16.mxu0 %v3786
      %4679 = vmatpush1.bf16.msra.mxu0 %v3785
      %4680 = vmatprep.subr.bf16.mxu0 %v3790
      %4681 = vmatpush1.bf16.msra.mxu0 %v3789
      %4682 = vmatprep.subr.bf16.mxu0 %v3794
      %4683 = vmatpush1.bf16.msra.mxu0 %v3793
      %4684 = vmatprep.subr.bf16.mxu0 %v3798
      %4685 = vmatpush1.bf16.msra.mxu0 %v3797
      %4686 = vmatprep.subr.bf16.mxu0 %v3802
      %4687 = vmatpush1.bf16.msra.mxu0 %v3801
      %4688 = vmatprep.subr.bf16.mxu0 %v3806
      %4689 = vmatpush1.bf16.msra.mxu0 %v3805
      %4690 = vmatprep.subr.bf16.mxu0 %v3810
      %4691 = vmatpush1.bf16.msra.mxu0 %v3809
      %4692 = vmatprep.subr.bf16.mxu0 %v3814
      %4693 = vmatpush1.bf16.msra.mxu0 %v3813
      %4694 = vmatprep.mubr.bf16.mxu0 %v1358
      %4695 = vmatmul.mubr.bf16.gmra.mrb[0].mxu0 %v1357
      %v4696 = vpop.f32.mrb[0].mxu0
      %v4697 = vadd.f32 %v4656, %v4696
      %v4698 = vpop.f32.mrb[0].mxu0
      %v4699 = vadd.f32 %v4658, %v4698
      %v4700 = vpop.f32.mrb[0].mxu0
      %v4701 = vpop.f32.mrb[0].mxu0
      %4702 = vdwg.mxu0
      %4703 = vmatprep.subr.bf16.mxu0 %v3818
      %4704 = vmatpush1.bf16.msra.mxu0 %v3817
      %4705 = vmatprep.subr.bf16.mxu0 %v3822
      %4706 = vmatpush1.bf16.msra.mxu0 %v3821
      %4707 = vmatprep.subr.bf16.mxu0 %v3826
      %4708 = vmatpush1.bf16.msra.mxu0 %v3825
      %4709 = vmatprep.subr.bf16.mxu0 %v3830
      %4710 = vmatpush1.bf16.msra.mxu0 %v3829
      %4711 = vmatprep.subr.bf16.mxu0 %v3834
      %4712 = vmatpush1.bf16.msra.mxu0 %v3833
      %4713 = vmatprep.subr.bf16.mxu0 %v3838
      %4714 = vmatpush1.bf16.msra.mxu0 %v3837
      %4715 = vmatprep.subr.bf16.mxu0 %v3842
      %4716 = vmatpush1.bf16.msra.mxu0 %v3841
      %4717 = vmatprep.subr.bf16.mxu0 %v3846
      %4718 = vmatpush1.bf16.msra.mxu0 %v3845
      %4719 = vmatprep.subr.bf16.mxu0 %v3850
      %4720 = vmatpush1.bf16.msra.mxu0 %v3849
      %4721 = vmatprep.subr.bf16.mxu0 %v3854
      %4722 = vmatpush1.bf16.msra.mxu0 %v3853
      %4723 = vmatprep.subr.bf16.mxu0 %v3858
      %4724 = vmatpush1.bf16.msra.mxu0 %v3857
      %4725 = vmatprep.subr.bf16.mxu0 %v3862
      %4726 = vmatpush1.bf16.msra.mxu0 %v3861
      %4727 = vmatprep.subr.bf16.mxu0 %v3866
      %4728 = vmatpush1.bf16.msra.mxu0 %v3865
      %4729 = vmatprep.subr.bf16.mxu0 %v3870
      %4730 = vmatpush1.bf16.msra.mxu0 %v3869
      %4731 = vmatprep.subr.bf16.mxu0 %v3874
      %4732 = vmatpush1.bf16.msra.mxu0 %v3873
      %4733 = vmatprep.subr.bf16.mxu0 %v3878
      %4734 = vmatpush1.bf16.msra.mxu0 %v3877
      %4735 = vmatprep.mubr.bf16.mxu0 %v1360
      %4736 = vmatmul.mubr.bf16.gmra.mrb[0].mxu0 %v1359
      %v4737 = vpop.f32.mrb[0].mxu0
      %v4738 = vadd.f32 %v4697, %v4737
      %v4739 = vpop.f32.mrb[0].mxu0
      %v4740 = vadd.f32 %v4699, %v4739
      %v4741 = vpop.f32.mrb[0].mxu0
      %v4742 = vpop.f32.mrb[0].mxu0
      %4743 = vdwg.mxu0
      %4744 = vmatprep.subr.bf16.mxu0 %v3882
      %4745 = vmatpush1.bf16.msra.mxu0 %v3881
      %4746 = vmatprep.subr.bf16.mxu0 %v3886
      %4747 = vmatpush1.bf16.msra.mxu0 %v3885
      %4748 = vmatprep.subr.bf16.mxu0 %v3890
      %4749 = vmatpush1.bf16.msra.mxu0 %v3889
      %4750 = vmatprep.subr.bf16.mxu0 %v3894
      %4751 = vmatpush1.bf16.msra.mxu0 %v3893
      %4752 = vmatprep.subr.bf16.mxu0 %v3898
      %4753 = vmatpush1.bf16.msra.mxu0 %v3897
      %4754 = vmatprep.subr.bf16.mxu0 %v3902
      %4755 = vmatpush1.bf16.msra.mxu0 %v3901
      %4756 = vmatprep.subr.bf16.mxu0 %v3906
      %4757 = vmatpush1.bf16.msra.mxu0 %v3905
      %4758 = vmatprep.subr.bf16.mxu0 %v3910
      %4759 = vmatpush1.bf16.msra.mxu0 %v3909
      %4760 = vmatprep.subr.bf16.mxu0 %v3914
      %4761 = vmatpush1.bf16.msra.mxu0 %v3913
      %4762 = vmatprep.subr.bf16.mxu0 %v3918
      %4763 = vmatpush1.bf16.msra.mxu0 %v3917
      %4764 = vmatprep.subr.bf16.mxu0 %v3922
      %4765 = vmatpush1.bf16.msra.mxu0 %v3921
      %4766 = vmatprep.subr.bf16.mxu0 %v3926
      %4767 = vmatpush1.bf16.msra.mxu0 %v3925
      %4768 = vmatprep.subr.bf16.mxu0 %v3930
      %4769 = vmatpush1.bf16.msra.mxu0 %v3929
      %4770 = vmatprep.subr.bf16.mxu0 %v3934
      %4771 = vmatpush1.bf16.msra.mxu0 %v3933
      %4772 = vmatprep.subr.bf16.mxu0 %v3938
      %4773 = vmatpush1.bf16.msra.mxu0 %v3937
      %4774 = vmatprep.subr.bf16.mxu0 %v3942
      %4775 = vmatpush1.bf16.msra.mxu0 %v3941
      %4776 = vmatprep.mubr.bf16.mxu0 %v1362
      %4777 = vmatmul.mubr.bf16.gmra.mrb[0].mxu0 %v1361
      %v4778 = vpop.f32.mrb[0].mxu0
      %v4779 = vadd.f32 %v4738, %v4778
      %v4780 = vpop.f32.mrb[0].mxu0
      %v4781 = vadd.f32 %v4740, %v4780
      %v4782 = vpop.f32.mrb[0].mxu0
      %v4783 = vpop.f32.mrb[0].mxu0
      %4784 = vdwg.mxu0
      %4785 = vmatprep.subr.bf16.mxu0 %v3436
      %4786 = vmatpush1.bf16.msra.mxu0 %v3435
      %4787 = vmatprep.subr.bf16.mxu0 %v3440
      %4788 = vmatpush1.bf16.msra.mxu0 %v3439
      %4789 = vmatprep.subr.bf16.mxu0 %v3444
      %4790 = vmatpush1.bf16.msra.mxu0 %v3443
      %4791 = vmatprep.subr.bf16.mxu0 %v3448
      %4792 = vmatpush1.bf16.msra.mxu0 %v3447
      %4793 = vmatprep.subr.bf16.mxu0 %v3452
      %4794 = vmatpush1.bf16.msra.mxu0 %v3451
      %4795 = vmatprep.subr.bf16.mxu0 %v3456
      %4796 = vmatpush1.bf16.msra.mxu0 %v3455
      %4797 = vmatprep.subr.bf16.mxu0 %v3460
      %4798 = vmatpush1.bf16.msra.mxu0 %v3459
      %4799 = vmatprep.subr.bf16.mxu0 %v3464
      %4800 = vmatpush1.bf16.msra.mxu0 %v3463
      %4801 = vmatprep.subr.bf16.mxu0 %v3468
      %4802 = vmatpush1.bf16.msra.mxu0 %v3467
      %4803 = vmatprep.subr.bf16.mxu0 %v3472
      %4804 = vmatpush1.bf16.msra.mxu0 %v3471
      %4805 = vmatprep.subr.bf16.mxu0 %v3476
      %4806 = vmatpush1.bf16.msra.mxu0 %v3475
      %4807 = vmatprep.subr.bf16.mxu0 %v3480
      %4808 = vmatpush1.bf16.msra.mxu0 %v3479
      %4809 = vmatprep.subr.bf16.mxu0 %v3484
      %4810 = vmatpush1.bf16.msra.mxu0 %v3483
      %4811 = vmatprep.subr.bf16.mxu0 %v3488
      %4812 = vmatpush1.bf16.msra.mxu0 %v3487
      %4813 = vmatprep.subr.bf16.mxu0 %v3492
      %4814 = vmatpush1.bf16.msra.mxu0 %v3491
      %4815 = vmatprep.subr.bf16.mxu0 %v3496
      %4816 = vmatpush1.bf16.msra.mxu0 %v3495
      %4817 = vmatprep.mubr.bf16.mxu0 %v1348
      %4818 = vmatmul.mubr.bf16.gmra.mrb[0].mxu0 %v1347
      %v4819 = vpop.f32.mrb[0].mxu0
      %v4820 = vadd.f32 %v1888, %v4819
      %v4821 = vpop.f32.mrb[0].mxu0
      %v4822 = vadd.f32 %v1892, %v4821
      %v4823 = vpop.f32.mrb[0].mxu0
      %v4824 = vpop.f32.mrb[0].mxu0
      %4825 = vdwg.mxu0
      %4826 = vmatprep.subr.bf16.mxu0 %v3500
      %4827 = vmatpush1.bf16.msra.mxu0 %v3499
      %4828 = vmatprep.subr.bf16.mxu0 %v3504
      %4829 = vmatpush1.bf16.msra.mxu0 %v3503
      %4830 = vmatprep.subr.bf16.mxu0 %v3508
      %4831 = vmatpush1.bf16.msra.mxu0 %v3507
      %4832 = vmatprep.subr.bf16.mxu0 %v3512
      %4833 = vmatpush1.bf16.msra.mxu0 %v3511
      %4834 = vmatprep.subr.bf16.mxu0 %v3516
      %4835 = vmatpush1.bf16.msra.mxu0 %v3515
      %4836 = vmatprep.subr.bf16.mxu0 %v3520
      %4837 = vmatpush1.bf16.msra.mxu0 %v3519
      %4838 = vmatprep.subr.bf16.mxu0 %v3524
      %4839 = vmatpush1.bf16.msra.mxu0 %v3523
      %4840 = vmatprep.subr.bf16.mxu0 %v3528
      %4841 = vmatpush1.bf16.msra.mxu0 %v3527
      %4842 = vmatprep.subr.bf16.mxu0 %v3532
      %4843 = vmatpush1.bf16.msra.mxu0 %v3531
      %4844 = vmatprep.subr.bf16.mxu0 %v3536
      %4845 = vmatpush1.bf16.msra.mxu0 %v3535
      %4846 = vmatprep.subr.bf16.mxu0 %v3540
      %4847 = vmatpush1.bf16.msra.mxu0 %v3539
      %4848 = vmatprep.subr.bf16.mxu0 %v3544
      %4849 = vmatpush1.bf16.msra.mxu0 %v3543
      %4850 = vmatprep.subr.bf16.mxu0 %v3548
      %4851 = vmatpush1.bf16.msra.mxu0 %v3547
      %4852 = vmatprep.subr.bf16.mxu0 %v3552
      %4853 = vmatpush1.bf16.msra.mxu0 %v3551
      %4854 = vmatprep.subr.bf16.mxu0 %v3556
      %4855 = vmatpush1.bf16.msra.mxu0 %v3555
      %4856 = vmatprep.subr.bf16.mxu0 %v3560
      %4857 = vmatpush1.bf16.msra.mxu0 %v3559
      %4858 = vmatprep.mubr.bf16.mxu0 %v1350
      %4859 = vmatmul.mubr.bf16.gmra.mrb[0].mxu0 %v1349
      %v4860 = vpop.f32.mrb[0].mxu0
      %v4861 = vadd.f32 %v4820, %v4860
      %v4862 = vpop.f32.mrb[0].mxu0
      %v4863 = vadd.f32 %v4822, %v4862
      %v4864 = vpop.f32.mrb[0].mxu0
      %v4865 = vpop.f32.mrb[0].mxu0
      %4866 = vdwg.mxu0
      %4867 = vmatprep.subr.bf16.mxu0 %v3564
      %4868 = vmatpush1.bf16.msra.mxu0 %v3563
      %4869 = vmatprep.subr.bf16.mxu0 %v3568
      %4870 = vmatpush1.bf16.msra.mxu0 %v3567
      %4871 = vmatprep.subr.bf16.mxu0 %v3572
      %4872 = vmatpush1.bf16.msra.mxu0 %v3571
      %4873 = vmatprep.subr.bf16.mxu0 %v3576
      %4874 = vmatpush1.bf16.msra.mxu0 %v3575
      %4875 = vmatprep.subr.bf16.mxu0 %v3580
      %4876 = vmatpush1.bf16.msra.mxu0 %v3579
      %4877 = vmatprep.subr.bf16.mxu0 %v3584
      %4878 = vmatpush1.bf16.msra.mxu0 %v3583
      %4879 = vmatprep.subr.bf16.mxu0 %v3588
      %4880 = vmatpush1.bf16.msra.mxu0 %v3587
      %4881 = vmatprep.subr.bf16.mxu0 %v3592
      %4882 = vmatpush1.bf16.msra.mxu0 %v3591
      %4883 = vmatprep.subr.bf16.mxu0 %v3596
      %4884 = vmatpush1.bf16.msra.mxu0 %v3595
      %4885 = vmatprep.subr.bf16.mxu0 %v3600
      %4886 = vmatpush1.bf16.msra.mxu0 %v3599
      %4887 = vmatprep.subr.bf16.mxu0 %v3604
      %4888 = vmatpush1.bf16.msra.mxu0 %v3603
      %4889 = vmatprep.subr.bf16.mxu0 %v3608
      %4890 = vmatpush1.bf16.msra.mxu0 %v3607
      %4891 = vmatprep.subr.bf16.mxu0 %v3612
      %4892 = vmatpush1.bf16.msra.mxu0 %v3611
      %4893 = vmatprep.subr.bf16.mxu0 %v3616
      %4894 = vmatpush1.bf16.msra.mxu0 %v3615
      %4895 = vmatprep.subr.bf16.mxu0 %v3620
      %4896 = vmatpush1.bf16.msra.mxu0 %v3619
      %4897 = vmatprep.subr.bf16.mxu0 %v3624
      %4898 = vmatpush1.bf16.msra.mxu0 %v3623
      %4899 = vmatprep.mubr.bf16.mxu0 %v1352
      %4900 = vmatmul.mubr.bf16.gmra.mrb[0].mxu0 %v1351
      %v4901 = vpop.f32.mrb[0].mxu0
      %v4902 = vadd.f32 %v4861, %v4901
      %v4903 = vpop.f32.mrb[0].mxu0
      %v4904 = vadd.f32 %v4863, %v4903
      %v4905 = vpop.f32.mrb[0].mxu0
      %v4906 = vpop.f32.mrb[0].mxu0
      %4907 = vdwg.mxu0
      %4908 = vmatprep.subr.bf16.mxu0 %v3628
      %4909 = vmatpush1.bf16.msra.mxu0 %v3627
      %4910 = vmatprep.subr.bf16.mxu0 %v3632
      %4911 = vmatpush1.bf16.msra.mxu0 %v3631
      %4912 = vmatprep.subr.bf16.mxu0 %v3636
      %4913 = vmatpush1.bf16.msra.mxu0 %v3635
      %4914 = vmatprep.subr.bf16.mxu0 %v3640
      %4915 = vmatpush1.bf16.msra.mxu0 %v3639
      %4916 = vmatprep.subr.bf16.mxu0 %v3644
      %4917 = vmatpush1.bf16.msra.mxu0 %v3643
      %4918 = vmatprep.subr.bf16.mxu0 %v3648
      %4919 = vmatpush1.bf16.msra.mxu0 %v3647
      %4920 = vmatprep.subr.bf16.mxu0 %v3652
      %4921 = vmatpush1.bf16.msra.mxu0 %v3651
      %4922 = vmatprep.subr.bf16.mxu0 %v3656
      %4923 = vmatpush1.bf16.msra.mxu0 %v3655
      %4924 = vmatprep.subr.bf16.mxu0 %v3660
      %4925 = vmatpush1.bf16.msra.mxu0 %v3659
      %4926 = vmatprep.subr.bf16.mxu0 %v3664
      %4927 = vmatpush1.bf16.msra.mxu0 %v3663
      %4928 = vmatprep.subr.bf16.mxu0 %v3668
      %4929 = vmatpush1.bf16.msra.mxu0 %v3667
      %4930 = vmatprep.subr.bf16.mxu0 %v3672
      %4931 = vmatpush1.bf16.msra.mxu0 %v3671
      %4932 = vmatprep.subr.bf16.mxu0 %v3676
      %4933 = vmatpush1.bf16.msra.mxu0 %v3675
      %4934 = vmatprep.subr.bf16.mxu0 %v3680
      %4935 = vmatpush1.bf16.msra.mxu0 %v3679
      %4936 = vmatprep.subr.bf16.mxu0 %v3684
      %4937 = vmatpush1.bf16.msra.mxu0 %v3683
      %4938 = vmatprep.subr.bf16.mxu0 %v3688
      %4939 = vmatpush1.bf16.msra.mxu0 %v3687
      %4940 = vmatprep.mubr.bf16.mxu0 %v1354
      %4941 = vmatmul.mubr.bf16.gmra.mrb[0].mxu0 %v1353
      %v4942 = vpop.f32.mrb[0].mxu0
      %v4943 = vadd.f32 %v4902, %v4942
      %v4944 = vpop.f32.mrb[0].mxu0
      %v4945 = vadd.f32 %v4904, %v4944
      %v4946 = vpop.f32.mrb[0].mxu0
      %v4947 = vpop.f32.mrb[0].mxu0
      %4948 = vdwg.mxu0
      %4949 = vmatprep.subr.bf16.mxu0 %v3692
      %4950 = vmatpush1.bf16.msra.mxu0 %v3691
      %4951 = vmatprep.subr.bf16.mxu0 %v3696
      %4952 = vmatpush1.bf16.msra.mxu0 %v3695
      %4953 = vmatprep.subr.bf16.mxu0 %v3700
      %4954 = vmatpush1.bf16.msra.mxu0 %v3699
      %4955 = vmatprep.subr.bf16.mxu0 %v3704
      %4956 = vmatpush1.bf16.msra.mxu0 %v3703
      %4957 = vmatprep.subr.bf16.mxu0 %v3708
      %4958 = vmatpush1.bf16.msra.mxu0 %v3707
      %4959 = vmatprep.subr.bf16.mxu0 %v3712
      %4960 = vmatpush1.bf16.msra.mxu0 %v3711
      %4961 = vmatprep.subr.bf16.mxu0 %v3716
      %4962 = vmatpush1.bf16.msra.mxu0 %v3715
      %4963 = vmatprep.subr.bf16.mxu0 %v3720
      %4964 = vmatpush1.bf16.msra.mxu0 %v3719
      %4965 = vmatprep.subr.bf16.mxu0 %v3724
      %4966 = vmatpush1.bf16.msra.mxu0 %v3723
      %4967 = vmatprep.subr.bf16.mxu0 %v3728
      %4968 = vmatpush1.bf16.msra.mxu0 %v3727
      %4969 = vmatprep.subr.bf16.mxu0 %v3732
      %4970 = vmatpush1.bf16.msra.mxu0 %v3731
      %4971 = vmatprep.subr.bf16.mxu0 %v3736
      %4972 = vmatpush1.bf16.msra.mxu0 %v3735
      %4973 = vmatprep.subr.bf16.mxu0 %v3740
      %4974 = vmatpush1.bf16.msra.mxu0 %v3739
      %4975 = vmatprep.subr.bf16.mxu0 %v3744
      %4976 = vmatpush1.bf16.msra.mxu0 %v3743
      %4977 = vmatprep.subr.bf16.mxu0 %v3748
      %4978 = vmatpush1.bf16.msra.mxu0 %v3747
      %4979 = vmatprep.subr.bf16.mxu0 %v3752
      %4980 = vmatpush1.bf16.msra.mxu0 %v3751
      %4981 = vmatprep.mubr.bf16.mxu0 %v1356
      %4982 = vmatmul.mubr.bf16.gmra.mrb[0].mxu0 %v1355
      %v4983 = vpop.f32.mrb[0].mxu0
      %v4984 = vadd.f32 %v4943, %v4983
      %v4985 = vpop.f32.mrb[0].mxu0
      %v4986 = vadd.f32 %v4945, %v4985
      %v4987 = vpop.f32.mrb[0].mxu0
      %v4988 = vpop.f32.mrb[0].mxu0
      %4989 = vdwg.mxu0
      %4990 = vmatprep.subr.bf16.mxu0 %v3756
      %4991 = vmatpush1.bf16.msra.mxu0 %v3755
      %4992 = vmatprep.subr.bf16.mxu0 %v3760
      %4993 = vmatpush1.bf16.msra.mxu0 %v3759
      %4994 = vmatprep.subr.bf16.mxu0 %v3764
      %4995 = vmatpush1.bf16.msra.mxu0 %v3763
      %4996 = vmatprep.subr.bf16.mxu0 %v3768
      %4997 = vmatpush1.bf16.msra.mxu0 %v3767
      %4998 = vmatprep.subr.bf16.mxu0 %v3772
      %4999 = vmatpush1.bf16.msra.mxu0 %v3771
      %5000 = vmatprep.subr.bf16.mxu0 %v3776
      %5001 = vmatpush1.bf16.msra.mxu0 %v3775
      %5002 = vmatprep.subr.bf16.mxu0 %v3780
      %5003 = vmatpush1.bf16.msra.mxu0 %v3779
      %5004 = vmatprep.subr.bf16.mxu0 %v3784
      %5005 = vmatpush1.bf16.msra.mxu0 %v3783
      %5006 = vmatprep.subr.bf16.mxu0 %v3788
      %5007 = vmatpush1.bf16.msra.mxu0 %v3787
      %5008 = vmatprep.subr.bf16.mxu0 %v3792
      %5009 = vmatpush1.bf16.msra.mxu0 %v3791
      %5010 = vmatprep.subr.bf16.mxu0 %v3796
      %5011 = vmatpush1.bf16.msra.mxu0 %v3795
      %5012 = vmatprep.subr.bf16.mxu0 %v3800
      %5013 = vmatpush1.bf16.msra.mxu0 %v3799
      %5014 = vmatprep.subr.bf16.mxu0 %v3804
      %5015 = vmatpush1.bf16.msra.mxu0 %v3803
      %5016 = vmatprep.subr.bf16.mxu0 %v3808
      %5017 = vmatpush1.bf16.msra.mxu0 %v3807
      %5018 = vmatprep.subr.bf16.mxu0 %v3812
      %5019 = vmatpush1.bf16.msra.mxu0 %v3811
      %5020 = vmatprep.subr.bf16.mxu0 %v3816
      %5021 = vmatpush1.bf16.msra.mxu0 %v3815
      %5022 = vmatprep.mubr.bf16.mxu0 %v1358
      %5023 = vmatmul.mubr.bf16.gmra.mrb[0].mxu0 %v1357
      %v5024 = vpop.f32.mrb[0].mxu0
      %v5025 = vadd.f32 %v4984, %v5024
      %v5026 = vpop.f32.mrb[0].mxu0
      %v5027 = vadd.f32 %v4986, %v5026
      %v5028 = vpop.f32.mrb[0].mxu0
      %v5029 = vpop.f32.mrb[0].mxu0
      %5030 = vdwg.mxu0
      %5031 = vmatprep.subr.bf16.mxu0 %v3820
      %5032 = vmatpush1.bf16.msra.mxu0 %v3819
      %5033 = vmatprep.subr.bf16.mxu0 %v3824
      %5034 = vmatpush1.bf16.msra.mxu0 %v3823
      %5035 = vmatprep.subr.bf16.mxu0 %v3828
      %5036 = vmatpush1.bf16.msra.mxu0 %v3827
      %5037 = vmatprep.subr.bf16.mxu0 %v3832
      %5038 = vmatpush1.bf16.msra.mxu0 %v3831
      %5039 = vmatprep.subr.bf16.mxu0 %v3836
      %5040 = vmatpush1.bf16.msra.mxu0 %v3835
      %5041 = vmatprep.subr.bf16.mxu0 %v3840
      %5042 = vmatpush1.bf16.msra.mxu0 %v3839
      %5043 = vmatprep.subr.bf16.mxu0 %v3844
      %5044 = vmatpush1.bf16.msra.mxu0 %v3843
      %5045 = vmatprep.subr.bf16.mxu0 %v3848
      %5046 = vmatpush1.bf16.msra.mxu0 %v3847
      %5047 = vmatprep.subr.bf16.mxu0 %v3852
      %5048 = vmatpush1.bf16.msra.mxu0 %v3851
      %5049 = vmatprep.subr.bf16.mxu0 %v3856
      %5050 = vmatpush1.bf16.msra.mxu0 %v3855
      %5051 = vmatprep.subr.bf16.mxu0 %v3860
      %5052 = vmatpush1.bf16.msra.mxu0 %v3859
      %5053 = vmatprep.subr.bf16.mxu0 %v3864
      %5054 = vmatpush1.bf16.msra.mxu0 %v3863
      %5055 = vmatprep.subr.bf16.mxu0 %v3868
      %5056 = vmatpush1.bf16.msra.mxu0 %v3867
      %5057 = vmatprep.subr.bf16.mxu0 %v3872
      %5058 = vmatpush1.bf16.msra.mxu0 %v3871
      %5059 = vmatprep.subr.bf16.mxu0 %v3876
      %5060 = vmatpush1.bf16.msra.mxu0 %v3875
      %5061 = vmatprep.subr.bf16.mxu0 %v3880
      %5062 = vmatpush1.bf16.msra.mxu0 %v3879
      %5063 = vmatprep.mubr.bf16.mxu0 %v1360
      %5064 = vmatmul.mubr.bf16.gmra.mrb[0].mxu0 %v1359
      %v5065 = vpop.f32.mrb[0].mxu0
      %v5066 = vadd.f32 %v5025, %v5065
      %v5067 = vpop.f32.mrb[0].mxu0
      %v5068 = vadd.f32 %v5027, %v5067
      %v5069 = vpop.f32.mrb[0].mxu0
      %v5070 = vpop.f32.mrb[0].mxu0
      %5071 = vdwg.mxu0
      %5072 = vmatprep.subr.bf16.mxu0 %v3884
      %5073 = vmatpush1.bf16.msra.mxu0 %v3883
      %5074 = vmatprep.subr.bf16.mxu0 %v3888
      %5075 = vmatpush1.bf16.msra.mxu0 %v3887
      %5076 = vmatprep.subr.bf16.mxu0 %v3892
      %5077 = vmatpush1.bf16.msra.mxu0 %v3891
      %5078 = vmatprep.subr.bf16.mxu0 %v3896
      %5079 = vmatpush1.bf16.msra.mxu0 %v3895
      %5080 = vmatprep.subr.bf16.mxu0 %v3900
      %5081 = vmatpush1.bf16.msra.mxu0 %v3899
      %5082 = vmatprep.subr.bf16.mxu0 %v3904
      %5083 = vmatpush1.bf16.msra.mxu0 %v3903
      %5084 = vmatprep.subr.bf16.mxu0 %v3908
      %5085 = vmatpush1.bf16.msra.mxu0 %v3907
      %5086 = vmatprep.subr.bf16.mxu0 %v3912
      %5087 = vmatpush1.bf16.msra.mxu0 %v3911
      %5088 = vmatprep.subr.bf16.mxu0 %v3916
      %5089 = vmatpush1.bf16.msra.mxu0 %v3915
      %5090 = vmatprep.subr.bf16.mxu0 %v3920
      %5091 = vmatpush1.bf16.msra.mxu0 %v3919
      %5092 = vmatprep.subr.bf16.mxu0 %v3924
      %5093 = vmatpush1.bf16.msra.mxu0 %v3923
      %5094 = vmatprep.subr.bf16.mxu0 %v3928
      %5095 = vmatpush1.bf16.msra.mxu0 %v3927
      %5096 = vmatprep.subr.bf16.mxu0 %v3932
      %5097 = vmatpush1.bf16.msra.mxu0 %v3931
      %5098 = vmatprep.subr.bf16.mxu0 %v3936
      %5099 = vmatpush1.bf16.msra.mxu0 %v3935
      %5100 = vmatprep.subr.bf16.mxu0 %v3940
      %5101 = vmatpush1.bf16.msra.mxu0 %v3939
      %5102 = vmatprep.subr.bf16.mxu0 %v3944
      %5103 = vmatpush1.bf16.msra.mxu0 %v3943
      %5104 = vmatprep.mubr.bf16.mxu0 %v1362
      %5105 = vmatmul.mubr.bf16.gmra.mrb[0].mxu0 %v1361
      %v5106 = vpop.f32.mrb[0].mxu0
      %v5107 = vadd.f32 %v5066, %v5106
      %v5108 = vpop.f32.mrb[0].mxu0
      %v5109 = vadd.f32 %v5068, %v5108
      %v5110 = vpop.f32.mrb[0].mxu0
      %v5111 = vpop.f32.mrb[0].mxu0
      %5112 = vdwg.mxu0
      %v5113 = vmax.f32 %v4779, 0.0
      %v5114 = vmax.f32 %v4781, 0.0
      %v5115 = vmax.f32 %v5107, 0.0
      %v5116 = vmax.f32 %v5109, 0.0
      %v5117 = vpack.c.bf16 %v5113, %v5113
      %v5118 = vpack.c.bf16 %v5114, %v5114
      %v5119 = vpack.c.bf16 %v5115, %v5115
      %v5120 = vpack.c.bf16 %v5116, %v5116
      %v5121 = vld [vmem:[#allocation12] sm:$0xff]
      %v5122 = vld [vmem:[#allocation12 + $0x8] sm:$0xff]
      %v5123 = vld [vmem:[#allocation12 + $0x10] sm:$0xff]
      %v5124 = vld [vmem:[#allocation12 + $0x18] sm:$0xff]
      %v5125 = vld [vmem:[#allocation12 + $0x20] sm:$0xff]
      %v5126 = vld [vmem:[#allocation12 + $0x28] sm:$0xff]
      %v5127 = vld [vmem:[#allocation12 + $0x30] sm:$0xff]
      %v5128 = vld [vmem:[#allocation12 + $0x38] sm:$0xff]
      %v5129 = vld [vmem:[#allocation12 + $0x40] sm:$0xff]
      %v5130 = vld [vmem:[#allocation12 + $0x48] sm:$0xff]
      %v5131 = vld [vmem:[#allocation12 + $0x50] sm:$0xff]
      %v5132 = vld [vmem:[#allocation12 + $0x58] sm:$0xff]
      %v5133 = vld [vmem:[#allocation12 + $0x60] sm:$0xff]
      %v5134 = vld [vmem:[#allocation12 + $0x68] sm:$0xff]
      %v5135 = vld [vmem:[#allocation12 + $0x70] sm:$0xff]
      %v5136 = vld [vmem:[#allocation12 + $0x78] sm:$0xff]
      %v5137 = vld [vmem:[#allocation12 + $0x80] sm:$0xff]
      %v5138 = vld [vmem:[#allocation12 + $0x88] sm:$0xff]
      %v5139 = vld [vmem:[#allocation12 + $0x90] sm:$0xff]
      %v5140 = vld [vmem:[#allocation12 + $0x98] sm:$0xff]
      %v5141 = vld [vmem:[#allocation12 + $0xa0] sm:$0xff]
      %v5142 = vld [vmem:[#allocation12 + $0xa8] sm:$0xff]
      %v5143 = vld [vmem:[#allocation12 + $0xb0] sm:$0xff]
      %v5144 = vld [vmem:[#allocation12 + $0xb8] sm:$0xff]
      %v5145 = vld [vmem:[#allocation12 + $0xc0] sm:$0xff]
      %v5146 = vld [vmem:[#allocation12 + $0xc8] sm:$0xff]
      %v5147 = vld [vmem:[#allocation12 + $0xd0] sm:$0xff]
      %v5148 = vld [vmem:[#allocation12 + $0xd8] sm:$0xff]
      %v5149 = vld [vmem:[#allocation12 + $0xe0] sm:$0xff]
      %v5150 = vld [vmem:[#allocation12 + $0xe8] sm:$0xff]
      %v5151 = vld [vmem:[#allocation12 + $0xf0] sm:$0xff]
      %v5152 = vld [vmem:[#allocation12 + $0xf8] sm:$0xff]
      %v5153 = vld [vmem:[#allocation12 + $0x100] sm:$0xff]
      %v5154 = vld [vmem:[#allocation12 + $0x108] sm:$0xff]
      %v5155 = vld [vmem:[#allocation12 + $0x110] sm:$0xff]
      %v5156 = vld [vmem:[#allocation12 + $0x118] sm:$0xff]
      %v5157 = vld [vmem:[#allocation12 + $0x120] sm:$0xff]
      %v5158 = vld [vmem:[#allocation12 + $0x128] sm:$0xff]
      %v5159 = vld [vmem:[#allocation12 + $0x130] sm:$0xff]
      %v5160 = vld [vmem:[#allocation12 + $0x138] sm:$0xff]
      %v5161 = vld [vmem:[#allocation12 + $0x140] sm:$0xff]
      %v5162 = vld [vmem:[#allocation12 + $0x148] sm:$0xff]
      %v5163 = vld [vmem:[#allocation12 + $0x150] sm:$0xff]
      %v5164 = vld [vmem:[#allocation12 + $0x158] sm:$0xff]
      %v5165 = vld [vmem:[#allocation12 + $0x160] sm:$0xff]
      %v5166 = vld [vmem:[#allocation12 + $0x168] sm:$0xff]
      %v5167 = vld [vmem:[#allocation12 + $0x170] sm:$0xff]
      %v5168 = vld [vmem:[#allocation12 + $0x178] sm:$0xff]
      %v5169 = vld [vmem:[#allocation12 + $0x180] sm:$0xff]
      %v5170 = vld [vmem:[#allocation12 + $0x188] sm:$0xff]
      %v5171 = vld [vmem:[#allocation12 + $0x190] sm:$0xff]
      %v5172 = vld [vmem:[#allocation12 + $0x198] sm:$0xff]
      %v5173 = vld [vmem:[#allocation12 + $0x1a0] sm:$0xff]
      %v5174 = vld [vmem:[#allocation12 + $0x1a8] sm:$0xff]
      %v5175 = vld [vmem:[#allocation12 + $0x1b0] sm:$0xff]
      %v5176 = vld [vmem:[#allocation12 + $0x1b8] sm:$0xff]
      %v5177 = vld [vmem:[#allocation12 + $0x1c0] sm:$0xff]
      %v5178 = vld [vmem:[#allocation12 + $0x1c8] sm:$0xff]
      %v5179 = vld [vmem:[#allocation12 + $0x1d0] sm:$0xff]
      %v5180 = vld [vmem:[#allocation12 + $0x1d8] sm:$0xff]
      %v5181 = vld [vmem:[#allocation12 + $0x1e0] sm:$0xff]
      %v5182 = vld [vmem:[#allocation12 + $0x1e8] sm:$0xff]
      %v5183 = vld [vmem:[#allocation12 + $0x1f0] sm:$0xff]
      %v5184 = vld [vmem:[#allocation12 + $0x1f8] sm:$0xff]
      %v5185 = vld [vmem:[#allocation12 + $0x200] sm:$0xff]
      %v5186 = vld [vmem:[#allocation12 + $0x208] sm:$0xff]
      %v5187 = vld [vmem:[#allocation12 + $0x210] sm:$0xff]
      %v5188 = vld [vmem:[#allocation12 + $0x218] sm:$0xff]
      %v5189 = vld [vmem:[#allocation12 + $0x220] sm:$0xff]
      %v5190 = vld [vmem:[#allocation12 + $0x228] sm:$0xff]
      %v5191 = vld [vmem:[#allocation12 + $0x230] sm:$0xff]
      %v5192 = vld [vmem:[#allocation12 + $0x238] sm:$0xff]
      %v5193 = vld [vmem:[#allocation12 + $0x240] sm:$0xff]
      %v5194 = vld [vmem:[#allocation12 + $0x248] sm:$0xff]
      %v5195 = vld [vmem:[#allocation12 + $0x250] sm:$0xff]
      %v5196 = vld [vmem:[#allocation12 + $0x258] sm:$0xff]
      %v5197 = vld [vmem:[#allocation12 + $0x260] sm:$0xff]
      %v5198 = vld [vmem:[#allocation12 + $0x268] sm:$0xff]
      %v5199 = vld [vmem:[#allocation12 + $0x270] sm:$0xff]
      %v5200 = vld [vmem:[#allocation12 + $0x278] sm:$0xff]
      %v5201 = vld [vmem:[#allocation12 + $0x280] sm:$0xff]
      %v5202 = vld [vmem:[#allocation12 + $0x288] sm:$0xff]
      %v5203 = vld [vmem:[#allocation12 + $0x290] sm:$0xff]
      %v5204 = vld [vmem:[#allocation12 + $0x298] sm:$0xff]
      %v5205 = vld [vmem:[#allocation12 + $0x2a0] sm:$0xff]
      %v5206 = vld [vmem:[#allocation12 + $0x2a8] sm:$0xff]
      %v5207 = vld [vmem:[#allocation12 + $0x2b0] sm:$0xff]
      %v5208 = vld [vmem:[#allocation12 + $0x2b8] sm:$0xff]
      %v5209 = vld [vmem:[#allocation12 + $0x2c0] sm:$0xff]
      %v5210 = vld [vmem:[#allocation12 + $0x2c8] sm:$0xff]
      %v5211 = vld [vmem:[#allocation12 + $0x2d0] sm:$0xff]
      %v5212 = vld [vmem:[#allocation12 + $0x2d8] sm:$0xff]
      %v5213 = vld [vmem:[#allocation12 + $0x2e0] sm:$0xff]
      %v5214 = vld [vmem:[#allocation12 + $0x2e8] sm:$0xff]
      %v5215 = vld [vmem:[#allocation12 + $0x2f0] sm:$0xff]
      %v5216 = vld [vmem:[#allocation12 + $0x2f8] sm:$0xff]
      %v5217 = vld [vmem:[#allocation12 + $0x300] sm:$0xff]
      %v5218 = vld [vmem:[#allocation12 + $0x308] sm:$0xff]
      %v5219 = vld [vmem:[#allocation12 + $0x310] sm:$0xff]
      %v5220 = vld [vmem:[#allocation12 + $0x318] sm:$0xff]
      %v5221 = vld [vmem:[#allocation12 + $0x320] sm:$0xff]
      %v5222 = vld [vmem:[#allocation12 + $0x328] sm:$0xff]
      %v5223 = vld [vmem:[#allocation12 + $0x330] sm:$0xff]
      %v5224 = vld [vmem:[#allocation12 + $0x338] sm:$0xff]
      %v5225 = vld [vmem:[#allocation12 + $0x340] sm:$0xff]
      %v5226 = vld [vmem:[#allocation12 + $0x348] sm:$0xff]
      %v5227 = vld [vmem:[#allocation12 + $0x350] sm:$0xff]
      %v5228 = vld [vmem:[#allocation12 + $0x358] sm:$0xff]
      %v5229 = vld [vmem:[#allocation12 + $0x360] sm:$0xff]
      %v5230 = vld [vmem:[#allocation12 + $0x368] sm:$0xff]
      %v5231 = vld [vmem:[#allocation12 + $0x370] sm:$0xff]
      %v5232 = vld [vmem:[#allocation12 + $0x378] sm:$0xff]
      %v5233 = vld [vmem:[#allocation12 + $0x380] sm:$0xff]
      %v5234 = vld [vmem:[#allocation12 + $0x388] sm:$0xff]
      %v5235 = vld [vmem:[#allocation12 + $0x390] sm:$0xff]
      %v5236 = vld [vmem:[#allocation12 + $0x398] sm:$0xff]
      %v5237 = vld [vmem:[#allocation12 + $0x3a0] sm:$0xff]
      %v5238 = vld [vmem:[#allocation12 + $0x3a8] sm:$0xff]
      %v5239 = vld [vmem:[#allocation12 + $0x3b0] sm:$0xff]
      %v5240 = vld [vmem:[#allocation12 + $0x3b8] sm:$0xff]
      %v5241 = vld [vmem:[#allocation12 + $0x3c0] sm:$0xff]
      %v5242 = vld [vmem:[#allocation12 + $0x3c8] sm:$0xff]
      %v5243 = vld [vmem:[#allocation12 + $0x3d0] sm:$0xff]
      %v5244 = vld [vmem:[#allocation12 + $0x3d8] sm:$0xff]
      %v5245 = vld [vmem:[#allocation12 + $0x3e0] sm:$0xff]
      %v5246 = vld [vmem:[#allocation12 + $0x3e8] sm:$0xff]
      %v5247 = vld [vmem:[#allocation12 + $0x3f0] sm:$0xff]
      %v5248 = vld [vmem:[#allocation12 + $0x3f8] sm:$0xff]
      %v5249 = vld [vmem:[#allocation12 + $0x400] sm:$0xff]
      %v5250 = vld [vmem:[#allocation12 + $0x408] sm:$0xff]
      %v5251 = vld [vmem:[#allocation12 + $0x410] sm:$0xff]
      %v5252 = vld [vmem:[#allocation12 + $0x418] sm:$0xff]
      %v5253 = vld [vmem:[#allocation12 + $0x420] sm:$0xff]
      %v5254 = vld [vmem:[#allocation12 + $0x428] sm:$0xff]
      %v5255 = vld [vmem:[#allocation12 + $0x430] sm:$0xff]
      %v5256 = vld [vmem:[#allocation12 + $0x438] sm:$0xff]
      %v5257 = vld [vmem:[#allocation12 + $0x440] sm:$0xff]
      %v5258 = vld [vmem:[#allocation12 + $0x448] sm:$0xff]
      %v5259 = vld [vmem:[#allocation12 + $0x450] sm:$0xff]
      %v5260 = vld [vmem:[#allocation12 + $0x458] sm:$0xff]
      %v5261 = vld [vmem:[#allocation12 + $0x460] sm:$0xff]
      %v5262 = vld [vmem:[#allocation12 + $0x468] sm:$0xff]
      %v5263 = vld [vmem:[#allocation12 + $0x470] sm:$0xff]
      %v5264 = vld [vmem:[#allocation12 + $0x478] sm:$0xff]
      %v5265 = vld [vmem:[#allocation12 + $0x480] sm:$0xff]
      %v5266 = vld [vmem:[#allocation12 + $0x488] sm:$0xff]
      %v5267 = vld [vmem:[#allocation12 + $0x490] sm:$0xff]
      %v5268 = vld [vmem:[#allocation12 + $0x498] sm:$0xff]
      %v5269 = vld [vmem:[#allocation12 + $0x4a0] sm:$0xff]
      %v5270 = vld [vmem:[#allocation12 + $0x4a8] sm:$0xff]
      %v5271 = vld [vmem:[#allocation12 + $0x4b0] sm:$0xff]
      %v5272 = vld [vmem:[#allocation12 + $0x4b8] sm:$0xff]
      %v5273 = vld [vmem:[#allocation12 + $0x4c0] sm:$0xff]
      %v5274 = vld [vmem:[#allocation12 + $0x4c8] sm:$0xff]
      %v5275 = vld [vmem:[#allocation12 + $0x4d0] sm:$0xff]
      %v5276 = vld [vmem:[#allocation12 + $0x4d8] sm:$0xff]
      %v5277 = vld [vmem:[#allocation12 + $0x4e0] sm:$0xff]
      %v5278 = vld [vmem:[#allocation12 + $0x4e8] sm:$0xff]
      %v5279 = vld [vmem:[#allocation12 + $0x4f0] sm:$0xff]
      %v5280 = vld [vmem:[#allocation12 + $0x4f8] sm:$0xff]
      %v5281 = vld [vmem:[#allocation12 + $0x500] sm:$0xff]
      %v5282 = vld [vmem:[#allocation12 + $0x508] sm:$0xff]
      %v5283 = vld [vmem:[#allocation12 + $0x510] sm:$0xff]
      %v5284 = vld [vmem:[#allocation12 + $0x518] sm:$0xff]
      %v5285 = vld [vmem:[#allocation12 + $0x520] sm:$0xff]
      %v5286 = vld [vmem:[#allocation12 + $0x528] sm:$0xff]
      %v5287 = vld [vmem:[#allocation12 + $0x530] sm:$0xff]
      %v5288 = vld [vmem:[#allocation12 + $0x538] sm:$0xff]
      %v5289 = vld [vmem:[#allocation12 + $0x540] sm:$0xff]
      %v5290 = vld [vmem:[#allocation12 + $0x548] sm:$0xff]
      %v5291 = vld [vmem:[#allocation12 + $0x550] sm:$0xff]
      %v5292 = vld [vmem:[#allocation12 + $0x558] sm:$0xff]
      %v5293 = vld [vmem:[#allocation12 + $0x560] sm:$0xff]
      %v5294 = vld [vmem:[#allocation12 + $0x568] sm:$0xff]
      %v5295 = vld [vmem:[#allocation12 + $0x570] sm:$0xff]
      %v5296 = vld [vmem:[#allocation12 + $0x578] sm:$0xff]
      %v5297 = vld [vmem:[#allocation12 + $0x580] sm:$0xff]
      %v5298 = vld [vmem:[#allocation12 + $0x588] sm:$0xff]
      %v5299 = vld [vmem:[#allocation12 + $0x590] sm:$0xff]
      %v5300 = vld [vmem:[#allocation12 + $0x598] sm:$0xff]
      %v5301 = vld [vmem:[#allocation12 + $0x5a0] sm:$0xff]
      %v5302 = vld [vmem:[#allocation12 + $0x5a8] sm:$0xff]
      %v5303 = vld [vmem:[#allocation12 + $0x5b0] sm:$0xff]
      %v5304 = vld [vmem:[#allocation12 + $0x5b8] sm:$0xff]
      %v5305 = vld [vmem:[#allocation12 + $0x5c0] sm:$0xff]
      %v5306 = vld [vmem:[#allocation12 + $0x5c8] sm:$0xff]
      %v5307 = vld [vmem:[#allocation12 + $0x5d0] sm:$0xff]
      %v5308 = vld [vmem:[#allocation12 + $0x5d8] sm:$0xff]
      %v5309 = vld [vmem:[#allocation12 + $0x5e0] sm:$0xff]
      %v5310 = vld [vmem:[#allocation12 + $0x5e8] sm:$0xff]
      %v5311 = vld [vmem:[#allocation12 + $0x5f0] sm:$0xff]
      %v5312 = vld [vmem:[#allocation12 + $0x5f8] sm:$0xff]
      %v5313 = vld [vmem:[#allocation12 + $0x600] sm:$0xff]
      %v5314 = vld [vmem:[#allocation12 + $0x608] sm:$0xff]
      %v5315 = vld [vmem:[#allocation12 + $0x610] sm:$0xff]
      %v5316 = vld [vmem:[#allocation12 + $0x618] sm:$0xff]
      %v5317 = vld [vmem:[#allocation12 + $0x620] sm:$0xff]
      %v5318 = vld [vmem:[#allocation12 + $0x628] sm:$0xff]
      %v5319 = vld [vmem:[#allocation12 + $0x630] sm:$0xff]
      %v5320 = vld [vmem:[#allocation12 + $0x638] sm:$0xff]
      %v5321 = vld [vmem:[#allocation12 + $0x640] sm:$0xff]
      %v5322 = vld [vmem:[#allocation12 + $0x648] sm:$0xff]
      %v5323 = vld [vmem:[#allocation12 + $0x650] sm:$0xff]
      %v5324 = vld [vmem:[#allocation12 + $0x658] sm:$0xff]
      %v5325 = vld [vmem:[#allocation12 + $0x660] sm:$0xff]
      %v5326 = vld [vmem:[#allocation12 + $0x668] sm:$0xff]
      %v5327 = vld [vmem:[#allocation12 + $0x670] sm:$0xff]
      %v5328 = vld [vmem:[#allocation12 + $0x678] sm:$0xff]
      %v5329 = vld [vmem:[#allocation12 + $0x680] sm:$0xff]
      %v5330 = vld [vmem:[#allocation12 + $0x688] sm:$0xff]
      %v5331 = vld [vmem:[#allocation12 + $0x690] sm:$0xff]
      %v5332 = vld [vmem:[#allocation12 + $0x698] sm:$0xff]
      %v5333 = vld [vmem:[#allocation12 + $0x6a0] sm:$0xff]
      %v5334 = vld [vmem:[#allocation12 + $0x6a8] sm:$0xff]
      %v5335 = vld [vmem:[#allocation12 + $0x6b0] sm:$0xff]
      %v5336 = vld [vmem:[#allocation12 + $0x6b8] sm:$0xff]
      %v5337 = vld [vmem:[#allocation12 + $0x6c0] sm:$0xff]
      %v5338 = vld [vmem:[#allocation12 + $0x6c8] sm:$0xff]
      %v5339 = vld [vmem:[#allocation12 + $0x6d0] sm:$0xff]
      %v5340 = vld [vmem:[#allocation12 + $0x6d8] sm:$0xff]
      %v5341 = vld [vmem:[#allocation12 + $0x6e0] sm:$0xff]
      %v5342 = vld [vmem:[#allocation12 + $0x6e8] sm:$0xff]
      %v5343 = vld [vmem:[#allocation12 + $0x6f0] sm:$0xff]
      %v5344 = vld [vmem:[#allocation12 + $0x6f8] sm:$0xff]
      %v5345 = vld [vmem:[#allocation12 + $0x700] sm:$0xff]
      %v5346 = vld [vmem:[#allocation12 + $0x708] sm:$0xff]
      %v5347 = vld [vmem:[#allocation12 + $0x710] sm:$0xff]
      %v5348 = vld [vmem:[#allocation12 + $0x718] sm:$0xff]
      %v5349 = vld [vmem:[#allocation12 + $0x720] sm:$0xff]
      %v5350 = vld [vmem:[#allocation12 + $0x728] sm:$0xff]
      %v5351 = vld [vmem:[#allocation12 + $0x730] sm:$0xff]
      %v5352 = vld [vmem:[#allocation12 + $0x738] sm:$0xff]
      %v5353 = vld [vmem:[#allocation12 + $0x740] sm:$0xff]
      %v5354 = vld [vmem:[#allocation12 + $0x748] sm:$0xff]
      %v5355 = vld [vmem:[#allocation12 + $0x750] sm:$0xff]
      %v5356 = vld [vmem:[#allocation12 + $0x758] sm:$0xff]
      %v5357 = vld [vmem:[#allocation12 + $0x760] sm:$0xff]
      %v5358 = vld [vmem:[#allocation12 + $0x768] sm:$0xff]
      %v5359 = vld [vmem:[#allocation12 + $0x770] sm:$0xff]
      %v5360 = vld [vmem:[#allocation12 + $0x778] sm:$0xff]
      %v5361 = vld [vmem:[#allocation12 + $0x780] sm:$0xff]
      %v5362 = vld [vmem:[#allocation12 + $0x788] sm:$0xff]
      %v5363 = vld [vmem:[#allocation12 + $0x790] sm:$0xff]
      %v5364 = vld [vmem:[#allocation12 + $0x798] sm:$0xff]
      %v5365 = vld [vmem:[#allocation12 + $0x7a0] sm:$0xff]
      %v5366 = vld [vmem:[#allocation12 + $0x7a8] sm:$0xff]
      %v5367 = vld [vmem:[#allocation12 + $0x7b0] sm:$0xff]
      %v5368 = vld [vmem:[#allocation12 + $0x7b8] sm:$0xff]
      %v5369 = vld [vmem:[#allocation12 + $0x7c0] sm:$0xff]
      %v5370 = vld [vmem:[#allocation12 + $0x7c8] sm:$0xff]
      %v5371 = vld [vmem:[#allocation12 + $0x7d0] sm:$0xff]
      %v5372 = vld [vmem:[#allocation12 + $0x7d8] sm:$0xff]
      %v5373 = vld [vmem:[#allocation12 + $0x7e0] sm:$0xff]
      %v5374 = vld [vmem:[#allocation12 + $0x7e8] sm:$0xff]
      %v5375 = vld [vmem:[#allocation12 + $0x7f0] sm:$0xff]
      %v5376 = vld [vmem:[#allocation12 + $0x7f8] sm:$0xff]
      %v5377 = vld [vmem:[#allocation12 + $0x800] sm:$0xff]
      %v5378 = vld [vmem:[#allocation12 + $0x808] sm:$0xff]
      %v5379 = vld [vmem:[#allocation12 + $0x810] sm:$0xff]
      %v5380 = vld [vmem:[#allocation12 + $0x818] sm:$0xff]
      %v5381 = vld [vmem:[#allocation12 + $0x820] sm:$0xff]
      %v5382 = vld [vmem:[#allocation12 + $0x828] sm:$0xff]
      %v5383 = vld [vmem:[#allocation12 + $0x830] sm:$0xff]
      %v5384 = vld [vmem:[#allocation12 + $0x838] sm:$0xff]
      %v5385 = vld [vmem:[#allocation12 + $0x840] sm:$0xff]
      %v5386 = vld [vmem:[#allocation12 + $0x848] sm:$0xff]
      %v5387 = vld [vmem:[#allocation12 + $0x850] sm:$0xff]
      %v5388 = vld [vmem:[#allocation12 + $0x858] sm:$0xff]
      %v5389 = vld [vmem:[#allocation12 + $0x860] sm:$0xff]
      %v5390 = vld [vmem:[#allocation12 + $0x868] sm:$0xff]
      %v5391 = vld [vmem:[#allocation12 + $0x870] sm:$0xff]
      %v5392 = vld [vmem:[#allocation12 + $0x878] sm:$0xff]
      %v5393 = vld [vmem:[#allocation12 + $0x880] sm:$0xff]
      %v5394 = vld [vmem:[#allocation12 + $0x888] sm:$0xff]
      %v5395 = vld [vmem:[#allocation12 + $0x890] sm:$0xff]
      %v5396 = vld [vmem:[#allocation12 + $0x898] sm:$0xff]
      %v5397 = vld [vmem:[#allocation12 + $0x8a0] sm:$0xff]
      %v5398 = vld [vmem:[#allocation12 + $0x8a8] sm:$0xff]
      %v5399 = vld [vmem:[#allocation12 + $0x8b0] sm:$0xff]
      %v5400 = vld [vmem:[#allocation12 + $0x8b8] sm:$0xff]
      %v5401 = vld [vmem:[#allocation12 + $0x8c0] sm:$0xff]
      %v5402 = vld [vmem:[#allocation12 + $0x8c8] sm:$0xff]
      %v5403 = vld [vmem:[#allocation12 + $0x8d0] sm:$0xff]
      %v5404 = vld [vmem:[#allocation12 + $0x8d8] sm:$0xff]
      %v5405 = vld [vmem:[#allocation12 + $0x8e0] sm:$0xff]
      %v5406 = vld [vmem:[#allocation12 + $0x8e8] sm:$0xff]
      %v5407 = vld [vmem:[#allocation12 + $0x8f0] sm:$0xff]
      %v5408 = vld [vmem:[#allocation12 + $0x8f8] sm:$0xff]
      %v5409 = vld [vmem:[#allocation12 + $0x900] sm:$0xff]
      %v5410 = vld [vmem:[#allocation12 + $0x908] sm:$0xff]
      %v5411 = vld [vmem:[#allocation12 + $0x910] sm:$0xff]
      %v5412 = vld [vmem:[#allocation12 + $0x918] sm:$0xff]
      %v5413 = vld [vmem:[#allocation12 + $0x920] sm:$0xff]
      %v5414 = vld [vmem:[#allocation12 + $0x928] sm:$0xff]
      %v5415 = vld [vmem:[#allocation12 + $0x930] sm:$0xff]
      %v5416 = vld [vmem:[#allocation12 + $0x938] sm:$0xff]
      %v5417 = vld [vmem:[#allocation12 + $0x940] sm:$0xff]
      %v5418 = vld [vmem:[#allocation12 + $0x948] sm:$0xff]
      %v5419 = vld [vmem:[#allocation12 + $0x950] sm:$0xff]
      %v5420 = vld [vmem:[#allocation12 + $0x958] sm:$0xff]
      %v5421 = vld [vmem:[#allocation12 + $0x960] sm:$0xff]
      %v5422 = vld [vmem:[#allocation12 + $0x968] sm:$0xff]
      %v5423 = vld [vmem:[#allocation12 + $0x970] sm:$0xff]
      %v5424 = vld [vmem:[#allocation12 + $0x978] sm:$0xff]
      %v5425 = vld [vmem:[#allocation12 + $0x980] sm:$0xff]
      %v5426 = vld [vmem:[#allocation12 + $0x988] sm:$0xff]
      %v5427 = vld [vmem:[#allocation12 + $0x990] sm:$0xff]
      %v5428 = vld [vmem:[#allocation12 + $0x998] sm:$0xff]
      %v5429 = vld [vmem:[#allocation12 + $0x9a0] sm:$0xff]
      %v5430 = vld [vmem:[#allocation12 + $0x9a8] sm:$0xff]
      %v5431 = vld [vmem:[#allocation12 + $0x9b0] sm:$0xff]
      %v5432 = vld [vmem:[#allocation12 + $0x9b8] sm:$0xff]
      %v5433 = vld [vmem:[#allocation12 + $0x9c0] sm:$0xff]
      %v5434 = vld [vmem:[#allocation12 + $0x9c8] sm:$0xff]
      %v5435 = vld [vmem:[#allocation12 + $0x9d0] sm:$0xff]
      %v5436 = vld [vmem:[#allocation12 + $0x9d8] sm:$0xff]
      %v5437 = vld [vmem:[#allocation12 + $0x9e0] sm:$0xff]
      %v5438 = vld [vmem:[#allocation12 + $0x9e8] sm:$0xff]
      %v5439 = vld [vmem:[#allocation12 + $0x9f0] sm:$0xff]
      %v5440 = vld [vmem:[#allocation12 + $0x9f8] sm:$0xff]
      %v5441 = vld [vmem:[#allocation12 + $0xa00] sm:$0xff]
      %v5442 = vld [vmem:[#allocation12 + $0xa08] sm:$0xff]
      %v5443 = vld [vmem:[#allocation12 + $0xa10] sm:$0xff]
      %v5444 = vld [vmem:[#allocation12 + $0xa18] sm:$0xff]
      %v5445 = vld [vmem:[#allocation12 + $0xa20] sm:$0xff]
      %v5446 = vld [vmem:[#allocation12 + $0xa28] sm:$0xff]
      %v5447 = vld [vmem:[#allocation12 + $0xa30] sm:$0xff]
      %v5448 = vld [vmem:[#allocation12 + $0xa38] sm:$0xff]
      %v5449 = vld [vmem:[#allocation12 + $0xa40] sm:$0xff]
      %v5450 = vld [vmem:[#allocation12 + $0xa48] sm:$0xff]
      %v5451 = vld [vmem:[#allocation12 + $0xa50] sm:$0xff]
      %v5452 = vld [vmem:[#allocation12 + $0xa58] sm:$0xff]
      %v5453 = vld [vmem:[#allocation12 + $0xa60] sm:$0xff]
      %v5454 = vld [vmem:[#allocation12 + $0xa68] sm:$0xff]
      %v5455 = vld [vmem:[#allocation12 + $0xa70] sm:$0xff]
      %v5456 = vld [vmem:[#allocation12 + $0xa78] sm:$0xff]
      %v5457 = vld [vmem:[#allocation12 + $0xa80] sm:$0xff]
      %v5458 = vld [vmem:[#allocation12 + $0xa88] sm:$0xff]
      %v5459 = vld [vmem:[#allocation12 + $0xa90] sm:$0xff]
      %v5460 = vld [vmem:[#allocation12 + $0xa98] sm:$0xff]
      %v5461 = vld [vmem:[#allocation12 + $0xaa0] sm:$0xff]
      %v5462 = vld [vmem:[#allocation12 + $0xaa8] sm:$0xff]
      %v5463 = vld [vmem:[#allocation12 + $0xab0] sm:$0xff]
      %v5464 = vld [vmem:[#allocation12 + $0xab8] sm:$0xff]
      %v5465 = vld [vmem:[#allocation12 + $0xac0] sm:$0xff]
      %v5466 = vld [vmem:[#allocation12 + $0xac8] sm:$0xff]
      %v5467 = vld [vmem:[#allocation12 + $0xad0] sm:$0xff]
      %v5468 = vld [vmem:[#allocation12 + $0xad8] sm:$0xff]
      %v5469 = vld [vmem:[#allocation12 + $0xae0] sm:$0xff]
      %v5470 = vld [vmem:[#allocation12 + $0xae8] sm:$0xff]
      %v5471 = vld [vmem:[#allocation12 + $0xaf0] sm:$0xff]
      %v5472 = vld [vmem:[#allocation12 + $0xaf8] sm:$0xff]
      %v5473 = vld [vmem:[#allocation12 + $0xb00] sm:$0xff]
      %v5474 = vld [vmem:[#allocation12 + $0xb08] sm:$0xff]
      %v5475 = vld [vmem:[#allocation12 + $0xb10] sm:$0xff]
      %v5476 = vld [vmem:[#allocation12 + $0xb18] sm:$0xff]
      %v5477 = vld [vmem:[#allocation12 + $0xb20] sm:$0xff]
      %v5478 = vld [vmem:[#allocation12 + $0xb28] sm:$0xff]
      %v5479 = vld [vmem:[#allocation12 + $0xb30] sm:$0xff]
      %v5480 = vld [vmem:[#allocation12 + $0xb38] sm:$0xff]
      %v5481 = vld [vmem:[#allocation12 + $0xb40] sm:$0xff]
      %v5482 = vld [vmem:[#allocation12 + $0xb48] sm:$0xff]
      %v5483 = vld [vmem:[#allocation12 + $0xb50] sm:$0xff]
      %v5484 = vld [vmem:[#allocation12 + $0xb58] sm:$0xff]
      %v5485 = vld [vmem:[#allocation12 + $0xb60] sm:$0xff]
      %v5486 = vld [vmem:[#allocation12 + $0xb68] sm:$0xff]
      %v5487 = vld [vmem:[#allocation12 + $0xb70] sm:$0xff]
      %v5488 = vld [vmem:[#allocation12 + $0xb78] sm:$0xff]
      %v5489 = vld [vmem:[#allocation12 + $0xb80] sm:$0xff]
      %v5490 = vld [vmem:[#allocation12 + $0xb88] sm:$0xff]
      %v5491 = vld [vmem:[#allocation12 + $0xb90] sm:$0xff]
      %v5492 = vld [vmem:[#allocation12 + $0xb98] sm:$0xff]
      %v5493 = vld [vmem:[#allocation12 + $0xba0] sm:$0xff]
      %v5494 = vld [vmem:[#allocation12 + $0xba8] sm:$0xff]
      %v5495 = vld [vmem:[#allocation12 + $0xbb0] sm:$0xff]
      %v5496 = vld [vmem:[#allocation12 + $0xbb8] sm:$0xff]
      %v5497 = vld [vmem:[#allocation12 + $0xbc0] sm:$0xff]
      %v5498 = vld [vmem:[#allocation12 + $0xbc8] sm:$0xff]
      %v5499 = vld [vmem:[#allocation12 + $0xbd0] sm:$0xff]
      %v5500 = vld [vmem:[#allocation12 + $0xbd8] sm:$0xff]
      %v5501 = vld [vmem:[#allocation12 + $0xbe0] sm:$0xff]
      %v5502 = vld [vmem:[#allocation12 + $0xbe8] sm:$0xff]
      %v5503 = vld [vmem:[#allocation12 + $0xbf0] sm:$0xff]
      %v5504 = vld [vmem:[#allocation12 + $0xbf8] sm:$0xff]
      %v5505 = vld [vmem:[#allocation12 + $0xc00] sm:$0xff]
      %v5506 = vld [vmem:[#allocation12 + $0xc08] sm:$0xff]
      %v5507 = vld [vmem:[#allocation12 + $0xc10] sm:$0xff]
      %v5508 = vld [vmem:[#allocation12 + $0xc18] sm:$0xff]
      %v5509 = vld [vmem:[#allocation12 + $0xc20] sm:$0xff]
      %v5510 = vld [vmem:[#allocation12 + $0xc28] sm:$0xff]
      %v5511 = vld [vmem:[#allocation12 + $0xc30] sm:$0xff]
      %v5512 = vld [vmem:[#allocation12 + $0xc38] sm:$0xff]
      %v5513 = vld [vmem:[#allocation12 + $0xc40] sm:$0xff]
      %v5514 = vld [vmem:[#allocation12 + $0xc48] sm:$0xff]
      %v5515 = vld [vmem:[#allocation12 + $0xc50] sm:$0xff]
      %v5516 = vld [vmem:[#allocation12 + $0xc58] sm:$0xff]
      %v5517 = vld [vmem:[#allocation12 + $0xc60] sm:$0xff]
      %v5518 = vld [vmem:[#allocation12 + $0xc68] sm:$0xff]
      %v5519 = vld [vmem:[#allocation12 + $0xc70] sm:$0xff]
      %v5520 = vld [vmem:[#allocation12 + $0xc78] sm:$0xff]
      %v5521 = vld [vmem:[#allocation12 + $0xc80] sm:$0xff]
      %v5522 = vld [vmem:[#allocation12 + $0xc88] sm:$0xff]
      %v5523 = vld [vmem:[#allocation12 + $0xc90] sm:$0xff]
      %v5524 = vld [vmem:[#allocation12 + $0xc98] sm:$0xff]
      %v5525 = vld [vmem:[#allocation12 + $0xca0] sm:$0xff]
      %v5526 = vld [vmem:[#allocation12 + $0xca8] sm:$0xff]
      %v5527 = vld [vmem:[#allocation12 + $0xcb0] sm:$0xff]
      %v5528 = vld [vmem:[#allocation12 + $0xcb8] sm:$0xff]
      %v5529 = vld [vmem:[#allocation12 + $0xcc0] sm:$0xff]
      %v5530 = vld [vmem:[#allocation12 + $0xcc8] sm:$0xff]
      %v5531 = vld [vmem:[#allocation12 + $0xcd0] sm:$0xff]
      %v5532 = vld [vmem:[#allocation12 + $0xcd8] sm:$0xff]
      %v5533 = vld [vmem:[#allocation12 + $0xce0] sm:$0xff]
      %v5534 = vld [vmem:[#allocation12 + $0xce8] sm:$0xff]
      %v5535 = vld [vmem:[#allocation12 + $0xcf0] sm:$0xff]
      %v5536 = vld [vmem:[#allocation12 + $0xcf8] sm:$0xff]
      %v5537 = vld [vmem:[#allocation12 + $0xd00] sm:$0xff]
      %v5538 = vld [vmem:[#allocation12 + $0xd08] sm:$0xff]
      %v5539 = vld [vmem:[#allocation12 + $0xd10] sm:$0xff]
      %v5540 = vld [vmem:[#allocation12 + $0xd18] sm:$0xff]
      %v5541 = vld [vmem:[#allocation12 + $0xd20] sm:$0xff]
      %v5542 = vld [vmem:[#allocation12 + $0xd28] sm:$0xff]
      %v5543 = vld [vmem:[#allocation12 + $0xd30] sm:$0xff]
      %v5544 = vld [vmem:[#allocation12 + $0xd38] sm:$0xff]
      %v5545 = vld [vmem:[#allocation12 + $0xd40] sm:$0xff]
      %v5546 = vld [vmem:[#allocation12 + $0xd48] sm:$0xff]
      %v5547 = vld [vmem:[#allocation12 + $0xd50] sm:$0xff]
      %v5548 = vld [vmem:[#allocation12 + $0xd58] sm:$0xff]
      %v5549 = vld [vmem:[#allocation12 + $0xd60] sm:$0xff]
      %v5550 = vld [vmem:[#allocation12 + $0xd68] sm:$0xff]
      %v5551 = vld [vmem:[#allocation12 + $0xd70] sm:$0xff]
      %v5552 = vld [vmem:[#allocation12 + $0xd78] sm:$0xff]
      %v5553 = vld [vmem:[#allocation12 + $0xd80] sm:$0xff]
      %v5554 = vld [vmem:[#allocation12 + $0xd88] sm:$0xff]
      %v5555 = vld [vmem:[#allocation12 + $0xd90] sm:$0xff]
      %v5556 = vld [vmem:[#allocation12 + $0xd98] sm:$0xff]
      %v5557 = vld [vmem:[#allocation12 + $0xda0] sm:$0xff]
      %v5558 = vld [vmem:[#allocation12 + $0xda8] sm:$0xff]
      %v5559 = vld [vmem:[#allocation12 + $0xdb0] sm:$0xff]
      %v5560 = vld [vmem:[#allocation12 + $0xdb8] sm:$0xff]
      %v5561 = vld [vmem:[#allocation12 + $0xdc0] sm:$0xff]
      %v5562 = vld [vmem:[#allocation12 + $0xdc8] sm:$0xff]
      %v5563 = vld [vmem:[#allocation12 + $0xdd0] sm:$0xff]
      %v5564 = vld [vmem:[#allocation12 + $0xdd8] sm:$0xff]
      %v5565 = vld [vmem:[#allocation12 + $0xde0] sm:$0xff]
      %v5566 = vld [vmem:[#allocation12 + $0xde8] sm:$0xff]
      %v5567 = vld [vmem:[#allocation12 + $0xdf0] sm:$0xff]
      %v5568 = vld [vmem:[#allocation12 + $0xdf8] sm:$0xff]
      %v5569 = vld [vmem:[#allocation12 + $0xe00] sm:$0xff]
      %v5570 = vld [vmem:[#allocation12 + $0xe08] sm:$0xff]
      %v5571 = vld [vmem:[#allocation12 + $0xe10] sm:$0xff]
      %v5572 = vld [vmem:[#allocation12 + $0xe18] sm:$0xff]
      %v5573 = vld [vmem:[#allocation12 + $0xe20] sm:$0xff]
      %v5574 = vld [vmem:[#allocation12 + $0xe28] sm:$0xff]
      %v5575 = vld [vmem:[#allocation12 + $0xe30] sm:$0xff]
      %v5576 = vld [vmem:[#allocation12 + $0xe38] sm:$0xff]
      %v5577 = vld [vmem:[#allocation12 + $0xe40] sm:$0xff]
      %v5578 = vld [vmem:[#allocation12 + $0xe48] sm:$0xff]
      %v5579 = vld [vmem:[#allocation12 + $0xe50] sm:$0xff]
      %v5580 = vld [vmem:[#allocation12 + $0xe58] sm:$0xff]
      %v5581 = vld [vmem:[#allocation12 + $0xe60] sm:$0xff]
      %v5582 = vld [vmem:[#allocation12 + $0xe68] sm:$0xff]
      %v5583 = vld [vmem:[#allocation12 + $0xe70] sm:$0xff]
      %v5584 = vld [vmem:[#allocation12 + $0xe78] sm:$0xff]
      %v5585 = vld [vmem:[#allocation12 + $0xe80] sm:$0xff]
      %v5586 = vld [vmem:[#allocation12 + $0xe88] sm:$0xff]
      %v5587 = vld [vmem:[#allocation12 + $0xe90] sm:$0xff]
      %v5588 = vld [vmem:[#allocation12 + $0xe98] sm:$0xff]
      %v5589 = vld [vmem:[#allocation12 + $0xea0] sm:$0xff]
      %v5590 = vld [vmem:[#allocation12 + $0xea8] sm:$0xff]
      %v5591 = vld [vmem:[#allocation12 + $0xeb0] sm:$0xff]
      %v5592 = vld [vmem:[#allocation12 + $0xeb8] sm:$0xff]
      %v5593 = vld [vmem:[#allocation12 + $0xec0] sm:$0xff]
      %v5594 = vld [vmem:[#allocation12 + $0xec8] sm:$0xff]
      %v5595 = vld [vmem:[#allocation12 + $0xed0] sm:$0xff]
      %v5596 = vld [vmem:[#allocation12 + $0xed8] sm:$0xff]
      %v5597 = vld [vmem:[#allocation12 + $0xee0] sm:$0xff]
      %v5598 = vld [vmem:[#allocation12 + $0xee8] sm:$0xff]
      %v5599 = vld [vmem:[#allocation12 + $0xef0] sm:$0xff]
      %v5600 = vld [vmem:[#allocation12 + $0xef8] sm:$0xff]
      %v5601 = vld [vmem:[#allocation12 + $0xf00] sm:$0xff]
      %v5602 = vld [vmem:[#allocation12 + $0xf08] sm:$0xff]
      %v5603 = vld [vmem:[#allocation12 + $0xf10] sm:$0xff]
      %v5604 = vld [vmem:[#allocation12 + $0xf18] sm:$0xff]
      %v5605 = vld [vmem:[#allocation12 + $0xf20] sm:$0xff]
      %v5606 = vld [vmem:[#allocation12 + $0xf28] sm:$0xff]
      %v5607 = vld [vmem:[#allocation12 + $0xf30] sm:$0xff]
      %v5608 = vld [vmem:[#allocation12 + $0xf38] sm:$0xff]
      %v5609 = vld [vmem:[#allocation12 + $0xf40] sm:$0xff]
      %v5610 = vld [vmem:[#allocation12 + $0xf48] sm:$0xff]
      %v5611 = vld [vmem:[#allocation12 + $0xf50] sm:$0xff]
      %v5612 = vld [vmem:[#allocation12 + $0xf58] sm:$0xff]
      %v5613 = vld [vmem:[#allocation12 + $0xf60] sm:$0xff]
      %v5614 = vld [vmem:[#allocation12 + $0xf68] sm:$0xff]
      %v5615 = vld [vmem:[#allocation12 + $0xf70] sm:$0xff]
      %v5616 = vld [vmem:[#allocation12 + $0xf78] sm:$0xff]
      %v5617 = vld [vmem:[#allocation12 + $0xf80] sm:$0xff]
      %v5618 = vld [vmem:[#allocation12 + $0xf88] sm:$0xff]
      %v5619 = vld [vmem:[#allocation12 + $0xf90] sm:$0xff]
      %v5620 = vld [vmem:[#allocation12 + $0xf98] sm:$0xff]
      %v5621 = vld [vmem:[#allocation12 + $0xfa0] sm:$0xff]
      %v5622 = vld [vmem:[#allocation12 + $0xfa8] sm:$0xff]
      %v5623 = vld [vmem:[#allocation12 + $0xfb0] sm:$0xff]
      %v5624 = vld [vmem:[#allocation12 + $0xfb8] sm:$0xff]
      %v5625 = vld [vmem:[#allocation12 + $0xfc0] sm:$0xff]
      %v5626 = vld [vmem:[#allocation12 + $0xfc8] sm:$0xff]
      %v5627 = vld [vmem:[#allocation12 + $0xfd0] sm:$0xff]
      %v5628 = vld [vmem:[#allocation12 + $0xfd8] sm:$0xff]
      %v5629 = vld [vmem:[#allocation12 + $0xfe0] sm:$0xff]
      %v5630 = vld [vmem:[#allocation12 + $0xfe8] sm:$0xff]
      %v5631 = vld [vmem:[#allocation12 + $0xff0] sm:$0xff]
      %v5632 = vld [vmem:[#allocation12 + $0xff8] sm:$0xff]
      %v5633 = vld [vmem:[#allocation14] sm:$0xff]
      %v5634 = vld [vmem:[#allocation14 + $0x8] sm:$0xff]
      %v5637 = vlaneseq
      %v5638 = vshrl.u32 %v5637, 7
      %v5639 = vsub.s32 0, %v5638
      %v5640 = vrot.slane %v5633, %v5639
      %v5641 = vlaneseq
      %v5642 = vshrl.u32 %v5641, 7
      %v5643 = vsub.s32 1, %v5642
      %v5644 = vrot.slane %v5633, %v5643
      %v5645 = vlaneseq
      %v5646 = vshrl.u32 %v5645, 7
      %v5647 = vsub.s32 2, %v5646
      %v5648 = vrot.slane %v5633, %v5647
      %v5649 = vlaneseq
      %v5650 = vshrl.u32 %v5649, 7
      %v5651 = vsub.s32 3, %v5650
      %v5652 = vrot.slane %v5633, %v5651
      %v5653 = vlaneseq
      %v5654 = vshrl.u32 %v5653, 7
      %v5655 = vsub.s32 4, %v5654
      %v5656 = vrot.slane %v5633, %v5655
      %v5657 = vlaneseq
      %v5658 = vshrl.u32 %v5657, 7
      %v5659 = vsub.s32 5, %v5658
      %v5660 = vrot.slane %v5633, %v5659
      %v5661 = vlaneseq
      %v5662 = vshrl.u32 %v5661, 7
      %v5663 = vsub.s32 6, %v5662
      %v5664 = vrot.slane %v5633, %v5663
      %v5665 = vlaneseq
      %v5666 = vshrl.u32 %v5665, 7
      %v5667 = vsub.s32 7, %v5666
      %v5668 = vrot.slane %v5633, %v5667
      %v5669 = vlaneseq
      %v5670 = vshrl.u32 %v5669, 7
      %v5671 = vsub.s32 0, %v5670
      %v5672 = vrot.slane %v5634, %v5671
      %v5673 = vlaneseq
      %v5674 = vshrl.u32 %v5673, 7
      %v5675 = vsub.s32 1, %v5674
      %v5676 = vrot.slane %v5634, %v5675
      %v5677 = vlaneseq
      %v5678 = vshrl.u32 %v5677, 7
      %v5679 = vsub.s32 2, %v5678
      %v5680 = vrot.slane %v5634, %v5679
      %v5681 = vlaneseq
      %v5682 = vshrl.u32 %v5681, 7
      %v5683 = vsub.s32 3, %v5682
      %v5684 = vrot.slane %v5634, %v5683
      %v5685 = vlaneseq
      %v5686 = vshrl.u32 %v5685, 7
      %v5687 = vsub.s32 4, %v5686
      %v5688 = vrot.slane %v5634, %v5687
      %v5689 = vlaneseq
      %v5690 = vshrl.u32 %v5689, 7
      %v5691 = vsub.s32 5, %v5690
      %v5692 = vrot.slane %v5634, %v5691
      %v5693 = vlaneseq
      %v5694 = vshrl.u32 %v5693, 7
      %v5695 = vsub.s32 6, %v5694
      %v5696 = vrot.slane %v5634, %v5695
      %v5697 = vlaneseq
      %v5698 = vshrl.u32 %v5697, 7
      %v5699 = vsub.s32 7, %v5698
      %v5700 = vrot.slane %v5634, %v5699
      %v6229 = vunpack.c.l.b16 %v5121
      %v6230 = vunpack.c.h.b16 %v5121
      %v6231 = vunpack.c.l.b16 %v5122
      %v6232 = vunpack.c.h.b16 %v5122
      %v6233 = vunpack.c.l.b16 %v5123
      %v6234 = vunpack.c.h.b16 %v5123
      %v6235 = vunpack.c.l.b16 %v5124
      %v6236 = vunpack.c.h.b16 %v5124
      %v6237 = vunpack.c.l.b16 %v5125
      %v6238 = vunpack.c.h.b16 %v5125
      %v6239 = vunpack.c.l.b16 %v5126
      %v6240 = vunpack.c.h.b16 %v5126
      %v6241 = vunpack.c.l.b16 %v5127
      %v6242 = vunpack.c.h.b16 %v5127
      %v6243 = vunpack.c.l.b16 %v5128
      %v6244 = vunpack.c.h.b16 %v5128
      %v6245 = vunpack.c.l.b16 %v5129
      %v6246 = vunpack.c.h.b16 %v5129
      %v6247 = vunpack.c.l.b16 %v5130
      %v6248 = vunpack.c.h.b16 %v5130
      %v6249 = vunpack.c.l.b16 %v5131
      %v6250 = vunpack.c.h.b16 %v5131
      %v6251 = vunpack.c.l.b16 %v5132
      %v6252 = vunpack.c.h.b16 %v5132
      %v6253 = vunpack.c.l.b16 %v5133
      %v6254 = vunpack.c.h.b16 %v5133
      %v6255 = vunpack.c.l.b16 %v5134
      %v6256 = vunpack.c.h.b16 %v5134
      %v6257 = vunpack.c.l.b16 %v5135
      %v6258 = vunpack.c.h.b16 %v5135
      %v6259 = vunpack.c.l.b16 %v5136
      %v6260 = vunpack.c.h.b16 %v5136
      %v6261 = vunpack.c.l.b16 %v5137
      %v6262 = vunpack.c.h.b16 %v5137
      %v6263 = vunpack.c.l.b16 %v5138
      %v6264 = vunpack.c.h.b16 %v5138
      %v6265 = vunpack.c.l.b16 %v5139
      %v6266 = vunpack.c.h.b16 %v5139
      %v6267 = vunpack.c.l.b16 %v5140
      %v6268 = vunpack.c.h.b16 %v5140
      %v6269 = vunpack.c.l.b16 %v5141
      %v6270 = vunpack.c.h.b16 %v5141
      %v6271 = vunpack.c.l.b16 %v5142
      %v6272 = vunpack.c.h.b16 %v5142
      %v6273 = vunpack.c.l.b16 %v5143
      %v6274 = vunpack.c.h.b16 %v5143
      %v6275 = vunpack.c.l.b16 %v5144
      %v6276 = vunpack.c.h.b16 %v5144
      %v6277 = vunpack.c.l.b16 %v5145
      %v6278 = vunpack.c.h.b16 %v5145
      %v6279 = vunpack.c.l.b16 %v5146
      %v6280 = vunpack.c.h.b16 %v5146
      %v6281 = vunpack.c.l.b16 %v5147
      %v6282 = vunpack.c.h.b16 %v5147
      %v6283 = vunpack.c.l.b16 %v5148
      %v6284 = vunpack.c.h.b16 %v5148
      %v6285 = vunpack.c.l.b16 %v5149
      %v6286 = vunpack.c.h.b16 %v5149
      %v6287 = vunpack.c.l.b16 %v5150
      %v6288 = vunpack.c.h.b16 %v5150
      %v6289 = vunpack.c.l.b16 %v5151
      %v6290 = vunpack.c.h.b16 %v5151
      %v6291 = vunpack.c.l.b16 %v5152
      %v6292 = vunpack.c.h.b16 %v5152
      %v6293 = vunpack.c.l.b16 %v5153
      %v6294 = vunpack.c.h.b16 %v5153
      %v6295 = vunpack.c.l.b16 %v5154
      %v6296 = vunpack.c.h.b16 %v5154
      %v6297 = vunpack.c.l.b16 %v5155
      %v6298 = vunpack.c.h.b16 %v5155
      %v6299 = vunpack.c.l.b16 %v5156
      %v6300 = vunpack.c.h.b16 %v5156
      %v6301 = vunpack.c.l.b16 %v5157
      %v6302 = vunpack.c.h.b16 %v5157
      %v6303 = vunpack.c.l.b16 %v5158
      %v6304 = vunpack.c.h.b16 %v5158
      %v6305 = vunpack.c.l.b16 %v5159
      %v6306 = vunpack.c.h.b16 %v5159
      %v6307 = vunpack.c.l.b16 %v5160
      %v6308 = vunpack.c.h.b16 %v5160
      %v6309 = vunpack.c.l.b16 %v5161
      %v6310 = vunpack.c.h.b16 %v5161
      %v6311 = vunpack.c.l.b16 %v5162
      %v6312 = vunpack.c.h.b16 %v5162
      %v6313 = vunpack.c.l.b16 %v5163
      %v6314 = vunpack.c.h.b16 %v5163
      %v6315 = vunpack.c.l.b16 %v5164
      %v6316 = vunpack.c.h.b16 %v5164
      %v6317 = vunpack.c.l.b16 %v5165
      %v6318 = vunpack.c.h.b16 %v5165
      %v6319 = vunpack.c.l.b16 %v5166
      %v6320 = vunpack.c.h.b16 %v5166
      %v6321 = vunpack.c.l.b16 %v5167
      %v6322 = vunpack.c.h.b16 %v5167
      %v6323 = vunpack.c.l.b16 %v5168
      %v6324 = vunpack.c.h.b16 %v5168
      %v6325 = vunpack.c.l.b16 %v5169
      %v6326 = vunpack.c.h.b16 %v5169
      %v6327 = vunpack.c.l.b16 %v5170
      %v6328 = vunpack.c.h.b16 %v5170
      %v6329 = vunpack.c.l.b16 %v5171
      %v6330 = vunpack.c.h.b16 %v5171
      %v6331 = vunpack.c.l.b16 %v5172
      %v6332 = vunpack.c.h.b16 %v5172
      %v6333 = vunpack.c.l.b16 %v5173
      %v6334 = vunpack.c.h.b16 %v5173
      %v6335 = vunpack.c.l.b16 %v5174
      %v6336 = vunpack.c.h.b16 %v5174
      %v6337 = vunpack.c.l.b16 %v5175
      %v6338 = vunpack.c.h.b16 %v5175
      %v6339 = vunpack.c.l.b16 %v5176
      %v6340 = vunpack.c.h.b16 %v5176
      %v6341 = vunpack.c.l.b16 %v5177
      %v6342 = vunpack.c.h.b16 %v5177
      %v6343 = vunpack.c.l.b16 %v5178
      %v6344 = vunpack.c.h.b16 %v5178
      %v6345 = vunpack.c.l.b16 %v5179
      %v6346 = vunpack.c.h.b16 %v5179
      %v6347 = vunpack.c.l.b16 %v5180
      %v6348 = vunpack.c.h.b16 %v5180
      %v6349 = vunpack.c.l.b16 %v5181
      %v6350 = vunpack.c.h.b16 %v5181
      %v6351 = vunpack.c.l.b16 %v5182
      %v6352 = vunpack.c.h.b16 %v5182
      %v6353 = vunpack.c.l.b16 %v5183
      %v6354 = vunpack.c.h.b16 %v5183
      %v6355 = vunpack.c.l.b16 %v5184
      %v6356 = vunpack.c.h.b16 %v5184
      %v6357 = vunpack.c.l.b16 %v5185
      %v6358 = vunpack.c.h.b16 %v5185
      %v6359 = vunpack.c.l.b16 %v5186
      %v6360 = vunpack.c.h.b16 %v5186
      %v6361 = vunpack.c.l.b16 %v5187
      %v6362 = vunpack.c.h.b16 %v5187
      %v6363 = vunpack.c.l.b16 %v5188
      %v6364 = vunpack.c.h.b16 %v5188
      %v6365 = vunpack.c.l.b16 %v5189
      %v6366 = vunpack.c.h.b16 %v5189
      %v6367 = vunpack.c.l.b16 %v5190
      %v6368 = vunpack.c.h.b16 %v5190
      %v6369 = vunpack.c.l.b16 %v5191
      %v6370 = vunpack.c.h.b16 %v5191
      %v6371 = vunpack.c.l.b16 %v5192
      %v6372 = vunpack.c.h.b16 %v5192
      %v6373 = vunpack.c.l.b16 %v5193
      %v6374 = vunpack.c.h.b16 %v5193
      %v6375 = vunpack.c.l.b16 %v5194
      %v6376 = vunpack.c.h.b16 %v5194
      %v6377 = vunpack.c.l.b16 %v5195
      %v6378 = vunpack.c.h.b16 %v5195
      %v6379 = vunpack.c.l.b16 %v5196
      %v6380 = vunpack.c.h.b16 %v5196
      %v6381 = vunpack.c.l.b16 %v5197
      %v6382 = vunpack.c.h.b16 %v5197
      %v6383 = vunpack.c.l.b16 %v5198
      %v6384 = vunpack.c.h.b16 %v5198
      %v6385 = vunpack.c.l.b16 %v5199
      %v6386 = vunpack.c.h.b16 %v5199
      %v6387 = vunpack.c.l.b16 %v5200
      %v6388 = vunpack.c.h.b16 %v5200
      %v6389 = vunpack.c.l.b16 %v5201
      %v6390 = vunpack.c.h.b16 %v5201
      %v6391 = vunpack.c.l.b16 %v5202
      %v6392 = vunpack.c.h.b16 %v5202
      %v6393 = vunpack.c.l.b16 %v5203
      %v6394 = vunpack.c.h.b16 %v5203
      %v6395 = vunpack.c.l.b16 %v5204
      %v6396 = vunpack.c.h.b16 %v5204
      %v6397 = vunpack.c.l.b16 %v5205
      %v6398 = vunpack.c.h.b16 %v5205
      %v6399 = vunpack.c.l.b16 %v5206
      %v6400 = vunpack.c.h.b16 %v5206
      %v6401 = vunpack.c.l.b16 %v5207
      %v6402 = vunpack.c.h.b16 %v5207
      %v6403 = vunpack.c.l.b16 %v5208
      %v6404 = vunpack.c.h.b16 %v5208
      %v6405 = vunpack.c.l.b16 %v5209
      %v6406 = vunpack.c.h.b16 %v5209
      %v6407 = vunpack.c.l.b16 %v5210
      %v6408 = vunpack.c.h.b16 %v5210
      %v6409 = vunpack.c.l.b16 %v5211
      %v6410 = vunpack.c.h.b16 %v5211
      %v6411 = vunpack.c.l.b16 %v5212
      %v6412 = vunpack.c.h.b16 %v5212
      %v6413 = vunpack.c.l.b16 %v5213
      %v6414 = vunpack.c.h.b16 %v5213
      %v6415 = vunpack.c.l.b16 %v5214
      %v6416 = vunpack.c.h.b16 %v5214
      %v6417 = vunpack.c.l.b16 %v5215
      %v6418 = vunpack.c.h.b16 %v5215
      %v6419 = vunpack.c.l.b16 %v5216
      %v6420 = vunpack.c.h.b16 %v5216
      %v6421 = vunpack.c.l.b16 %v5217
      %v6422 = vunpack.c.h.b16 %v5217
      %v6423 = vunpack.c.l.b16 %v5218
      %v6424 = vunpack.c.h.b16 %v5218
      %v6425 = vunpack.c.l.b16 %v5219
      %v6426 = vunpack.c.h.b16 %v5219
      %v6427 = vunpack.c.l.b16 %v5220
      %v6428 = vunpack.c.h.b16 %v5220
      %v6429 = vunpack.c.l.b16 %v5221
      %v6430 = vunpack.c.h.b16 %v5221
      %v6431 = vunpack.c.l.b16 %v5222
      %v6432 = vunpack.c.h.b16 %v5222
      %v6433 = vunpack.c.l.b16 %v5223
      %v6434 = vunpack.c.h.b16 %v5223
      %v6435 = vunpack.c.l.b16 %v5224
      %v6436 = vunpack.c.h.b16 %v5224
      %v6437 = vunpack.c.l.b16 %v5225
      %v6438 = vunpack.c.h.b16 %v5225
      %v6439 = vunpack.c.l.b16 %v5226
      %v6440 = vunpack.c.h.b16 %v5226
      %v6441 = vunpack.c.l.b16 %v5227
      %v6442 = vunpack.c.h.b16 %v5227
      %v6443 = vunpack.c.l.b16 %v5228
      %v6444 = vunpack.c.h.b16 %v5228
      %v6445 = vunpack.c.l.b16 %v5229
      %v6446 = vunpack.c.h.b16 %v5229
      %v6447 = vunpack.c.l.b16 %v5230
      %v6448 = vunpack.c.h.b16 %v5230
      %v6449 = vunpack.c.l.b16 %v5231
      %v6450 = vunpack.c.h.b16 %v5231
      %v6451 = vunpack.c.l.b16 %v5232
      %v6452 = vunpack.c.h.b16 %v5232
      %v6453 = vunpack.c.l.b16 %v5233
      %v6454 = vunpack.c.h.b16 %v5233
      %v6455 = vunpack.c.l.b16 %v5234
      %v6456 = vunpack.c.h.b16 %v5234
      %v6457 = vunpack.c.l.b16 %v5235
      %v6458 = vunpack.c.h.b16 %v5235
      %v6459 = vunpack.c.l.b16 %v5236
      %v6460 = vunpack.c.h.b16 %v5236
      %v6461 = vunpack.c.l.b16 %v5237
      %v6462 = vunpack.c.h.b16 %v5237
      %v6463 = vunpack.c.l.b16 %v5238
      %v6464 = vunpack.c.h.b16 %v5238
      %v6465 = vunpack.c.l.b16 %v5239
      %v6466 = vunpack.c.h.b16 %v5239
      %v6467 = vunpack.c.l.b16 %v5240
      %v6468 = vunpack.c.h.b16 %v5240
      %v6469 = vunpack.c.l.b16 %v5241
      %v6470 = vunpack.c.h.b16 %v5241
      %v6471 = vunpack.c.l.b16 %v5242
      %v6472 = vunpack.c.h.b16 %v5242
      %v6473 = vunpack.c.l.b16 %v5243
      %v6474 = vunpack.c.h.b16 %v5243
      %v6475 = vunpack.c.l.b16 %v5244
      %v6476 = vunpack.c.h.b16 %v5244
      %v6477 = vunpack.c.l.b16 %v5245
      %v6478 = vunpack.c.h.b16 %v5245
      %v6479 = vunpack.c.l.b16 %v5246
      %v6480 = vunpack.c.h.b16 %v5246
      %v6481 = vunpack.c.l.b16 %v5247
      %v6482 = vunpack.c.h.b16 %v5247
      %v6483 = vunpack.c.l.b16 %v5248
      %v6484 = vunpack.c.h.b16 %v5248
      %v6485 = vunpack.c.l.b16 %v5249
      %v6486 = vunpack.c.h.b16 %v5249
      %v6487 = vunpack.c.l.b16 %v5250
      %v6488 = vunpack.c.h.b16 %v5250
      %v6489 = vunpack.c.l.b16 %v5251
      %v6490 = vunpack.c.h.b16 %v5251
      %v6491 = vunpack.c.l.b16 %v5252
      %v6492 = vunpack.c.h.b16 %v5252
      %v6493 = vunpack.c.l.b16 %v5253
      %v6494 = vunpack.c.h.b16 %v5253
      %v6495 = vunpack.c.l.b16 %v5254
      %v6496 = vunpack.c.h.b16 %v5254
      %v6497 = vunpack.c.l.b16 %v5255
      %v6498 = vunpack.c.h.b16 %v5255
      %v6499 = vunpack.c.l.b16 %v5256
      %v6500 = vunpack.c.h.b16 %v5256
      %v6501 = vunpack.c.l.b16 %v5257
      %v6502 = vunpack.c.h.b16 %v5257
      %v6503 = vunpack.c.l.b16 %v5258
      %v6504 = vunpack.c.h.b16 %v5258
      %v6505 = vunpack.c.l.b16 %v5259
      %v6506 = vunpack.c.h.b16 %v5259
      %v6507 = vunpack.c.l.b16 %v5260
      %v6508 = vunpack.c.h.b16 %v5260
      %v6509 = vunpack.c.l.b16 %v5261
      %v6510 = vunpack.c.h.b16 %v5261
      %v6511 = vunpack.c.l.b16 %v5262
      %v6512 = vunpack.c.h.b16 %v5262
      %v6513 = vunpack.c.l.b16 %v5263
      %v6514 = vunpack.c.h.b16 %v5263
      %v6515 = vunpack.c.l.b16 %v5264
      %v6516 = vunpack.c.h.b16 %v5264
      %v6517 = vunpack.c.l.b16 %v5265
      %v6518 = vunpack.c.h.b16 %v5265
      %v6519 = vunpack.c.l.b16 %v5266
      %v6520 = vunpack.c.h.b16 %v5266
      %v6521 = vunpack.c.l.b16 %v5267
      %v6522 = vunpack.c.h.b16 %v5267
      %v6523 = vunpack.c.l.b16 %v5268
      %v6524 = vunpack.c.h.b16 %v5268
      %v6525 = vunpack.c.l.b16 %v5269
      %v6526 = vunpack.c.h.b16 %v5269
      %v6527 = vunpack.c.l.b16 %v5270
      %v6528 = vunpack.c.h.b16 %v5270
      %v6529 = vunpack.c.l.b16 %v5271
      %v6530 = vunpack.c.h.b16 %v5271
      %v6531 = vunpack.c.l.b16 %v5272
      %v6532 = vunpack.c.h.b16 %v5272
      %v6533 = vunpack.c.l.b16 %v5273
      %v6534 = vunpack.c.h.b16 %v5273
      %v6535 = vunpack.c.l.b16 %v5274
      %v6536 = vunpack.c.h.b16 %v5274
      %v6537 = vunpack.c.l.b16 %v5275
      %v6538 = vunpack.c.h.b16 %v5275
      %v6539 = vunpack.c.l.b16 %v5276
      %v6540 = vunpack.c.h.b16 %v5276
      %v6541 = vunpack.c.l.b16 %v5277
      %v6542 = vunpack.c.h.b16 %v5277
      %v6543 = vunpack.c.l.b16 %v5278
      %v6544 = vunpack.c.h.b16 %v5278
      %v6545 = vunpack.c.l.b16 %v5279
      %v6546 = vunpack.c.h.b16 %v5279
      %v6547 = vunpack.c.l.b16 %v5280
      %v6548 = vunpack.c.h.b16 %v5280
      %v6549 = vunpack.c.l.b16 %v5281
      %v6550 = vunpack.c.h.b16 %v5281
      %v6551 = vunpack.c.l.b16 %v5282
      %v6552 = vunpack.c.h.b16 %v5282
      %v6553 = vunpack.c.l.b16 %v5283
      %v6554 = vunpack.c.h.b16 %v5283
      %v6555 = vunpack.c.l.b16 %v5284
      %v6556 = vunpack.c.h.b16 %v5284
      %v6557 = vunpack.c.l.b16 %v5285
      %v6558 = vunpack.c.h.b16 %v5285
      %v6559 = vunpack.c.l.b16 %v5286
      %v6560 = vunpack.c.h.b16 %v5286
      %v6561 = vunpack.c.l.b16 %v5287
      %v6562 = vunpack.c.h.b16 %v5287
      %v6563 = vunpack.c.l.b16 %v5288
      %v6564 = vunpack.c.h.b16 %v5288
      %v6565 = vunpack.c.l.b16 %v5289
      %v6566 = vunpack.c.h.b16 %v5289
      %v6567 = vunpack.c.l.b16 %v5290
      %v6568 = vunpack.c.h.b16 %v5290
      %v6569 = vunpack.c.l.b16 %v5291
      %v6570 = vunpack.c.h.b16 %v5291
      %v6571 = vunpack.c.l.b16 %v5292
      %v6572 = vunpack.c.h.b16 %v5292
      %v6573 = vunpack.c.l.b16 %v5293
      %v6574 = vunpack.c.h.b16 %v5293
      %v6575 = vunpack.c.l.b16 %v5294
      %v6576 = vunpack.c.h.b16 %v5294
      %v6577 = vunpack.c.l.b16 %v5295
      %v6578 = vunpack.c.h.b16 %v5295
      %v6579 = vunpack.c.l.b16 %v5296
      %v6580 = vunpack.c.h.b16 %v5296
      %v6581 = vunpack.c.l.b16 %v5297
      %v6582 = vunpack.c.h.b16 %v5297
      %v6583 = vunpack.c.l.b16 %v5298
      %v6584 = vunpack.c.h.b16 %v5298
      %v6585 = vunpack.c.l.b16 %v5299
      %v6586 = vunpack.c.h.b16 %v5299
      %v6587 = vunpack.c.l.b16 %v5300
      %v6588 = vunpack.c.h.b16 %v5300
      %v6589 = vunpack.c.l.b16 %v5301
      %v6590 = vunpack.c.h.b16 %v5301
      %v6591 = vunpack.c.l.b16 %v5302
      %v6592 = vunpack.c.h.b16 %v5302
      %v6593 = vunpack.c.l.b16 %v5303
      %v6594 = vunpack.c.h.b16 %v5303
      %v6595 = vunpack.c.l.b16 %v5304
      %v6596 = vunpack.c.h.b16 %v5304
      %v6597 = vunpack.c.l.b16 %v5305
      %v6598 = vunpack.c.h.b16 %v5305
      %v6599 = vunpack.c.l.b16 %v5306
      %v6600 = vunpack.c.h.b16 %v5306
      %v6601 = vunpack.c.l.b16 %v5307
      %v6602 = vunpack.c.h.b16 %v5307
      %v6603 = vunpack.c.l.b16 %v5308
      %v6604 = vunpack.c.h.b16 %v5308
      %v6605 = vunpack.c.l.b16 %v5309
      %v6606 = vunpack.c.h.b16 %v5309
      %v6607 = vunpack.c.l.b16 %v5310
      %v6608 = vunpack.c.h.b16 %v5310
      %v6609 = vunpack.c.l.b16 %v5311
      %v6610 = vunpack.c.h.b16 %v5311
      %v6611 = vunpack.c.l.b16 %v5312
      %v6612 = vunpack.c.h.b16 %v5312
      %v6613 = vunpack.c.l.b16 %v5313
      %v6614 = vunpack.c.h.b16 %v5313
      %v6615 = vunpack.c.l.b16 %v5314
      %v6616 = vunpack.c.h.b16 %v5314
      %v6617 = vunpack.c.l.b16 %v5315
      %v6618 = vunpack.c.h.b16 %v5315
      %v6619 = vunpack.c.l.b16 %v5316
      %v6620 = vunpack.c.h.b16 %v5316
      %v6621 = vunpack.c.l.b16 %v5317
      %v6622 = vunpack.c.h.b16 %v5317
      %v6623 = vunpack.c.l.b16 %v5318
      %v6624 = vunpack.c.h.b16 %v5318
      %v6625 = vunpack.c.l.b16 %v5319
      %v6626 = vunpack.c.h.b16 %v5319
      %v6627 = vunpack.c.l.b16 %v5320
      %v6628 = vunpack.c.h.b16 %v5320
      %v6629 = vunpack.c.l.b16 %v5321
      %v6630 = vunpack.c.h.b16 %v5321
      %v6631 = vunpack.c.l.b16 %v5322
      %v6632 = vunpack.c.h.b16 %v5322
      %v6633 = vunpack.c.l.b16 %v5323
      %v6634 = vunpack.c.h.b16 %v5323
      %v6635 = vunpack.c.l.b16 %v5324
      %v6636 = vunpack.c.h.b16 %v5324
      %v6637 = vunpack.c.l.b16 %v5325
      %v6638 = vunpack.c.h.b16 %v5325
      %v6639 = vunpack.c.l.b16 %v5326
      %v6640 = vunpack.c.h.b16 %v5326
      %v6641 = vunpack.c.l.b16 %v5327
      %v6642 = vunpack.c.h.b16 %v5327
      %v6643 = vunpack.c.l.b16 %v5328
      %v6644 = vunpack.c.h.b16 %v5328
      %v6645 = vunpack.c.l.b16 %v5329
      %v6646 = vunpack.c.h.b16 %v5329
      %v6647 = vunpack.c.l.b16 %v5330
      %v6648 = vunpack.c.h.b16 %v5330
      %v6649 = vunpack.c.l.b16 %v5331
      %v6650 = vunpack.c.h.b16 %v5331
      %v6651 = vunpack.c.l.b16 %v5332
      %v6652 = vunpack.c.h.b16 %v5332
      %v6653 = vunpack.c.l.b16 %v5333
      %v6654 = vunpack.c.h.b16 %v5333
      %v6655 = vunpack.c.l.b16 %v5334
      %v6656 = vunpack.c.h.b16 %v5334
      %v6657 = vunpack.c.l.b16 %v5335
      %v6658 = vunpack.c.h.b16 %v5335
      %v6659 = vunpack.c.l.b16 %v5336
      %v6660 = vunpack.c.h.b16 %v5336
      %v6661 = vunpack.c.l.b16 %v5337
      %v6662 = vunpack.c.h.b16 %v5337
      %v6663 = vunpack.c.l.b16 %v5338
      %v6664 = vunpack.c.h.b16 %v5338
      %v6665 = vunpack.c.l.b16 %v5339
      %v6666 = vunpack.c.h.b16 %v5339
      %v6667 = vunpack.c.l.b16 %v5340
      %v6668 = vunpack.c.h.b16 %v5340
      %v6669 = vunpack.c.l.b16 %v5341
      %v6670 = vunpack.c.h.b16 %v5341
      %v6671 = vunpack.c.l.b16 %v5342
      %v6672 = vunpack.c.h.b16 %v5342
      %v6673 = vunpack.c.l.b16 %v5343
      %v6674 = vunpack.c.h.b16 %v5343
      %v6675 = vunpack.c.l.b16 %v5344
      %v6676 = vunpack.c.h.b16 %v5344
      %v6677 = vunpack.c.l.b16 %v5345
      %v6678 = vunpack.c.h.b16 %v5345
      %v6679 = vunpack.c.l.b16 %v5346
      %v6680 = vunpack.c.h.b16 %v5346
      %v6681 = vunpack.c.l.b16 %v5347
      %v6682 = vunpack.c.h.b16 %v5347
      %v6683 = vunpack.c.l.b16 %v5348
      %v6684 = vunpack.c.h.b16 %v5348
      %v6685 = vunpack.c.l.b16 %v5349
      %v6686 = vunpack.c.h.b16 %v5349
      %v6687 = vunpack.c.l.b16 %v5350
      %v6688 = vunpack.c.h.b16 %v5350
      %v6689 = vunpack.c.l.b16 %v5351
      %v6690 = vunpack.c.h.b16 %v5351
      %v6691 = vunpack.c.l.b16 %v5352
      %v6692 = vunpack.c.h.b16 %v5352
      %v6693 = vunpack.c.l.b16 %v5353
      %v6694 = vunpack.c.h.b16 %v5353
      %v6695 = vunpack.c.l.b16 %v5354
      %v6696 = vunpack.c.h.b16 %v5354
      %v6697 = vunpack.c.l.b16 %v5355
      %v6698 = vunpack.c.h.b16 %v5355
      %v6699 = vunpack.c.l.b16 %v5356
      %v6700 = vunpack.c.h.b16 %v5356
      %v6701 = vunpack.c.l.b16 %v5357
      %v6702 = vunpack.c.h.b16 %v5357
      %v6703 = vunpack.c.l.b16 %v5358
      %v6704 = vunpack.c.h.b16 %v5358
      %v6705 = vunpack.c.l.b16 %v5359
      %v6706 = vunpack.c.h.b16 %v5359
      %v6707 = vunpack.c.l.b16 %v5360
      %v6708 = vunpack.c.h.b16 %v5360
      %v6709 = vunpack.c.l.b16 %v5361
      %v6710 = vunpack.c.h.b16 %v5361
      %v6711 = vunpack.c.l.b16 %v5362
      %v6712 = vunpack.c.h.b16 %v5362
      %v6713 = vunpack.c.l.b16 %v5363
      %v6714 = vunpack.c.h.b16 %v5363
      %v6715 = vunpack.c.l.b16 %v5364
      %v6716 = vunpack.c.h.b16 %v5364
      %v6717 = vunpack.c.l.b16 %v5365
      %v6718 = vunpack.c.h.b16 %v5365
      %v6719 = vunpack.c.l.b16 %v5366
      %v6720 = vunpack.c.h.b16 %v5366
      %v6721 = vunpack.c.l.b16 %v5367
      %v6722 = vunpack.c.h.b16 %v5367
      %v6723 = vunpack.c.l.b16 %v5368
      %v6724 = vunpack.c.h.b16 %v5368
      %v6725 = vunpack.c.l.b16 %v5369
      %v6726 = vunpack.c.h.b16 %v5369
      %v6727 = vunpack.c.l.b16 %v5370
      %v6728 = vunpack.c.h.b16 %v5370
      %v6729 = vunpack.c.l.b16 %v5371
      %v6730 = vunpack.c.h.b16 %v5371
      %v6731 = vunpack.c.l.b16 %v5372
      %v6732 = vunpack.c.h.b16 %v5372
      %v6733 = vunpack.c.l.b16 %v5373
      %v6734 = vunpack.c.h.b16 %v5373
      %v6735 = vunpack.c.l.b16 %v5374
      %v6736 = vunpack.c.h.b16 %v5374
      %v6737 = vunpack.c.l.b16 %v5375
      %v6738 = vunpack.c.h.b16 %v5375
      %v6739 = vunpack.c.l.b16 %v5376
      %v6740 = vunpack.c.h.b16 %v5376
      %v6741 = vunpack.c.l.b16 %v5377
      %v6742 = vunpack.c.h.b16 %v5377
      %v6743 = vunpack.c.l.b16 %v5378
      %v6744 = vunpack.c.h.b16 %v5378
      %v6745 = vunpack.c.l.b16 %v5379
      %v6746 = vunpack.c.h.b16 %v5379
      %v6747 = vunpack.c.l.b16 %v5380
      %v6748 = vunpack.c.h.b16 %v5380
      %v6749 = vunpack.c.l.b16 %v5381
      %v6750 = vunpack.c.h.b16 %v5381
      %v6751 = vunpack.c.l.b16 %v5382
      %v6752 = vunpack.c.h.b16 %v5382
      %v6753 = vunpack.c.l.b16 %v5383
      %v6754 = vunpack.c.h.b16 %v5383
      %v6755 = vunpack.c.l.b16 %v5384
      %v6756 = vunpack.c.h.b16 %v5384
      %v6757 = vunpack.c.l.b16 %v5385
      %v6758 = vunpack.c.h.b16 %v5385
      %v6759 = vunpack.c.l.b16 %v5386
      %v6760 = vunpack.c.h.b16 %v5386
      %v6761 = vunpack.c.l.b16 %v5387
      %v6762 = vunpack.c.h.b16 %v5387
      %v6763 = vunpack.c.l.b16 %v5388
      %v6764 = vunpack.c.h.b16 %v5388
      %v6765 = vunpack.c.l.b16 %v5389
      %v6766 = vunpack.c.h.b16 %v5389
      %v6767 = vunpack.c.l.b16 %v5390
      %v6768 = vunpack.c.h.b16 %v5390
      %v6769 = vunpack.c.l.b16 %v5391
      %v6770 = vunpack.c.h.b16 %v5391
      %v6771 = vunpack.c.l.b16 %v5392
      %v6772 = vunpack.c.h.b16 %v5392
      %v6773 = vunpack.c.l.b16 %v5393
      %v6774 = vunpack.c.h.b16 %v5393
      %v6775 = vunpack.c.l.b16 %v5394
      %v6776 = vunpack.c.h.b16 %v5394
      %v6777 = vunpack.c.l.b16 %v5395
      %v6778 = vunpack.c.h.b16 %v5395
      %v6779 = vunpack.c.l.b16 %v5396
      %v6780 = vunpack.c.h.b16 %v5396
      %v6781 = vunpack.c.l.b16 %v5397
      %v6782 = vunpack.c.h.b16 %v5397
      %v6783 = vunpack.c.l.b16 %v5398
      %v6784 = vunpack.c.h.b16 %v5398
      %v6785 = vunpack.c.l.b16 %v5399
      %v6786 = vunpack.c.h.b16 %v5399
      %v6787 = vunpack.c.l.b16 %v5400
      %v6788 = vunpack.c.h.b16 %v5400
      %v6789 = vunpack.c.l.b16 %v5401
      %v6790 = vunpack.c.h.b16 %v5401
      %v6791 = vunpack.c.l.b16 %v5402
      %v6792 = vunpack.c.h.b16 %v5402
      %v6793 = vunpack.c.l.b16 %v5403
      %v6794 = vunpack.c.h.b16 %v5403
      %v6795 = vunpack.c.l.b16 %v5404
      %v6796 = vunpack.c.h.b16 %v5404
      %v6797 = vunpack.c.l.b16 %v5405
      %v6798 = vunpack.c.h.b16 %v5405
      %v6799 = vunpack.c.l.b16 %v5406
      %v6800 = vunpack.c.h.b16 %v5406
      %v6801 = vunpack.c.l.b16 %v5407
      %v6802 = vunpack.c.h.b16 %v5407
      %v6803 = vunpack.c.l.b16 %v5408
      %v6804 = vunpack.c.h.b16 %v5408
      %v6805 = vunpack.c.l.b16 %v5409
      %v6806 = vunpack.c.h.b16 %v5409
      %v6807 = vunpack.c.l.b16 %v5410
      %v6808 = vunpack.c.h.b16 %v5410
      %v6809 = vunpack.c.l.b16 %v5411
      %v6810 = vunpack.c.h.b16 %v5411
      %v6811 = vunpack.c.l.b16 %v5412
      %v6812 = vunpack.c.h.b16 %v5412
      %v6813 = vunpack.c.l.b16 %v5413
      %v6814 = vunpack.c.h.b16 %v5413
      %v6815 = vunpack.c.l.b16 %v5414
      %v6816 = vunpack.c.h.b16 %v5414
      %v6817 = vunpack.c.l.b16 %v5415
      %v6818 = vunpack.c.h.b16 %v5415
      %v6819 = vunpack.c.l.b16 %v5416
      %v6820 = vunpack.c.h.b16 %v5416
      %v6821 = vunpack.c.l.b16 %v5417
      %v6822 = vunpack.c.h.b16 %v5417
      %v6823 = vunpack.c.l.b16 %v5418
      %v6824 = vunpack.c.h.b16 %v5418
      %v6825 = vunpack.c.l.b16 %v5419
      %v6826 = vunpack.c.h.b16 %v5419
      %v6827 = vunpack.c.l.b16 %v5420
      %v6828 = vunpack.c.h.b16 %v5420
      %v6829 = vunpack.c.l.b16 %v5421
      %v6830 = vunpack.c.h.b16 %v5421
      %v6831 = vunpack.c.l.b16 %v5422
      %v6832 = vunpack.c.h.b16 %v5422
      %v6833 = vunpack.c.l.b16 %v5423
      %v6834 = vunpack.c.h.b16 %v5423
      %v6835 = vunpack.c.l.b16 %v5424
      %v6836 = vunpack.c.h.b16 %v5424
      %v6837 = vunpack.c.l.b16 %v5425
      %v6838 = vunpack.c.h.b16 %v5425
      %v6839 = vunpack.c.l.b16 %v5426
      %v6840 = vunpack.c.h.b16 %v5426
      %v6841 = vunpack.c.l.b16 %v5427
      %v6842 = vunpack.c.h.b16 %v5427
      %v6843 = vunpack.c.l.b16 %v5428
      %v6844 = vunpack.c.h.b16 %v5428
      %v6845 = vunpack.c.l.b16 %v5429
      %v6846 = vunpack.c.h.b16 %v5429
      %v6847 = vunpack.c.l.b16 %v5430
      %v6848 = vunpack.c.h.b16 %v5430
      %v6849 = vunpack.c.l.b16 %v5431
      %v6850 = vunpack.c.h.b16 %v5431
      %v6851 = vunpack.c.l.b16 %v5432
      %v6852 = vunpack.c.h.b16 %v5432
      %v6853 = vunpack.c.l.b16 %v5433
      %v6854 = vunpack.c.h.b16 %v5433
      %v6855 = vunpack.c.l.b16 %v5434
      %v6856 = vunpack.c.h.b16 %v5434
      %v6857 = vunpack.c.l.b16 %v5435
      %v6858 = vunpack.c.h.b16 %v5435
      %v6859 = vunpack.c.l.b16 %v5436
      %v6860 = vunpack.c.h.b16 %v5436
      %v6861 = vunpack.c.l.b16 %v5437
      %v6862 = vunpack.c.h.b16 %v5437
      %v6863 = vunpack.c.l.b16 %v5438
      %v6864 = vunpack.c.h.b16 %v5438
      %v6865 = vunpack.c.l.b16 %v5439
      %v6866 = vunpack.c.h.b16 %v5439
      %v6867 = vunpack.c.l.b16 %v5440
      %v6868 = vunpack.c.h.b16 %v5440
      %v6869 = vunpack.c.l.b16 %v5441
      %v6870 = vunpack.c.h.b16 %v5441
      %v6871 = vunpack.c.l.b16 %v5442
      %v6872 = vunpack.c.h.b16 %v5442
      %v6873 = vunpack.c.l.b16 %v5443
      %v6874 = vunpack.c.h.b16 %v5443
      %v6875 = vunpack.c.l.b16 %v5444
      %v6876 = vunpack.c.h.b16 %v5444
      %v6877 = vunpack.c.l.b16 %v5445
      %v6878 = vunpack.c.h.b16 %v5445
      %v6879 = vunpack.c.l.b16 %v5446
      %v6880 = vunpack.c.h.b16 %v5446
      %v6881 = vunpack.c.l.b16 %v5447
      %v6882 = vunpack.c.h.b16 %v5447
      %v6883 = vunpack.c.l.b16 %v5448
      %v6884 = vunpack.c.h.b16 %v5448
      %v6885 = vunpack.c.l.b16 %v5449
      %v6886 = vunpack.c.h.b16 %v5449
      %v6887 = vunpack.c.l.b16 %v5450
      %v6888 = vunpack.c.h.b16 %v5450
      %v6889 = vunpack.c.l.b16 %v5451
      %v6890 = vunpack.c.h.b16 %v5451
      %v6891 = vunpack.c.l.b16 %v5452
      %v6892 = vunpack.c.h.b16 %v5452
      %v6893 = vunpack.c.l.b16 %v5453
      %v6894 = vunpack.c.h.b16 %v5453
      %v6895 = vunpack.c.l.b16 %v5454
      %v6896 = vunpack.c.h.b16 %v5454
      %v6897 = vunpack.c.l.b16 %v5455
      %v6898 = vunpack.c.h.b16 %v5455
      %v6899 = vunpack.c.l.b16 %v5456
      %v6900 = vunpack.c.h.b16 %v5456
      %v6901 = vunpack.c.l.b16 %v5457
      %v6902 = vunpack.c.h.b16 %v5457
      %v6903 = vunpack.c.l.b16 %v5458
      %v6904 = vunpack.c.h.b16 %v5458
      %v6905 = vunpack.c.l.b16 %v5459
      %v6906 = vunpack.c.h.b16 %v5459
      %v6907 = vunpack.c.l.b16 %v5460
      %v6908 = vunpack.c.h.b16 %v5460
      %v6909 = vunpack.c.l.b16 %v5461
      %v6910 = vunpack.c.h.b16 %v5461
      %v6911 = vunpack.c.l.b16 %v5462
      %v6912 = vunpack.c.h.b16 %v5462
      %v6913 = vunpack.c.l.b16 %v5463
      %v6914 = vunpack.c.h.b16 %v5463
      %v6915 = vunpack.c.l.b16 %v5464
      %v6916 = vunpack.c.h.b16 %v5464
      %v6917 = vunpack.c.l.b16 %v5465
      %v6918 = vunpack.c.h.b16 %v5465
      %v6919 = vunpack.c.l.b16 %v5466
      %v6920 = vunpack.c.h.b16 %v5466
      %v6921 = vunpack.c.l.b16 %v5467
      %v6922 = vunpack.c.h.b16 %v5467
      %v6923 = vunpack.c.l.b16 %v5468
      %v6924 = vunpack.c.h.b16 %v5468
      %v6925 = vunpack.c.l.b16 %v5469
      %v6926 = vunpack.c.h.b16 %v5469
      %v6927 = vunpack.c.l.b16 %v5470
      %v6928 = vunpack.c.h.b16 %v5470
      %v6929 = vunpack.c.l.b16 %v5471
      %v6930 = vunpack.c.h.b16 %v5471
      %v6931 = vunpack.c.l.b16 %v5472
      %v6932 = vunpack.c.h.b16 %v5472
      %v6933 = vunpack.c.l.b16 %v5473
      %v6934 = vunpack.c.h.b16 %v5473
      %v6935 = vunpack.c.l.b16 %v5474
      %v6936 = vunpack.c.h.b16 %v5474
      %v6937 = vunpack.c.l.b16 %v5475
      %v6938 = vunpack.c.h.b16 %v5475
      %v6939 = vunpack.c.l.b16 %v5476
      %v6940 = vunpack.c.h.b16 %v5476
      %v6941 = vunpack.c.l.b16 %v5477
      %v6942 = vunpack.c.h.b16 %v5477
      %v6943 = vunpack.c.l.b16 %v5478
      %v6944 = vunpack.c.h.b16 %v5478
      %v6945 = vunpack.c.l.b16 %v5479
      %v6946 = vunpack.c.h.b16 %v5479
      %v6947 = vunpack.c.l.b16 %v5480
      %v6948 = vunpack.c.h.b16 %v5480
      %v6949 = vunpack.c.l.b16 %v5481
      %v6950 = vunpack.c.h.b16 %v5481
      %v6951 = vunpack.c.l.b16 %v5482
      %v6952 = vunpack.c.h.b16 %v5482
      %v6953 = vunpack.c.l.b16 %v5483
      %v6954 = vunpack.c.h.b16 %v5483
      %v6955 = vunpack.c.l.b16 %v5484
      %v6956 = vunpack.c.h.b16 %v5484
      %v6957 = vunpack.c.l.b16 %v5485
      %v6958 = vunpack.c.h.b16 %v5485
      %v6959 = vunpack.c.l.b16 %v5486
      %v6960 = vunpack.c.h.b16 %v5486
      %v6961 = vunpack.c.l.b16 %v5487
      %v6962 = vunpack.c.h.b16 %v5487
      %v6963 = vunpack.c.l.b16 %v5488
      %v6964 = vunpack.c.h.b16 %v5488
      %v6965 = vunpack.c.l.b16 %v5489
      %v6966 = vunpack.c.h.b16 %v5489
      %v6967 = vunpack.c.l.b16 %v5490
      %v6968 = vunpack.c.h.b16 %v5490
      %v6969 = vunpack.c.l.b16 %v5491
      %v6970 = vunpack.c.h.b16 %v5491
      %v6971 = vunpack.c.l.b16 %v5492
      %v6972 = vunpack.c.h.b16 %v5492
      %v6973 = vunpack.c.l.b16 %v5493
      %v6974 = vunpack.c.h.b16 %v5493
      %v6975 = vunpack.c.l.b16 %v5494
      %v6976 = vunpack.c.h.b16 %v5494
      %v6977 = vunpack.c.l.b16 %v5495
      %v6978 = vunpack.c.h.b16 %v5495
      %v6979 = vunpack.c.l.b16 %v5496
      %v6980 = vunpack.c.h.b16 %v5496
      %v6981 = vunpack.c.l.b16 %v5497
      %v6982 = vunpack.c.h.b16 %v5497
      %v6983 = vunpack.c.l.b16 %v5498
      %v6984 = vunpack.c.h.b16 %v5498
      %v6985 = vunpack.c.l.b16 %v5499
      %v6986 = vunpack.c.h.b16 %v5499
      %v6987 = vunpack.c.l.b16 %v5500
      %v6988 = vunpack.c.h.b16 %v5500
      %v6989 = vunpack.c.l.b16 %v5501
      %v6990 = vunpack.c.h.b16 %v5501
      %v6991 = vunpack.c.l.b16 %v5502
      %v6992 = vunpack.c.h.b16 %v5502
      %v6993 = vunpack.c.l.b16 %v5503
      %v6994 = vunpack.c.h.b16 %v5503
      %v6995 = vunpack.c.l.b16 %v5504
      %v6996 = vunpack.c.h.b16 %v5504
      %v6997 = vunpack.c.l.b16 %v5505
      %v6998 = vunpack.c.h.b16 %v5505
      %v6999 = vunpack.c.l.b16 %v5506
      %v7000 = vunpack.c.h.b16 %v5506
      %v7001 = vunpack.c.l.b16 %v5507
      %v7002 = vunpack.c.h.b16 %v5507
      %v7003 = vunpack.c.l.b16 %v5508
      %v7004 = vunpack.c.h.b16 %v5508
      %v7005 = vunpack.c.l.b16 %v5509
      %v7006 = vunpack.c.h.b16 %v5509
      %v7007 = vunpack.c.l.b16 %v5510
      %v7008 = vunpack.c.h.b16 %v5510
      %v7009 = vunpack.c.l.b16 %v5511
      %v7010 = vunpack.c.h.b16 %v5511
      %v7011 = vunpack.c.l.b16 %v5512
      %v7012 = vunpack.c.h.b16 %v5512
      %v7013 = vunpack.c.l.b16 %v5513
      %v7014 = vunpack.c.h.b16 %v5513
      %v7015 = vunpack.c.l.b16 %v5514
      %v7016 = vunpack.c.h.b16 %v5514
      %v7017 = vunpack.c.l.b16 %v5515
      %v7018 = vunpack.c.h.b16 %v5515
      %v7019 = vunpack.c.l.b16 %v5516
      %v7020 = vunpack.c.h.b16 %v5516
      %v7021 = vunpack.c.l.b16 %v5517
      %v7022 = vunpack.c.h.b16 %v5517
      %v7023 = vunpack.c.l.b16 %v5518
      %v7024 = vunpack.c.h.b16 %v5518
      %v7025 = vunpack.c.l.b16 %v5519
      %v7026 = vunpack.c.h.b16 %v5519
      %v7027 = vunpack.c.l.b16 %v5520
      %v7028 = vunpack.c.h.b16 %v5520
      %v7029 = vunpack.c.l.b16 %v5521
      %v7030 = vunpack.c.h.b16 %v5521
      %v7031 = vunpack.c.l.b16 %v5522
      %v7032 = vunpack.c.h.b16 %v5522
      %v7033 = vunpack.c.l.b16 %v5523
      %v7034 = vunpack.c.h.b16 %v5523
      %v7035 = vunpack.c.l.b16 %v5524
      %v7036 = vunpack.c.h.b16 %v5524
      %v7037 = vunpack.c.l.b16 %v5525
      %v7038 = vunpack.c.h.b16 %v5525
      %v7039 = vunpack.c.l.b16 %v5526
      %v7040 = vunpack.c.h.b16 %v5526
      %v7041 = vunpack.c.l.b16 %v5527
      %v7042 = vunpack.c.h.b16 %v5527
      %v7043 = vunpack.c.l.b16 %v5528
      %v7044 = vunpack.c.h.b16 %v5528
      %v7045 = vunpack.c.l.b16 %v5529
      %v7046 = vunpack.c.h.b16 %v5529
      %v7047 = vunpack.c.l.b16 %v5530
      %v7048 = vunpack.c.h.b16 %v5530
      %v7049 = vunpack.c.l.b16 %v5531
      %v7050 = vunpack.c.h.b16 %v5531
      %v7051 = vunpack.c.l.b16 %v5532
      %v7052 = vunpack.c.h.b16 %v5532
      %v7053 = vunpack.c.l.b16 %v5533
      %v7054 = vunpack.c.h.b16 %v5533
      %v7055 = vunpack.c.l.b16 %v5534
      %v7056 = vunpack.c.h.b16 %v5534
      %v7057 = vunpack.c.l.b16 %v5535
      %v7058 = vunpack.c.h.b16 %v5535
      %v7059 = vunpack.c.l.b16 %v5536
      %v7060 = vunpack.c.h.b16 %v5536
      %v7061 = vunpack.c.l.b16 %v5537
      %v7062 = vunpack.c.h.b16 %v5537
      %v7063 = vunpack.c.l.b16 %v5538
      %v7064 = vunpack.c.h.b16 %v5538
      %v7065 = vunpack.c.l.b16 %v5539
      %v7066 = vunpack.c.h.b16 %v5539
      %v7067 = vunpack.c.l.b16 %v5540
      %v7068 = vunpack.c.h.b16 %v5540
      %v7069 = vunpack.c.l.b16 %v5541
      %v7070 = vunpack.c.h.b16 %v5541
      %v7071 = vunpack.c.l.b16 %v5542
      %v7072 = vunpack.c.h.b16 %v5542
      %v7073 = vunpack.c.l.b16 %v5543
      %v7074 = vunpack.c.h.b16 %v5543
      %v7075 = vunpack.c.l.b16 %v5544
      %v7076 = vunpack.c.h.b16 %v5544
      %v7077 = vunpack.c.l.b16 %v5545
      %v7078 = vunpack.c.h.b16 %v5545
      %v7079 = vunpack.c.l.b16 %v5546
      %v7080 = vunpack.c.h.b16 %v5546
      %v7081 = vunpack.c.l.b16 %v5547
      %v7082 = vunpack.c.h.b16 %v5547
      %v7083 = vunpack.c.l.b16 %v5548
      %v7084 = vunpack.c.h.b16 %v5548
      %v7085 = vunpack.c.l.b16 %v5549
      %v7086 = vunpack.c.h.b16 %v5549
      %v7087 = vunpack.c.l.b16 %v5550
      %v7088 = vunpack.c.h.b16 %v5550
      %v7089 = vunpack.c.l.b16 %v5551
      %v7090 = vunpack.c.h.b16 %v5551
      %v7091 = vunpack.c.l.b16 %v5552
      %v7092 = vunpack.c.h.b16 %v5552
      %v7093 = vunpack.c.l.b16 %v5553
      %v7094 = vunpack.c.h.b16 %v5553
      %v7095 = vunpack.c.l.b16 %v5554
      %v7096 = vunpack.c.h.b16 %v5554
      %v7097 = vunpack.c.l.b16 %v5555
      %v7098 = vunpack.c.h.b16 %v5555
      %v7099 = vunpack.c.l.b16 %v5556
      %v7100 = vunpack.c.h.b16 %v5556
      %v7101 = vunpack.c.l.b16 %v5557
      %v7102 = vunpack.c.h.b16 %v5557
      %v7103 = vunpack.c.l.b16 %v5558
      %v7104 = vunpack.c.h.b16 %v5558
      %v7105 = vunpack.c.l.b16 %v5559
      %v7106 = vunpack.c.h.b16 %v5559
      %v7107 = vunpack.c.l.b16 %v5560
      %v7108 = vunpack.c.h.b16 %v5560
      %v7109 = vunpack.c.l.b16 %v5561
      %v7110 = vunpack.c.h.b16 %v5561
      %v7111 = vunpack.c.l.b16 %v5562
      %v7112 = vunpack.c.h.b16 %v5562
      %v7113 = vunpack.c.l.b16 %v5563
      %v7114 = vunpack.c.h.b16 %v5563
      %v7115 = vunpack.c.l.b16 %v5564
      %v7116 = vunpack.c.h.b16 %v5564
      %v7117 = vunpack.c.l.b16 %v5565
      %v7118 = vunpack.c.h.b16 %v5565
      %v7119 = vunpack.c.l.b16 %v5566
      %v7120 = vunpack.c.h.b16 %v5566
      %v7121 = vunpack.c.l.b16 %v5567
      %v7122 = vunpack.c.h.b16 %v5567
      %v7123 = vunpack.c.l.b16 %v5568
      %v7124 = vunpack.c.h.b16 %v5568
      %v7125 = vunpack.c.l.b16 %v5569
      %v7126 = vunpack.c.h.b16 %v5569
      %v7127 = vunpack.c.l.b16 %v5570
      %v7128 = vunpack.c.h.b16 %v5570
      %v7129 = vunpack.c.l.b16 %v5571
      %v7130 = vunpack.c.h.b16 %v5571
      %v7131 = vunpack.c.l.b16 %v5572
      %v7132 = vunpack.c.h.b16 %v5572
      %v7133 = vunpack.c.l.b16 %v5573
      %v7134 = vunpack.c.h.b16 %v5573
      %v7135 = vunpack.c.l.b16 %v5574
      %v7136 = vunpack.c.h.b16 %v5574
      %v7137 = vunpack.c.l.b16 %v5575
      %v7138 = vunpack.c.h.b16 %v5575
      %v7139 = vunpack.c.l.b16 %v5576
      %v7140 = vunpack.c.h.b16 %v5576
      %v7141 = vunpack.c.l.b16 %v5577
      %v7142 = vunpack.c.h.b16 %v5577
      %v7143 = vunpack.c.l.b16 %v5578
      %v7144 = vunpack.c.h.b16 %v5578
      %v7145 = vunpack.c.l.b16 %v5579
      %v7146 = vunpack.c.h.b16 %v5579
      %v7147 = vunpack.c.l.b16 %v5580
      %v7148 = vunpack.c.h.b16 %v5580
      %v7149 = vunpack.c.l.b16 %v5581
      %v7150 = vunpack.c.h.b16 %v5581
      %v7151 = vunpack.c.l.b16 %v5582
      %v7152 = vunpack.c.h.b16 %v5582
      %v7153 = vunpack.c.l.b16 %v5583
      %v7154 = vunpack.c.h.b16 %v5583
      %v7155 = vunpack.c.l.b16 %v5584
      %v7156 = vunpack.c.h.b16 %v5584
      %v7157 = vunpack.c.l.b16 %v5585
      %v7158 = vunpack.c.h.b16 %v5585
      %v7159 = vunpack.c.l.b16 %v5586
      %v7160 = vunpack.c.h.b16 %v5586
      %v7161 = vunpack.c.l.b16 %v5587
      %v7162 = vunpack.c.h.b16 %v5587
      %v7163 = vunpack.c.l.b16 %v5588
      %v7164 = vunpack.c.h.b16 %v5588
      %v7165 = vunpack.c.l.b16 %v5589
      %v7166 = vunpack.c.h.b16 %v5589
      %v7167 = vunpack.c.l.b16 %v5590
      %v7168 = vunpack.c.h.b16 %v5590
      %v7169 = vunpack.c.l.b16 %v5591
      %v7170 = vunpack.c.h.b16 %v5591
      %v7171 = vunpack.c.l.b16 %v5592
      %v7172 = vunpack.c.h.b16 %v5592
      %v7173 = vunpack.c.l.b16 %v5593
      %v7174 = vunpack.c.h.b16 %v5593
      %v7175 = vunpack.c.l.b16 %v5594
      %v7176 = vunpack.c.h.b16 %v5594
      %v7177 = vunpack.c.l.b16 %v5595
      %v7178 = vunpack.c.h.b16 %v5595
      %v7179 = vunpack.c.l.b16 %v5596
      %v7180 = vunpack.c.h.b16 %v5596
      %v7181 = vunpack.c.l.b16 %v5597
      %v7182 = vunpack.c.h.b16 %v5597
      %v7183 = vunpack.c.l.b16 %v5598
      %v7184 = vunpack.c.h.b16 %v5598
      %v7185 = vunpack.c.l.b16 %v5599
      %v7186 = vunpack.c.h.b16 %v5599
      %v7187 = vunpack.c.l.b16 %v5600
      %v7188 = vunpack.c.h.b16 %v5600
      %v7189 = vunpack.c.l.b16 %v5601
      %v7190 = vunpack.c.h.b16 %v5601
      %v7191 = vunpack.c.l.b16 %v5602
      %v7192 = vunpack.c.h.b16 %v5602
      %v7193 = vunpack.c.l.b16 %v5603
      %v7194 = vunpack.c.h.b16 %v5603
      %v7195 = vunpack.c.l.b16 %v5604
      %v7196 = vunpack.c.h.b16 %v5604
      %v7197 = vunpack.c.l.b16 %v5605
      %v7198 = vunpack.c.h.b16 %v5605
      %v7199 = vunpack.c.l.b16 %v5606
      %v7200 = vunpack.c.h.b16 %v5606
      %v7201 = vunpack.c.l.b16 %v5607
      %v7202 = vunpack.c.h.b16 %v5607
      %v7203 = vunpack.c.l.b16 %v5608
      %v7204 = vunpack.c.h.b16 %v5608
      %v7205 = vunpack.c.l.b16 %v5609
      %v7206 = vunpack.c.h.b16 %v5609
      %v7207 = vunpack.c.l.b16 %v5610
      %v7208 = vunpack.c.h.b16 %v5610
      %v7209 = vunpack.c.l.b16 %v5611
      %v7210 = vunpack.c.h.b16 %v5611
      %v7211 = vunpack.c.l.b16 %v5612
      %v7212 = vunpack.c.h.b16 %v5612
      %v7213 = vunpack.c.l.b16 %v5613
      %v7214 = vunpack.c.h.b16 %v5613
      %v7215 = vunpack.c.l.b16 %v5614
      %v7216 = vunpack.c.h.b16 %v5614
      %v7217 = vunpack.c.l.b16 %v5615
      %v7218 = vunpack.c.h.b16 %v5615
      %v7219 = vunpack.c.l.b16 %v5616
      %v7220 = vunpack.c.h.b16 %v5616
      %v7221 = vunpack.c.l.b16 %v5617
      %v7222 = vunpack.c.h.b16 %v5617
      %v7223 = vunpack.c.l.b16 %v5618
      %v7224 = vunpack.c.h.b16 %v5618
      %v7225 = vunpack.c.l.b16 %v5619
      %v7226 = vunpack.c.h.b16 %v5619
      %v7227 = vunpack.c.l.b16 %v5620
      %v7228 = vunpack.c.h.b16 %v5620
      %v7229 = vunpack.c.l.b16 %v5621
      %v7230 = vunpack.c.h.b16 %v5621
      %v7231 = vunpack.c.l.b16 %v5622
      %v7232 = vunpack.c.h.b16 %v5622
      %v7233 = vunpack.c.l.b16 %v5623
      %v7234 = vunpack.c.h.b16 %v5623
      %v7235 = vunpack.c.l.b16 %v5624
      %v7236 = vunpack.c.h.b16 %v5624
      %v7237 = vunpack.c.l.b16 %v5625
      %v7238 = vunpack.c.h.b16 %v5625
      %v7239 = vunpack.c.l.b16 %v5626
      %v7240 = vunpack.c.h.b16 %v5626
      %v7241 = vunpack.c.l.b16 %v5627
      %v7242 = vunpack.c.h.b16 %v5627
      %v7243 = vunpack.c.l.b16 %v5628
      %v7244 = vunpack.c.h.b16 %v5628
      %v7245 = vunpack.c.l.b16 %v5629
      %v7246 = vunpack.c.h.b16 %v5629
      %v7247 = vunpack.c.l.b16 %v5630
      %v7248 = vunpack.c.h.b16 %v5630
      %v7249 = vunpack.c.l.b16 %v5631
      %v7250 = vunpack.c.h.b16 %v5631
      %v7251 = vunpack.c.l.b16 %v5632
      %v7252 = vunpack.c.h.b16 %v5632
      %v7253 = vpack.c.b16 %v6245, %v6229
      %v7254 = vpack.c.b16 %v6246, %v6230
      %v7255 = vpack.c.b16 %v6247, %v6231
      %v7256 = vpack.c.b16 %v6248, %v6232
      %v7257 = vpack.c.b16 %v6249, %v6233
      %v7258 = vpack.c.b16 %v6250, %v6234
      %v7259 = vpack.c.b16 %v6251, %v6235
      %v7260 = vpack.c.b16 %v6252, %v6236
      %v7261 = vpack.c.b16 %v6253, %v6237
      %v7262 = vpack.c.b16 %v6254, %v6238
      %v7263 = vpack.c.b16 %v6255, %v6239
      %v7264 = vpack.c.b16 %v6256, %v6240
      %v7265 = vpack.c.b16 %v6257, %v6241
      %v7266 = vpack.c.b16 %v6258, %v6242
      %v7267 = vpack.c.b16 %v6259, %v6243
      %v7268 = vpack.c.b16 %v6260, %v6244
      %v7269 = vpack.c.b16 %v6277, %v6261
      %v7270 = vpack.c.b16 %v6278, %v6262
      %v7271 = vpack.c.b16 %v6279, %v6263
      %v7272 = vpack.c.b16 %v6280, %v6264
      %v7273 = vpack.c.b16 %v6281, %v6265
      %v7274 = vpack.c.b16 %v6282, %v6266
      %v7275 = vpack.c.b16 %v6283, %v6267
      %v7276 = vpack.c.b16 %v6284, %v6268
      %v7277 = vpack.c.b16 %v6285, %v6269
      %v7278 = vpack.c.b16 %v6286, %v6270
      %v7279 = vpack.c.b16 %v6287, %v6271
      %v7280 = vpack.c.b16 %v6288, %v6272
      %v7281 = vpack.c.b16 %v6289, %v6273
      %v7282 = vpack.c.b16 %v6290, %v6274
      %v7283 = vpack.c.b16 %v6291, %v6275
      %v7284 = vpack.c.b16 %v6292, %v6276
      %v7285 = vpack.c.b16 %v6309, %v6293
      %v7286 = vpack.c.b16 %v6310, %v6294
      %v7287 = vpack.c.b16 %v6311, %v6295
      %v7288 = vpack.c.b16 %v6312, %v6296
      %v7289 = vpack.c.b16 %v6313, %v6297
      %v7290 = vpack.c.b16 %v6314, %v6298
      %v7291 = vpack.c.b16 %v6315, %v6299
      %v7292 = vpack.c.b16 %v6316, %v6300
      %v7293 = vpack.c.b16 %v6317, %v6301
      %v7294 = vpack.c.b16 %v6318, %v6302
      %v7295 = vpack.c.b16 %v6319, %v6303
      %v7296 = vpack.c.b16 %v6320, %v6304
      %v7297 = vpack.c.b16 %v6321, %v6305
      %v7298 = vpack.c.b16 %v6322, %v6306
      %v7299 = vpack.c.b16 %v6323, %v6307
      %v7300 = vpack.c.b16 %v6324, %v6308
      %v7301 = vpack.c.b16 %v6341, %v6325
      %v7302 = vpack.c.b16 %v6342, %v6326
      %v7303 = vpack.c.b16 %v6343, %v6327
      %v7304 = vpack.c.b16 %v6344, %v6328
      %v7305 = vpack.c.b16 %v6345, %v6329
      %v7306 = vpack.c.b16 %v6346, %v6330
      %v7307 = vpack.c.b16 %v6347, %v6331
      %v7308 = vpack.c.b16 %v6348, %v6332
      %v7309 = vpack.c.b16 %v6349, %v6333
      %v7310 = vpack.c.b16 %v6350, %v6334
      %v7311 = vpack.c.b16 %v6351, %v6335
      %v7312 = vpack.c.b16 %v6352, %v6336
      %v7313 = vpack.c.b16 %v6353, %v6337
      %v7314 = vpack.c.b16 %v6354, %v6338
      %v7315 = vpack.c.b16 %v6355, %v6339
      %v7316 = vpack.c.b16 %v6356, %v6340
      %v7317 = vpack.c.b16 %v6373, %v6357
      %v7318 = vpack.c.b16 %v6374, %v6358
      %v7319 = vpack.c.b16 %v6375, %v6359
      %v7320 = vpack.c.b16 %v6376, %v6360
      %v7321 = vpack.c.b16 %v6377, %v6361
      %v7322 = vpack.c.b16 %v6378, %v6362
      %v7323 = vpack.c.b16 %v6379, %v6363
      %v7324 = vpack.c.b16 %v6380, %v6364
      %v7325 = vpack.c.b16 %v6381, %v6365
      %v7326 = vpack.c.b16 %v6382, %v6366
      %v7327 = vpack.c.b16 %v6383, %v6367
      %v7328 = vpack.c.b16 %v6384, %v6368
      %v7329 = vpack.c.b16 %v6385, %v6369
      %v7330 = vpack.c.b16 %v6386, %v6370
      %v7331 = vpack.c.b16 %v6387, %v6371
      %v7332 = vpack.c.b16 %v6388, %v6372
      %v7333 = vpack.c.b16 %v6405, %v6389
      %v7334 = vpack.c.b16 %v6406, %v6390
      %v7335 = vpack.c.b16 %v6407, %v6391
      %v7336 = vpack.c.b16 %v6408, %v6392
      %v7337 = vpack.c.b16 %v6409, %v6393
      %v7338 = vpack.c.b16 %v6410, %v6394
      %v7339 = vpack.c.b16 %v6411, %v6395
      %v7340 = vpack.c.b16 %v6412, %v6396
      %v7341 = vpack.c.b16 %v6413, %v6397
      %v7342 = vpack.c.b16 %v6414, %v6398
      %v7343 = vpack.c.b16 %v6415, %v6399
      %v7344 = vpack.c.b16 %v6416, %v6400
      %v7345 = vpack.c.b16 %v6417, %v6401
      %v7346 = vpack.c.b16 %v6418, %v6402
      %v7347 = vpack.c.b16 %v6419, %v6403
      %v7348 = vpack.c.b16 %v6420, %v6404
      %v7349 = vpack.c.b16 %v6437, %v6421
      %v7350 = vpack.c.b16 %v6438, %v6422
      %v7351 = vpack.c.b16 %v6439, %v6423
      %v7352 = vpack.c.b16 %v6440, %v6424
      %v7353 = vpack.c.b16 %v6441, %v6425
      %v7354 = vpack.c.b16 %v6442, %v6426
      %v7355 = vpack.c.b16 %v6443, %v6427
      %v7356 = vpack.c.b16 %v6444, %v6428
      %v7357 = vpack.c.b16 %v6445, %v6429
      %v7358 = vpack.c.b16 %v6446, %v6430
      %v7359 = vpack.c.b16 %v6447, %v6431
      %v7360 = vpack.c.b16 %v6448, %v6432
      %v7361 = vpack.c.b16 %v6449, %v6433
      %v7362 = vpack.c.b16 %v6450, %v6434
      %v7363 = vpack.c.b16 %v6451, %v6435
      %v7364 = vpack.c.b16 %v6452, %v6436
      %v7365 = vpack.c.b16 %v6469, %v6453
      %v7366 = vpack.c.b16 %v6470, %v6454
      %v7367 = vpack.c.b16 %v6471, %v6455
      %v7368 = vpack.c.b16 %v6472, %v6456
      %v7369 = vpack.c.b16 %v6473, %v6457
      %v7370 = vpack.c.b16 %v6474, %v6458
      %v7371 = vpack.c.b16 %v6475, %v6459
      %v7372 = vpack.c.b16 %v6476, %v6460
      %v7373 = vpack.c.b16 %v6477, %v6461
      %v7374 = vpack.c.b16 %v6478, %v6462
      %v7375 = vpack.c.b16 %v6479, %v6463
      %v7376 = vpack.c.b16 %v6480, %v6464
      %v7377 = vpack.c.b16 %v6481, %v6465
      %v7378 = vpack.c.b16 %v6482, %v6466
      %v7379 = vpack.c.b16 %v6483, %v6467
      %v7380 = vpack.c.b16 %v6484, %v6468
      %v7381 = vpack.c.b16 %v6501, %v6485
      %v7382 = vpack.c.b16 %v6502, %v6486
      %v7383 = vpack.c.b16 %v6503, %v6487
      %v7384 = vpack.c.b16 %v6504, %v6488
      %v7385 = vpack.c.b16 %v6505, %v6489
      %v7386 = vpack.c.b16 %v6506, %v6490
      %v7387 = vpack.c.b16 %v6507, %v6491
      %v7388 = vpack.c.b16 %v6508, %v6492
      %v7389 = vpack.c.b16 %v6509, %v6493
      %v7390 = vpack.c.b16 %v6510, %v6494
      %v7391 = vpack.c.b16 %v6511, %v6495
      %v7392 = vpack.c.b16 %v6512, %v6496
      %v7393 = vpack.c.b16 %v6513, %v6497
      %v7394 = vpack.c.b16 %v6514, %v6498
      %v7395 = vpack.c.b16 %v6515, %v6499
      %v7396 = vpack.c.b16 %v6516, %v6500
      %v7397 = vpack.c.b16 %v6533, %v6517
      %v7398 = vpack.c.b16 %v6534, %v6518
      %v7399 = vpack.c.b16 %v6535, %v6519
      %v7400 = vpack.c.b16 %v6536, %v6520
      %v7401 = vpack.c.b16 %v6537, %v6521
      %v7402 = vpack.c.b16 %v6538, %v6522
      %v7403 = vpack.c.b16 %v6539, %v6523
      %v7404 = vpack.c.b16 %v6540, %v6524
      %v7405 = vpack.c.b16 %v6541, %v6525
      %v7406 = vpack.c.b16 %v6542, %v6526
      %v7407 = vpack.c.b16 %v6543, %v6527
      %v7408 = vpack.c.b16 %v6544, %v6528
      %v7409 = vpack.c.b16 %v6545, %v6529
      %v7410 = vpack.c.b16 %v6546, %v6530
      %v7411 = vpack.c.b16 %v6547, %v6531
      %v7412 = vpack.c.b16 %v6548, %v6532
      %v7413 = vpack.c.b16 %v6565, %v6549
      %v7414 = vpack.c.b16 %v6566, %v6550
      %v7415 = vpack.c.b16 %v6567, %v6551
      %v7416 = vpack.c.b16 %v6568, %v6552
      %v7417 = vpack.c.b16 %v6569, %v6553
      %v7418 = vpack.c.b16 %v6570, %v6554
      %v7419 = vpack.c.b16 %v6571, %v6555
      %v7420 = vpack.c.b16 %v6572, %v6556
      %v7421 = vpack.c.b16 %v6573, %v6557
      %v7422 = vpack.c.b16 %v6574, %v6558
      %v7423 = vpack.c.b16 %v6575, %v6559
      %v7424 = vpack.c.b16 %v6576, %v6560
      %v7425 = vpack.c.b16 %v6577, %v6561
      %v7426 = vpack.c.b16 %v6578, %v6562
      %v7427 = vpack.c.b16 %v6579, %v6563
      %v7428 = vpack.c.b16 %v6580, %v6564
      %v7429 = vpack.c.b16 %v6597, %v6581
      %v7430 = vpack.c.b16 %v6598, %v6582
      %v7431 = vpack.c.b16 %v6599, %v6583
      %v7432 = vpack.c.b16 %v6600, %v6584
      %v7433 = vpack.c.b16 %v6601, %v6585
      %v7434 = vpack.c.b16 %v6602, %v6586
      %v7435 = vpack.c.b16 %v6603, %v6587
      %v7436 = vpack.c.b16 %v6604, %v6588
      %v7437 = vpack.c.b16 %v6605, %v6589
      %v7438 = vpack.c.b16 %v6606, %v6590
      %v7439 = vpack.c.b16 %v6607, %v6591
      %v7440 = vpack.c.b16 %v6608, %v6592
      %v7441 = vpack.c.b16 %v6609, %v6593
      %v7442 = vpack.c.b16 %v6610, %v6594
      %v7443 = vpack.c.b16 %v6611, %v6595
      %v7444 = vpack.c.b16 %v6612, %v6596
      %v7445 = vpack.c.b16 %v6629, %v6613
      %v7446 = vpack.c.b16 %v6630, %v6614
      %v7447 = vpack.c.b16 %v6631, %v6615
      %v7448 = vpack.c.b16 %v6632, %v6616
      %v7449 = vpack.c.b16 %v6633, %v6617
      %v7450 = vpack.c.b16 %v6634, %v6618
      %v7451 = vpack.c.b16 %v6635, %v6619
      %v7452 = vpack.c.b16 %v6636, %v6620
      %v7453 = vpack.c.b16 %v6637, %v6621
      %v7454 = vpack.c.b16 %v6638, %v6622
      %v7455 = vpack.c.b16 %v6639, %v6623
      %v7456 = vpack.c.b16 %v6640, %v6624
      %v7457 = vpack.c.b16 %v6641, %v6625
      %v7458 = vpack.c.b16 %v6642, %v6626
      %v7459 = vpack.c.b16 %v6643, %v6627
      %v7460 = vpack.c.b16 %v6644, %v6628
      %v7461 = vpack.c.b16 %v6661, %v6645
      %v7462 = vpack.c.b16 %v6662, %v6646
      %v7463 = vpack.c.b16 %v6663, %v6647
      %v7464 = vpack.c.b16 %v6664, %v6648
      %v7465 = vpack.c.b16 %v6665, %v6649
      %v7466 = vpack.c.b16 %v6666, %v6650
      %v7467 = vpack.c.b16 %v6667, %v6651
      %v7468 = vpack.c.b16 %v6668, %v6652
      %v7469 = vpack.c.b16 %v6669, %v6653
      %v7470 = vpack.c.b16 %v6670, %v6654
      %v7471 = vpack.c.b16 %v6671, %v6655
      %v7472 = vpack.c.b16 %v6672, %v6656
      %v7473 = vpack.c.b16 %v6673, %v6657
      %v7474 = vpack.c.b16 %v6674, %v6658
      %v7475 = vpack.c.b16 %v6675, %v6659
      %v7476 = vpack.c.b16 %v6676, %v6660
      %v7477 = vpack.c.b16 %v6693, %v6677
      %v7478 = vpack.c.b16 %v6694, %v6678
      %v7479 = vpack.c.b16 %v6695, %v6679
      %v7480 = vpack.c.b16 %v6696, %v6680
      %v7481 = vpack.c.b16 %v6697, %v6681
      %v7482 = vpack.c.b16 %v6698, %v6682
      %v7483 = vpack.c.b16 %v6699, %v6683
      %v7484 = vpack.c.b16 %v6700, %v6684
      %v7485 = vpack.c.b16 %v6701, %v6685
      %v7486 = vpack.c.b16 %v6702, %v6686
      %v7487 = vpack.c.b16 %v6703, %v6687
      %v7488 = vpack.c.b16 %v6704, %v6688
      %v7489 = vpack.c.b16 %v6705, %v6689
      %v7490 = vpack.c.b16 %v6706, %v6690
      %v7491 = vpack.c.b16 %v6707, %v6691
      %v7492 = vpack.c.b16 %v6708, %v6692
      %v7493 = vpack.c.b16 %v6725, %v6709
      %v7494 = vpack.c.b16 %v6726, %v6710
      %v7495 = vpack.c.b16 %v6727, %v6711
      %v7496 = vpack.c.b16 %v6728, %v6712
      %v7497 = vpack.c.b16 %v6729, %v6713
      %v7498 = vpack.c.b16 %v6730, %v6714
      %v7499 = vpack.c.b16 %v6731, %v6715
      %v7500 = vpack.c.b16 %v6732, %v6716
      %v7501 = vpack.c.b16 %v6733, %v6717
      %v7502 = vpack.c.b16 %v6734, %v6718
      %v7503 = vpack.c.b16 %v6735, %v6719
      %v7504 = vpack.c.b16 %v6736, %v6720
      %v7505 = vpack.c.b16 %v6737, %v6721
      %v7506 = vpack.c.b16 %v6738, %v6722
      %v7507 = vpack.c.b16 %v6739, %v6723
      %v7508 = vpack.c.b16 %v6740, %v6724
      %v7509 = vpack.c.b16 %v6757, %v6741
      %v7510 = vpack.c.b16 %v6758, %v6742
      %v7511 = vpack.c.b16 %v6759, %v6743
      %v7512 = vpack.c.b16 %v6760, %v6744
      %v7513 = vpack.c.b16 %v6761, %v6745
      %v7514 = vpack.c.b16 %v6762, %v6746
      %v7515 = vpack.c.b16 %v6763, %v6747
      %v7516 = vpack.c.b16 %v6764, %v6748
      %v7517 = vpack.c.b16 %v6765, %v6749
      %v7518 = vpack.c.b16 %v6766, %v6750
      %v7519 = vpack.c.b16 %v6767, %v6751
      %v7520 = vpack.c.b16 %v6768, %v6752
      %v7521 = vpack.c.b16 %v6769, %v6753
      %v7522 = vpack.c.b16 %v6770, %v6754
      %v7523 = vpack.c.b16 %v6771, %v6755
      %v7524 = vpack.c.b16 %v6772, %v6756
      %v7525 = vpack.c.b16 %v6789, %v6773
      %v7526 = vpack.c.b16 %v6790, %v6774
      %v7527 = vpack.c.b16 %v6791, %v6775
      %v7528 = vpack.c.b16 %v6792, %v6776
      %v7529 = vpack.c.b16 %v6793, %v6777
      %v7530 = vpack.c.b16 %v6794, %v6778
      %v7531 = vpack.c.b16 %v6795, %v6779
      %v7532 = vpack.c.b16 %v6796, %v6780
      %v7533 = vpack.c.b16 %v6797, %v6781
      %v7534 = vpack.c.b16 %v6798, %v6782
      %v7535 = vpack.c.b16 %v6799, %v6783
      %v7536 = vpack.c.b16 %v6800, %v6784
      %v7537 = vpack.c.b16 %v6801, %v6785
      %v7538 = vpack.c.b16 %v6802, %v6786
      %v7539 = vpack.c.b16 %v6803, %v6787
      %v7540 = vpack.c.b16 %v6804, %v6788
      %v7541 = vpack.c.b16 %v6821, %v6805
      %v7542 = vpack.c.b16 %v6822, %v6806
      %v7543 = vpack.c.b16 %v6823, %v6807
      %v7544 = vpack.c.b16 %v6824, %v6808
      %v7545 = vpack.c.b16 %v6825, %v6809
      %v7546 = vpack.c.b16 %v6826, %v6810
      %v7547 = vpack.c.b16 %v6827, %v6811
      %v7548 = vpack.c.b16 %v6828, %v6812
      %v7549 = vpack.c.b16 %v6829, %v6813
      %v7550 = vpack.c.b16 %v6830, %v6814
      %v7551 = vpack.c.b16 %v6831, %v6815
      %v7552 = vpack.c.b16 %v6832, %v6816
      %v7553 = vpack.c.b16 %v6833, %v6817
      %v7554 = vpack.c.b16 %v6834, %v6818
      %v7555 = vpack.c.b16 %v6835, %v6819
      %v7556 = vpack.c.b16 %v6836, %v6820
      %v7557 = vpack.c.b16 %v6853, %v6837
      %v7558 = vpack.c.b16 %v6854, %v6838
      %v7559 = vpack.c.b16 %v6855, %v6839
      %v7560 = vpack.c.b16 %v6856, %v6840
      %v7561 = vpack.c.b16 %v6857, %v6841
      %v7562 = vpack.c.b16 %v6858, %v6842
      %v7563 = vpack.c.b16 %v6859, %v6843
      %v7564 = vpack.c.b16 %v6860, %v6844
      %v7565 = vpack.c.b16 %v6861, %v6845
      %v7566 = vpack.c.b16 %v6862, %v6846
      %v7567 = vpack.c.b16 %v6863, %v6847
      %v7568 = vpack.c.b16 %v6864, %v6848
      %v7569 = vpack.c.b16 %v6865, %v6849
      %v7570 = vpack.c.b16 %v6866, %v6850
      %v7571 = vpack.c.b16 %v6867, %v6851
      %v7572 = vpack.c.b16 %v6868, %v6852
      %v7573 = vpack.c.b16 %v6885, %v6869
      %v7574 = vpack.c.b16 %v6886, %v6870
      %v7575 = vpack.c.b16 %v6887, %v6871
      %v7576 = vpack.c.b16 %v6888, %v6872
      %v7577 = vpack.c.b16 %v6889, %v6873
      %v7578 = vpack.c.b16 %v6890, %v6874
      %v7579 = vpack.c.b16 %v6891, %v6875
      %v7580 = vpack.c.b16 %v6892, %v6876
      %v7581 = vpack.c.b16 %v6893, %v6877
      %v7582 = vpack.c.b16 %v6894, %v6878
      %v7583 = vpack.c.b16 %v6895, %v6879
      %v7584 = vpack.c.b16 %v6896, %v6880
      %v7585 = vpack.c.b16 %v6897, %v6881
      %v7586 = vpack.c.b16 %v6898, %v6882
      %v7587 = vpack.c.b16 %v6899, %v6883
      %v7588 = vpack.c.b16 %v6900, %v6884
      %v7589 = vpack.c.b16 %v6917, %v6901
      %v7590 = vpack.c.b16 %v6918, %v6902
      %v7591 = vpack.c.b16 %v6919, %v6903
      %v7592 = vpack.c.b16 %v6920, %v6904
      %v7593 = vpack.c.b16 %v6921, %v6905
      %v7594 = vpack.c.b16 %v6922, %v6906
      %v7595 = vpack.c.b16 %v6923, %v6907
      %v7596 = vpack.c.b16 %v6924, %v6908
      %v7597 = vpack.c.b16 %v6925, %v6909
      %v7598 = vpack.c.b16 %v6926, %v6910
      %v7599 = vpack.c.b16 %v6927, %v6911
      %v7600 = vpack.c.b16 %v6928, %v6912
      %v7601 = vpack.c.b16 %v6929, %v6913
      %v7602 = vpack.c.b16 %v6930, %v6914
      %v7603 = vpack.c.b16 %v6931, %v6915
      %v7604 = vpack.c.b16 %v6932, %v6916
      %v7605 = vpack.c.b16 %v6949, %v6933
      %v7606 = vpack.c.b16 %v6950, %v6934
      %v7607 = vpack.c.b16 %v6951, %v6935
      %v7608 = vpack.c.b16 %v6952, %v6936
      %v7609 = vpack.c.b16 %v6953, %v6937
      %v7610 = vpack.c.b16 %v6954, %v6938
      %v7611 = vpack.c.b16 %v6955, %v6939
      %v7612 = vpack.c.b16 %v6956, %v6940
      %v7613 = vpack.c.b16 %v6957, %v6941
      %v7614 = vpack.c.b16 %v6958, %v6942
      %v7615 = vpack.c.b16 %v6959, %v6943
      %v7616 = vpack.c.b16 %v6960, %v6944
      %v7617 = vpack.c.b16 %v6961, %v6945
      %v7618 = vpack.c.b16 %v6962, %v6946
      %v7619 = vpack.c.b16 %v6963, %v6947
      %v7620 = vpack.c.b16 %v6964, %v6948
      %v7621 = vpack.c.b16 %v6981, %v6965
      %v7622 = vpack.c.b16 %v6982, %v6966
      %v7623 = vpack.c.b16 %v6983, %v6967
      %v7624 = vpack.c.b16 %v6984, %v6968
      %v7625 = vpack.c.b16 %v6985, %v6969
      %v7626 = vpack.c.b16 %v6986, %v6970
      %v7627 = vpack.c.b16 %v6987, %v6971
      %v7628 = vpack.c.b16 %v6988, %v6972
      %v7629 = vpack.c.b16 %v6989, %v6973
      %v7630 = vpack.c.b16 %v6990, %v6974
      %v7631 = vpack.c.b16 %v6991, %v6975
      %v7632 = vpack.c.b16 %v6992, %v6976
      %v7633 = vpack.c.b16 %v6993, %v6977
      %v7634 = vpack.c.b16 %v6994, %v6978
      %v7635 = vpack.c.b16 %v6995, %v6979
      %v7636 = vpack.c.b16 %v6996, %v6980
      %v7637 = vpack.c.b16 %v7013, %v6997
      %v7638 = vpack.c.b16 %v7014, %v6998
      %v7639 = vpack.c.b16 %v7015, %v6999
      %v7640 = vpack.c.b16 %v7016, %v7000
      %v7641 = vpack.c.b16 %v7017, %v7001
      %v7642 = vpack.c.b16 %v7018, %v7002
      %v7643 = vpack.c.b16 %v7019, %v7003
      %v7644 = vpack.c.b16 %v7020, %v7004
      %v7645 = vpack.c.b16 %v7021, %v7005
      %v7646 = vpack.c.b16 %v7022, %v7006
      %v7647 = vpack.c.b16 %v7023, %v7007
      %v7648 = vpack.c.b16 %v7024, %v7008
      %v7649 = vpack.c.b16 %v7025, %v7009
      %v7650 = vpack.c.b16 %v7026, %v7010
      %v7651 = vpack.c.b16 %v7027, %v7011
      %v7652 = vpack.c.b16 %v7028, %v7012
      %v7653 = vpack.c.b16 %v7045, %v7029
      %v7654 = vpack.c.b16 %v7046, %v7030
      %v7655 = vpack.c.b16 %v7047, %v7031
      %v7656 = vpack.c.b16 %v7048, %v7032
      %v7657 = vpack.c.b16 %v7049, %v7033
      %v7658 = vpack.c.b16 %v7050, %v7034
      %v7659 = vpack.c.b16 %v7051, %v7035
      %v7660 = vpack.c.b16 %v7052, %v7036
      %v7661 = vpack.c.b16 %v7053, %v7037
      %v7662 = vpack.c.b16 %v7054, %v7038
      %v7663 = vpack.c.b16 %v7055, %v7039
      %v7664 = vpack.c.b16 %v7056, %v7040
      %v7665 = vpack.c.b16 %v7057, %v7041
      %v7666 = vpack.c.b16 %v7058, %v7042
      %v7667 = vpack.c.b16 %v7059, %v7043
      %v7668 = vpack.c.b16 %v7060, %v7044
      %v7669 = vpack.c.b16 %v7077, %v7061
      %v7670 = vpack.c.b16 %v7078, %v7062
      %v7671 = vpack.c.b16 %v7079, %v7063
      %v7672 = vpack.c.b16 %v7080, %v7064
      %v7673 = vpack.c.b16 %v7081, %v7065
      %v7674 = vpack.c.b16 %v7082, %v7066
      %v7675 = vpack.c.b16 %v7083, %v7067
      %v7676 = vpack.c.b16 %v7084, %v7068
      %v7677 = vpack.c.b16 %v7085, %v7069
      %v7678 = vpack.c.b16 %v7086, %v7070
      %v7679 = vpack.c.b16 %v7087, %v7071
      %v7680 = vpack.c.b16 %v7088, %v7072
      %v7681 = vpack.c.b16 %v7089, %v7073
      %v7682 = vpack.c.b16 %v7090, %v7074
      %v7683 = vpack.c.b16 %v7091, %v7075
      %v7684 = vpack.c.b16 %v7092, %v7076
      %v7685 = vpack.c.b16 %v7109, %v7093
      %v7686 = vpack.c.b16 %v7110, %v7094
      %v7687 = vpack.c.b16 %v7111, %v7095
      %v7688 = vpack.c.b16 %v7112, %v7096
      %v7689 = vpack.c.b16 %v7113, %v7097
      %v7690 = vpack.c.b16 %v7114, %v7098
      %v7691 = vpack.c.b16 %v7115, %v7099
      %v7692 = vpack.c.b16 %v7116, %v7100
      %v7693 = vpack.c.b16 %v7117, %v7101
      %v7694 = vpack.c.b16 %v7118, %v7102
      %v7695 = vpack.c.b16 %v7119, %v7103
      %v7696 = vpack.c.b16 %v7120, %v7104
      %v7697 = vpack.c.b16 %v7121, %v7105
      %v7698 = vpack.c.b16 %v7122, %v7106
      %v7699 = vpack.c.b16 %v7123, %v7107
      %v7700 = vpack.c.b16 %v7124, %v7108
      %v7701 = vpack.c.b16 %v7141, %v7125
      %v7702 = vpack.c.b16 %v7142, %v7126
      %v7703 = vpack.c.b16 %v7143, %v7127
      %v7704 = vpack.c.b16 %v7144, %v7128
      %v7705 = vpack.c.b16 %v7145, %v7129
      %v7706 = vpack.c.b16 %v7146, %v7130
      %v7707 = vpack.c.b16 %v7147, %v7131
      %v7708 = vpack.c.b16 %v7148, %v7132
      %v7709 = vpack.c.b16 %v7149, %v7133
      %v7710 = vpack.c.b16 %v7150, %v7134
      %v7711 = vpack.c.b16 %v7151, %v7135
      %v7712 = vpack.c.b16 %v7152, %v7136
      %v7713 = vpack.c.b16 %v7153, %v7137
      %v7714 = vpack.c.b16 %v7154, %v7138
      %v7715 = vpack.c.b16 %v7155, %v7139
      %v7716 = vpack.c.b16 %v7156, %v7140
      %v7717 = vpack.c.b16 %v7173, %v7157
      %v7718 = vpack.c.b16 %v7174, %v7158
      %v7719 = vpack.c.b16 %v7175, %v7159
      %v7720 = vpack.c.b16 %v7176, %v7160
      %v7721 = vpack.c.b16 %v7177, %v7161
      %v7722 = vpack.c.b16 %v7178, %v7162
      %v7723 = vpack.c.b16 %v7179, %v7163
      %v7724 = vpack.c.b16 %v7180, %v7164
      %v7725 = vpack.c.b16 %v7181, %v7165
      %v7726 = vpack.c.b16 %v7182, %v7166
      %v7727 = vpack.c.b16 %v7183, %v7167
      %v7728 = vpack.c.b16 %v7184, %v7168
      %v7729 = vpack.c.b16 %v7185, %v7169
      %v7730 = vpack.c.b16 %v7186, %v7170
      %v7731 = vpack.c.b16 %v7187, %v7171
      %v7732 = vpack.c.b16 %v7188, %v7172
      %v7733 = vpack.c.b16 %v7205, %v7189
      %v7734 = vpack.c.b16 %v7206, %v7190
      %v7735 = vpack.c.b16 %v7207, %v7191
      %v7736 = vpack.c.b16 %v7208, %v7192
      %v7737 = vpack.c.b16 %v7209, %v7193
      %v7738 = vpack.c.b16 %v7210, %v7194
      %v7739 = vpack.c.b16 %v7211, %v7195
      %v7740 = vpack.c.b16 %v7212, %v7196
      %v7741 = vpack.c.b16 %v7213, %v7197
      %v7742 = vpack.c.b16 %v7214, %v7198
      %v7743 = vpack.c.b16 %v7215, %v7199
      %v7744 = vpack.c.b16 %v7216, %v7200
      %v7745 = vpack.c.b16 %v7217, %v7201
      %v7746 = vpack.c.b16 %v7218, %v7202
      %v7747 = vpack.c.b16 %v7219, %v7203
      %v7748 = vpack.c.b16 %v7220, %v7204
      %v7749 = vpack.c.b16 %v7237, %v7221
      %v7750 = vpack.c.b16 %v7238, %v7222
      %v7751 = vpack.c.b16 %v7239, %v7223
      %v7752 = vpack.c.b16 %v7240, %v7224
      %v7753 = vpack.c.b16 %v7241, %v7225
      %v7754 = vpack.c.b16 %v7242, %v7226
      %v7755 = vpack.c.b16 %v7243, %v7227
      %v7756 = vpack.c.b16 %v7244, %v7228
      %v7757 = vpack.c.b16 %v7245, %v7229
      %v7758 = vpack.c.b16 %v7246, %v7230
      %v7759 = vpack.c.b16 %v7247, %v7231
      %v7760 = vpack.c.b16 %v7248, %v7232
      %v7761 = vpack.c.b16 %v7249, %v7233
      %v7762 = vpack.c.b16 %v7250, %v7234
      %v7763 = vpack.c.b16 %v7251, %v7235
      %v7764 = vpack.c.b16 %v7252, %v7236
      %8277 = vmatprep.subr.bf16.mxu0 %v7254
      %8278 = vmatpush1.bf16.msra.mxu0 %v7253
      %8279 = vmatprep.subr.bf16.mxu0 %v7270
      %8280 = vmatpush1.bf16.msra.mxu0 %v7269
      %8281 = vmatprep.subr.bf16.mxu0 %v7286
      %8282 = vmatpush1.bf16.msra.mxu0 %v7285
      %8283 = vmatprep.subr.bf16.mxu0 %v7302
      %8284 = vmatpush1.bf16.msra.mxu0 %v7301
      %8285 = vmatprep.subr.bf16.mxu0 %v7318
      %8286 = vmatpush1.bf16.msra.mxu0 %v7317
      %8287 = vmatprep.subr.bf16.mxu0 %v7334
      %8288 = vmatpush1.bf16.msra.mxu0 %v7333
      %8289 = vmatprep.subr.bf16.mxu0 %v7350
      %8290 = vmatpush1.bf16.msra.mxu0 %v7349
      %8291 = vmatprep.subr.bf16.mxu0 %v7366
      %8292 = vmatpush1.bf16.msra.mxu0 %v7365
      %8293 = vmatprep.subr.bf16.mxu0 %v7382
      %8294 = vmatpush1.bf16.msra.mxu0 %v7381
      %8295 = vmatprep.subr.bf16.mxu0 %v7398
      %8296 = vmatpush1.bf16.msra.mxu0 %v7397
      %8297 = vmatprep.subr.bf16.mxu0 %v7414
      %8298 = vmatpush1.bf16.msra.mxu0 %v7413
      %8299 = vmatprep.subr.bf16.mxu0 %v7430
      %8300 = vmatpush1.bf16.msra.mxu0 %v7429
      %8301 = vmatprep.subr.bf16.mxu0 %v7446
      %8302 = vmatpush1.bf16.msra.mxu0 %v7445
      %8303 = vmatprep.subr.bf16.mxu0 %v7462
      %8304 = vmatpush1.bf16.msra.mxu0 %v7461
      %8305 = vmatprep.subr.bf16.mxu0 %v7478
      %8306 = vmatpush1.bf16.msra.mxu0 %v7477
      %8307 = vmatprep.subr.bf16.mxu0 %v7494
      %8308 = vmatpush1.bf16.msra.mxu0 %v7493
      %8309 = vmatprep.mubr.bf16.mxu0 %v5118
      %8310 = vmatmul.mubr.bf16.gmra.mrb[0].mxu0 %v5117
      %v8311 = vpop.f32.mrb[0].mxu0
      %v8312 = vadd.f32 %v5640, %v8311
      %v8313 = vpop.f32.mrb[0].mxu0
      %v8314 = vadd.f32 %v5644, %v8313
      %v8315 = vpop.f32.mrb[0].mxu0
      %v8316 = vpop.f32.mrb[0].mxu0
      %8317 = vdwg.mxu0
      %8318 = vmatprep.subr.bf16.mxu0 %v7510
      %8319 = vmatpush1.bf16.msra.mxu0 %v7509
      %8320 = vmatprep.subr.bf16.mxu0 %v7526
      %8321 = vmatpush1.bf16.msra.mxu0 %v7525
      %8322 = vmatprep.subr.bf16.mxu0 %v7542
      %8323 = vmatpush1.bf16.msra.mxu0 %v7541
      %8324 = vmatprep.subr.bf16.mxu0 %v7558
      %8325 = vmatpush1.bf16.msra.mxu0 %v7557
      %8326 = vmatprep.subr.bf16.mxu0 %v7574
      %8327 = vmatpush1.bf16.msra.mxu0 %v7573
      %8328 = vmatprep.subr.bf16.mxu0 %v7590
      %8329 = vmatpush1.bf16.msra.mxu0 %v7589
      %8330 = vmatprep.subr.bf16.mxu0 %v7606
      %8331 = vmatpush1.bf16.msra.mxu0 %v7605
      %8332 = vmatprep.subr.bf16.mxu0 %v7622
      %8333 = vmatpush1.bf16.msra.mxu0 %v7621
      %8334 = vmatprep.subr.bf16.mxu0 %v7638
      %8335 = vmatpush1.bf16.msra.mxu0 %v7637
      %8336 = vmatprep.subr.bf16.mxu0 %v7654
      %8337 = vmatpush1.bf16.msra.mxu0 %v7653
      %8338 = vmatprep.subr.bf16.mxu0 %v7670
      %8339 = vmatpush1.bf16.msra.mxu0 %v7669
      %8340 = vmatprep.subr.bf16.mxu0 %v7686
      %8341 = vmatpush1.bf16.msra.mxu0 %v7685
      %8342 = vmatprep.subr.bf16.mxu0 %v7702
      %8343 = vmatpush1.bf16.msra.mxu0 %v7701
      %8344 = vmatprep.subr.bf16.mxu0 %v7718
      %8345 = vmatpush1.bf16.msra.mxu0 %v7717
      %8346 = vmatprep.subr.bf16.mxu0 %v7734
      %8347 = vmatpush1.bf16.msra.mxu0 %v7733
      %8348 = vmatprep.subr.bf16.mxu0 %v7750
      %8349 = vmatpush1.bf16.msra.mxu0 %v7749
      %8350 = vmatprep.mubr.bf16.mxu0 %v5120
      %8351 = vmatmul.mubr.bf16.gmra.mrb[0].mxu0 %v5119
      %v8352 = vpop.f32.mrb[0].mxu0
      %v8353 = vadd.f32 %v8312, %v8352
      %v8354 = vpop.f32.mrb[0].mxu0
      %v8355 = vadd.f32 %v8314, %v8354
      %v8356 = vpop.f32.mrb[0].mxu0
      %v8357 = vpop.f32.mrb[0].mxu0
      %8358 = vdwg.mxu0
      %8359 = vmatprep.subr.bf16.mxu0 %v7256
      %8360 = vmatpush1.bf16.msra.mxu0 %v7255
      %8361 = vmatprep.subr.bf16.mxu0 %v7272
      %8362 = vmatpush1.bf16.msra.mxu0 %v7271
      %8363 = vmatprep.subr.bf16.mxu0 %v7288
      %8364 = vmatpush1.bf16.msra.mxu0 %v7287
      %8365 = vmatprep.subr.bf16.mxu0 %v7304
      %8366 = vmatpush1.bf16.msra.mxu0 %v7303
      %8367 = vmatprep.subr.bf16.mxu0 %v7320
      %8368 = vmatpush1.bf16.msra.mxu0 %v7319
      %8369 = vmatprep.subr.bf16.mxu0 %v7336
      %8370 = vmatpush1.bf16.msra.mxu0 %v7335
      %8371 = vmatprep.subr.bf16.mxu0 %v7352
      %8372 = vmatpush1.bf16.msra.mxu0 %v7351
      %8373 = vmatprep.subr.bf16.mxu0 %v7368
      %8374 = vmatpush1.bf16.msra.mxu0 %v7367
      %8375 = vmatprep.subr.bf16.mxu0 %v7384
      %8376 = vmatpush1.bf16.msra.mxu0 %v7383
      %8377 = vmatprep.subr.bf16.mxu0 %v7400
      %8378 = vmatpush1.bf16.msra.mxu0 %v7399
      %8379 = vmatprep.subr.bf16.mxu0 %v7416
      %8380 = vmatpush1.bf16.msra.mxu0 %v7415
      %8381 = vmatprep.subr.bf16.mxu0 %v7432
      %8382 = vmatpush1.bf16.msra.mxu0 %v7431
      %8383 = vmatprep.subr.bf16.mxu0 %v7448
      %8384 = vmatpush1.bf16.msra.mxu0 %v7447
      %8385 = vmatprep.subr.bf16.mxu0 %v7464
      %8386 = vmatpush1.bf16.msra.mxu0 %v7463
      %8387 = vmatprep.subr.bf16.mxu0 %v7480
      %8388 = vmatpush1.bf16.msra.mxu0 %v7479
      %8389 = vmatprep.subr.bf16.mxu0 %v7496
      %8390 = vmatpush1.bf16.msra.mxu0 %v7495
      %8391 = vmatprep.mubr.bf16.mxu0 %v5118
      %8392 = vmatmul.mubr.bf16.gmra.mrb[0].mxu0 %v5117
      %v8393 = vpop.f32.mrb[0].mxu0
      %v8394 = vadd.f32 %v5648, %v8393
      %v8395 = vpop.f32.mrb[0].mxu0
      %v8396 = vadd.f32 %v5652, %v8395
      %v8397 = vpop.f32.mrb[0].mxu0
      %v8398 = vpop.f32.mrb[0].mxu0
      %8399 = vdwg.mxu0
      %8400 = vmatprep.subr.bf16.mxu0 %v7512
      %8401 = vmatpush1.bf16.msra.mxu0 %v7511
      %8402 = vmatprep.subr.bf16.mxu0 %v7528
      %8403 = vmatpush1.bf16.msra.mxu0 %v7527
      %8404 = vmatprep.subr.bf16.mxu0 %v7544
      %8405 = vmatpush1.bf16.msra.mxu0 %v7543
      %8406 = vmatprep.subr.bf16.mxu0 %v7560
      %8407 = vmatpush1.bf16.msra.mxu0 %v7559
      %8408 = vmatprep.subr.bf16.mxu0 %v7576
      %8409 = vmatpush1.bf16.msra.mxu0 %v7575
      %8410 = vmatprep.subr.bf16.mxu0 %v7592
      %8411 = vmatpush1.bf16.msra.mxu0 %v7591
      %8412 = vmatprep.subr.bf16.mxu0 %v7608
      %8413 = vmatpush1.bf16.msra.mxu0 %v7607
      %8414 = vmatprep.subr.bf16.mxu0 %v7624
      %8415 = vmatpush1.bf16.msra.mxu0 %v7623
      %8416 = vmatprep.subr.bf16.mxu0 %v7640
      %8417 = vmatpush1.bf16.msra.mxu0 %v7639
      %8418 = vmatprep.subr.bf16.mxu0 %v7656
      %8419 = vmatpush1.bf16.msra.mxu0 %v7655
      %8420 = vmatprep.subr.bf16.mxu0 %v7672
      %8421 = vmatpush1.bf16.msra.mxu0 %v7671
      %8422 = vmatprep.subr.bf16.mxu0 %v7688
      %8423 = vmatpush1.bf16.msra.mxu0 %v7687
      %8424 = vmatprep.subr.bf16.mxu0 %v7704
      %8425 = vmatpush1.bf16.msra.mxu0 %v7703
      %8426 = vmatprep.subr.bf16.mxu0 %v7720
      %8427 = vmatpush1.bf16.msra.mxu0 %v7719
      %8428 = vmatprep.subr.bf16.mxu0 %v7736
      %8429 = vmatpush1.bf16.msra.mxu0 %v7735
      %8430 = vmatprep.subr.bf16.mxu0 %v7752
      %8431 = vmatpush1.bf16.msra.mxu0 %v7751
      %8432 = vmatprep.mubr.bf16.mxu0 %v5120
      %8433 = vmatmul.mubr.bf16.gmra.mrb[0].mxu0 %v5119
      %v8434 = vpop.f32.mrb[0].mxu0
      %v8435 = vadd.f32 %v8394, %v8434
      %v8436 = vpop.f32.mrb[0].mxu0
      %v8437 = vadd.f32 %v8396, %v8436
      %v8438 = vpop.f32.mrb[0].mxu0
      %v8439 = vpop.f32.mrb[0].mxu0
      %8440 = vdwg.mxu0
      %8441 = vmatprep.subr.bf16.mxu0 %v7258
      %8442 = vmatpush1.bf16.msra.mxu0 %v7257
      %8443 = vmatprep.subr.bf16.mxu0 %v7274
      %8444 = vmatpush1.bf16.msra.mxu0 %v7273
      %8445 = vmatprep.subr.bf16.mxu0 %v7290
      %8446 = vmatpush1.bf16.msra.mxu0 %v7289
      %8447 = vmatprep.subr.bf16.mxu0 %v7306
      %8448 = vmatpush1.bf16.msra.mxu0 %v7305
      %8449 = vmatprep.subr.bf16.mxu0 %v7322
      %8450 = vmatpush1.bf16.msra.mxu0 %v7321
      %8451 = vmatprep.subr.bf16.mxu0 %v7338
      %8452 = vmatpush1.bf16.msra.mxu0 %v7337
      %8453 = vmatprep.subr.bf16.mxu0 %v7354
      %8454 = vmatpush1.bf16.msra.mxu0 %v7353
      %8455 = vmatprep.subr.bf16.mxu0 %v7370
      %8456 = vmatpush1.bf16.msra.mxu0 %v7369
      %8457 = vmatprep.subr.bf16.mxu0 %v7386
      %8458 = vmatpush1.bf16.msra.mxu0 %v7385
      %8459 = vmatprep.subr.bf16.mxu0 %v7402
      %8460 = vmatpush1.bf16.msra.mxu0 %v7401
      %8461 = vmatprep.subr.bf16.mxu0 %v7418
      %8462 = vmatpush1.bf16.msra.mxu0 %v7417
      %8463 = vmatprep.subr.bf16.mxu0 %v7434
      %8464 = vmatpush1.bf16.msra.mxu0 %v7433
      %8465 = vmatprep.subr.bf16.mxu0 %v7450
      %8466 = vmatpush1.bf16.msra.mxu0 %v7449
      %8467 = vmatprep.subr.bf16.mxu0 %v7466
      %8468 = vmatpush1.bf16.msra.mxu0 %v7465
      %8469 = vmatprep.subr.bf16.mxu0 %v7482
      %8470 = vmatpush1.bf16.msra.mxu0 %v7481
      %8471 = vmatprep.subr.bf16.mxu0 %v7498
      %8472 = vmatpush1.bf16.msra.mxu0 %v7497
      %8473 = vmatprep.mubr.bf16.mxu0 %v5118
      %8474 = vmatmul.mubr.bf16.gmra.mrb[0].mxu0 %v5117
      %v8475 = vpop.f32.mrb[0].mxu0
      %v8476 = vadd.f32 %v5656, %v8475
      %v8477 = vpop.f32.mrb[0].mxu0
      %v8478 = vadd.f32 %v5660, %v8477
      %v8479 = vpop.f32.mrb[0].mxu0
      %v8480 = vpop.f32.mrb[0].mxu0
      %8481 = vdwg.mxu0
      %8482 = vmatprep.subr.bf16.mxu0 %v7514
      %8483 = vmatpush1.bf16.msra.mxu0 %v7513
      %8484 = vmatprep.subr.bf16.mxu0 %v7530
      %8485 = vmatpush1.bf16.msra.mxu0 %v7529
      %8486 = vmatprep.subr.bf16.mxu0 %v7546
      %8487 = vmatpush1.bf16.msra.mxu0 %v7545
      %8488 = vmatprep.subr.bf16.mxu0 %v7562
      %8489 = vmatpush1.bf16.msra.mxu0 %v7561
      %8490 = vmatprep.subr.bf16.mxu0 %v7578
      %8491 = vmatpush1.bf16.msra.mxu0 %v7577
      %8492 = vmatprep.subr.bf16.mxu0 %v7594
      %8493 = vmatpush1.bf16.msra.mxu0 %v7593
      %8494 = vmatprep.subr.bf16.mxu0 %v7610
      %8495 = vmatpush1.bf16.msra.mxu0 %v7609
      %8496 = vmatprep.subr.bf16.mxu0 %v7626
      %8497 = vmatpush1.bf16.msra.mxu0 %v7625
      %8498 = vmatprep.subr.bf16.mxu0 %v7642
      %8499 = vmatpush1.bf16.msra.mxu0 %v7641
      %8500 = vmatprep.subr.bf16.mxu0 %v7658
      %8501 = vmatpush1.bf16.msra.mxu0 %v7657
      %8502 = vmatprep.subr.bf16.mxu0 %v7674
      %8503 = vmatpush1.bf16.msra.mxu0 %v7673
      %8504 = vmatprep.subr.bf16.mxu0 %v7690
      %8505 = vmatpush1.bf16.msra.mxu0 %v7689
      %8506 = vmatprep.subr.bf16.mxu0 %v7706
      %8507 = vmatpush1.bf16.msra.mxu0 %v7705
      %8508 = vmatprep.subr.bf16.mxu0 %v7722
      %8509 = vmatpush1.bf16.msra.mxu0 %v7721
      %8510 = vmatprep.subr.bf16.mxu0 %v7738
      %8511 = vmatpush1.bf16.msra.mxu0 %v7737
      %8512 = vmatprep.subr.bf16.mxu0 %v7754
      %8513 = vmatpush1.bf16.msra.mxu0 %v7753
      %8514 = vmatprep.mubr.bf16.mxu0 %v5120
      %8515 = vmatmul.mubr.bf16.gmra.mrb[0].mxu0 %v5119
      %v8516 = vpop.f32.mrb[0].mxu0
      %v8517 = vadd.f32 %v8476, %v8516
      %v8518 = vpop.f32.mrb[0].mxu0
      %v8519 = vadd.f32 %v8478, %v8518
      %v8520 = vpop.f32.mrb[0].mxu0
      %v8521 = vpop.f32.mrb[0].mxu0
      %8522 = vdwg.mxu0
      %8523 = vmatprep.subr.bf16.mxu0 %v7260
      %8524 = vmatpush1.bf16.msra.mxu0 %v7259
      %8525 = vmatprep.subr.bf16.mxu0 %v7276
      %8526 = vmatpush1.bf16.msra.mxu0 %v7275
      %8527 = vmatprep.subr.bf16.mxu0 %v7292
      %8528 = vmatpush1.bf16.msra.mxu0 %v7291
      %8529 = vmatprep.subr.bf16.mxu0 %v7308
      %8530 = vmatpush1.bf16.msra.mxu0 %v7307
      %8531 = vmatprep.subr.bf16.mxu0 %v7324
      %8532 = vmatpush1.bf16.msra.mxu0 %v7323
      %8533 = vmatprep.subr.bf16.mxu0 %v7340
      %8534 = vmatpush1.bf16.msra.mxu0 %v7339
      %8535 = vmatprep.subr.bf16.mxu0 %v7356
      %8536 = vmatpush1.bf16.msra.mxu0 %v7355
      %8537 = vmatprep.subr.bf16.mxu0 %v7372
      %8538 = vmatpush1.bf16.msra.mxu0 %v7371
      %8539 = vmatprep.subr.bf16.mxu0 %v7388
      %8540 = vmatpush1.bf16.msra.mxu0 %v7387
      %8541 = vmatprep.subr.bf16.mxu0 %v7404
      %8542 = vmatpush1.bf16.msra.mxu0 %v7403
      %8543 = vmatprep.subr.bf16.mxu0 %v7420
      %8544 = vmatpush1.bf16.msra.mxu0 %v7419
      %8545 = vmatprep.subr.bf16.mxu0 %v7436
      %8546 = vmatpush1.bf16.msra.mxu0 %v7435
      %8547 = vmatprep.subr.bf16.mxu0 %v7452
      %8548 = vmatpush1.bf16.msra.mxu0 %v7451
      %8549 = vmatprep.subr.bf16.mxu0 %v7468
      %8550 = vmatpush1.bf16.msra.mxu0 %v7467
      %8551 = vmatprep.subr.bf16.mxu0 %v7484
      %8552 = vmatpush1.bf16.msra.mxu0 %v7483
      %8553 = vmatprep.subr.bf16.mxu0 %v7500
      %8554 = vmatpush1.bf16.msra.mxu0 %v7499
      %8555 = vmatprep.mubr.bf16.mxu0 %v5118
      %8556 = vmatmul.mubr.bf16.gmra.mrb[0].mxu0 %v5117
      %v8557 = vpop.f32.mrb[0].mxu0
      %v8558 = vadd.f32 %v5664, %v8557
      %v8559 = vpop.f32.mrb[0].mxu0
      %v8560 = vadd.f32 %v5668, %v8559
      %v8561 = vpop.f32.mrb[0].mxu0
      %v8562 = vpop.f32.mrb[0].mxu0
      %8563 = vdwg.mxu0
      %8564 = vmatprep.subr.bf16.mxu0 %v7516
      %8565 = vmatpush1.bf16.msra.mxu0 %v7515
      %8566 = vmatprep.subr.bf16.mxu0 %v7532
      %8567 = vmatpush1.bf16.msra.mxu0 %v7531
      %8568 = vmatprep.subr.bf16.mxu0 %v7548
      %8569 = vmatpush1.bf16.msra.mxu0 %v7547
      %8570 = vmatprep.subr.bf16.mxu0 %v7564
      %8571 = vmatpush1.bf16.msra.mxu0 %v7563
      %8572 = vmatprep.subr.bf16.mxu0 %v7580
      %8573 = vmatpush1.bf16.msra.mxu0 %v7579
      %8574 = vmatprep.subr.bf16.mxu0 %v7596
      %8575 = vmatpush1.bf16.msra.mxu0 %v7595
      %8576 = vmatprep.subr.bf16.mxu0 %v7612
      %8577 = vmatpush1.bf16.msra.mxu0 %v7611
      %8578 = vmatprep.subr.bf16.mxu0 %v7628
      %8579 = vmatpush1.bf16.msra.mxu0 %v7627
      %8580 = vmatprep.subr.bf16.mxu0 %v7644
      %8581 = vmatpush1.bf16.msra.mxu0 %v7643
      %8582 = vmatprep.subr.bf16.mxu0 %v7660
      %8583 = vmatpush1.bf16.msra.mxu0 %v7659
      %8584 = vmatprep.subr.bf16.mxu0 %v7676
      %8585 = vmatpush1.bf16.msra.mxu0 %v7675
      %8586 = vmatprep.subr.bf16.mxu0 %v7692
      %8587 = vmatpush1.bf16.msra.mxu0 %v7691
      %8588 = vmatprep.subr.bf16.mxu0 %v7708
      %8589 = vmatpush1.bf16.msra.mxu0 %v7707
      %8590 = vmatprep.subr.bf16.mxu0 %v7724
      %8591 = vmatpush1.bf16.msra.mxu0 %v7723
      %8592 = vmatprep.subr.bf16.mxu0 %v7740
      %8593 = vmatpush1.bf16.msra.mxu0 %v7739
      %8594 = vmatprep.subr.bf16.mxu0 %v7756
      %8595 = vmatpush1.bf16.msra.mxu0 %v7755
      %8596 = vmatprep.mubr.bf16.mxu0 %v5120
      %8597 = vmatmul.mubr.bf16.gmra.mrb[0].mxu0 %v5119
      %v8598 = vpop.f32.mrb[0].mxu0
      %v8599 = vadd.f32 %v8558, %v8598
      %v8600 = vpop.f32.mrb[0].mxu0
      %v8601 = vadd.f32 %v8560, %v8600
      %v8602 = vpop.f32.mrb[0].mxu0
      %v8603 = vpop.f32.mrb[0].mxu0
      %8604 = vdwg.mxu0
      %8605 = vmatprep.subr.bf16.mxu0 %v7262
      %8606 = vmatpush1.bf16.msra.mxu0 %v7261
      %8607 = vmatprep.subr.bf16.mxu0 %v7278
      %8608 = vmatpush1.bf16.msra.mxu0 %v7277
      %8609 = vmatprep.subr.bf16.mxu0 %v7294
      %8610 = vmatpush1.bf16.msra.mxu0 %v7293
      %8611 = vmatprep.subr.bf16.mxu0 %v7310
      %8612 = vmatpush1.bf16.msra.mxu0 %v7309
      %8613 = vmatprep.subr.bf16.mxu0 %v7326
      %8614 = vmatpush1.bf16.msra.mxu0 %v7325
      %8615 = vmatprep.subr.bf16.mxu0 %v7342
      %8616 = vmatpush1.bf16.msra.mxu0 %v7341
      %8617 = vmatprep.subr.bf16.mxu0 %v7358
      %8618 = vmatpush1.bf16.msra.mxu0 %v7357
      %8619 = vmatprep.subr.bf16.mxu0 %v7374
      %8620 = vmatpush1.bf16.msra.mxu0 %v7373
      %8621 = vmatprep.subr.bf16.mxu0 %v7390
      %8622 = vmatpush1.bf16.msra.mxu0 %v7389
      %8623 = vmatprep.subr.bf16.mxu0 %v7406
      %8624 = vmatpush1.bf16.msra.mxu0 %v7405
      %8625 = vmatprep.subr.bf16.mxu0 %v7422
      %8626 = vmatpush1.bf16.msra.mxu0 %v7421
      %8627 = vmatprep.subr.bf16.mxu0 %v7438
      %8628 = vmatpush1.bf16.msra.mxu0 %v7437
      %8629 = vmatprep.subr.bf16.mxu0 %v7454
      %8630 = vmatpush1.bf16.msra.mxu0 %v7453
      %8631 = vmatprep.subr.bf16.mxu0 %v7470
      %8632 = vmatpush1.bf16.msra.mxu0 %v7469
      %8633 = vmatprep.subr.bf16.mxu0 %v7486
      %8634 = vmatpush1.bf16.msra.mxu0 %v7485
      %8635 = vmatprep.subr.bf16.mxu0 %v7502
      %8636 = vmatpush1.bf16.msra.mxu0 %v7501
      %8637 = vmatprep.mubr.bf16.mxu0 %v5118
      %8638 = vmatmul.mubr.bf16.gmra.mrb[0].mxu0 %v5117
      %v8639 = vpop.f32.mrb[0].mxu0
      %v8640 = vadd.f32 %v5672, %v8639
      %v8641 = vpop.f32.mrb[0].mxu0
      %v8642 = vadd.f32 %v5676, %v8641
      %v8643 = vpop.f32.mrb[0].mxu0
      %v8644 = vpop.f32.mrb[0].mxu0
      %8645 = vdwg.mxu0
      %8646 = vmatprep.subr.bf16.mxu0 %v7518
      %8647 = vmatpush1.bf16.msra.mxu0 %v7517
      %8648 = vmatprep.subr.bf16.mxu0 %v7534
      %8649 = vmatpush1.bf16.msra.mxu0 %v7533
      %8650 = vmatprep.subr.bf16.mxu0 %v7550
      %8651 = vmatpush1.bf16.msra.mxu0 %v7549
      %8652 = vmatprep.subr.bf16.mxu0 %v7566
      %8653 = vmatpush1.bf16.msra.mxu0 %v7565
      %8654 = vmatprep.subr.bf16.mxu0 %v7582
      %8655 = vmatpush1.bf16.msra.mxu0 %v7581
      %8656 = vmatprep.subr.bf16.mxu0 %v7598
      %8657 = vmatpush1.bf16.msra.mxu0 %v7597
      %8658 = vmatprep.subr.bf16.mxu0 %v7614
      %8659 = vmatpush1.bf16.msra.mxu0 %v7613
      %8660 = vmatprep.subr.bf16.mxu0 %v7630
      %8661 = vmatpush1.bf16.msra.mxu0 %v7629
      %8662 = vmatprep.subr.bf16.mxu0 %v7646
      %8663 = vmatpush1.bf16.msra.mxu0 %v7645
      %8664 = vmatprep.subr.bf16.mxu0 %v7662
      %8665 = vmatpush1.bf16.msra.mxu0 %v7661
      %8666 = vmatprep.subr.bf16.mxu0 %v7678
      %8667 = vmatpush1.bf16.msra.mxu0 %v7677
      %8668 = vmatprep.subr.bf16.mxu0 %v7694
      %8669 = vmatpush1.bf16.msra.mxu0 %v7693
      %8670 = vmatprep.subr.bf16.mxu0 %v7710
      %8671 = vmatpush1.bf16.msra.mxu0 %v7709
      %8672 = vmatprep.subr.bf16.mxu0 %v7726
      %8673 = vmatpush1.bf16.msra.mxu0 %v7725
      %8674 = vmatprep.subr.bf16.mxu0 %v7742
      %8675 = vmatpush1.bf16.msra.mxu0 %v7741
      %8676 = vmatprep.subr.bf16.mxu0 %v7758
      %8677 = vmatpush1.bf16.msra.mxu0 %v7757
      %8678 = vmatprep.mubr.bf16.mxu0 %v5120
      %8679 = vmatmul.mubr.bf16.gmra.mrb[0].mxu0 %v5119
      %v8680 = vpop.f32.mrb[0].mxu0
      %v8681 = vadd.f32 %v8640, %v8680
      %v8682 = vpop.f32.mrb[0].mxu0
      %v8683 = vadd.f32 %v8642, %v8682
      %v8684 = vpop.f32.mrb[0].mxu0
      %v8685 = vpop.f32.mrb[0].mxu0
      %8686 = vdwg.mxu0
      %8687 = vmatprep.subr.bf16.mxu0 %v7264
      %8688 = vmatpush1.bf16.msra.mxu0 %v7263
      %8689 = vmatprep.subr.bf16.mxu0 %v7280
      %8690 = vmatpush1.bf16.msra.mxu0 %v7279
      %8691 = vmatprep.subr.bf16.mxu0 %v7296
      %8692 = vmatpush1.bf16.msra.mxu0 %v7295
      %8693 = vmatprep.subr.bf16.mxu0 %v7312
      %8694 = vmatpush1.bf16.msra.mxu0 %v7311
      %8695 = vmatprep.subr.bf16.mxu0 %v7328
      %8696 = vmatpush1.bf16.msra.mxu0 %v7327
      %8697 = vmatprep.subr.bf16.mxu0 %v7344
      %8698 = vmatpush1.bf16.msra.mxu0 %v7343
      %8699 = vmatprep.subr.bf16.mxu0 %v7360
      %8700 = vmatpush1.bf16.msra.mxu0 %v7359
      %8701 = vmatprep.subr.bf16.mxu0 %v7376
      %8702 = vmatpush1.bf16.msra.mxu0 %v7375
      %8703 = vmatprep.subr.bf16.mxu0 %v7392
      %8704 = vmatpush1.bf16.msra.mxu0 %v7391
      %8705 = vmatprep.subr.bf16.mxu0 %v7408
      %8706 = vmatpush1.bf16.msra.mxu0 %v7407
      %8707 = vmatprep.subr.bf16.mxu0 %v7424
      %8708 = vmatpush1.bf16.msra.mxu0 %v7423
      %8709 = vmatprep.subr.bf16.mxu0 %v7440
      %8710 = vmatpush1.bf16.msra.mxu0 %v7439
      %8711 = vmatprep.subr.bf16.mxu0 %v7456
      %8712 = vmatpush1.bf16.msra.mxu0 %v7455
      %8713 = vmatprep.subr.bf16.mxu0 %v7472
      %8714 = vmatpush1.bf16.msra.mxu0 %v7471
      %8715 = vmatprep.subr.bf16.mxu0 %v7488
      %8716 = vmatpush1.bf16.msra.mxu0 %v7487
      %8717 = vmatprep.subr.bf16.mxu0 %v7504
      %8718 = vmatpush1.bf16.msra.mxu0 %v7503
      %8719 = vmatprep.mubr.bf16.mxu0 %v5118
      %8720 = vmatmul.mubr.bf16.gmra.mrb[0].mxu0 %v5117
      %v8721 = vpop.f32.mrb[0].mxu0
      %v8722 = vadd.f32 %v5680, %v8721
      %v8723 = vpop.f32.mrb[0].mxu0
      %v8724 = vadd.f32 %v5684, %v8723
      %v8725 = vpop.f32.mrb[0].mxu0
      %v8726 = vpop.f32.mrb[0].mxu0
      %8727 = vdwg.mxu0
      %8728 = vmatprep.subr.bf16.mxu0 %v7520
      %8729 = vmatpush1.bf16.msra.mxu0 %v7519
      %8730 = vmatprep.subr.bf16.mxu0 %v7536
      %8731 = vmatpush1.bf16.msra.mxu0 %v7535
      %8732 = vmatprep.subr.bf16.mxu0 %v7552
      %8733 = vmatpush1.bf16.msra.mxu0 %v7551
      %8734 = vmatprep.subr.bf16.mxu0 %v7568
      %8735 = vmatpush1.bf16.msra.mxu0 %v7567
      %8736 = vmatprep.subr.bf16.mxu0 %v7584
      %8737 = vmatpush1.bf16.msra.mxu0 %v7583
      %8738 = vmatprep.subr.bf16.mxu0 %v7600
      %8739 = vmatpush1.bf16.msra.mxu0 %v7599
      %8740 = vmatprep.subr.bf16.mxu0 %v7616
      %8741 = vmatpush1.bf16.msra.mxu0 %v7615
      %8742 = vmatprep.subr.bf16.mxu0 %v7632
      %8743 = vmatpush1.bf16.msra.mxu0 %v7631
      %8744 = vmatprep.subr.bf16.mxu0 %v7648
      %8745 = vmatpush1.bf16.msra.mxu0 %v7647
      %8746 = vmatprep.subr.bf16.mxu0 %v7664
      %8747 = vmatpush1.bf16.msra.mxu0 %v7663
      %8748 = vmatprep.subr.bf16.mxu0 %v7680
      %8749 = vmatpush1.bf16.msra.mxu0 %v7679
      %8750 = vmatprep.subr.bf16.mxu0 %v7696
      %8751 = vmatpush1.bf16.msra.mxu0 %v7695
      %8752 = vmatprep.subr.bf16.mxu0 %v7712
      %8753 = vmatpush1.bf16.msra.mxu0 %v7711
      %8754 = vmatprep.subr.bf16.mxu0 %v7728
      %8755 = vmatpush1.bf16.msra.mxu0 %v7727
      %8756 = vmatprep.subr.bf16.mxu0 %v7744
      %8757 = vmatpush1.bf16.msra.mxu0 %v7743
      %8758 = vmatprep.subr.bf16.mxu0 %v7760
      %8759 = vmatpush1.bf16.msra.mxu0 %v7759
      %8760 = vmatprep.mubr.bf16.mxu0 %v5120
      %8761 = vmatmul.mubr.bf16.gmra.mrb[0].mxu0 %v5119
      %v8762 = vpop.f32.mrb[0].mxu0
      %v8763 = vadd.f32 %v8722, %v8762
      %v8764 = vpop.f32.mrb[0].mxu0
      %v8765 = vadd.f32 %v8724, %v8764
      %v8766 = vpop.f32.mrb[0].mxu0
      %v8767 = vpop.f32.mrb[0].mxu0
      %8768 = vdwg.mxu0
      %8769 = vmatprep.subr.bf16.mxu0 %v7266
      %8770 = vmatpush1.bf16.msra.mxu0 %v7265
      %8771 = vmatprep.subr.bf16.mxu0 %v7282
      %8772 = vmatpush1.bf16.msra.mxu0 %v7281
      %8773 = vmatprep.subr.bf16.mxu0 %v7298
      %8774 = vmatpush1.bf16.msra.mxu0 %v7297
      %8775 = vmatprep.subr.bf16.mxu0 %v7314
      %8776 = vmatpush1.bf16.msra.mxu0 %v7313
      %8777 = vmatprep.subr.bf16.mxu0 %v7330
      %8778 = vmatpush1.bf16.msra.mxu0 %v7329
      %8779 = vmatprep.subr.bf16.mxu0 %v7346
      %8780 = vmatpush1.bf16.msra.mxu0 %v7345
      %8781 = vmatprep.subr.bf16.mxu0 %v7362
      %8782 = vmatpush1.bf16.msra.mxu0 %v7361
      %8783 = vmatprep.subr.bf16.mxu0 %v7378
      %8784 = vmatpush1.bf16.msra.mxu0 %v7377
      %8785 = vmatprep.subr.bf16.mxu0 %v7394
      %8786 = vmatpush1.bf16.msra.mxu0 %v7393
      %8787 = vmatprep.subr.bf16.mxu0 %v7410
      %8788 = vmatpush1.bf16.msra.mxu0 %v7409
      %8789 = vmatprep.subr.bf16.mxu0 %v7426
      %8790 = vmatpush1.bf16.msra.mxu0 %v7425
      %8791 = vmatprep.subr.bf16.mxu0 %v7442
      %8792 = vmatpush1.bf16.msra.mxu0 %v7441
      %8793 = vmatprep.subr.bf16.mxu0 %v7458
      %8794 = vmatpush1.bf16.msra.mxu0 %v7457
      %8795 = vmatprep.subr.bf16.mxu0 %v7474
      %8796 = vmatpush1.bf16.msra.mxu0 %v7473
      %8797 = vmatprep.subr.bf16.mxu0 %v7490
      %8798 = vmatpush1.bf16.msra.mxu0 %v7489
      %8799 = vmatprep.subr.bf16.mxu0 %v7506
      %8800 = vmatpush1.bf16.msra.mxu0 %v7505
      %8801 = vmatprep.mubr.bf16.mxu0 %v5118
      %8802 = vmatmul.mubr.bf16.gmra.mrb[0].mxu0 %v5117
      %v8803 = vpop.f32.mrb[0].mxu0
      %v8804 = vadd.f32 %v5688, %v8803
      %v8805 = vpop.f32.mrb[0].mxu0
      %v8806 = vadd.f32 %v5692, %v8805
      %v8807 = vpop.f32.mrb[0].mxu0
      %v8808 = vpop.f32.mrb[0].mxu0
      %8809 = vdwg.mxu0
      %8810 = vmatprep.subr.bf16.mxu0 %v7522
      %8811 = vmatpush1.bf16.msra.mxu0 %v7521
      %8812 = vmatprep.subr.bf16.mxu0 %v7538
      %8813 = vmatpush1.bf16.msra.mxu0 %v7537
      %8814 = vmatprep.subr.bf16.mxu0 %v7554
      %8815 = vmatpush1.bf16.msra.mxu0 %v7553
      %8816 = vmatprep.subr.bf16.mxu0 %v7570
      %8817 = vmatpush1.bf16.msra.mxu0 %v7569
      %8818 = vmatprep.subr.bf16.mxu0 %v7586
      %8819 = vmatpush1.bf16.msra.mxu0 %v7585
      %8820 = vmatprep.subr.bf16.mxu0 %v7602
      %8821 = vmatpush1.bf16.msra.mxu0 %v7601
      %8822 = vmatprep.subr.bf16.mxu0 %v7618
      %8823 = vmatpush1.bf16.msra.mxu0 %v7617
      %8824 = vmatprep.subr.bf16.mxu0 %v7634
      %8825 = vmatpush1.bf16.msra.mxu0 %v7633
      %8826 = vmatprep.subr.bf16.mxu0 %v7650
      %8827 = vmatpush1.bf16.msra.mxu0 %v7649
      %8828 = vmatprep.subr.bf16.mxu0 %v7666
      %8829 = vmatpush1.bf16.msra.mxu0 %v7665
      %8830 = vmatprep.subr.bf16.mxu0 %v7682
      %8831 = vmatpush1.bf16.msra.mxu0 %v7681
      %8832 = vmatprep.subr.bf16.mxu0 %v7698
      %8833 = vmatpush1.bf16.msra.mxu0 %v7697
      %8834 = vmatprep.subr.bf16.mxu0 %v7714
      %8835 = vmatpush1.bf16.msra.mxu0 %v7713
      %8836 = vmatprep.subr.bf16.mxu0 %v7730
      %8837 = vmatpush1.bf16.msra.mxu0 %v7729
      %8838 = vmatprep.subr.bf16.mxu0 %v7746
      %8839 = vmatpush1.bf16.msra.mxu0 %v7745
      %8840 = vmatprep.subr.bf16.mxu0 %v7762
      %8841 = vmatpush1.bf16.msra.mxu0 %v7761
      %8842 = vmatprep.mubr.bf16.mxu0 %v5120
      %8843 = vmatmul.mubr.bf16.gmra.mrb[0].mxu0 %v5119
      %v8844 = vpop.f32.mrb[0].mxu0
      %v8845 = vadd.f32 %v8804, %v8844
      %v8846 = vpop.f32.mrb[0].mxu0
      %v8847 = vadd.f32 %v8806, %v8846
      %v8848 = vpop.f32.mrb[0].mxu0
      %v8849 = vpop.f32.mrb[0].mxu0
      %8850 = vdwg.mxu0
      %8851 = vmatprep.subr.bf16.mxu0 %v7268
      %8852 = vmatpush1.bf16.msra.mxu0 %v7267
      %8853 = vmatprep.subr.bf16.mxu0 %v7284
      %8854 = vmatpush1.bf16.msra.mxu0 %v7283
      %8855 = vmatprep.subr.bf16.mxu0 %v7300
      %8856 = vmatpush1.bf16.msra.mxu0 %v7299
      %8857 = vmatprep.subr.bf16.mxu0 %v7316
      %8858 = vmatpush1.bf16.msra.mxu0 %v7315
      %8859 = vmatprep.subr.bf16.mxu0 %v7332
      %8860 = vmatpush1.bf16.msra.mxu0 %v7331
      %8861 = vmatprep.subr.bf16.mxu0 %v7348
      %8862 = vmatpush1.bf16.msra.mxu0 %v7347
      %8863 = vmatprep.subr.bf16.mxu0 %v7364
      %8864 = vmatpush1.bf16.msra.mxu0 %v7363
      %8865 = vmatprep.subr.bf16.mxu0 %v7380
      %8866 = vmatpush1.bf16.msra.mxu0 %v7379
      %8867 = vmatprep.subr.bf16.mxu0 %v7396
      %8868 = vmatpush1.bf16.msra.mxu0 %v7395
      %8869 = vmatprep.subr.bf16.mxu0 %v7412
      %8870 = vmatpush1.bf16.msra.mxu0 %v7411
      %8871 = vmatprep.subr.bf16.mxu0 %v7428
      %8872 = vmatpush1.bf16.msra.mxu0 %v7427
      %8873 = vmatprep.subr.bf16.mxu0 %v7444
      %8874 = vmatpush1.bf16.msra.mxu0 %v7443
      %8875 = vmatprep.subr.bf16.mxu0 %v7460
      %8876 = vmatpush1.bf16.msra.mxu0 %v7459
      %8877 = vmatprep.subr.bf16.mxu0 %v7476
      %8878 = vmatpush1.bf16.msra.mxu0 %v7475
      %8879 = vmatprep.subr.bf16.mxu0 %v7492
      %8880 = vmatpush1.bf16.msra.mxu0 %v7491
      %8881 = vmatprep.subr.bf16.mxu0 %v7508
      %8882 = vmatpush1.bf16.msra.mxu0 %v7507
      %8883 = vmatprep.mubr.bf16.mxu0 %v5118
      %8884 = vmatmul.mubr.bf16.gmra.mrb[0].mxu0 %v5117
      %v8885 = vpop.f32.mrb[0].mxu0
      %v8886 = vadd.f32 %v5696, %v8885
      %v8887 = vpop.f32.mrb[0].mxu0
      %v8888 = vadd.f32 %v5700, %v8887
      %v8889 = vpop.f32.mrb[0].mxu0
      %v8890 = vpop.f32.mrb[0].mxu0
      %8891 = vdwg.mxu0
      %8892 = vmatprep.subr.bf16.mxu0 %v7524
      %8893 = vmatpush1.bf16.msra.mxu0 %v7523
      %8894 = vmatprep.subr.bf16.mxu0 %v7540
      %8895 = vmatpush1.bf16.msra.mxu0 %v7539
      %8896 = vmatprep.subr.bf16.mxu0 %v7556
      %8897 = vmatpush1.bf16.msra.mxu0 %v7555
      %8898 = vmatprep.subr.bf16.mxu0 %v7572
      %8899 = vmatpush1.bf16.msra.mxu0 %v7571
      %8900 = vmatprep.subr.bf16.mxu0 %v7588
      %8901 = vmatpush1.bf16.msra.mxu0 %v7587
      %8902 = vmatprep.subr.bf16.mxu0 %v7604
      %8903 = vmatpush1.bf16.msra.mxu0 %v7603
      %8904 = vmatprep.subr.bf16.mxu0 %v7620
      %8905 = vmatpush1.bf16.msra.mxu0 %v7619
      %8906 = vmatprep.subr.bf16.mxu0 %v7636
      %8907 = vmatpush1.bf16.msra.mxu0 %v7635
      %8908 = vmatprep.subr.bf16.mxu0 %v7652
      %8909 = vmatpush1.bf16.msra.mxu0 %v7651
      %8910 = vmatprep.subr.bf16.mxu0 %v7668
      %8911 = vmatpush1.bf16.msra.mxu0 %v7667
      %8912 = vmatprep.subr.bf16.mxu0 %v7684
      %8913 = vmatpush1.bf16.msra.mxu0 %v7683
      %8914 = vmatprep.subr.bf16.mxu0 %v7700
      %8915 = vmatpush1.bf16.msra.mxu0 %v7699
      %8916 = vmatprep.subr.bf16.mxu0 %v7716
      %8917 = vmatpush1.bf16.msra.mxu0 %v7715
      %8918 = vmatprep.subr.bf16.mxu0 %v7732
      %8919 = vmatpush1.bf16.msra.mxu0 %v7731
      %8920 = vmatprep.subr.bf16.mxu0 %v7748
      %8921 = vmatpush1.bf16.msra.mxu0 %v7747
      %8922 = vmatprep.subr.bf16.mxu0 %v7764
      %8923 = vmatpush1.bf16.msra.mxu0 %v7763
      %8924 = vmatprep.mubr.bf16.mxu0 %v5120
      %8925 = vmatmul.mubr.bf16.gmra.mrb[0].mxu0 %v5119
      %v8926 = vpop.f32.mrb[0].mxu0
      %v8927 = vadd.f32 %v8886, %v8926
      %v8928 = vpop.f32.mrb[0].mxu0
      %v8929 = vadd.f32 %v8888, %v8928
      %v8930 = vpop.f32.mrb[0].mxu0
      %v8931 = vpop.f32.mrb[0].mxu0
      %8932 = vdwg.mxu0
      %v8933 = vmax.f32 %v8353, 0.0
      %v8934 = vmax.f32 %v8355, 0.0
      %v8935 = vmax.f32 %v8435, 0.0
      %v8936 = vmax.f32 %v8437, 0.0
      %v8937 = vmax.f32 %v8517, 0.0
      %v8938 = vmax.f32 %v8519, 0.0
      %v8939 = vmax.f32 %v8599, 0.0
      %v8940 = vmax.f32 %v8601, 0.0
      %v8941 = vmax.f32 %v8681, 0.0
      %v8942 = vmax.f32 %v8683, 0.0
      %v8943 = vmax.f32 %v8763, 0.0
      %v8944 = vmax.f32 %v8765, 0.0
      %v8945 = vmax.f32 %v8845, 0.0
      %v8946 = vmax.f32 %v8847, 0.0
      %v8947 = vmax.f32 %v8927, 0.0
      %v8948 = vmax.f32 %v8929, 0.0
      %v8949 = vpack.c.bf16 %v8933, %v8933
      %v8950 = vpack.c.bf16 %v8934, %v8934
      %v8951 = vpack.c.bf16 %v8935, %v8935
      %v8952 = vpack.c.bf16 %v8936, %v8936
      %v8953 = vpack.c.bf16 %v8937, %v8937
      %v8954 = vpack.c.bf16 %v8938, %v8938
      %v8955 = vpack.c.bf16 %v8939, %v8939
      %v8956 = vpack.c.bf16 %v8940, %v8940
      %v8957 = vpack.c.bf16 %v8941, %v8941
      %v8958 = vpack.c.bf16 %v8942, %v8942
      %v8959 = vpack.c.bf16 %v8943, %v8943
      %v8960 = vpack.c.bf16 %v8944, %v8944
      %v8961 = vpack.c.bf16 %v8945, %v8945
      %v8962 = vpack.c.bf16 %v8946, %v8946
      %v8963 = vpack.c.bf16 %v8947, %v8947
      %v8964 = vpack.c.bf16 %v8948, %v8948
      %v8981 = vunpack.c.l.b16 %v8949
      %v8982 = vunpack.c.l.b16 %v8950
      %v8983 = vunpack.c.l.b16 %v8951
      %v8984 = vunpack.c.l.b16 %v8952
      %v8985 = vunpack.c.l.b16 %v8953
      %v8986 = vunpack.c.l.b16 %v8954
      %v8987 = vunpack.c.l.b16 %v8955
      %v8988 = vunpack.c.l.b16 %v8956
      %v8989 = vunpack.c.l.b16 %v8957
      %v8990 = vunpack.c.l.b16 %v8958
      %v8991 = vunpack.c.l.b16 %v8959
      %v8992 = vunpack.c.l.b16 %v8960
      %v8993 = vunpack.c.l.b16 %v8961
      %v8994 = vunpack.c.l.b16 %v8962
      %v8995 = vunpack.c.l.b16 %v8963
      %v8996 = vunpack.c.l.b16 %v8964
      %v8997 = vpack.c.b16 %v8982, %v8981
      %v8998 = vpack.c.b16 %v8984, %v8983
      %v8999 = vpack.c.b16 %v8986, %v8985
      %v9000 = vpack.c.b16 %v8988, %v8987
      %v9001 = vpack.c.b16 %v8990, %v8989
      %v9002 = vpack.c.b16 %v8992, %v8991
      %v9003 = vpack.c.b16 %v8994, %v8993
      %v9004 = vpack.c.b16 %v8996, %v8995
      %9013 = vst [vmem:[#allocation2] sm:$0xff] %v8997
      %9014 = vst [vmem:[#allocation2 + $0x8] sm:$0xff] %v8998
      %9015 = vst [vmem:[#allocation2 + $0x10] sm:$0xff] %v8999
      %9016 = vst [vmem:[#allocation2 + $0x18] sm:$0xff] %v9000
      %9017 = vst [vmem:[#allocation2 + $0x20] sm:$0xff] %v9001
      %9018 = vst [vmem:[#allocation2 + $0x28] sm:$0xff] %v9002
      %9019 = vst [vmem:[#allocation2 + $0x30] sm:$0xff] %v9003
      %9020 = vst [vmem:[#allocation2 + $0x38] sm:$0xff] %v9004
    $region77: #{tpu_custom_call.1} parent=1 // pred_fallthru
      _
    %v9021 = vld [vmem:[#allocation2] sm:$0xff]
    %v9022 = vld [vmem:[#allocation2 + $0x8] sm:$0xff]
    %v9023 = vld [vmem:[#allocation2 + $0x10] sm:$0xff]
    %v9024 = vld [vmem:[#allocation2 + $0x18] sm:$0xff]
    %v9025 = vld [vmem:[#allocation2 + $0x20] sm:$0xff]
    %v9026 = vld [vmem:[#allocation2 + $0x28] sm:$0xff]
    %v9027 = vld [vmem:[#allocation2 + $0x30] sm:$0xff]
    %v9028 = vld [vmem:[#allocation2 + $0x38] sm:$0xff]
    %v9029 = vld [vmem:[#allocation15] sm:$0xf]
    %v9030 = vld [vmem:[#allocation15 + $0x4] sm:$0xf]
    %v9031 = vld [vmem:[#allocation15 + $0x8] sm:$0xf]
    %v9032 = vld [vmem:[#allocation15 + $0xc] sm:$0xf]
    %v9033 = vld [vmem:[#allocation15 + $0x10] sm:$0xf]
    %v9034 = vld [vmem:[#allocation15 + $0x14] sm:$0xf]
    %v9035 = vld [vmem:[#allocation15 + $0x18] sm:$0xf]
    %v9036 = vld [vmem:[#allocation15 + $0x1c] sm:$0xf]
    %v9037 = vld [vmem:[#allocation15 + $0x20] sm:$0xf]
    %v9038 = vld [vmem:[#allocation15 + $0x24] sm:$0xf]
    %v9039 = vld [vmem:[#allocation15 + $0x28] sm:$0xf]
    %v9040 = vld [vmem:[#allocation15 + $0x2c] sm:$0xf]
    %v9041 = vld [vmem:[#allocation15 + $0x30] sm:$0xf]
    %v9042 = vld [vmem:[#allocation15 + $0x34] sm:$0xf]
    %v9043 = vld [vmem:[#allocation15 + $0x38] sm:$0xf]
    %v9044 = vld [vmem:[#allocation15 + $0x3c] sm:$0xf]
    %v9045 = vld [vmem:[#allocation15 + $0x40] sm:$0xf]
    %v9046 = vld [vmem:[#allocation15 + $0x44] sm:$0xf]
    %v9047 = vld [vmem:[#allocation15 + $0x48] sm:$0xf]
    %v9048 = vld [vmem:[#allocation15 + $0x4c] sm:$0xf]
    %v9049 = vld [vmem:[#allocation15 + $0x50] sm:$0xf]
    %v9050 = vld [vmem:[#allocation15 + $0x54] sm:$0xf]
    %v9051 = vld [vmem:[#allocation15 + $0x58] sm:$0xf]
    %v9052 = vld [vmem:[#allocation15 + $0x5c] sm:$0xf]
    %v9053 = vld [vmem:[#allocation15 + $0x60] sm:$0xf]
    %v9054 = vld [vmem:[#allocation15 + $0x64] sm:$0xf]
    %v9055 = vld [vmem:[#allocation15 + $0x68] sm:$0xf]
    %v9056 = vld [vmem:[#allocation15 + $0x6c] sm:$0xf]
    %v9057 = vld [vmem:[#allocation15 + $0x70] sm:$0xf]
    %v9058 = vld [vmem:[#allocation15 + $0x74] sm:$0xf]
    %v9059 = vld [vmem:[#allocation15 + $0x78] sm:$0xf]
    %v9060 = vld [vmem:[#allocation15 + $0x7c] sm:$0xf]
    %v9061 = vld [vmem:[#allocation15 + $0x80] sm:$0xf]
    %v9062 = vld [vmem:[#allocation15 + $0x84] sm:$0xf]
    %v9063 = vld [vmem:[#allocation15 + $0x88] sm:$0xf]
    %v9064 = vld [vmem:[#allocation15 + $0x8c] sm:$0xf]
    %v9065 = vld [vmem:[#allocation15 + $0x90] sm:$0xf]
    %v9066 = vld [vmem:[#allocation15 + $0x94] sm:$0xf]
    %v9067 = vld [vmem:[#allocation15 + $0x98] sm:$0xf]
    %v9068 = vld [vmem:[#allocation15 + $0x9c] sm:$0xf]
    %v9069 = vld [vmem:[#allocation15 + $0xa0] sm:$0xf]
    %v9070 = vld [vmem:[#allocation15 + $0xa4] sm:$0xf]
    %v9071 = vld [vmem:[#allocation15 + $0xa8] sm:$0xf]
    %v9072 = vld [vmem:[#allocation15 + $0xac] sm:$0xf]
    %v9073 = vld [vmem:[#allocation15 + $0xb0] sm:$0xf]
    %v9074 = vld [vmem:[#allocation15 + $0xb4] sm:$0xf]
    %v9075 = vld [vmem:[#allocation15 + $0xb8] sm:$0xf]
    %v9076 = vld [vmem:[#allocation15 + $0xbc] sm:$0xf]
    %v9077 = vld [vmem:[#allocation15 + $0xc0] sm:$0xf]
    %v9078 = vld [vmem:[#allocation15 + $0xc4] sm:$0xf]
    %v9079 = vld [vmem:[#allocation15 + $0xc8] sm:$0xf]
    %v9080 = vld [vmem:[#allocation15 + $0xcc] sm:$0xf]
    %v9081 = vld [vmem:[#allocation15 + $0xd0] sm:$0xf]
    %v9082 = vld [vmem:[#allocation15 + $0xd4] sm:$0xf]
    %v9083 = vld [vmem:[#allocation15 + $0xd8] sm:$0xf]
    %v9084 = vld [vmem:[#allocation15 + $0xdc] sm:$0xf]
    %v9085 = vld [vmem:[#allocation15 + $0xe0] sm:$0xf]
    %v9086 = vld [vmem:[#allocation15 + $0xe4] sm:$0xf]
    %v9087 = vld [vmem:[#allocation15 + $0xe8] sm:$0xf]
    %v9088 = vld [vmem:[#allocation15 + $0xec] sm:$0xf]
    %v9089 = vld [vmem:[#allocation15 + $0xf0] sm:$0xf]
    %v9090 = vld [vmem:[#allocation15 + $0xf4] sm:$0xf]
    %v9091 = vld [vmem:[#allocation15 + $0xf8] sm:$0xf]
    %v9092 = vld [vmem:[#allocation15 + $0xfc] sm:$0xf]
    %v9093 = vld [vmem:[#allocation15 + $0x100] sm:$0xf]
    %v9094 = vld [vmem:[#allocation15 + $0x104] sm:$0xf]
    %v9095 = vld [vmem:[#allocation15 + $0x108] sm:$0xf]
    %v9096 = vld [vmem:[#allocation15 + $0x10c] sm:$0xf]
    %v9097 = vld [vmem:[#allocation15 + $0x110] sm:$0xf]
    %v9098 = vld [vmem:[#allocation15 + $0x114] sm:$0xf]
    %v9099 = vld [vmem:[#allocation15 + $0x118] sm:$0xf]
    %v9100 = vld [vmem:[#allocation15 + $0x11c] sm:$0xf]
    %v9101 = vld [vmem:[#allocation15 + $0x120] sm:$0xf]
    %v9102 = vld [vmem:[#allocation15 + $0x124] sm:$0xf]
    %v9103 = vld [vmem:[#allocation15 + $0x128] sm:$0xf]
    %v9104 = vld [vmem:[#allocation15 + $0x12c] sm:$0xf]
    %v9105 = vld [vmem:[#allocation15 + $0x130] sm:$0xf]
    %v9106 = vld [vmem:[#allocation15 + $0x134] sm:$0xf]
    %v9107 = vld [vmem:[#allocation15 + $0x138] sm:$0xf]
    %v9108 = vld [vmem:[#allocation15 + $0x13c] sm:$0xf]
    %v9109 = vld [vmem:[#allocation15 + $0x140] sm:$0xf]
    %v9110 = vld [vmem:[#allocation15 + $0x144] sm:$0xf]
    %v9111 = vld [vmem:[#allocation15 + $0x148] sm:$0xf]
    %v9112 = vld [vmem:[#allocation15 + $0x14c] sm:$0xf]
    %v9113 = vld [vmem:[#allocation15 + $0x150] sm:$0xf]
    %v9114 = vld [vmem:[#allocation15 + $0x154] sm:$0xf]
    %v9115 = vld [vmem:[#allocation15 + $0x158] sm:$0xf]
    %v9116 = vld [vmem:[#allocation15 + $0x15c] sm:$0xf]
    %v9117 = vld [vmem:[#allocation15 + $0x160] sm:$0xf]
    %v9118 = vld [vmem:[#allocation15 + $0x164] sm:$0xf]
    %v9119 = vld [vmem:[#allocation15 + $0x168] sm:$0xf]
    %v9120 = vld [vmem:[#allocation15 + $0x16c] sm:$0xf]
    %v9121 = vld [vmem:[#allocation15 + $0x170] sm:$0xf]
    %v9122 = vld [vmem:[#allocation15 + $0x174] sm:$0xf]
    %v9123 = vld [vmem:[#allocation15 + $0x178] sm:$0xf]
    %v9124 = vld [vmem:[#allocation15 + $0x17c] sm:$0xf]
    %v9125 = vld [vmem:[#allocation15 + $0x180] sm:$0xf]
    %v9126 = vld [vmem:[#allocation15 + $0x184] sm:$0xf]
    %v9127 = vld [vmem:[#allocation15 + $0x188] sm:$0xf]
    %v9128 = vld [vmem:[#allocation15 + $0x18c] sm:$0xf]
    %v9129 = vld [vmem:[#allocation15 + $0x190] sm:$0xf]
    %v9130 = vld [vmem:[#allocation15 + $0x194] sm:$0xf]
    %v9131 = vld [vmem:[#allocation15 + $0x198] sm:$0xf]
    %v9132 = vld [vmem:[#allocation15 + $0x19c] sm:$0xf]
    %v9133 = vld [vmem:[#allocation15 + $0x1a0] sm:$0xf]
    %v9134 = vld [vmem:[#allocation15 + $0x1a4] sm:$0xf]
    %v9135 = vld [vmem:[#allocation15 + $0x1a8] sm:$0xf]
    %v9136 = vld [vmem:[#allocation15 + $0x1ac] sm:$0xf]
    %v9137 = vld [vmem:[#allocation15 + $0x1b0] sm:$0xf]
    %v9138 = vld [vmem:[#allocation15 + $0x1b4] sm:$0xf]
    %v9139 = vld [vmem:[#allocation15 + $0x1b8] sm:$0xf]
    %v9140 = vld [vmem:[#allocation15 + $0x1bc] sm:$0xf]
    %v9141 = vld [vmem:[#allocation15 + $0x1c0] sm:$0xf]
    %v9142 = vld [vmem:[#allocation15 + $0x1c4] sm:$0xf]
    %v9143 = vld [vmem:[#allocation15 + $0x1c8] sm:$0xf]
    %v9144 = vld [vmem:[#allocation15 + $0x1cc] sm:$0xf]
    %v9145 = vld [vmem:[#allocation15 + $0x1d0] sm:$0xf]
    %v9146 = vld [vmem:[#allocation15 + $0x1d4] sm:$0xf]
    %v9147 = vld [vmem:[#allocation15 + $0x1d8] sm:$0xf]
    %v9148 = vld [vmem:[#allocation15 + $0x1dc] sm:$0xf]
    %v9149 = vld [vmem:[#allocation15 + $0x1e0] sm:$0xf]
    %v9150 = vld [vmem:[#allocation15 + $0x1e4] sm:$0xf]
    %v9151 = vld [vmem:[#allocation15 + $0x1e8] sm:$0xf]
    %v9152 = vld [vmem:[#allocation15 + $0x1ec] sm:$0xf]
    %v9153 = vld [vmem:[#allocation15 + $0x1f0] sm:$0xf]
    %v9154 = vld [vmem:[#allocation15 + $0x1f4] sm:$0xf]
    %v9155 = vld [vmem:[#allocation15 + $0x1f8] sm:$0xf]
    %v9156 = vld [vmem:[#allocation15 + $0x1fc] sm:$0xf]
    %v9157 = vld [vmem:[#allocation15 + $0x200] sm:$0xf]
    %v9158 = vld [vmem:[#allocation15 + $0x204] sm:$0xf]
    %v9159 = vld [vmem:[#allocation15 + $0x208] sm:$0xf]
    %v9160 = vld [vmem:[#allocation15 + $0x20c] sm:$0xf]
    %v9161 = vld [vmem:[#allocation15 + $0x210] sm:$0xf]
    %v9162 = vld [vmem:[#allocation15 + $0x214] sm:$0xf]
    %v9163 = vld [vmem:[#allocation15 + $0x218] sm:$0xf]
    %v9164 = vld [vmem:[#allocation15 + $0x21c] sm:$0xf]
    %v9165 = vld [vmem:[#allocation15 + $0x220] sm:$0xf]
    %v9166 = vld [vmem:[#allocation15 + $0x224] sm:$0xf]
    %v9167 = vld [vmem:[#allocation15 + $0x228] sm:$0xf]
    %v9168 = vld [vmem:[#allocation15 + $0x22c] sm:$0xf]
    %v9169 = vld [vmem:[#allocation15 + $0x230] sm:$0xf]
    %v9170 = vld [vmem:[#allocation15 + $0x234] sm:$0xf]
    %v9171 = vld [vmem:[#allocation15 + $0x238] sm:$0xf]
    %v9172 = vld [vmem:[#allocation15 + $0x23c] sm:$0xf]
    %v9173 = vld [vmem:[#allocation15 + $0x240] sm:$0xf]
    %v9174 = vld [vmem:[#allocation15 + $0x244] sm:$0xf]
    %v9175 = vld [vmem:[#allocation15 + $0x248] sm:$0xf]
    %v9176 = vld [vmem:[#allocation15 + $0x24c] sm:$0xf]
    %v9177 = vld [vmem:[#allocation15 + $0x250] sm:$0xf]
    %v9178 = vld [vmem:[#allocation15 + $0x254] sm:$0xf]
    %v9179 = vld [vmem:[#allocation15 + $0x258] sm:$0xf]
    %v9180 = vld [vmem:[#allocation15 + $0x25c] sm:$0xf]
    %v9181 = vld [vmem:[#allocation15 + $0x260] sm:$0xf]
    %v9182 = vld [vmem:[#allocation15 + $0x264] sm:$0xf]
    %v9183 = vld [vmem:[#allocation15 + $0x268] sm:$0xf]
    %v9184 = vld [vmem:[#allocation15 + $0x26c] sm:$0xf]
    %v9185 = vld [vmem:[#allocation15 + $0x270] sm:$0xf]
    %v9186 = vld [vmem:[#allocation15 + $0x274] sm:$0xf]
    %v9187 = vld [vmem:[#allocation15 + $0x278] sm:$0xf]
    %v9188 = vld [vmem:[#allocation15 + $0x27c] sm:$0xf]
    %v9189 = vld [vmem:[#allocation15 + $0x280] sm:$0xf]
    %v9190 = vld [vmem:[#allocation15 + $0x284] sm:$0xf]
    %v9191 = vld [vmem:[#allocation15 + $0x288] sm:$0xf]
    %v9192 = vld [vmem:[#allocation15 + $0x28c] sm:$0xf]
    %v9193 = vld [vmem:[#allocation15 + $0x290] sm:$0xf]
    %v9194 = vld [vmem:[#allocation15 + $0x294] sm:$0xf]
    %v9195 = vld [vmem:[#allocation15 + $0x298] sm:$0xf]
    %v9196 = vld [vmem:[#allocation15 + $0x29c] sm:$0xf]
    %v9197 = vld [vmem:[#allocation15 + $0x2a0] sm:$0xf]
    %v9198 = vld [vmem:[#allocation15 + $0x2a4] sm:$0xf]
    %v9199 = vld [vmem:[#allocation15 + $0x2a8] sm:$0xf]
    %v9200 = vld [vmem:[#allocation15 + $0x2ac] sm:$0xf]
    %v9201 = vld [vmem:[#allocation15 + $0x2b0] sm:$0xf]
    %v9202 = vld [vmem:[#allocation15 + $0x2b4] sm:$0xf]
    %v9203 = vld [vmem:[#allocation15 + $0x2b8] sm:$0xf]
    %v9204 = vld [vmem:[#allocation15 + $0x2bc] sm:$0xf]
    %v9205 = vld [vmem:[#allocation15 + $0x2c0] sm:$0xf]
    %v9206 = vld [vmem:[#allocation15 + $0x2c4] sm:$0xf]
    %v9207 = vld [vmem:[#allocation15 + $0x2c8] sm:$0xf]
    %v9208 = vld [vmem:[#allocation15 + $0x2cc] sm:$0xf]
    %v9209 = vld [vmem:[#allocation15 + $0x2d0] sm:$0xf]
    %v9210 = vld [vmem:[#allocation15 + $0x2d4] sm:$0xf]
    %v9211 = vld [vmem:[#allocation15 + $0x2d8] sm:$0xf]
    %v9212 = vld [vmem:[#allocation15 + $0x2dc] sm:$0xf]
    %v9213 = vld [vmem:[#allocation15 + $0x2e0] sm:$0xf]
    %v9214 = vld [vmem:[#allocation15 + $0x2e4] sm:$0xf]
    %v9215 = vld [vmem:[#allocation15 + $0x2e8] sm:$0xf]
    %v9216 = vld [vmem:[#allocation15 + $0x2ec] sm:$0xf]
    %v9217 = vld [vmem:[#allocation15 + $0x2f0] sm:$0xf]
    %v9218 = vld [vmem:[#allocation15 + $0x2f4] sm:$0xf]
    %v9219 = vld [vmem:[#allocation15 + $0x2f8] sm:$0xf]
    %v9220 = vld [vmem:[#allocation15 + $0x2fc] sm:$0xf]
    %v9221 = vld [vmem:[#allocation15 + $0x300] sm:$0xf]
    %v9222 = vld [vmem:[#allocation15 + $0x304] sm:$0xf]
    %v9223 = vld [vmem:[#allocation15 + $0x308] sm:$0xf]
    %v9224 = vld [vmem:[#allocation15 + $0x30c] sm:$0xf]
    %v9225 = vld [vmem:[#allocation15 + $0x310] sm:$0xf]
    %v9226 = vld [vmem:[#allocation15 + $0x314] sm:$0xf]
    %v9227 = vld [vmem:[#allocation15 + $0x318] sm:$0xf]
    %v9228 = vld [vmem:[#allocation15 + $0x31c] sm:$0xf]
    %v9229 = vld [vmem:[#allocation15 + $0x320] sm:$0xf]
    %v9230 = vld [vmem:[#allocation15 + $0x324] sm:$0xf]
    %v9231 = vld [vmem:[#allocation15 + $0x328] sm:$0xf]
    %v9232 = vld [vmem:[#allocation15 + $0x32c] sm:$0xf]
    %v9233 = vld [vmem:[#allocation15 + $0x330] sm:$0xf]
    %v9234 = vld [vmem:[#allocation15 + $0x334] sm:$0xf]
    %v9235 = vld [vmem:[#allocation15 + $0x338] sm:$0xf]
    %v9236 = vld [vmem:[#allocation15 + $0x33c] sm:$0xf]
    %v9237 = vld [vmem:[#allocation15 + $0x340] sm:$0xf]
    %v9238 = vld [vmem:[#allocation15 + $0x344] sm:$0xf]
    %v9239 = vld [vmem:[#allocation15 + $0x348] sm:$0xf]
    %v9240 = vld [vmem:[#allocation15 + $0x34c] sm:$0xf]
    %v9241 = vld [vmem:[#allocation15 + $0x350] sm:$0xf]
    %v9242 = vld [vmem:[#allocation15 + $0x354] sm:$0xf]
    %v9243 = vld [vmem:[#allocation15 + $0x358] sm:$0xf]
    %v9244 = vld [vmem:[#allocation15 + $0x35c] sm:$0xf]
    %v9245 = vld [vmem:[#allocation15 + $0x360] sm:$0xf]
    %v9246 = vld [vmem:[#allocation15 + $0x364] sm:$0xf]
    %v9247 = vld [vmem:[#allocation15 + $0x368] sm:$0xf]
    %v9248 = vld [vmem:[#allocation15 + $0x36c] sm:$0xf]
    %v9249 = vld [vmem:[#allocation15 + $0x370] sm:$0xf]
    %v9250 = vld [vmem:[#allocation15 + $0x374] sm:$0xf]
    %v9251 = vld [vmem:[#allocation15 + $0x378] sm:$0xf]
    %v9252 = vld [vmem:[#allocation15 + $0x37c] sm:$0xf]
    %v9253 = vld [vmem:[#allocation15 + $0x380] sm:$0xf]
    %v9254 = vld [vmem:[#allocation15 + $0x384] sm:$0xf]
    %v9255 = vld [vmem:[#allocation15 + $0x388] sm:$0xf]
    %v9256 = vld [vmem:[#allocation15 + $0x38c] sm:$0xf]
    %v9257 = vld [vmem:[#allocation15 + $0x390] sm:$0xf]
    %v9258 = vld [vmem:[#allocation15 + $0x394] sm:$0xf]
    %v9259 = vld [vmem:[#allocation15 + $0x398] sm:$0xf]
    %v9260 = vld [vmem:[#allocation15 + $0x39c] sm:$0xf]
    %v9261 = vld [vmem:[#allocation15 + $0x3a0] sm:$0xf]
    %v9262 = vld [vmem:[#allocation15 + $0x3a4] sm:$0xf]
    %v9263 = vld [vmem:[#allocation15 + $0x3a8] sm:$0xf]
    %v9264 = vld [vmem:[#allocation15 + $0x3ac] sm:$0xf]
    %v9265 = vld [vmem:[#allocation15 + $0x3b0] sm:$0xf]
    %v9266 = vld [vmem:[#allocation15 + $0x3b4] sm:$0xf]
    %v9267 = vld [vmem:[#allocation15 + $0x3b8] sm:$0xf]
    %v9268 = vld [vmem:[#allocation15 + $0x3bc] sm:$0xf]
    %v9269 = vld [vmem:[#allocation15 + $0x3c0] sm:$0xf]
    %v9270 = vld [vmem:[#allocation15 + $0x3c4] sm:$0xf]
    %v9271 = vld [vmem:[#allocation15 + $0x3c8] sm:$0xf]
    %v9272 = vld [vmem:[#allocation15 + $0x3cc] sm:$0xf]
    %v9273 = vld [vmem:[#allocation15 + $0x3d0] sm:$0xf]
    %v9274 = vld [vmem:[#allocation15 + $0x3d4] sm:$0xf]
    %v9275 = vld [vmem:[#allocation15 + $0x3d8] sm:$0xf]
    %v9276 = vld [vmem:[#allocation15 + $0x3dc] sm:$0xf]
    %v9277 = vld [vmem:[#allocation15 + $0x3e0] sm:$0xf]
    %v9278 = vld [vmem:[#allocation15 + $0x3e4] sm:$0xf]
    %v9279 = vld [vmem:[#allocation15 + $0x3e8] sm:$0xf]
    %v9280 = vld [vmem:[#allocation15 + $0x3ec] sm:$0xf]
    %v9281 = vld [vmem:[#allocation15 + $0x3f0] sm:$0xf]
    %v9282 = vld [vmem:[#allocation15 + $0x3f4] sm:$0xf]
    %v9283 = vld [vmem:[#allocation15 + $0x3f8] sm:$0xf]
    %v9284 = vld [vmem:[#allocation15 + $0x3fc] sm:$0xf]
    %v9285 = vld [vmem:[#allocation17] sm:$0x1]
    %v9287 = vlaneseq
    %v9288 = vshrl.u32 %v9287, 7
    %v9289 = vsub.s32 0, %v9288
    %v9290 = vrot.slane %v9285, %v9289
    %v9300 = vunpack.c.l.b16 %v9021
    %v9301 = vunpack.c.h.b16 %v9021
    %v9302 = vunpack.c.l.b16 %v9022
    %v9303 = vunpack.c.h.b16 %v9022
    %v9304 = vunpack.c.l.b16 %v9023
    %v9305 = vunpack.c.h.b16 %v9023
    %v9306 = vunpack.c.l.b16 %v9024
    %v9307 = vunpack.c.h.b16 %v9024
    %v9308 = vunpack.c.l.b16 %v9025
    %v9309 = vunpack.c.h.b16 %v9025
    %v9310 = vunpack.c.l.b16 %v9026
    %v9311 = vunpack.c.h.b16 %v9026
    %v9312 = vunpack.c.l.b16 %v9027
    %v9313 = vunpack.c.h.b16 %v9027
    %v9314 = vunpack.c.l.b16 %v9028
    %v9315 = vunpack.c.h.b16 %v9028
    %v9316 = vpack.c.b16 %v9300, %v9300
    %v9317 = vpack.c.b16 %v9301, %v9301
    %v9318 = vpack.c.b16 %v9302, %v9302
    %v9319 = vpack.c.b16 %v9303, %v9303
    %v9320 = vpack.c.b16 %v9304, %v9304
    %v9321 = vpack.c.b16 %v9305, %v9305
    %v9322 = vpack.c.b16 %v9306, %v9306
    %v9323 = vpack.c.b16 %v9307, %v9307
    %v9324 = vpack.c.b16 %v9308, %v9308
    %v9325 = vpack.c.b16 %v9309, %v9309
    %v9326 = vpack.c.b16 %v9310, %v9310
    %v9327 = vpack.c.b16 %v9311, %v9311
    %v9328 = vpack.c.b16 %v9312, %v9312
    %v9329 = vpack.c.b16 %v9313, %v9313
    %v9330 = vpack.c.b16 %v9314, %v9314
    %v9331 = vpack.c.b16 %v9315, %v9315
    %v9604 = vunpack.c.l.b16 %v9029
    %v9605 = vunpack.c.l.b16 %v9030
    %v9606 = vunpack.c.l.b16 %v9031
    %v9607 = vunpack.c.l.b16 %v9032
    %v9608 = vunpack.c.l.b16 %v9033
    %v9609 = vunpack.c.l.b16 %v9034
    %v9610 = vunpack.c.l.b16 %v9035
    %v9611 = vunpack.c.l.b16 %v9036
    %v9612 = vunpack.c.l.b16 %v9037
    %v9613 = vunpack.c.l.b16 %v9038
    %v9614 = vunpack.c.l.b16 %v9039
    %v9615 = vunpack.c.l.b16 %v9040
    %v9616 = vunpack.c.l.b16 %v9041
    %v9617 = vunpack.c.l.b16 %v9042
    %v9618 = vunpack.c.l.b16 %v9043
    %v9619 = vunpack.c.l.b16 %v9044
    %v9620 = vunpack.c.l.b16 %v9045
    %v9621 = vunpack.c.l.b16 %v9046
    %v9622 = vunpack.c.l.b16 %v9047
    %v9623 = vunpack.c.l.b16 %v9048
    %v9624 = vunpack.c.l.b16 %v9049
    %v9625 = vunpack.c.l.b16 %v9050
    %v9626 = vunpack.c.l.b16 %v9051
    %v9627 = vunpack.c.l.b16 %v9052
    %v9628 = vunpack.c.l.b16 %v9053
    %v9629 = vunpack.c.l.b16 %v9054
    %v9630 = vunpack.c.l.b16 %v9055
    %v9631 = vunpack.c.l.b16 %v9056
    %v9632 = vunpack.c.l.b16 %v9057
    %v9633 = vunpack.c.l.b16 %v9058
    %v9634 = vunpack.c.l.b16 %v9059
    %v9635 = vunpack.c.l.b16 %v9060
    %v9636 = vunpack.c.l.b16 %v9061
    %v9637 = vunpack.c.l.b16 %v9062
    %v9638 = vunpack.c.l.b16 %v9063
    %v9639 = vunpack.c.l.b16 %v9064
    %v9640 = vunpack.c.l.b16 %v9065
    %v9641 = vunpack.c.l.b16 %v9066
    %v9642 = vunpack.c.l.b16 %v9067
    %v9643 = vunpack.c.l.b16 %v9068
    %v9644 = vunpack.c.l.b16 %v9069
    %v9645 = vunpack.c.l.b16 %v9070
    %v9646 = vunpack.c.l.b16 %v9071
    %v9647 = vunpack.c.l.b16 %v9072
    %v9648 = vunpack.c.l.b16 %v9073
    %v9649 = vunpack.c.l.b16 %v9074
    %v9650 = vunpack.c.l.b16 %v9075
    %v9651 = vunpack.c.l.b16 %v9076
    %v9652 = vunpack.c.l.b16 %v9077
    %v9653 = vunpack.c.l.b16 %v9078
    %v9654 = vunpack.c.l.b16 %v9079
    %v9655 = vunpack.c.l.b16 %v9080
    %v9656 = vunpack.c.l.b16 %v9081
    %v9657 = vunpack.c.l.b16 %v9082
    %v9658 = vunpack.c.l.b16 %v9083
    %v9659 = vunpack.c.l.b16 %v9084
    %v9660 = vunpack.c.l.b16 %v9085
    %v9661 = vunpack.c.l.b16 %v9086
    %v9662 = vunpack.c.l.b16 %v9087
    %v9663 = vunpack.c.l.b16 %v9088
    %v9664 = vunpack.c.l.b16 %v9089
    %v9665 = vunpack.c.l.b16 %v9090
    %v9666 = vunpack.c.l.b16 %v9091
    %v9667 = vunpack.c.l.b16 %v9092
    %v9668 = vunpack.c.l.b16 %v9093
    %v9669 = vunpack.c.l.b16 %v9094
    %v9670 = vunpack.c.l.b16 %v9095
    %v9671 = vunpack.c.l.b16 %v9096
    %v9672 = vunpack.c.l.b16 %v9097
    %v9673 = vunpack.c.l.b16 %v9098
    %v9674 = vunpack.c.l.b16 %v9099
    %v9675 = vunpack.c.l.b16 %v9100
    %v9676 = vunpack.c.l.b16 %v9101
    %v9677 = vunpack.c.l.b16 %v9102
    %v9678 = vunpack.c.l.b16 %v9103
    %v9679 = vunpack.c.l.b16 %v9104
    %v9680 = vunpack.c.l.b16 %v9105
    %v9681 = vunpack.c.l.b16 %v9106
    %v9682 = vunpack.c.l.b16 %v9107
    %v9683 = vunpack.c.l.b16 %v9108
    %v9684 = vunpack.c.l.b16 %v9109
    %v9685 = vunpack.c.l.b16 %v9110
    %v9686 = vunpack.c.l.b16 %v9111
    %v9687 = vunpack.c.l.b16 %v9112
    %v9688 = vunpack.c.l.b16 %v9113
    %v9689 = vunpack.c.l.b16 %v9114
    %v9690 = vunpack.c.l.b16 %v9115
    %v9691 = vunpack.c.l.b16 %v9116
    %v9692 = vunpack.c.l.b16 %v9117
    %v9693 = vunpack.c.l.b16 %v9118
    %v9694 = vunpack.c.l.b16 %v9119
    %v9695 = vunpack.c.l.b16 %v9120
    %v9696 = vunpack.c.l.b16 %v9121
    %v9697 = vunpack.c.l.b16 %v9122
    %v9698 = vunpack.c.l.b16 %v9123
    %v9699 = vunpack.c.l.b16 %v9124
    %v9700 = vunpack.c.l.b16 %v9125
    %v9701 = vunpack.c.l.b16 %v9126
    %v9702 = vunpack.c.l.b16 %v9127
    %v9703 = vunpack.c.l.b16 %v9128
    %v9704 = vunpack.c.l.b16 %v9129
    %v9705 = vunpack.c.l.b16 %v9130
    %v9706 = vunpack.c.l.b16 %v9131
    %v9707 = vunpack.c.l.b16 %v9132
    %v9708 = vunpack.c.l.b16 %v9133
    %v9709 = vunpack.c.l.b16 %v9134
    %v9710 = vunpack.c.l.b16 %v9135
    %v9711 = vunpack.c.l.b16 %v9136
    %v9712 = vunpack.c.l.b16 %v9137
    %v9713 = vunpack.c.l.b16 %v9138
    %v9714 = vunpack.c.l.b16 %v9139
    %v9715 = vunpack.c.l.b16 %v9140
    %v9716 = vunpack.c.l.b16 %v9141
    %v9717 = vunpack.c.l.b16 %v9142
    %v9718 = vunpack.c.l.b16 %v9143
    %v9719 = vunpack.c.l.b16 %v9144
    %v9720 = vunpack.c.l.b16 %v9145
    %v9721 = vunpack.c.l.b16 %v9146
    %v9722 = vunpack.c.l.b16 %v9147
    %v9723 = vunpack.c.l.b16 %v9148
    %v9724 = vunpack.c.l.b16 %v9149
    %v9725 = vunpack.c.l.b16 %v9150
    %v9726 = vunpack.c.l.b16 %v9151
    %v9727 = vunpack.c.l.b16 %v9152
    %v9728 = vunpack.c.l.b16 %v9153
    %v9729 = vunpack.c.l.b16 %v9154
    %v9730 = vunpack.c.l.b16 %v9155
    %v9731 = vunpack.c.l.b16 %v9156
    %v9732 = vunpack.c.l.b16 %v9157
    %v9733 = vunpack.c.l.b16 %v9158
    %v9734 = vunpack.c.l.b16 %v9159
    %v9735 = vunpack.c.l.b16 %v9160
    %v9736 = vunpack.c.l.b16 %v9161
    %v9737 = vunpack.c.l.b16 %v9162
    %v9738 = vunpack.c.l.b16 %v9163
    %v9739 = vunpack.c.l.b16 %v9164
    %v9740 = vunpack.c.l.b16 %v9165
    %v9741 = vunpack.c.l.b16 %v9166
    %v9742 = vunpack.c.l.b16 %v9167
    %v9743 = vunpack.c.l.b16 %v9168
    %v9744 = vunpack.c.l.b16 %v9169
    %v9745 = vunpack.c.l.b16 %v9170
    %v9746 = vunpack.c.l.b16 %v9171
    %v9747 = vunpack.c.l.b16 %v9172
    %v9748 = vunpack.c.l.b16 %v9173
    %v9749 = vunpack.c.l.b16 %v9174
    %v9750 = vunpack.c.l.b16 %v9175
    %v9751 = vunpack.c.l.b16 %v9176
    %v9752 = vunpack.c.l.b16 %v9177
    %v9753 = vunpack.c.l.b16 %v9178
    %v9754 = vunpack.c.l.b16 %v9179
    %v9755 = vunpack.c.l.b16 %v9180
    %v9756 = vunpack.c.l.b16 %v9181
    %v9757 = vunpack.c.l.b16 %v9182
    %v9758 = vunpack.c.l.b16 %v9183
    %v9759 = vunpack.c.l.b16 %v9184
    %v9760 = vunpack.c.l.b16 %v9185
    %v9761 = vunpack.c.l.b16 %v9186
    %v9762 = vunpack.c.l.b16 %v9187
    %v9763 = vunpack.c.l.b16 %v9188
    %v9764 = vunpack.c.l.b16 %v9189
    %v9765 = vunpack.c.l.b16 %v9190
    %v9766 = vunpack.c.l.b16 %v9191
    %v9767 = vunpack.c.l.b16 %v9192
    %v9768 = vunpack.c.l.b16 %v9193
    %v9769 = vunpack.c.l.b16 %v9194
    %v9770 = vunpack.c.l.b16 %v9195
    %v9771 = vunpack.c.l.b16 %v9196
    %v9772 = vunpack.c.l.b16 %v9197
    %v9773 = vunpack.c.l.b16 %v9198
    %v9774 = vunpack.c.l.b16 %v9199
    %v9775 = vunpack.c.l.b16 %v9200
    %v9776 = vunpack.c.l.b16 %v9201
    %v9777 = vunpack.c.l.b16 %v9202
    %v9778 = vunpack.c.l.b16 %v9203
    %v9779 = vunpack.c.l.b16 %v9204
    %v9780 = vunpack.c.l.b16 %v9205
    %v9781 = vunpack.c.l.b16 %v9206
    %v9782 = vunpack.c.l.b16 %v9207
    %v9783 = vunpack.c.l.b16 %v9208
    %v9784 = vunpack.c.l.b16 %v9209
    %v9785 = vunpack.c.l.b16 %v9210
    %v9786 = vunpack.c.l.b16 %v9211
    %v9787 = vunpack.c.l.b16 %v9212
    %v9788 = vunpack.c.l.b16 %v9213
    %v9789 = vunpack.c.l.b16 %v9214
    %v9790 = vunpack.c.l.b16 %v9215
    %v9791 = vunpack.c.l.b16 %v9216
    %v9792 = vunpack.c.l.b16 %v9217
    %v9793 = vunpack.c.l.b16 %v9218
    %v9794 = vunpack.c.l.b16 %v9219
    %v9795 = vunpack.c.l.b16 %v9220
    %v9796 = vunpack.c.l.b16 %v9221
    %v9797 = vunpack.c.l.b16 %v9222
    %v9798 = vunpack.c.l.b16 %v9223
    %v9799 = vunpack.c.l.b16 %v9224
    %v9800 = vunpack.c.l.b16 %v9225
    %v9801 = vunpack.c.l.b16 %v9226
    %v9802 = vunpack.c.l.b16 %v9227
    %v9803 = vunpack.c.l.b16 %v9228
    %v9804 = vunpack.c.l.b16 %v9229
    %v9805 = vunpack.c.l.b16 %v9230
    %v9806 = vunpack.c.l.b16 %v9231
    %v9807 = vunpack.c.l.b16 %v9232
    %v9808 = vunpack.c.l.b16 %v9233
    %v9809 = vunpack.c.l.b16 %v9234
    %v9810 = vunpack.c.l.b16 %v9235
    %v9811 = vunpack.c.l.b16 %v9236
    %v9812 = vunpack.c.l.b16 %v9237
    %v9813 = vunpack.c.l.b16 %v9238
    %v9814 = vunpack.c.l.b16 %v9239
    %v9815 = vunpack.c.l.b16 %v9240
    %v9816 = vunpack.c.l.b16 %v9241
    %v9817 = vunpack.c.l.b16 %v9242
    %v9818 = vunpack.c.l.b16 %v9243
    %v9819 = vunpack.c.l.b16 %v9244
    %v9820 = vunpack.c.l.b16 %v9245
    %v9821 = vunpack.c.l.b16 %v9246
    %v9822 = vunpack.c.l.b16 %v9247
    %v9823 = vunpack.c.l.b16 %v9248
    %v9824 = vunpack.c.l.b16 %v9249
    %v9825 = vunpack.c.l.b16 %v9250
    %v9826 = vunpack.c.l.b16 %v9251
    %v9827 = vunpack.c.l.b16 %v9252
    %v9828 = vunpack.c.l.b16 %v9253
    %v9829 = vunpack.c.l.b16 %v9254
    %v9830 = vunpack.c.l.b16 %v9255
    %v9831 = vunpack.c.l.b16 %v9256
    %v9832 = vunpack.c.l.b16 %v9257
    %v9833 = vunpack.c.l.b16 %v9258
    %v9834 = vunpack.c.l.b16 %v9259
    %v9835 = vunpack.c.l.b16 %v9260
    %v9836 = vunpack.c.l.b16 %v9261
    %v9837 = vunpack.c.l.b16 %v9262
    %v9838 = vunpack.c.l.b16 %v9263
    %v9839 = vunpack.c.l.b16 %v9264
    %v9840 = vunpack.c.l.b16 %v9265
    %v9841 = vunpack.c.l.b16 %v9266
    %v9842 = vunpack.c.l.b16 %v9267
    %v9843 = vunpack.c.l.b16 %v9268
    %v9844 = vunpack.c.l.b16 %v9269
    %v9845 = vunpack.c.l.b16 %v9270
    %v9846 = vunpack.c.l.b16 %v9271
    %v9847 = vunpack.c.l.b16 %v9272
    %v9848 = vunpack.c.l.b16 %v9273
    %v9849 = vunpack.c.l.b16 %v9274
    %v9850 = vunpack.c.l.b16 %v9275
    %v9851 = vunpack.c.l.b16 %v9276
    %v9852 = vunpack.c.l.b16 %v9277
    %v9853 = vunpack.c.l.b16 %v9278
    %v9854 = vunpack.c.l.b16 %v9279
    %v9855 = vunpack.c.l.b16 %v9280
    %v9856 = vunpack.c.l.b16 %v9281
    %v9857 = vunpack.c.l.b16 %v9282
    %v9858 = vunpack.c.l.b16 %v9283
    %v9859 = vunpack.c.l.b16 %v9284
    %v9860 = vpack.c.b16 %v9605, %v9604
    %v9861 = vpack.c.b16 %v9607, %v9606
    %v9862 = vpack.c.b16 %v9609, %v9608
    %v9863 = vpack.c.b16 %v9611, %v9610
    %v9864 = vpack.c.b16 %v9613, %v9612
    %v9865 = vpack.c.b16 %v9615, %v9614
    %v9866 = vpack.c.b16 %v9617, %v9616
    %v9867 = vpack.c.b16 %v9619, %v9618
    %v9868 = vpack.c.b16 %v9621, %v9620
    %v9869 = vpack.c.b16 %v9623, %v9622
    %v9870 = vpack.c.b16 %v9625, %v9624
    %v9871 = vpack.c.b16 %v9627, %v9626
    %v9872 = vpack.c.b16 %v9629, %v9628
    %v9873 = vpack.c.b16 %v9631, %v9630
    %v9874 = vpack.c.b16 %v9633, %v9632
    %v9875 = vpack.c.b16 %v9635, %v9634
    %v9876 = vpack.c.b16 %v9637, %v9636
    %v9877 = vpack.c.b16 %v9639, %v9638
    %v9878 = vpack.c.b16 %v9641, %v9640
    %v9879 = vpack.c.b16 %v9643, %v9642
    %v9880 = vpack.c.b16 %v9645, %v9644
    %v9881 = vpack.c.b16 %v9647, %v9646
    %v9882 = vpack.c.b16 %v9649, %v9648
    %v9883 = vpack.c.b16 %v9651, %v9650
    %v9884 = vpack.c.b16 %v9653, %v9652
    %v9885 = vpack.c.b16 %v9655, %v9654
    %v9886 = vpack.c.b16 %v9657, %v9656
    %v9887 = vpack.c.b16 %v9659, %v9658
    %v9888 = vpack.c.b16 %v9661, %v9660
    %v9889 = vpack.c.b16 %v9663, %v9662
    %v9890 = vpack.c.b16 %v9665, %v9664
    %v9891 = vpack.c.b16 %v9667, %v9666
    %v9892 = vpack.c.b16 %v9669, %v9668
    %v9893 = vpack.c.b16 %v9671, %v9670
    %v9894 = vpack.c.b16 %v9673, %v9672
    %v9895 = vpack.c.b16 %v9675, %v9674
    %v9896 = vpack.c.b16 %v9677, %v9676
    %v9897 = vpack.c.b16 %v9679, %v9678
    %v9898 = vpack.c.b16 %v9681, %v9680
    %v9899 = vpack.c.b16 %v9683, %v9682
    %v9900 = vpack.c.b16 %v9685, %v9684
    %v9901 = vpack.c.b16 %v9687, %v9686
    %v9902 = vpack.c.b16 %v9689, %v9688
    %v9903 = vpack.c.b16 %v9691, %v9690
    %v9904 = vpack.c.b16 %v9693, %v9692
    %v9905 = vpack.c.b16 %v9695, %v9694
    %v9906 = vpack.c.b16 %v9697, %v9696
    %v9907 = vpack.c.b16 %v9699, %v9698
    %v9908 = vpack.c.b16 %v9701, %v9700
    %v9909 = vpack.c.b16 %v9703, %v9702
    %v9910 = vpack.c.b16 %v9705, %v9704
    %v9911 = vpack.c.b16 %v9707, %v9706
    %v9912 = vpack.c.b16 %v9709, %v9708
    %v9913 = vpack.c.b16 %v9711, %v9710
    %v9914 = vpack.c.b16 %v9713, %v9712
    %v9915 = vpack.c.b16 %v9715, %v9714
    %v9916 = vpack.c.b16 %v9717, %v9716
    %v9917 = vpack.c.b16 %v9719, %v9718
    %v9918 = vpack.c.b16 %v9721, %v9720
    %v9919 = vpack.c.b16 %v9723, %v9722
    %v9920 = vpack.c.b16 %v9725, %v9724
    %v9921 = vpack.c.b16 %v9727, %v9726
    %v9922 = vpack.c.b16 %v9729, %v9728
    %v9923 = vpack.c.b16 %v9731, %v9730
    %v9924 = vpack.c.b16 %v9733, %v9732
    %v9925 = vpack.c.b16 %v9735, %v9734
    %v9926 = vpack.c.b16 %v9737, %v9736
    %v9927 = vpack.c.b16 %v9739, %v9738
    %v9928 = vpack.c.b16 %v9741, %v9740
    %v9929 = vpack.c.b16 %v9743, %v9742
    %v9930 = vpack.c.b16 %v9745, %v9744
    %v9931 = vpack.c.b16 %v9747, %v9746
    %v9932 = vpack.c.b16 %v9749, %v9748
    %v9933 = vpack.c.b16 %v9751, %v9750
    %v9934 = vpack.c.b16 %v9753, %v9752
    %v9935 = vpack.c.b16 %v9755, %v9754
    %v9936 = vpack.c.b16 %v9757, %v9756
    %v9937 = vpack.c.b16 %v9759, %v9758
    %v9938 = vpack.c.b16 %v9761, %v9760
    %v9939 = vpack.c.b16 %v9763, %v9762
    %v9940 = vpack.c.b16 %v9765, %v9764
    %v9941 = vpack.c.b16 %v9767, %v9766
    %v9942 = vpack.c.b16 %v9769, %v9768
    %v9943 = vpack.c.b16 %v9771, %v9770
    %v9944 = vpack.c.b16 %v9773, %v9772
    %v9945 = vpack.c.b16 %v9775, %v9774
    %v9946 = vpack.c.b16 %v9777, %v9776
    %v9947 = vpack.c.b16 %v9779, %v9778
    %v9948 = vpack.c.b16 %v9781, %v9780
    %v9949 = vpack.c.b16 %v9783, %v9782
    %v9950 = vpack.c.b16 %v9785, %v9784
    %v9951 = vpack.c.b16 %v9787, %v9786
    %v9952 = vpack.c.b16 %v9789, %v9788
    %v9953 = vpack.c.b16 %v9791, %v9790
    %v9954 = vpack.c.b16 %v9793, %v9792
    %v9955 = vpack.c.b16 %v9795, %v9794
    %v9956 = vpack.c.b16 %v9797, %v9796
    %v9957 = vpack.c.b16 %v9799, %v9798
    %v9958 = vpack.c.b16 %v9801, %v9800
    %v9959 = vpack.c.b16 %v9803, %v9802
    %v9960 = vpack.c.b16 %v9805, %v9804
    %v9961 = vpack.c.b16 %v9807, %v9806
    %v9962 = vpack.c.b16 %v9809, %v9808
    %v9963 = vpack.c.b16 %v9811, %v9810
    %v9964 = vpack.c.b16 %v9813, %v9812
    %v9965 = vpack.c.b16 %v9815, %v9814
    %v9966 = vpack.c.b16 %v9817, %v9816
    %v9967 = vpack.c.b16 %v9819, %v9818
    %v9968 = vpack.c.b16 %v9821, %v9820
    %v9969 = vpack.c.b16 %v9823, %v9822
    %v9970 = vpack.c.b16 %v9825, %v9824
    %v9971 = vpack.c.b16 %v9827, %v9826
    %v9972 = vpack.c.b16 %v9829, %v9828
    %v9973 = vpack.c.b16 %v9831, %v9830
    %v9974 = vpack.c.b16 %v9833, %v9832
    %v9975 = vpack.c.b16 %v9835, %v9834
    %v9976 = vpack.c.b16 %v9837, %v9836
    %v9977 = vpack.c.b16 %v9839, %v9838
    %v9978 = vpack.c.b16 %v9841, %v9840
    %v9979 = vpack.c.b16 %v9843, %v9842
    %v9980 = vpack.c.b16 %v9845, %v9844
    %v9981 = vpack.c.b16 %v9847, %v9846
    %v9982 = vpack.c.b16 %v9849, %v9848
    %v9983 = vpack.c.b16 %v9851, %v9850
    %v9984 = vpack.c.b16 %v9853, %v9852
    %v9985 = vpack.c.b16 %v9855, %v9854
    %v9986 = vpack.c.b16 %v9857, %v9856
    %v9987 = vpack.c.b16 %v9859, %v9858
    %10116 = vmatprep.subr.bf16.mxu0 0
    %10117 = vmatpush1.bf16.msra.mxu0 %v9860
    %10118 = vmatprep.subr.bf16.mxu0 0
    %10119 = vmatpush1.bf16.msra.mxu0 %v9861
    %10120 = vmatprep.subr.bf16.mxu0 0
    %10121 = vmatpush1.bf16.msra.mxu0 %v9862
    %10122 = vmatprep.subr.bf16.mxu0 0
    %10123 = vmatpush1.bf16.msra.mxu0 %v9863
    %10124 = vmatprep.subr.bf16.mxu0 0
    %10125 = vmatpush1.bf16.msra.mxu0 %v9864
    %10126 = vmatprep.subr.bf16.mxu0 0
    %10127 = vmatpush1.bf16.msra.mxu0 %v9865
    %10128 = vmatprep.subr.bf16.mxu0 0
    %10129 = vmatpush1.bf16.msra.mxu0 %v9866
    %10130 = vmatprep.subr.bf16.mxu0 0
    %10131 = vmatpush1.bf16.msra.mxu0 %v9867
    %10132 = vmatprep.subr.bf16.mxu0 0
    %10133 = vmatpush1.bf16.msra.mxu0 %v9868
    %10134 = vmatprep.subr.bf16.mxu0 0
    %10135 = vmatpush1.bf16.msra.mxu0 %v9869
    %10136 = vmatprep.subr.bf16.mxu0 0
    %10137 = vmatpush1.bf16.msra.mxu0 %v9870
    %10138 = vmatprep.subr.bf16.mxu0 0
    %10139 = vmatpush1.bf16.msra.mxu0 %v9871
    %10140 = vmatprep.subr.bf16.mxu0 0
    %10141 = vmatpush1.bf16.msra.mxu0 %v9872
    %10142 = vmatprep.subr.bf16.mxu0 0
    %10143 = vmatpush1.bf16.msra.mxu0 %v9873
    %10144 = vmatprep.subr.bf16.mxu0 0
    %10145 = vmatpush1.bf16.msra.mxu0 %v9874
    %10146 = vmatprep.subr.bf16.mxu0 0
    %10147 = vmatpush1.bf16.msra.mxu0 %v9875
    %10148 = vmatprep.mubr.bf16.mxu0 %v9317
    %10149 = vmatmul.mubr.bf16.gmra.mrb[0].mxu0 %v9316
    %v10150 = vpop.f32.mrb[0].mxu0
    %v10151 = vadd.f32 %v9290, %v10150
    %v10152 = vpop.f32.mrb[0].mxu0
    %v10153 = vpop.f32.mrb[0].mxu0
    %v10154 = vpop.f32.mrb[0].mxu0
    %10155 = vdwg.mxu0
    %10156 = vmatprep.subr.bf16.mxu0 0
    %10157 = vmatpush1.bf16.msra.mxu0 %v9876
    %10158 = vmatprep.subr.bf16.mxu0 0
    %10159 = vmatpush1.bf16.msra.mxu0 %v9877
    %10160 = vmatprep.subr.bf16.mxu0 0
    %10161 = vmatpush1.bf16.msra.mxu0 %v9878
    %10162 = vmatprep.subr.bf16.mxu0 0
    %10163 = vmatpush1.bf16.msra.mxu0 %v9879
    %10164 = vmatprep.subr.bf16.mxu0 0
    %10165 = vmatpush1.bf16.msra.mxu0 %v9880
    %10166 = vmatprep.subr.bf16.mxu0 0
    %10167 = vmatpush1.bf16.msra.mxu0 %v9881
    %10168 = vmatprep.subr.bf16.mxu0 0
    %10169 = vmatpush1.bf16.msra.mxu0 %v9882
    %10170 = vmatprep.subr.bf16.mxu0 0
    %10171 = vmatpush1.bf16.msra.mxu0 %v9883
    %10172 = vmatprep.subr.bf16.mxu0 0
    %10173 = vmatpush1.bf16.msra.mxu0 %v9884
    %10174 = vmatprep.subr.bf16.mxu0 0
    %10175 = vmatpush1.bf16.msra.mxu0 %v9885
    %10176 = vmatprep.subr.bf16.mxu0 0
    %10177 = vmatpush1.bf16.msra.mxu0 %v9886
    %10178 = vmatprep.subr.bf16.mxu0 0
    %10179 = vmatpush1.bf16.msra.mxu0 %v9887
    %10180 = vmatprep.subr.bf16.mxu0 0
    %10181 = vmatpush1.bf16.msra.mxu0 %v9888
    %10182 = vmatprep.subr.bf16.mxu0 0
    %10183 = vmatpush1.bf16.msra.mxu0 %v9889
    %10184 = vmatprep.subr.bf16.mxu0 0
    %10185 = vmatpush1.bf16.msra.mxu0 %v9890
    %10186 = vmatprep.subr.bf16.mxu0 0
    %10187 = vmatpush1.bf16.msra.mxu0 %v9891
    %10188 = vmatprep.mubr.bf16.mxu0 %v9319
    %10189 = vmatmul.mubr.bf16.gmra.mrb[0].mxu0 %v9318
    %v10190 = vpop.f32.mrb[0].mxu0
    %v10191 = vadd.f32 %v10151, %v10190
    %v10192 = vpop.f32.mrb[0].mxu0
    %v10193 = vpop.f32.mrb[0].mxu0
    %v10194 = vpop.f32.mrb[0].mxu0
    %10195 = vdwg.mxu0
    %10196 = vmatprep.subr.bf16.mxu0 0
    %10197 = vmatpush1.bf16.msra.mxu0 %v9892
    %10198 = vmatprep.subr.bf16.mxu0 0
    %10199 = vmatpush1.bf16.msra.mxu0 %v9893
    %10200 = vmatprep.subr.bf16.mxu0 0
    %10201 = vmatpush1.bf16.msra.mxu0 %v9894
    %10202 = vmatprep.subr.bf16.mxu0 0
    %10203 = vmatpush1.bf16.msra.mxu0 %v9895
    %10204 = vmatprep.subr.bf16.mxu0 0
    %10205 = vmatpush1.bf16.msra.mxu0 %v9896
    %10206 = vmatprep.subr.bf16.mxu0 0
    %10207 = vmatpush1.bf16.msra.mxu0 %v9897
    %10208 = vmatprep.subr.bf16.mxu0 0
    %10209 = vmatpush1.bf16.msra.mxu0 %v9898
    %10210 = vmatprep.subr.bf16.mxu0 0
    %10211 = vmatpush1.bf16.msra.mxu0 %v9899
    %10212 = vmatprep.subr.bf16.mxu0 0
    %10213 = vmatpush1.bf16.msra.mxu0 %v9900
    %10214 = vmatprep.subr.bf16.mxu0 0
    %10215 = vmatpush1.bf16.msra.mxu0 %v9901
    %10216 = vmatprep.subr.bf16.mxu0 0
    %10217 = vmatpush1.bf16.msra.mxu0 %v9902
    %10218 = vmatprep.subr.bf16.mxu0 0
    %10219 = vmatpush1.bf16.msra.mxu0 %v9903
    %10220 = vmatprep.subr.bf16.mxu0 0
    %10221 = vmatpush1.bf16.msra.mxu0 %v9904
    %10222 = vmatprep.subr.bf16.mxu0 0
    %10223 = vmatpush1.bf16.msra.mxu0 %v9905
    %10224 = vmatprep.subr.bf16.mxu0 0
    %10225 = vmatpush1.bf16.msra.mxu0 %v9906
    %10226 = vmatprep.subr.bf16.mxu0 0
    %10227 = vmatpush1.bf16.msra.mxu0 %v9907
    %10228 = vmatprep.mubr.bf16.mxu0 %v9321
    %10229 = vmatmul.mubr.bf16.gmra.mrb[0].mxu0 %v9320
    %v10230 = vpop.f32.mrb[0].mxu0
    %v10231 = vadd.f32 %v10191, %v10230
    %v10232 = vpop.f32.mrb[0].mxu0
    %v10233 = vpop.f32.mrb[0].mxu0
    %v10234 = vpop.f32.mrb[0].mxu0
    %10235 = vdwg.mxu0
    %10236 = vmatprep.subr.bf16.mxu0 0
    %10237 = vmatpush1.bf16.msra.mxu0 %v9908
    %10238 = vmatprep.subr.bf16.mxu0 0
    %10239 = vmatpush1.bf16.msra.mxu0 %v9909
    %10240 = vmatprep.subr.bf16.mxu0 0
    %10241 = vmatpush1.bf16.msra.mxu0 %v9910
    %10242 = vmatprep.subr.bf16.mxu0 0
    %10243 = vmatpush1.bf16.msra.mxu0 %v9911
    %10244 = vmatprep.subr.bf16.mxu0 0
    %10245 = vmatpush1.bf16.msra.mxu0 %v9912
    %10246 = vmatprep.subr.bf16.mxu0 0
    %10247 = vmatpush1.bf16.msra.mxu0 %v9913
    %10248 = vmatprep.subr.bf16.mxu0 0
    %10249 = vmatpush1.bf16.msra.mxu0 %v9914
    %10250 = vmatprep.subr.bf16.mxu0 0
    %10251 = vmatpush1.bf16.msra.mxu0 %v9915
    %10252 = vmatprep.subr.bf16.mxu0 0
    %10253 = vmatpush1.bf16.msra.mxu0 %v9916
    %10254 = vmatprep.subr.bf16.mxu0 0
    %10255 = vmatpush1.bf16.msra.mxu0 %v9917
    %10256 = vmatprep.subr.bf16.mxu0 0
    %10257 = vmatpush1.bf16.msra.mxu0 %v9918
    %10258 = vmatprep.subr.bf16.mxu0 0
    %10259 = vmatpush1.bf16.msra.mxu0 %v9919
    %10260 = vmatprep.subr.bf16.mxu0 0
    %10261 = vmatpush1.bf16.msra.mxu0 %v9920
    %10262 = vmatprep.subr.bf16.mxu0 0
    %10263 = vmatpush1.bf16.msra.mxu0 %v9921
    %10264 = vmatprep.subr.bf16.mxu0 0
    %10265 = vmatpush1.bf16.msra.mxu0 %v9922
    %10266 = vmatprep.subr.bf16.mxu0 0
    %10267 = vmatpush1.bf16.msra.mxu0 %v9923
    %10268 = vmatprep.mubr.bf16.mxu0 %v9323
    %10269 = vmatmul.mubr.bf16.gmra.mrb[0].mxu0 %v9322
    %v10270 = vpop.f32.mrb[0].mxu0
    %v10271 = vadd.f32 %v10231, %v10270
    %v10272 = vpop.f32.mrb[0].mxu0
    %v10273 = vpop.f32.mrb[0].mxu0
    %v10274 = vpop.f32.mrb[0].mxu0
    %10275 = vdwg.mxu0
    %10276 = vmatprep.subr.bf16.mxu0 0
    %10277 = vmatpush1.bf16.msra.mxu0 %v9924
    %10278 = vmatprep.subr.bf16.mxu0 0
    %10279 = vmatpush1.bf16.msra.mxu0 %v9925
    %10280 = vmatprep.subr.bf16.mxu0 0
    %10281 = vmatpush1.bf16.msra.mxu0 %v9926
    %10282 = vmatprep.subr.bf16.mxu0 0
    %10283 = vmatpush1.bf16.msra.mxu0 %v9927
    %10284 = vmatprep.subr.bf16.mxu0 0
    %10285 = vmatpush1.bf16.msra.mxu0 %v9928
    %10286 = vmatprep.subr.bf16.mxu0 0
    %10287 = vmatpush1.bf16.msra.mxu0 %v9929
    %10288 = vmatprep.subr.bf16.mxu0 0
    %10289 = vmatpush1.bf16.msra.mxu0 %v9930
    %10290 = vmatprep.subr.bf16.mxu0 0
    %10291 = vmatpush1.bf16.msra.mxu0 %v9931
    %10292 = vmatprep.subr.bf16.mxu0 0
    %10293 = vmatpush1.bf16.msra.mxu0 %v9932
    %10294 = vmatprep.subr.bf16.mxu0 0
    %10295 = vmatpush1.bf16.msra.mxu0 %v9933
    %10296 = vmatprep.subr.bf16.mxu0 0
    %10297 = vmatpush1.bf16.msra.mxu0 %v9934
    %10298 = vmatprep.subr.bf16.mxu0 0
    %10299 = vmatpush1.bf16.msra.mxu0 %v9935
    %10300 = vmatprep.subr.bf16.mxu0 0
    %10301 = vmatpush1.bf16.msra.mxu0 %v9936
    %10302 = vmatprep.subr.bf16.mxu0 0
    %10303 = vmatpush1.bf16.msra.mxu0 %v9937
    %10304 = vmatprep.subr.bf16.mxu0 0
    %10305 = vmatpush1.bf16.msra.mxu0 %v9938
    %10306 = vmatprep.subr.bf16.mxu0 0
    %10307 = vmatpush1.bf16.msra.mxu0 %v9939
    %10308 = vmatprep.mubr.bf16.mxu0 %v9325
    %10309 = vmatmul.mubr.bf16.gmra.mrb[0].mxu0 %v9324
    %v10310 = vpop.f32.mrb[0].mxu0
    %v10311 = vadd.f32 %v10271, %v10310
    %v10312 = vpop.f32.mrb[0].mxu0
    %v10313 = vpop.f32.mrb[0].mxu0
    %v10314 = vpop.f32.mrb[0].mxu0
    %10315 = vdwg.mxu0
    %10316 = vmatprep.subr.bf16.mxu0 0
    %10317 = vmatpush1.bf16.msra.mxu0 %v9940
    %10318 = vmatprep.subr.bf16.mxu0 0
    %10319 = vmatpush1.bf16.msra.mxu0 %v9941
    %10320 = vmatprep.subr.bf16.mxu0 0
    %10321 = vmatpush1.bf16.msra.mxu0 %v9942
    %10322 = vmatprep.subr.bf16.mxu0 0
    %10323 = vmatpush1.bf16.msra.mxu0 %v9943
    %10324 = vmatprep.subr.bf16.mxu0 0
    %10325 = vmatpush1.bf16.msra.mxu0 %v9944
    %10326 = vmatprep.subr.bf16.mxu0 0
    %10327 = vmatpush1.bf16.msra.mxu0 %v9945
    %10328 = vmatprep.subr.bf16.mxu0 0
    %10329 = vmatpush1.bf16.msra.mxu0 %v9946
    %10330 = vmatprep.subr.bf16.mxu0 0
    %10331 = vmatpush1.bf16.msra.mxu0 %v9947
    %10332 = vmatprep.subr.bf16.mxu0 0
    %10333 = vmatpush1.bf16.msra.mxu0 %v9948
    %10334 = vmatprep.subr.bf16.mxu0 0
    %10335 = vmatpush1.bf16.msra.mxu0 %v9949
    %10336 = vmatprep.subr.bf16.mxu0 0
    %10337 = vmatpush1.bf16.msra.mxu0 %v9950
    %10338 = vmatprep.subr.bf16.mxu0 0
    %10339 = vmatpush1.bf16.msra.mxu0 %v9951
    %10340 = vmatprep.subr.bf16.mxu0 0
    %10341 = vmatpush1.bf16.msra.mxu0 %v9952
    %10342 = vmatprep.subr.bf16.mxu0 0
    %10343 = vmatpush1.bf16.msra.mxu0 %v9953
    %10344 = vmatprep.subr.bf16.mxu0 0
    %10345 = vmatpush1.bf16.msra.mxu0 %v9954
    %10346 = vmatprep.subr.bf16.mxu0 0
    %10347 = vmatpush1.bf16.msra.mxu0 %v9955
    %10348 = vmatprep.mubr.bf16.mxu0 %v9327
    %10349 = vmatmul.mubr.bf16.gmra.mrb[0].mxu0 %v9326
    %v10350 = vpop.f32.mrb[0].mxu0
    %v10351 = vadd.f32 %v10311, %v10350
    %v10352 = vpop.f32.mrb[0].mxu0
    %v10353 = vpop.f32.mrb[0].mxu0
    %v10354 = vpop.f32.mrb[0].mxu0
    %10355 = vdwg.mxu0
    %10356 = vmatprep.subr.bf16.mxu0 0
    %10357 = vmatpush1.bf16.msra.mxu0 %v9956
    %10358 = vmatprep.subr.bf16.mxu0 0
    %10359 = vmatpush1.bf16.msra.mxu0 %v9957
    %10360 = vmatprep.subr.bf16.mxu0 0
    %10361 = vmatpush1.bf16.msra.mxu0 %v9958
    %10362 = vmatprep.subr.bf16.mxu0 0
    %10363 = vmatpush1.bf16.msra.mxu0 %v9959
    %10364 = vmatprep.subr.bf16.mxu0 0
    %10365 = vmatpush1.bf16.msra.mxu0 %v9960
    %10366 = vmatprep.subr.bf16.mxu0 0
    %10367 = vmatpush1.bf16.msra.mxu0 %v9961
    %10368 = vmatprep.subr.bf16.mxu0 0
    %10369 = vmatpush1.bf16.msra.mxu0 %v9962
    %10370 = vmatprep.subr.bf16.mxu0 0
    %10371 = vmatpush1.bf16.msra.mxu0 %v9963
    %10372 = vmatprep.subr.bf16.mxu0 0
    %10373 = vmatpush1.bf16.msra.mxu0 %v9964
    %10374 = vmatprep.subr.bf16.mxu0 0
    %10375 = vmatpush1.bf16.msra.mxu0 %v9965
    %10376 = vmatprep.subr.bf16.mxu0 0
    %10377 = vmatpush1.bf16.msra.mxu0 %v9966
    %10378 = vmatprep.subr.bf16.mxu0 0
    %10379 = vmatpush1.bf16.msra.mxu0 %v9967
    %10380 = vmatprep.subr.bf16.mxu0 0
    %10381 = vmatpush1.bf16.msra.mxu0 %v9968
    %10382 = vmatprep.subr.bf16.mxu0 0
    %10383 = vmatpush1.bf16.msra.mxu0 %v9969
    %10384 = vmatprep.subr.bf16.mxu0 0
    %10385 = vmatpush1.bf16.msra.mxu0 %v9970
    %10386 = vmatprep.subr.bf16.mxu0 0
    %10387 = vmatpush1.bf16.msra.mxu0 %v9971
    %10388 = vmatprep.mubr.bf16.mxu0 %v9329
    %10389 = vmatmul.mubr.bf16.gmra.mrb[0].mxu0 %v9328
    %v10390 = vpop.f32.mrb[0].mxu0
    %v10391 = vadd.f32 %v10351, %v10390
    %v10392 = vpop.f32.mrb[0].mxu0
    %v10393 = vpop.f32.mrb[0].mxu0
    %v10394 = vpop.f32.mrb[0].mxu0
    %10395 = vdwg.mxu0
    %10396 = vmatprep.subr.bf16.mxu0 0
    %10397 = vmatpush1.bf16.msra.mxu0 %v9972
    %10398 = vmatprep.subr.bf16.mxu0 0
    %10399 = vmatpush1.bf16.msra.mxu0 %v9973
    %10400 = vmatprep.subr.bf16.mxu0 0
    %10401 = vmatpush1.bf16.msra.mxu0 %v9974
    %10402 = vmatprep.subr.bf16.mxu0 0
    %10403 = vmatpush1.bf16.msra.mxu0 %v9975
    %10404 = vmatprep.subr.bf16.mxu0 0
    %10405 = vmatpush1.bf16.msra.mxu0 %v9976
    %10406 = vmatprep.subr.bf16.mxu0 0
    %10407 = vmatpush1.bf16.msra.mxu0 %v9977
    %10408 = vmatprep.subr.bf16.mxu0 0
    %10409 = vmatpush1.bf16.msra.mxu0 %v9978
    %10410 = vmatprep.subr.bf16.mxu0 0
    %10411 = vmatpush1.bf16.msra.mxu0 %v9979
    %10412 = vmatprep.subr.bf16.mxu0 0
    %10413 = vmatpush1.bf16.msra.mxu0 %v9980
    %10414 = vmatprep.subr.bf16.mxu0 0
    %10415 = vmatpush1.bf16.msra.mxu0 %v9981
    %10416 = vmatprep.subr.bf16.mxu0 0
    %10417 = vmatpush1.bf16.msra.mxu0 %v9982
    %10418 = vmatprep.subr.bf16.mxu0 0
    %10419 = vmatpush1.bf16.msra.mxu0 %v9983
    %10420 = vmatprep.subr.bf16.mxu0 0
    %10421 = vmatpush1.bf16.msra.mxu0 %v9984
    %10422 = vmatprep.subr.bf16.mxu0 0
    %10423 = vmatpush1.bf16.msra.mxu0 %v9985
    %10424 = vmatprep.subr.bf16.mxu0 0
    %10425 = vmatpush1.bf16.msra.mxu0 %v9986
    %10426 = vmatprep.subr.bf16.mxu0 0
    %10427 = vmatpush1.bf16.msra.mxu0 %v9987
    %10428 = vmatprep.mubr.bf16.mxu0 %v9331
    %10429 = vmatmul.mubr.bf16.gmra.mrb[0].mxu0 %v9330
    %v10430 = vpop.f32.mrb[0].mxu0
    %v10431 = vadd.f32 %v10391, %v10430
    %v10432 = vpop.f32.mrb[0].mxu0
    %v10433 = vpop.f32.mrb[0].mxu0
    %v10434 = vpop.f32.mrb[0].mxu0
    %10435 = vdwg.mxu0
    %10436 = vst [vmem:[#allocation18] sm:$0xff] %v10431
    // Predicated region
    $region78: #{tpu_custom_call.1} parent=1 // pred_check
      _
    $region79: #{tpu_custom_call.1} parent=1 // pred_check_branch
      %10438 = sbr.rel (0) target = $region81
    $region80: #{tpu_custom_call.1} parent=1 // pred_region
      %s10440 = ssub.s32 128, 128
      %10441 = vsyncadd [#allocation5], %s10440
      %s10443 = sshll.u32 [#allocation18], 4
      %s10444 = int_to_ptr.vmem [resolvable:$true] %s10443
      %10446 = dma.vmem_to_hbm [thread:$0]  %s10444, 128, %s9, [#allocation5]
    $region81: #{tpu_custom_call.1} parent=1 // pred_fallthru
      _
    // Predicated region
    $region82: #{tpu_custom_call.1} parent=1 // pred_check
      _
    $region83: #{tpu_custom_call.1} parent=1 // pred_check_branch
      %10448 = sbr.rel (0) target = $region85
    $region84: #{tpu_custom_call.1} parent=1 // pred_region
      %10449 = dma.done [#allocation5], 128
    $region85: #{tpu_custom_call.1} parent=1 // pred_fallthru
      _
    %10450 = vsyncpa [#allocation4], 1
    %10451 = vsyncpa [#allocation7], 1
    %10452 = vsyncpa [#allocation10], 1
    %10453 = vsyncpa [#allocation13], 1
    %10454 = vsyncpa [#allocation16], 1
    %10455 = vsyncpa [#allocation5], 1

</llo_original>
